<compile_context>
chip_gen: v5e
topology: v5e:2x2
jax: 0.10.0
libtpu: 0.0.40
codegen_flags: <defaults>
</compile_context>

<pallas_src>
import numpy as np
import jax
import jax.numpy as jnp
from jax.experimental import pallas as pl
from jax.experimental.pallas import tpu as pltpu  # noqa: F401  (TPU backend)

# ------------------------- config (stands in for argparse opt / globals) ----
NC = 3          # image channels (nc)
NZ = 32         # latent dim (opt.nz)
NGF = 16        # generator features (opt.ngf)
NSIZE = 32      # image size (opt.imageSize)  -> depth_in_bg == depth_in == 64
NTIMESTEP = 3   # opt.ntimestep (>2 so the encoder branch is exercised)
BATCH = 2       # opt.batchSize
MAXOBJSCALE = 1.5
ROT = 0.25      # global `rot` in train.py
BN_EPS = 1e-5


# ----------------------------- in-kernel helpers -----------------------------
def _bn_rows(x, gamma, beta):
    """Training-mode BatchNorm over the row axis (rows = batch [* spatial])."""
    mean = jnp.mean(x, axis=0, keepdims=True)
    var = jnp.mean(jnp.square(x - mean), axis=0, keepdims=True)
    return (x - mean) * jax.lax.rsqrt(var + BN_EPS) * gamma + beta


def _lstm_from_gates(gates, c):
    """nn.LSTMCell update from pre-activation gates (order i, f, g, o)."""
    nz = c.shape[1]
    i_g = jax.nn.sigmoid(gates[:, 0 * nz:1 * nz])
    f_g = jax.nn.sigmoid(gates[:, 1 * nz:2 * nz])
    g_g = jnp.tanh(gates[:, 2 * nz:3 * nz])
    o_g = jax.nn.sigmoid(gates[:, 3 * nz:4 * nz])
    c_new = f_g * c + i_g * g_g
    h_new = o_g * jnp.tanh(c_new)
    return h_new, c_new


# ----------------------------- Pallas kernels -------------------------------
def _lstm_seed_kernel(xh_ref, c_ref, wl_ref, bl_ref, wseed_ref,
                      h_o, c_o, seed_o):
    """t=0: LSTMCell on [x0, h0] + the 1x1-spatial ConvT seed of Gbgc on x0."""
    gates = jnp.dot(xh_ref[...], wl_ref[...],
                    preferred_element_type=jnp.float32) + bl_ref[...]
    h_new, c_new = _lstm_from_gates(gates, c_ref[...])
    h_o[...] = h_new
    c_o[...] = c_new
    x0 = xh_ref[...][:, :NZ]
    seed_o[...] = jnp.dot(x0.astype(jnp.bfloat16), wseed_ref[...],
                          preferred_element_type=jnp.float32)


def _fg_step_kernel(xh_ref, c_ref, prevc_ref,
                    p1_ref, p2_ref, p3_ref,
                    eg1_ref, eb1_ref, eg2_ref, eb2_ref, eg3_ref, eb3_ref,
                    wfc_ref, bfc_ref, gfc_ref, befc_ref,
                    wl_ref, bl_ref,
                    wnlh_ref, wnle_ref, bnl_ref, gnl_ref, benl_ref,
                    wgt_ref, bgt_ref, wseed_ref,
                    h_o, c_o, g_o, t_o, seed_o):
    """One fused per-timestep kernel (ntimestep > 2):
       LSTMCell + encoderconv (3x [avgpool-as-matmul + BN2d + LeakyReLU])
       + encoderfc (Linear + BN1d + Tanh) + nlnet (Linear + BN1d + Tanh)
       + Gtransform Linear + Gfgc seed ConvT (1x1 spatial, stride 4)."""
    # ---- LSTMCell on the concatenated [x, h] (single (2nz, 4nz) weight) ----
    gates = jnp.dot(xh_ref[...], wl_ref[...],
                    preferred_element_type=jnp.float32) + bl_ref[...]
    h_new, c_new = _lstm_from_gates(gates, c_ref[...])
    h_o[...] = h_new
    c_o[...] = c_new

    # ---- encoder conv: AvgPool2d(4,2,1) as constant matmul, BN, LeakyReLU ----
    def bn_lrelu(x, g, b):
        y = _bn_rows(x, g, b)
        return jnp.where(y > 0, y, 0.2 * y)

    e1 = bn_lrelu(jnp.dot(p1_ref[...], prevc_ref[...],
                          preferred_element_type=jnp.float32),
                  eg1_ref[...], eb1_ref[...])                    # (B*64, 64)
    e2 = bn_lrelu(jnp.dot(p2_ref[...], e1,
                          preferred_element_type=jnp.float32),
                  eg2_ref[...], eb2_ref[...])                    # (B*16, 64)
    # last pool produced per spatial position (2x2 -> 4 positions) so the
    # encoder FC below needs no layout-changing reshape.
    e3 = [jnp.dot(p3_ref[i], e2, preferred_element_type=jnp.float32)
          for i in range(4)]                                     # 4 x (B, 64)
    n3 = 4.0 * e3[0].shape[0]
    mean3 = sum(jnp.sum(p, axis=0, keepdims=True) for p in e3) / n3
    var3 = sum(jnp.sum(jnp.square(p - mean3), axis=0, keepdims=True)
               for p in e3) / n3
    inv3 = jax.lax.rsqrt(var3 + BN_EPS)
    e3n = [(p - mean3) * inv3 * eg3_ref[...] + eb3_ref[...] for p in e3]
    e3a = [jnp.where(y > 0, y, 0.2 * y) for y in e3n]

    # ---- encoder FC: Linear(depth*2*2 -> nz) + BN1d + Tanh ----
    wfc = wfc_ref[...]                                           # (4, 64, nz)
    pre = bfc_ref[...]
    for i in range(4):
        pre = pre + jnp.dot(e3a[i], wfc[i],
                            preferred_element_type=jnp.float32)
    encfc = jnp.tanh(_bn_rows(pre, gfc_ref[...], befc_ref[...]))

    # ---- nlnet on cat([h, encFC]) (two dots == one dot on the concat) ----
    nl = (jnp.dot(h_new, wnlh_ref[...], preferred_element_type=jnp.float32)
          + jnp.dot(encfc, wnle_ref[...], preferred_element_type=jnp.float32)
          + bnl_ref[...])
    input4g = jnp.tanh(_bn_rows(nl, gnl_ref[...], benl_ref[...]))
    g_o[...] = input4g

    # ---- Gtransform linear (clampT applied outside, fuses with grid/STNM) ----
    t_o[...] = jnp.dot(input4g, wgt_ref[...],
                       preferred_element_type=jnp.float32) + bgt_ref[...]

    # ---- Gfgc seed: ConvTranspose2d(nz, 8*ngf, 4, 4, 0) on 1x1 input ----
    seed_o[...] = jnp.dot(input4g.astype(jnp.bfloat16), wseed_ref[...],
                          preferred_element_type=jnp.float32)


def _convt_mid_kernel(x_ref, g_ref, b_ref, w_ref, o_ref):
    """Fused [previous-layer BN2d + ReLU] + ConvTranspose2d matmul.
       x: (B*H*W, Cin) channels-last rows; w: (Cin, 4*4*Cout) bf16;
       out: cols (B*H*W, 4*4*Cout) f32 (col2im fold done outside)."""
    a = jnp.maximum(_bn_rows(x_ref[...], g_ref[...], b_ref[...]), 0.0)
    o_ref[...] = jnp.dot(a.astype(jnp.bfloat16), w_ref[...],
                         preferred_element_type=jnp.float32)


def _convt_head_kernel(x_ref, g_ref, b_ref, w_ref, cols_o, act_o):
    """Same as _convt_mid_kernel but also emits the post-BN/ReLU feature rows
       (the `prevc` carried into the next timestep's encoder)."""
    a = jnp.maximum(_bn_rows(x_ref[...], g_ref[...], b_ref[...]), 0.0)
    act_o[...] = a
    cols_o[...] = jnp.dot(a.astype(jnp.bfloat16), w_ref[...],
                          preferred_element_type=jnp.float32)


# ----------------------------- pallas_call wrappers --------------------------
def lstm_seed_call(xh, cx, seed_w, ops):
    B = xh.shape[0]
    return pl.pallas_call(
        _lstm_seed_kernel,
        out_shape=(jax.ShapeDtypeStruct((B, NZ), jnp.float32),
                   jax.ShapeDtypeStruct((B, NZ), jnp.float32),
                   jax.ShapeDtypeStruct((B, seed_w.shape[1]), jnp.float32)),
    )(xh, cx, ops['wlstm'], ops['blstm'], seed_w)


def fg_step_call(xh, cx, prevc_rows, ops):
    B = xh.shape[0]
    eb = ops['enc_bn']
    out_shape = (
        jax.ShapeDtypeStruct((B, NZ), jnp.float32),
        jax.ShapeDtypeStruct((B, NZ), jnp.float32),
        jax.ShapeDtypeStruct((B, NZ), jnp.float32),
        jax.ShapeDtypeStruct((B, 6), jnp.float32),
        jax.ShapeDtypeStruct((B, ops['fg_w'][0].shape[1]), jnp.float32),
    )
    return pl.pallas_call(_fg_step_kernel, out_shape=out_shape)(
        xh, cx, prevc_rows,
        ops['p1'], ops['p2'], ops['p3'],
        eb[0][0], eb[0][1], eb[1][0], eb[1][1], eb[2][0], eb[2][1],
        ops['wfc'], ops['bfc'], ops['gfc'], ops['befc'],
        ops['wlstm'], ops['blstm'],
        ops['wnlh'], ops['wnle'], ops['bnl'], ops['gnl'], ops['benl'],
        ops['wgt'], ops['bgt'], ops['fg_w'][0])


def convt_mid(x_rows, bn, w):
    R = x_rows.shape[0]
    return pl.pallas_call(
        _convt_mid_kernel,
        out_shape=jax.ShapeDtypeStruct((R, w.shape[1]), jnp.float32),
    )(x_rows, bn[0], bn[1], w)


def convt_head(x_rows, bn, w):
    R, Cin = x_rows.shape
    return pl.pallas_call(
        _convt_head_kernel,
        out_shape=(jax.ShapeDtypeStruct((R, w.shape[1]), jnp.float32),
                   jax.ShapeDtypeStruct((R, Cin), jnp.float32)),
    )(x_rows, bn[0], bn[1], w)


# ----------------------------- XLA glue (data movement only) -----------------
def fold_stride2_pad1(cols, B, H, W, C):
    """col2im fold for ConvTranspose2d(K=4, stride=2, pad=1), channels-last.
       cols: (B*H*W, 16*C) with column order (kh, kw, c).  -> (B, 2H, 2W, C)."""
    c6 = cols.reshape(B, H, W, 4, 4, C)
    S = lambda kh, kw: c6[:, :, :, kh, kw, :]
    zh = jnp.zeros((B, 1, W, C), cols.dtype)
    zw = jnp.zeros((B, H, 1, C), cols.dtype)
    sh_m = lambda x: jnp.concatenate([zh, x[:, :-1]], axis=1)     # value at m-1
    sh_p = lambda x: jnp.concatenate([x[:, 1:], zh], axis=1)      # value at m+1
    sw_m = lambda x: jnp.concatenate([zw, x[:, :, :-1]], axis=2)  # value at n-1
    sw_p = lambda x: jnp.concatenate([x[:, :, 1:], zw], axis=2)   # value at n+1
    p00 = S(1, 1) + sh_m(S(3, 1)) + sw_m(S(1, 3)) + sh_m(sw_m(S(3, 3)))
    p01 = S(1, 2) + sw_p(S(1, 0)) + sh_m(S(3, 2)) + sh_m(sw_p(S(3, 0)))
    p10 = S(2, 1) + sh_p(S(0, 1)) + sw_m(S(2, 3)) + sh_p(sw_m(S(0, 3)))
    p11 = S(2, 2) + sh_p(sw_p(S(0, 0))) + sw_p(S(2, 0)) + sh_p(S(0, 2))
    row0 = jnp.stack([p00, p01], axis=3)      # (B,H,W,2,C)
    row1 = jnp.stack([p10, p11], axis=3)
    ph = jnp.stack([row0, row1], axis=2)      # (B,H,2,W,2,C)
    return ph.reshape(B, 2 * H, 2 * W, C)


def conv_branch(seed_cols, ws, bns, head_w, B):
    """Gbgc/Gfgc 3-layer stack + padded image head, channels-last.
       Returns the (B,32,32,8) pre-activation head output and the (B*256, 64)
       post-BN/ReLU feature rows of the last Gxgc layer (the `prevc` carry)."""
    assert len(ws) == 3 and len(bns) == 3
    C1 = ws[0].shape[1] // 16
    rows = seed_cols.reshape(B * 16, C1)                     # 4x4, rows (b,h,w)
    cols = convt_mid(rows, bns[0], ws[1])                    # 4x4 -> 8x8
    C2 = ws[1].shape[1] // 16
    rows = fold_stride2_pad1(cols, B, 4, 4, C2).reshape(B * 64, C2)
    cols = convt_mid(rows, bns[1], ws[2])                    # 8x8 -> 16x16
    C3 = ws[2].shape[1] // 16
    rows = fold_stride2_pad1(cols, B, 8, 8, C3).reshape(B * 256, C3)
    cols, act_rows = convt_head(rows, bns[2], head_w)        # 16x16 -> 32x32
    head = fold_stride2_pad1(cols, B, 16, 16, 8)
    return head, act_rows


def clampT(T):
    x_s = jnp.clip(T[:, 0], MAXOBJSCALE, 2 * MAXOBJSCALE)
    x_r = jnp.clip(T[:, 1], -ROT, ROT)
    x_t = jnp.clip(T[:, 2], -1.0, 1.0)
    y_r = jnp.clip(T[:, 3], -ROT, ROT)
    y_s = jnp.clip(T[:, 4], MAXOBJSCALE, 2 * MAXOBJSCALE)
    y_t = jnp.clip(T[:, 5], -1.0, 1.0)
    return jnp.stack([x_s, x_r, x_t, y_r, y_s, y_t], axis=1)


def affine_grid(theta, H, W):
    """torch.nn.functional.affine_grid(theta, (B, C, H, W), align_corners=False)."""
    xs = (2.0 * jnp.arange(W, dtype=jnp.float32) + 1.0) / W - 1.0
    ys = (2.0 * jnp.arange(H, dtype=jnp.float32) + 1.0) / H - 1.0
    X, Y = jnp.meshgrid(xs, ys)
    base = jnp.stack([X, Y, jnp.ones_like(X)], axis=-1)      # (H, W, 3)
    return jnp.einsum('hwk,bnk->bhwn', base, theta)          # (B, H, W, 2)


def stnm_nhwc(canvas, fgi, fgm, grid):
    """STNM: 4-tap bilinear warp (zero padding, align_corners=False) of the fg
       image+mask, composited onto the canvas.  NHWC, one fused gather."""
    B, H, W, C = canvas.shape
    HW = H * W
    x = grid[..., 0].reshape(B, HW)
    y = grid[..., 1].reshape(B, HW)
    ix = ((x + 1.0) * W - 1.0) * 0.5
    iy = ((y + 1.0) * H - 1.0) * 0.5
    x0 = jnp.floor(ix)
    y0 = jnp.floor(iy)
    x1 = x0 + 1.0
    y1 = y0 + 1.0
    wx1 = ix - x0
    wx0 = 1.0 - wx1
    wy1 = iy - y0
    wy0 = 1.0 - wy1

    def tap(xc, yc, w):
        valid = (xc >= 0) & (xc <= W - 1) & (yc >= 0) & (yc <= H - 1)
        xi = jnp.clip(xc, 0, W - 1).astype(jnp.int32)
        yi = jnp.clip(yc, 0, H - 1).astype(jnp.int32)
        return yi * W + xi, w * valid.astype(jnp.float32)

    i00, w00 = tap(x0, y0, wx0 * wy0)
    i10, w10 = tap(x1, y0, wx1 * wy0)
    i01, w01 = tap(x0, y1, wx0 * wy1)
    i11, w11 = tap(x1, y1, wx1 * wy1)
    idx = jnp.concatenate([i00, i10, i01, i11], axis=1)       # (B, 4*HW)
    wts = jnp.stack([w00, w10, w01, w11], axis=1)             # (B, 4, HW)

    fg_flat = jnp.concatenate([fgi, fgm], axis=-1).reshape(B, HW, C + 1)
    gathered = jnp.take_along_axis(
        fg_flat, jnp.broadcast_to(idx[:, :, None], (B, 4 * HW, C + 1)), axis=1)
    gathered = gathered.reshape(B, 4, HW, C + 1)
    warped = jnp.sum(wts[..., None] * gathered, axis=1)       # (B, HW, C+1)
    m = warped[..., C:C + 1]
    out = m * warped[..., :C] + (1.0 - m) * canvas.reshape(B, HW, C)
    return out.reshape(B, H, W, C)


# ----------------------------- parameters ------------------------------------
def _gbg_arch():
    layers = [(NZ, 4 * NGF)]
    size_map, d_in, d_out = 4, 4 * NGF, 2 * NGF
    while size_map < NSIZE / 2:
        layers.append((d_in, d_out))
        d_in, d_out = d_out, max(d_out // 2, 64)
        size_map *= 2
    return layers, d_in


def _gfg_arch():
    layers = [(NZ, 8 * NGF)]
    size_map, d_in, d_out = 4, 8 * NGF, 4 * NGF
    while size_map < NSIZE / 2:
        layers.append((d_in, d_out))
        d_in, d_out = d_out, max(d_out // 2, 64)
        size_map *= 2
    return layers, d_in


def init_params(key):
    keys = list(jax.random.split(key, 32))
    kit = iter(keys)

    def nrm(shape, scale=0.02):
        return scale * jax.random.normal(next(kit), shape, jnp.float32)

    bg_arch, depth_in_bg = _gbg_arch()
    fg_arch, depth_in_fg = _gfg_arch()
    assert depth_in_bg == depth_in_fg, "config must give matching bg/fg depths"

    def convt_layer(cin, cout, bias):
        lyr = {'w': nrm((cin, cout, 4, 4)),
               'gamma': jnp.ones((cout,), jnp.float32),
               'beta': jnp.zeros((cout,), jnp.float32)}
        if bias:
            # kept for parity with the module; a pre-BN per-channel bias is
            # exactly cancelled by train-mode BatchNorm so it is never used.
            lyr['b'] = jnp.zeros((cout,), jnp.float32)
        return lyr

    n_enc_blocks = 0
    nsize_i, nsize_out = NSIZE // 2, 2
    while nsize_i > nsize_out:
        n_enc_blocks += 1
        nsize_i //= 2

    params = {
        'lstm': {'w_ih': nrm((4 * NZ, NZ), 0.1), 'w_hh': nrm((4 * NZ, NZ), 0.1),
                 'b_ih': jnp.zeros((4 * NZ,), jnp.float32),
                 'b_hh': jnp.zeros((4 * NZ,), jnp.float32)},
        'Gbgc': [convt_layer(ci, co, bias=True) for ci, co in bg_arch],
        'Gbgi': {'w': nrm((depth_in_bg, NC, 4, 4)),
                 'b': jnp.zeros((NC,), jnp.float32)},
        'Gfgc': [convt_layer(ci, co, bias=False) for ci, co in fg_arch],
        'Gfgi': {'w': nrm((depth_in_fg, NC, 4, 4))},
        'Gfgm': {'w': nrm((depth_in_fg, 1, 4, 4)),
                 'b': jnp.zeros((1,), jnp.float32)},
        # Gtransform: zero weight, bias[0]=bias[4]=maxobjscale (as in __init__)
        'Gt': {'w': jnp.zeros((6, NZ), jnp.float32),
               'b': jnp.array([MAXOBJSCALE, 0, 0, 0, MAXOBJSCALE, 0], jnp.float32)},
        'encconv': [{'gamma': jnp.ones((depth_in_fg,), jnp.float32),
                     'beta': jnp.zeros((depth_in_fg,), jnp.float32)}
                    for _ in range(n_enc_blocks)],
        'encfc': {'w': nrm((NZ, depth_in_fg * 2 * 2)),
                  'b': jnp.zeros((NZ,), jnp.float32),
                  'gamma': jnp.ones((NZ,), jnp.float32),
                  'beta': jnp.zeros((NZ,), jnp.float32)},
        'nlnet': {'w': nrm((NZ, 2 * NZ)), 'b': jnp.zeros((NZ,), jnp.float32),
                  'gamma': jnp.ones((NZ,), jnp.float32),
                  'beta': jnp.zeros((NZ,), jnp.float32)},
    }
    return params


def _avgpool_mat(B, H, W):
    """nn.AvgPool2d(4, 2, 1) (count_include_pad=True) as a constant matrix
       acting on channels-last pixel rows ordered (b, h, w)."""
    Ho, Wo = H // 2, W // 2
    M = np.zeros((B * Ho * Wo, B * H * W), np.float32)
    for b in range(B):
        for ho in range(Ho):
            for wo in range(Wo):
                r = (b * Ho + ho) * Wo + wo
                for dy in range(4):
                    for dx in range(4):
                        hi = 2 * ho - 1 + dy
                        wi = 2 * wo - 1 + dx
                        if 0 <= hi < H and 0 <= wi < W:
                            M[r, (b * H + hi) * W + wi] += 1.0 / 16.0
    return M


def _prepare(params, B):
    """One-time (per forward) weight reshapes/casts + constant pooling matrices.
       Conv/seed weights are bf16 (MXU); the tiny recurrent dense ops stay f32."""
    nz = NZ
    L, efc, nl, gt = params['lstm'], params['encfc'], params['nlnet'], params['Gt']
    ops = {}
    ops['wlstm'] = jnp.concatenate([L['w_ih'].T, L['w_hh'].T], axis=0)  # (2nz,4nz)
    ops['blstm'] = (L['b_ih'] + L['b_hh']).reshape(1, 4 * nz)
    # encoderfc weight regrouped per spatial position of the (2,2) encoder map
    # (PyTorch flattens NCHW: in-feature index = c*4 + h*2 + w).
    wfc = efc['w']
    ops['wfc'] = jnp.stack([wfc[:, hw::4].T for hw in range(4)], axis=0)
    ops['bfc'] = efc['b'].reshape(1, nz)
    ops['gfc'] = efc['gamma'].reshape(1, nz)
    ops['befc'] = efc['beta'].reshape(1, nz)
    ops['wnlh'] = nl['w'][:, :nz].T
    ops['wnle'] = nl['w'][:, nz:].T
    ops['bnl'] = nl['b'].reshape(1, nz)
    ops['gnl'] = nl['gamma'].reshape(1, nz)
    ops['benl'] = nl['beta'].reshape(1, nz)
    ops['wgt'] = gt['w'].T
    ops['bgt'] = gt['b'].reshape(1, 6)

    # ConvTranspose2d weights -> (Cin, 4*4*Cout) bf16, column order (kh,kw,cout)
    def cw(w):
        return w.transpose(0, 2, 3, 1).reshape(w.shape[0], -1).astype(jnp.bfloat16)

    ops['bg_w'] = [cw(l['w']) for l in params['Gbgc']]
    ops['fg_w'] = [cw(l['w']) for l in params['Gfgc']]
    ops['bg_bn'] = [(l['gamma'].reshape(1, -1), l['beta'].reshape(1, -1))
                    for l in params['Gbgc']]
    ops['fg_bn'] = [(l['gamma'].reshape(1, -1), l['beta'].reshape(1, -1))
                    for l in params['Gfgc']]

    # Heads padded to 8 output channels so the matmul N dim is 128 (lane-dense)
    def head_w(ws):
        w = jnp.concatenate(ws, axis=1)
        w = jnp.pad(w, ((0, 0), (0, 8 - w.shape[1]), (0, 0), (0, 0)))
        return cw(w)

    ops['bgi_w'] = head_w([params['Gbgi']['w']])
    ops['fgh_w'] = head_w([params['Gfgi']['w'], params['Gfgm']['w']])

    ops['enc_bn'] = [(b['gamma'].reshape(1, -1), b['beta'].reshape(1, -1))
                     for b in params['encconv']]

    # Constant AvgPool2d(4,2,1) matrices (16x16 -> 8x8 -> 4x4 -> 2x2)
    ops['p1'] = jnp.asarray(_avgpool_mat(B, 16, 16))
    ops['p2'] = jnp.asarray(_avgpool_mat(B, 8, 8))
    m3 = _avgpool_mat(B, 4, 4)
    ops['p3'] = jnp.asarray(np.stack(
        [m3[[b * 4 + hw for b in range(B)], :] for hw in range(4)], axis=0))
    return ops


# ----------------------------- forward pass ----------------------------------
def netG_forward(params, inp):
    """inp: (ntimestep, batchSize, nz) -- matches input[i] indexing in PyTorch."""
    T, B, nz = inp.shape
    assert nz == NZ and len(params['Gbgc']) == 3 and len(params['Gfgc']) == 3
    assert len(params['encconv']) == 3, "fused encoder kernel expects nsize=32"
    ops = _prepare(params, B)

    hx = jnp.zeros((B, nz), jnp.float32)
    cx = jnp.zeros((B, nz), jnp.float32)
    outputsT, fgimgsT, fgmaskT = [], [], []

    # ----- t = 0: LSTM step + background canvas (hx_view is dead code) -----
    xh0 = jnp.concatenate([inp[0], hx], axis=1)
    hx, cx, bg_seed = lstm_seed_call(xh0, cx, ops['bg_w'][0], ops)
    head, bgc_rows = conv_branch(bg_seed, ops['bg_w'], ops['bg_bn'],
                                 ops['bgi_w'], B)
    canvas = jnp.tanh(head[..., :NC] + params['Gbgi']['b'][None, None, None, :])
    outputsT.append(jnp.transpose(canvas, (0, 3, 1, 2)))

    prevc_rows = bgc_rows
    for t in range(1, T):
        xh = jnp.concatenate([inp[t], hx], axis=1)
        if T > 2:
            hx, cx, input4g, fgt_raw, fg_seed = fg_step_call(xh, cx,
                                                             prevc_rows, ops)
        else:
            # ntimestep <= 2: no encoder/nlnet, input4g is the hidden state.
            # (cold path for this config; tiny dense ops left to XLA)
            hx, cx, _ = lstm_seed_call(xh, cx, ops['bg_w'][0], ops)
            input4g = hx
            fgt_raw = input4g @ params['Gt']['w'].T + params['Gt']['b'][None, :]
            fg_seed = (input4g.astype(jnp.bfloat16)
                       @ ops['fg_w'][0]).astype(jnp.float32)

        fgt = clampT(fgt_raw)
        head, fgc_rows = conv_branch(fg_seed, ops['fg_w'], ops['fg_bn'],
                                     ops['fgh_w'], B)
        fgi = jnp.tanh(head[..., :NC])
        fgm = jax.nn.sigmoid(head[..., NC:NC + 1]
                             + params['Gfgm']['b'][None, None, None, :])
        grid = affine_grid(fgt.reshape(B, 2, 3), NSIZE, NSIZE)
        canvas = stnm_nhwc(canvas, fgi, fgm, grid)
        prevc_rows = fgc_rows

        outputsT.append(jnp.transpose(canvas, (0, 3, 1, 2)))
        fgimgsT.append(jnp.transpose(fgi, (0, 3, 1, 2)))
        fgmaskT.append(jnp.transpose(fgm, (0, 3, 1, 2)))

    return outputsT[-1], outputsT, fgimgsT, fgmaskT


# ----------------------------- main -------------------------------------------
if __name__ == "__main__":
    key = jax.random.PRNGKey(0)
    pkey, xkey = jax.random.split(key)
    params = init_params(pkey)
    inp = jax.random.normal(xkey, (NTIMESTEP, BATCH, NZ), jnp.float32)

    fwd = jax.jit(netG_forward)
    final, outputsT, fgimgsT, fgmaskT = fwd(params, inp)
    jax.block_until_ready(final)

    assert final.shape == (BATCH, NC, NSIZE, NSIZE)
    assert len(outputsT) == NTIMESTEP
    assert len(fgimgsT) == NTIMESTEP - 1 and len(fgmaskT) == NTIMESTEP - 1
    assert fgimgsT[0].shape == (BATCH, NC, NSIZE, NSIZE)
    assert fgmaskT[0].shape == (BATCH, 1, NSIZE, NSIZE)
    assert bool(jnp.all(jnp.isfinite(final)))
    print("KERNEL_OK")
</pallas_src>

<mosaic_0001>
module attributes {stable_mosaic.version = 11 : i64} {
  func.func @_lstm_seed_kernel(%arg0: memref<2x64xf32, #tpu.memory_space<vmem>>, %arg1: memref<2x32xf32, #tpu.memory_space<vmem>>, %arg2: memref<64x128xf32, #tpu.memory_space<vmem>>, %arg3: memref<1x128xf32, #tpu.memory_space<vmem>>, %arg4: memref<32x1024xbf16, #tpu.memory_space<vmem>>, %arg5: memref<2x32xf32, #tpu.memory_space<vmem>>, %arg6: memref<2x32xf32, #tpu.memory_space<vmem>>, %arg7: memref<2x1024xf32, #tpu.memory_space<vmem>>) attributes {dimension_semantics = [], scalar_prefetch = 0 : i64, scratch_operands = 0 : i64, tpu.core_type = #tpu.core_type<tc>} {
    %c0 = arith.constant 0 : index
    %c0_0 = arith.constant 0 : index
    %0 = vector.load %arg0[%c0, %c0_0] : memref<2x64xf32, #tpu.memory_space<vmem>>, vector<2x64xf32>
    %c0_1 = arith.constant 0 : index
    %c0_2 = arith.constant 0 : index
    %1 = vector.load %arg2[%c0_1, %c0_2] : memref<64x128xf32, #tpu.memory_space<vmem>>, vector<64x128xf32>
    %cst = arith.constant dense<0.000000e+00> : vector<2x128xf32>
    %2 = tpu.matmul %0, %1, %cst {dimension_numbers = #tpu.dot_dimension_numbers<[1], [0], [0], [1], [0, 0, 1, 1], [], []>} : vector<2x64xf32>, vector<64x128xf32>, vector<2x128xf32> -> vector<2x128xf32>
    %c0_3 = arith.constant 0 : index
    %c0_4 = arith.constant 0 : index
    %3 = vector.load %arg3[%c0_3, %c0_4] : memref<1x128xf32, #tpu.memory_space<vmem>>, vector<1x128xf32>
    %4 = vector.broadcast %3 : vector<1x128xf32> to vector<2x128xf32>
    %5 = arith.addf %2, %4 : vector<2x128xf32>
    %c0_5 = arith.constant 0 : index
    %c0_6 = arith.constant 0 : index
    %6 = vector.load %arg1[%c0_5, %c0_6] : memref<2x32xf32, #tpu.memory_space<vmem>>, vector<2x32xf32>
    %7 = vector.extract_strided_slice %5 {offsets = [0, 0], sizes = [2, 32], strides = [1, 1]} : vector<2x128xf32> to vector<2x32xf32>
    %8 = arith.negf %7 : vector<2x32xf32>
    %9 = math.exp %8 : vector<2x32xf32>
    %cst_7 = arith.constant 1.000000e+00 : f32
    %10 = vector.broadcast %cst_7 : f32 to vector<2x32xf32>
    %11 = arith.addf %10, %9 : vector<2x32xf32>
    %12 = arith.divf %10, %11 : vector<2x32xf32>
    %13 = vector.extract_strided_slice %5 {offsets = [0, 32], sizes = [2, 32], strides = [1, 1]} : vector<2x128xf32> to vector<2x32xf32>
    %14 = arith.negf %13 : vector<2x32xf32>
    %15 = math.exp %14 : vector<2x32xf32>
    %cst_8 = arith.constant 1.000000e+00 : f32
    %16 = vector.broadcast %cst_8 : f32 to vector<2x32xf32>
    %17 = arith.addf %16, %15 : vector<2x32xf32>
    %18 = arith.divf %16, %17 : vector<2x32xf32>
    %19 = vector.extract_strided_slice %5 {offsets = [0, 64], sizes = [2, 32], strides = [1, 1]} : vector<2x128xf32> to vector<2x32xf32>
    %20 = math.tanh %19 : vector<2x32xf32>
    %21 = vector.extract_strided_slice %5 {offsets = [0, 96], sizes = [2, 32], strides = [1, 1]} : vector<2x128xf32> to vector<2x32xf32>
    %22 = arith.negf %21 : vector<2x32xf32>
    %23 = math.exp %22 : vector<2x32xf32>
    %cst_9 = arith.constant 1.000000e+00 : f32
    %24 = vector.broadcast %cst_9 : f32 to vector<2x32xf32>
    %25 = arith.addf %24, %23 : vector<2x32xf32>
    %26 = arith.divf %24, %25 : vector<2x32xf32>
    %27 = arith.mulf %18, %6 : vector<2x32xf32>
    %28 = arith.mulf %12, %20 : vector<2x32xf32>
    %29 = arith.addf %27, %28 : vector<2x32xf32>
    %30 = math.tanh %29 : vector<2x32xf32>
    %31 = arith.mulf %26, %30 : vector<2x32xf32>
    %c0_10 = arith.constant 0 : index
    %c0_11 = arith.constant 0 : index
    %32 = vector.load %arg5[%c0_10, %c0_11] : memref<2x32xf32, #tpu.memory_space<vmem>>, vector<2x32xf32>
    tpu.vector_store %arg5[%c0_10, %c0_11], %31 {strides = array<i32>} : memref<2x32xf32, #tpu.memory_space<vmem>>, vector<2x32xf32>,
    %c0_12 = arith.constant 0 : index
    %c0_13 = arith.constant 0 : index
    %33 = vector.load %arg6[%c0_12, %c0_13] : memref<2x32xf32, #tpu.memory_space<vmem>>, vector<2x32xf32>
    tpu.vector_store %arg6[%c0_12, %c0_13], %29 {strides = array<i32>} : memref<2x32xf32, #tpu.memory_space<vmem>>, vector<2x32xf32>,
    %c0_14 = arith.constant 0 : index
    %c0_15 = arith.constant 0 : index
    %34 = vector.load %arg0[%c0_14, %c0_15] : memref<2x64xf32, #tpu.memory_space<vmem>>, vector<2x64xf32>
    %35 = vector.extract_strided_slice %34 {offsets = [0, 0], sizes = [2, 32], strides = [1, 1]} : vector<2x64xf32> to vector<2x32xf32>
    %36 = arith.truncf %35 : vector<2x32xf32> to vector<2x32xbf16>
    %c0_16 = arith.constant 0 : index
    %c0_17 = arith.constant 0 : index
    %37 = vector.load %arg4[%c0_16, %c0_17] : memref<32x1024xbf16, #tpu.memory_space<vmem>>, vector<32x1024xbf16>
    %cst_18 = arith.constant dense<0.000000e+00> : vector<2x1024xf32>
    %38 = tpu.matmul %36, %37, %cst_18 {dimension_numbers = #tpu.dot_dimension_numbers<[1], [0], [0], [1], [0, 0, 1, 1], [], []>} : vector<2x32xbf16>, vector<32x1024xbf16>, vector<2x1024xf32> -> vector<2x1024xf32>
    %c0_19 = arith.constant 0 : index
    %c0_20 = arith.constant 0 : index
    %39 = vector.load %arg7[%c0_19, %c0_20] : memref<2x1024xf32, #tpu.memory_space<vmem>>, vector<2x1024xf32>
    tpu.vector_store %arg7[%c0_19, %c0_20], %38 {strides = array<i32>} : memref<2x1024xf32, #tpu.memory_space<vmem>>, vector<2x1024xf32>,
    return
  }
}

module attributes {stable_mosaic.version = 11 : i64} {
  func.func @_convt_mid_kernel(%arg0: memref<32x64xf32, #tpu.memory_space<vmem>>, %arg1: memref<1x64xf32, #tpu.memory_space<vmem>>, %arg2: memref<1x64xf32, #tpu.memory_space<vmem>>, %arg3: memref<64x512xbf16, #tpu.memory_space<vmem>>, %arg4: memref<32x512xf32, #tpu.memory_space<vmem>>) attributes {dimension_semantics = [], scalar_prefetch = 0 : i64, scratch_operands = 0 : i64, tpu.core_type = #tpu.core_type<tc>} {
    %c0 = arith.constant 0 : index
    %c0_0 = arith.constant 0 : index
    %0 = vector.load %arg0[%c0, %c0_0] : memref<32x64xf32, #tpu.memory_space<vmem>>, vector<32x64xf32>
    %c0_1 = arith.constant 0 : index
    %c0_2 = arith.constant 0 : index
    %1 = vector.load %arg1[%c0_1, %c0_2] : memref<1x64xf32, #tpu.memory_space<vmem>>, vector<1x64xf32>
    %c0_3 = arith.constant 0 : index
    %c0_4 = arith.constant 0 : index
    %2 = vector.load %arg2[%c0_3, %c0_4] : memref<1x64xf32, #tpu.memory_space<vmem>>, vector<1x64xf32>
    %cst = arith.constant dense<0.000000e+00> : vector<64xf32>
    %3 = vector.multi_reduction <add>, %0, %cst [0] : vector<32x64xf32> to vector<64xf32>
    %4 = vector.shape_cast %3 : vector<64xf32> to vector<1x64xf32>
    %cst_5 = arith.constant 3.200000e+01 : f32
    %5 = vector.broadcast %cst_5 : f32 to vector<1x64xf32>
    %6 = arith.divf %4, %5 : vector<1x64xf32>
    %7 = vector.broadcast %6 : vector<1x64xf32> to vector<32x64xf32>
    %8 = arith.subf %0, %7 : vector<32x64xf32>
    %9 = arith.mulf %8, %8 : vector<32x64xf32>
    %cst_6 = arith.constant dense<0.000000e+00> : vector<64xf32>
    %10 = vector.multi_reduction <add>, %9, %cst_6 [0] : vector<32x64xf32> to vector<64xf32>
    %11 = vector.shape_cast %10 : vector<64xf32> to vector<1x64xf32>
    %cst_7 = arith.constant 3.200000e+01 : f32
    %12 = vector.broadcast %cst_7 : f32 to vector<1x64xf32>
    %13 = arith.divf %11, %12 : vector<1x64xf32>
    %14 = vector.broadcast %6 : vector<1x64xf32> to vector<32x64xf32>
    %15 = arith.subf %0, %14 : vector<32x64xf32>
    %cst_8 = arith.constant 9.99999974E-6 : f32
    %16 = vector.broadcast %cst_8 : f32 to vector<1x64xf32>
    %17 = arith.addf %13, %16 : vector<1x64xf32>
    %18 = math.rsqrt %17 : vector<1x64xf32>
    %19 = vector.broadcast %18 : vector<1x64xf32> to vector<32x64xf32>
    %20 = arith.mulf %15, %19 : vector<32x64xf32>
    %21 = vector.broadcast %1 : vector<1x64xf32> to vector<32x64xf32>
    %22 = arith.mulf %20, %21 : vector<32x64xf32>
    %23 = vector.broadcast %2 : vector<1x64xf32> to vector<32x64xf32>
    %24 = arith.addf %22, %23 : vector<32x64xf32>
    %cst_9 = arith.constant 0.000000e+00 : f32
    %25 = vector.broadcast %cst_9 : f32 to vector<32x64xf32>
    %26 = arith.maximumf %24, %25 : vector<32x64xf32>
    %27 = arith.truncf %26 : vector<32x64xf32> to vector<32x64xbf16>
    %c0_10 = arith.constant 0 : index
    %c0_11 = arith.constant 0 : index
    %28 = vector.load %arg3[%c0_10, %c0_11] : memref<64x512xbf16, #tpu.memory_space<vmem>>, vector<64x512xbf16>
    %cst_12 = arith.constant dense<0.000000e+00> : vector<32x512xf32>
    %29 = tpu.matmul %27, %28, %cst_12 {dimension_numbers = #tpu.dot_dimension_numbers<[1], [0], [0], [1], [0, 0, 1, 1], [], []>} : vector<32x64xbf16>, vector<64x512xbf16>, vector<32x512xf32> -> vector<32x512xf32>
    %c0_13 = arith.constant 0 : index
    %c0_14 = arith.constant 0 : index
    %30 = vector.load %arg4[%c0_13, %c0_14] : memref<32x512xf32, #tpu.memory_space<vmem>>, vector<32x512xf32>
    tpu.vector_store %arg4[%c0_13, %c0_14], %29 {strides = array<i32>} : memref<32x512xf32, #tpu.memory_space<vmem>>, vector<32x512xf32>,
    return
  }
}

module attributes {stable_mosaic.version = 11 : i64} {
  func.func @_convt_mid_kernel(%arg0: memref<128x32xf32, #tpu.memory_space<vmem>>, %arg1: memref<1x32xf32, #tpu.memory_space<vmem>>, %arg2: memref<1x32xf32, #tpu.memory_space<vmem>>, %arg3: memref<32x1024xbf16, #tpu.memory_space<vmem>>, %arg4: memref<128x1024xf32, #tpu.memory_space<vmem>>) attributes {dimension_semantics = [], scalar_prefetch = 0 : i64, scratch_operands = 0 : i64, tpu.core_type = #tpu.core_type<tc>} {
    %c0 = arith.constant 0 : index
    %c0_0 = arith.constant 0 : index
    %0 = vector.load %arg0[%c0, %c0_0] : memref<128x32xf32, #tpu.memory_space<vmem>>, vector<128x32xf32>
    %c0_1 = arith.constant 0 : index
    %c0_2 = arith.constant 0 : index
    %1 = vector.load %arg1[%c0_1, %c0_2] : memref<1x32xf32, #tpu.memory_space<vmem>>, vector<1x32xf32>
    %c0_3 = arith.constant 0 : index
    %c0_4 = arith.constant 0 : index
    %2 = vector.load %arg2[%c0_3, %c0_4] : memref<1x32xf32, #tpu.memory_space<vmem>>, vector<1x32xf32>
    %cst = arith.constant dense<0.000000e+00> : vector<32xf32>
    %3 = vector.multi_reduction <add>, %0, %cst [0] : vector<128x32xf32> to vector<32xf32>
    %4 = vector.shape_cast %3 : vector<32xf32> to vector<1x32xf32>
    %cst_5 = arith.constant 1.280000e+02 : f32
    %5 = vector.broadcast %cst_5 : f32 to vector<1x32xf32>
    %6 = arith.divf %4, %5 : vector<1x32xf32>
    %7 = vector.broadcast %6 : vector<1x32xf32> to vector<128x32xf32>
    %8 = arith.subf %0, %7 : vector<128x32xf32>
    %9 = arith.mulf %8, %8 : vector<128x32xf32>
    %cst_6 = arith.constant dense<0.000000e+00> : vector<32xf32>
    %10 = vector.multi_reduction <add>, %9, %cst_6 [0] : vector<128x32xf32> to vector<32xf32>
    %11 = vector.shape_cast %10 : vector<32xf32> to vector<1x32xf32>
    %cst_7 = arith.constant 1.280000e+02 : f32
    %12 = vector.broadcast %cst_7 : f32 to vector<1x32xf32>
    %13 = arith.divf %11, %12 : vector<1x32xf32>
    %14 = vector.broadcast %6 : vector<1x32xf32> to vector<128x32xf32>
    %15 = arith.subf %0, %14 : vector<128x32xf32>
    %cst_8 = arith.constant 9.99999974E-6 : f32
    %16 = vector.broadcast %cst_8 : f32 to vector<1x32xf32>
    %17 = arith.addf %13, %16 : vector<1x32xf32>
    %18 = math.rsqrt %17 : vector<1x32xf32>
    %19 = vector.broadcast %18 : vector<1x32xf32> to vector<128x32xf32>
    %20 = arith.mulf %15, %19 : vector<128x32xf32>
    %21 = vector.broadcast %1 : vector<1x32xf32> to vector<128x32xf32>
    %22 = arith.mulf %20, %21 : vector<128x32xf32>
    %23 = vector.broadcast %2 : vector<1x32xf32> to vector<128x32xf32>
    %24 = arith.addf %22, %23 : vector<128x32xf32>
    %cst_9 = arith.constant 0.000000e+00 : f32
    %25 = vector.broadcast %cst_9 : f32 to vector<128x32xf32>
    %26 = arith.maximumf %24, %25 : vector<128x32xf32>
    %27 = arith.truncf %26 : vector<128x32xf32> to vector<128x32xbf16>
    %c0_10 = arith.constant 0 : index
    %c0_11 = arith.constant 0 : index
    %28 = vector.load %arg3[%c0_10, %c0_11] : memref<32x1024xbf16, #tpu.memory_space<vmem>>, vector<32x1024xbf16>
    %cst_12 = arith.constant dense<0.000000e+00> : vector<128x1024xf32>
    %29 = tpu.matmul %27, %28, %cst_12 {dimension_numbers = #tpu.dot_dimension_numbers<[1], [0], [0], [1], [0, 0, 1, 1], [], []>} : vector<128x32xbf16>, vector<32x1024xbf16>, vector<128x1024xf32> -> vector<128x1024xf32>
    %c0_13 = arith.constant 0 : index
    %c0_14 = arith.constant 0 : index
    %30 = vector.load %arg4[%c0_13, %c0_14] : memref<128x1024xf32, #tpu.memory_space<vmem>>, vector<128x1024xf32>
    tpu.vector_store %arg4[%c0_13, %c0_14], %29 {strides = array<i32>} : memref<128x1024xf32, #tpu.memory_space<vmem>>, vector<128x1024xf32>,
    return
  }
}

module attributes {stable_mosaic.version = 11 : i64} {
  func.func @_convt_head_kernel(%arg0: memref<512x64xf32, #tpu.memory_space<vmem>>, %arg1: memref<1x64xf32, #tpu.memory_space<vmem>>, %arg2: memref<1x64xf32, #tpu.memory_space<vmem>>, %arg3: memref<64x128xbf16, #tpu.memory_space<vmem>>, %arg4: memref<512x128xf32, #tpu.memory_space<vmem>>, %arg5: memref<512x64xf32, #tpu.memory_space<vmem>>) attributes {dimension_semantics = [], scalar_prefetch = 0 : i64, scratch_operands = 0 : i64, tpu.core_type = #tpu.core_type<tc>} {
    %c0 = arith.constant 0 : index
    %c0_0 = arith.constant 0 : index
    %0 = vector.load %arg0[%c0, %c0_0] : memref<512x64xf32, #tpu.memory_space<vmem>>, vector<512x64xf32>
    %c0_1 = arith.constant 0 : index
    %c0_2 = arith.constant 0 : index
    %1 = vector.load %arg1[%c0_1, %c0_2] : memref<1x64xf32, #tpu.memory_space<vmem>>, vector<1x64xf32>
    %c0_3 = arith.constant 0 : index
    %c0_4 = arith.constant 0 : index
    %2 = vector.load %arg2[%c0_3, %c0_4] : memref<1x64xf32, #tpu.memory_space<vmem>>, vector<1x64xf32>
    %cst = arith.constant dense<0.000000e+00> : vector<64xf32>
    %3 = vector.multi_reduction <add>, %0, %cst [0] : vector<512x64xf32> to vector<64xf32>
    %4 = vector.shape_cast %3 : vector<64xf32> to vector<1x64xf32>
    %cst_5 = arith.constant 5.120000e+02 : f32
    %5 = vector.broadcast %cst_5 : f32 to vector<1x64xf32>
    %6 = arith.divf %4, %5 : vector<1x64xf32>
    %7 = vector.broadcast %6 : vector<1x64xf32> to vector<512x64xf32>
    %8 = arith.subf %0, %7 : vector<512x64xf32>
    %9 = arith.mulf %8, %8 : vector<512x64xf32>
    %cst_6 = arith.constant dense<0.000000e+00> : vector<64xf32>
    %10 = vector.multi_reduction <add>, %9, %cst_6 [0] : vector<512x64xf32> to vector<64xf32>
    %11 = vector.shape_cast %10 : vector<64xf32> to vector<1x64xf32>
    %cst_7 = arith.constant 5.120000e+02 : f32
    %12 = vector.broadcast %cst_7 : f32 to vector<1x64xf32>
    %13 = arith.divf %11, %12 : vector<1x64xf32>
    %14 = vector.broadcast %6 : vector<1x64xf32> to vector<512x64xf32>
    %15 = arith.subf %0, %14 : vector<512x64xf32>
    %cst_8 = arith.constant 9.99999974E-6 : f32
    %16 = vector.broadcast %cst_8 : f32 to vector<1x64xf32>
    %17 = arith.addf %13, %16 : vector<1x64xf32>
    %18 = math.rsqrt %17 : vector<1x64xf32>
    %19 = vector.broadcast %18 : vector<1x64xf32> to vector<512x64xf32>
    %20 = arith.mulf %15, %19 : vector<512x64xf32>
    %21 = vector.broadcast %1 : vector<1x64xf32> to vector<512x64xf32>
    %22 = arith.mulf %20, %21 : vector<512x64xf32>
    %23 = vector.broadcast %2 : vector<1x64xf32> to vector<512x64xf32>
    %24 = arith.addf %22, %23 : vector<512x64xf32>
    %cst_9 = arith.constant 0.000000e+00 : f32
    %25 = vector.broadcast %cst_9 : f32 to vector<512x64xf32>
    %26 = arith.maximumf %24, %25 : vector<512x64xf32>
    %c0_10 = arith.constant 0 : index
    %c0_11 = arith.constant 0 : index
    %27 = vector.load %arg5[%c0_10, %c0_11] : memref<512x64xf32, #tpu.memory_space<vmem>>, vector<512x64xf32>
    tpu.vector_store %arg5[%c0_10, %c0_11], %26 {strides = array<i32>} : memref<512x64xf32, #tpu.memory_space<vmem>>, vector<512x64xf32>,
    %28 = arith.truncf %26 : vector<512x64xf32> to vector<512x64xbf16>
    %c0_12 = arith.constant 0 : index
    %c0_13 = arith.constant 0 : index
    %29 = vector.load %arg3[%c0_12, %c0_13] : memref<64x128xbf16, #tpu.memory_space<vmem>>, vector<64x128xbf16>
    %cst_14 = arith.constant dense<0.000000e+00> : vector<512x128xf32>
    %30 = tpu.matmul %28, %29, %cst_14 {dimension_numbers = #tpu.dot_dimension_numbers<[1], [0], [0], [1], [0, 0, 1, 1], [], []>} : vector<512x64xbf16>, vector<64x128xbf16>, vector<512x128xf32> -> vector<512x128xf32>
    %c0_15 = arith.constant 0 : index
    %c0_16 = arith.constant 0 : index
    %31 = vector.load %arg4[%c0_15, %c0_16] : memref<512x128xf32, #tpu.memory_space<vmem>>, vector<512x128xf32>
    tpu.vector_store %arg4[%c0_15, %c0_16], %30 {strides = array<i32>} : memref<512x128xf32, #tpu.memory_space<vmem>>, vector<512x128xf32>,
    return
  }
}

module attributes {stable_mosaic.version = 11 : i64} {
  func.func @_fg_step_kernel(%arg0: memref<2x64xf32, #tpu.memory_space<vmem>>, %arg1: memref<2x32xf32, #tpu.memory_space<vmem>>, %arg2: memref<512x64xf32, #tpu.memory_space<vmem>>, %arg3: memref<128x512xf32, #tpu.memory_space<vmem>>, %arg4: memref<32x128xf32, #tpu.memory_space<vmem>>, %arg5: memref<4x2x32xf32, #tpu.memory_space<vmem>>, %arg6: memref<1x64xf32, #tpu.memory_space<vmem>>, %arg7: memref<1x64xf32, #tpu.memory_space<vmem>>, %arg8: memref<1x64xf32, #tpu.memory_space<vmem>>, %arg9: memref<1x64xf32, #tpu.memory_space<vmem>>, %arg10: memref<1x64xf32, #tpu.memory_space<vmem>>, %arg11: memref<1x64xf32, #tpu.memory_space<vmem>>, %arg12: memref<4x64x32xf32, #tpu.memory_space<vmem>>, %arg13: memref<1x32xf32, #tpu.memory_space<vmem>>, %arg14: memref<1x32xf32, #tpu.memory_space<vmem>>, %arg15: memref<1x32xf32, #tpu.memory_space<vmem>>, %arg16: memref<64x128xf32, #tpu.memory_space<vmem>>, %arg17: memref<1x128xf32, #tpu.memory_space<vmem>>, %arg18: memref<32x32xf32, #tpu.memory_space<vmem>>, %arg19: memref<32x32xf32, #tpu.memory_space<vmem>>, %arg20: memref<1x32xf32, #tpu.memory_space<vmem>>, %arg21: memref<1x32xf32, #tpu.memory_space<vmem>>, %arg22: memref<1x32xf32, #tpu.memory_space<vmem>>, %arg23: memref<32x6xf32, #tpu.memory_space<vmem>>, %arg24: memref<1x6xf32, #tpu.memory_space<vmem>>, %arg25: memref<32x2048xbf16, #tpu.memory_space<vmem>>, %arg26: memref<2x32xf32, #tpu.memory_space<vmem>>, %arg27: memref<2x32xf32, #tpu.memory_space<vmem>>, %arg28: memref<2x32xf32, #tpu.memory_space<vmem>>, %arg29: memref<2x6xf32, #tpu.memory_space<vmem>>, %arg30: memref<2x2048xf32, #tpu.memory_space<vmem>>) attributes {dimension_semantics = [], scalar_prefetch = 0 : i64, scratch_operands = 0 : i64, tpu.core_type = #tpu.core_type<tc>} {
    %c0 = arith.constant 0 : index
    %c0_0 = arith.constant 0 : index
    %0 = vector.load %arg0[%c0, %c0_0] : memref<2x64xf32, #tpu.memory_space<vmem>>, vector<2x64xf32>
    %c0_1 = arith.constant 0 : index
    %c0_2 = arith.constant 0 : index
    %1 = vector.load %arg16[%c0_1, %c0_2] : memref<64x128xf32, #tpu.memory_space<vmem>>, vector<64x128xf32>
    %cst = arith.constant dense<0.000000e+00> : vector<2x128xf32>
    %2 = tpu.matmul %0, %1, %cst {dimension_numbers = #tpu.dot_dimension_numbers<[1], [0], [0], [1], [0, 0, 1, 1], [], []>} : vector<2x64xf32>, vector<64x128xf32>, vector<2x128xf32> -> vector<2x128xf32>
    %c0_3 = arith.constant 0 : index
    %c0_4 = arith.constant 0 : index
    %3 = vector.load %arg17[%c0_3, %c0_4] : memref<1x128xf32, #tpu.memory_space<vmem>>, vector<1x128xf32>
    %4 = vector.broadcast %3 : vector<1x128xf32> to vector<2x128xf32>
    %5 = arith.addf %2, %4 : vector<2x128xf32>
    %c0_5 = arith.constant 0 : index
    %c0_6 = arith.constant 0 : index
    %6 = vector.load %arg1[%c0_5, %c0_6] : memref<2x32xf32, #tpu.memory_space<vmem>>, vector<2x32xf32>
    %7 = vector.extract_strided_slice %5 {offsets = [0, 0], sizes = [2, 32], strides = [1, 1]} : vector<2x128xf32> to vector<2x32xf32>
    %8 = arith.negf %7 : vector<2x32xf32>
    %9 = math.exp %8 : vector<2x32xf32>
    %cst_7 = arith.constant 1.000000e+00 : f32
    %10 = vector.broadcast %cst_7 : f32 to vector<2x32xf32>
    %11 = arith.addf %10, %9 : vector<2x32xf32>
    %12 = arith.divf %10, %11 : vector<2x32xf32>
    %13 = vector.extract_strided_slice %5 {offsets = [0, 32], sizes = [2, 32], strides = [1, 1]} : vector<2x128xf32> to vector<2x32xf32>
    %14 = arith.negf %13 : vector<2x32xf32>
    %15 = math.exp %14 : vector<2x32xf32>
    %cst_8 = arith.constant 1.000000e+00 : f32
    %16 = vector.broadcast %cst_8 : f32 to vector<2x32xf32>
    %17 = arith.addf %16, %15 : vector<2x32xf32>
    %18 = arith.divf %16, %17 : vector<2x32xf32>
    %19 = vector.extract_strided_slice %5 {offsets = [0, 64], sizes = [2, 32], strides = [1, 1]} : vector<2x128xf32> to vector<2x32xf32>
    %20 = math.tanh %19 : vector<2x32xf32>
    %21 = vector.extract_strided_slice %5 {offsets = [0, 96], sizes = [2, 32], strides = [1, 1]} : vector<2x128xf32> to vector<2x32xf32>
    %22 = arith.negf %21 : vector<2x32xf32>
    %23 = math.exp %22 : vector<2x32xf32>
    %cst_9 = arith.constant 1.000000e+00 : f32
    %24 = vector.broadcast %cst_9 : f32 to vector<2x32xf32>
    %25 = arith.addf %24, %23 : vector<2x32xf32>
    %26 = arith.divf %24, %25 : vector<2x32xf32>
    %27 = arith.mulf %18, %6 : vector<2x32xf32>
    %28 = arith.mulf %12, %20 : vector<2x32xf32>
    %29 = arith.addf %27, %28 : vector<2x32xf32>
    %30 = math.tanh %29 : vector<2x32xf32>
    %31 = arith.mulf %26, %30 : vector<2x32xf32>
    %c0_10 = arith.constant 0 : index
    %c0_11 = arith.constant 0 : index
    %32 = vector.load %arg26[%c0_10, %c0_11] : memref<2x32xf32, #tpu.memory_space<vmem>>, vector<2x32xf32>
    tpu.vector_store %arg26[%c0_10, %c0_11], %31 {strides = array<i32>} : memref<2x32xf32, #tpu.memory_space<vmem>>, vector<2x32xf32>,
    %c0_12 = arith.constant 0 : index
    %c0_13 = arith.constant 0 : index
    %33 = vector.load %arg27[%c0_12, %c0_13] : memref<2x32xf32, #tpu.memory_space<vmem>>, vector<2x32xf32>
    tpu.vector_store %arg27[%c0_12, %c0_13], %29 {strides = array<i32>} : memref<2x32xf32, #tpu.memory_space<vmem>>, vector<2x32xf32>,
    %c0_14 = arith.constant 0 : index
    %c0_15 = arith.constant 0 : index
    %34 = vector.load %arg3[%c0_14, %c0_15] : memref<128x512xf32, #tpu.memory_space<vmem>>, vector<128x512xf32>
    %c0_16 = arith.constant 0 : index
    %c0_17 = arith.constant 0 : index
    %35 = vector.load %arg2[%c0_16, %c0_17] : memref<512x64xf32, #tpu.memory_space<vmem>>, vector<512x64xf32>
    %cst_18 = arith.constant dense<0.000000e+00> : vector<128x64xf32>
    %36 = tpu.matmul %34, %35, %cst_18 {dimension_numbers = #tpu.dot_dimension_numbers<[1], [0], [0], [1], [0, 0, 1, 1], [], []>} : vector<128x512xf32>, vector<512x64xf32>, vector<128x64xf32> -> vector<128x64xf32>
    %c0_19 = arith.constant 0 : index
    %c0_20 = arith.constant 0 : index
    %37 = vector.load %arg6[%c0_19, %c0_20] : memref<1x64xf32, #tpu.memory_space<vmem>>, vector<1x64xf32>
    %c0_21 = arith.constant 0 : index
    %c0_22 = arith.constant 0 : index
    %38 = vector.load %arg7[%c0_21, %c0_22] : memref<1x64xf32, #tpu.memory_space<vmem>>, vector<1x64xf32>
    %cst_23 = arith.constant dense<0.000000e+00> : vector<64xf32>
    %39 = vector.multi_reduction <add>, %36, %cst_23 [0] : vector<128x64xf32> to vector<64xf32>
    %40 = vector.shape_cast %39 : vector<64xf32> to vector<1x64xf32>
    %cst_24 = arith.constant 1.280000e+02 : f32
    %41 = vector.broadcast %cst_24 : f32 to vector<1x64xf32>
    %42 = arith.divf %40, %41 : vector<1x64xf32>
    %43 = vector.broadcast %42 : vector<1x64xf32> to vector<128x64xf32>
    %44 = arith.subf %36, %43 : vector<128x64xf32>
    %45 = arith.mulf %44, %44 : vector<128x64xf32>
    %cst_25 = arith.constant dense<0.000000e+00> : vector<64xf32>
    %46 = vector.multi_reduction <add>, %45, %cst_25 [0] : vector<128x64xf32> to vector<64xf32>
    %47 = vector.shape_cast %46 : vector<64xf32> to vector<1x64xf32>
    %cst_26 = arith.constant 1.280000e+02 : f32
    %48 = vector.broadcast %cst_26 : f32 to vector<1x64xf32>
    %49 = arith.divf %47, %48 : vector<1x64xf32>
    %50 = vector.broadcast %42 : vector<1x64xf32> to vector<128x64xf32>
    %51 = arith.subf %36, %50 : vector<128x64xf32>
    %cst_27 = arith.constant 9.99999974E-6 : f32
    %52 = vector.broadcast %cst_27 : f32 to vector<1x64xf32>
    %53 = arith.addf %49, %52 : vector<1x64xf32>
    %54 = math.rsqrt %53 : vector<1x64xf32>
    %55 = vector.broadcast %54 : vector<1x64xf32> to vector<128x64xf32>
    %56 = arith.mulf %51, %55 : vector<128x64xf32>
    %57 = vector.broadcast %37 : vector<1x64xf32> to vector<128x64xf32>
    %58 = arith.mulf %56, %57 : vector<128x64xf32>
    %59 = vector.broadcast %38 : vector<1x64xf32> to vector<128x64xf32>
    %60 = arith.addf %58, %59 : vector<128x64xf32>
    %cst_28 = arith.constant 0.000000e+00 : f32
    %61 = vector.broadcast %cst_28 : f32 to vector<128x64xf32>
    %62 = arith.cmpf ogt, %60, %61 : vector<128x64xf32>
    %cst_29 = arith.constant 2.000000e-01 : f32
    %63 = vector.broadcast %cst_29 : f32 to vector<128x64xf32>
    %64 = arith.mulf %63, %60 : vector<128x64xf32>
    %65 = arith.select %62, %60, %64 : vector<128x64xi1>, vector<128x64xf32>
    %c0_30 = arith.constant 0 : index
    %c0_31 = arith.constant 0 : index
    %66 = vector.load %arg4[%c0_30, %c0_31] : memref<32x128xf32, #tpu.memory_space<vmem>>, vector<32x128xf32>
    %cst_32 = arith.constant dense<0.000000e+00> : vector<32x64xf32>
    %67 = tpu.matmul %66, %65, %cst_32 {dimension_numbers = #tpu.dot_dimension_numbers<[1], [0], [0], [1], [0, 0, 1, 1], [], []>} : vector<32x128xf32>, vector<128x64xf32>, vector<32x64xf32> -> vector<32x64xf32>
    %c0_33 = arith.constant 0 : index
    %c0_34 = arith.constant 0 : index
    %68 = vector.load %arg8[%c0_33, %c0_34] : memref<1x64xf32, #tpu.memory_space<vmem>>, vector<1x64xf32>
    %c0_35 = arith.constant 0 : index
    %c0_36 = arith.constant 0 : index
    %69 = vector.load %arg9[%c0_35, %c0_36] : memref<1x64xf32, #tpu.memory_space<vmem>>, vector<1x64xf32>
    %cst_37 = arith.constant dense<0.000000e+00> : vector<64xf32>
    %70 = vector.multi_reduction <add>, %67, %cst_37 [0] : vector<32x64xf32> to vector<64xf32>
    %71 = vector.shape_cast %70 : vector<64xf32> to vector<1x64xf32>
    %cst_38 = arith.constant 3.200000e+01 : f32
    %72 = vector.broadcast %cst_38 : f32 to vector<1x64xf32>
    %73 = arith.divf %71, %72 : vector<1x64xf32>
    %74 = vector.broadcast %73 : vector<1x64xf32> to vector<32x64xf32>
    %75 = arith.subf %67, %74 : vector<32x64xf32>
    %76 = arith.mulf %75, %75 : vector<32x64xf32>
    %cst_39 = arith.constant dense<0.000000e+00> : vector<64xf32>
    %77 = vector.multi_reduction <add>, %76, %cst_39 [0] : vector<32x64xf32> to vector<64xf32>
    %78 = vector.shape_cast %77 : vector<64xf32> to vector<1x64xf32>
    %cst_40 = arith.constant 3.200000e+01 : f32
    %79 = vector.broadcast %cst_40 : f32 to vector<1x64xf32>
    %80 = arith.divf %78, %79 : vector<1x64xf32>
    %81 = vector.broadcast %73 : vector<1x64xf32> to vector<32x64xf32>
    %82 = arith.subf %67, %81 : vector<32x64xf32>
    %cst_41 = arith.constant 9.99999974E-6 : f32
    %83 = vector.broadcast %cst_41 : f32 to vector<1x64xf32>
    %84 = arith.addf %80, %83 : vector<1x64xf32>
    %85 = math.rsqrt %84 : vector<1x64xf32>
    %86 = vector.broadcast %85 : vector<1x64xf32> to vector<32x64xf32>
    %87 = arith.mulf %82, %86 : vector<32x64xf32>
    %88 = vector.broadcast %68 : vector<1x64xf32> to vector<32x64xf32>
    %89 = arith.mulf %87, %88 : vector<32x64xf32>
    %90 = vector.broadcast %69 : vector<1x64xf32> to vector<32x64xf32>
    %91 = arith.addf %89, %90 : vector<32x64xf32>
    %cst_42 = arith.constant 0.000000e+00 : f32
    %92 = vector.broadcast %cst_42 : f32 to vector<32x64xf32>
    %93 = arith.cmpf ogt, %91, %92 : vector<32x64xf32>
    %cst_43 = arith.constant 2.000000e-01 : f32
    %94 = vector.broadcast %cst_43 : f32 to vector<32x64xf32>
    %95 = arith.mulf %94, %91 : vector<32x64xf32>
    %96 = arith.select %93, %91, %95 : vector<32x64xi1>, vector<32x64xf32>
    %c0_44 = arith.constant 0 : index
    %c0_45 = arith.constant 0 : index
    %c0_46 = arith.constant 0 : index
    %97 = vector.load %arg5[%c0_44, %c0_45, %c0_46] : memref<4x2x32xf32, #tpu.memory_space<vmem>>, vector<1x2x32xf32>
    %98 = vector.shape_cast %97 : vector<1x2x32xf32> to vector<2x32xf32>
    %cst_47 = arith.constant dense<0.000000e+00> : vector<2x64xf32>
    %99 = tpu.matmul %98, %96, %cst_47 {dimension_numbers = #tpu.dot_dimension_numbers<[1], [0], [0], [1], [0, 0, 1, 1], [], []>} : vector<2x32xf32>, vector<32x64xf32>, vector<2x64xf32> -> vector<2x64xf32>
    %c1 = arith.constant 1 : index
    %c0_48 = arith.constant 0 : index
    %c0_49 = arith.constant 0 : index
    %100 = vector.load %arg5[%c1, %c0_48, %c0_49] : memref<4x2x32xf32, #tpu.memory_space<vmem>>, vector<1x2x32xf32>
    %101 = vector.shape_cast %100 : vector<1x2x32xf32> to vector<2x32xf32>
    %cst_50 = arith.constant dense<0.000000e+00> : vector<2x64xf32>
    %102 = tpu.matmul %101, %96, %cst_50 {dimension_numbers = #tpu.dot_dimension_numbers<[1], [0], [0], [1], [0, 0, 1, 1], [], []>} : vector<2x32xf32>, vector<32x64xf32>, vector<2x64xf32> -> vector<2x64xf32>
    %c2 = arith.constant 2 : index
    %c0_51 = arith.constant 0 : index
    %c0_52 = arith.constant 0 : index
    %103 = vector.load %arg5[%c2, %c0_51, %c0_52] : memref<4x2x32xf32, #tpu.memory_space<vmem>>, vector<1x2x32xf32>
    %104 = vector.shape_cast %103 : vector<1x2x32xf32> to vector<2x32xf32>
    %cst_53 = arith.constant dense<0.000000e+00> : vector<2x64xf32>
    %105 = tpu.matmul %104, %96, %cst_53 {dimension_numbers = #tpu.dot_dimension_numbers<[1], [0], [0], [1], [0, 0, 1, 1], [], []>} : vector<2x32xf32>, vector<32x64xf32>, vector<2x64xf32> -> vector<2x64xf32>
    %c3 = arith.constant 3 : index
    %c0_54 = arith.constant 0 : index
    %c0_55 = arith.constant 0 : index
    %106 = vector.load %arg5[%c3, %c0_54, %c0_55] : memref<4x2x32xf32, #tpu.memory_space<vmem>>, vector<1x2x32xf32>
    %107 = vector.shape_cast %106 : vector<1x2x32xf32> to vector<2x32xf32>
    %cst_56 = arith.constant dense<0.000000e+00> : vector<2x64xf32>
    %108 = tpu.matmul %107, %96, %cst_56 {dimension_numbers = #tpu.dot_dimension_numbers<[1], [0], [0], [1], [0, 0, 1, 1], [], []>} : vector<2x32xf32>, vector<32x64xf32>, vector<2x64xf32> -> vector<2x64xf32>
    %cst_57 = arith.constant dense<0.000000e+00> : vector<64xf32>
    %109 = vector.multi_reduction <add>, %99, %cst_57 [0] : vector<2x64xf32> to vector<64xf32>
    %110 = vector.shape_cast %109 : vector<64xf32> to vector<1x64xf32>
    %cst_58 = arith.constant 0.000000e+00 : f32
    %111 = vector.broadcast %cst_58 : f32 to vector<1x64xf32>
    %112 = arith.addf %111, %110 : vector<1x64xf32>
    %cst_59 = arith.constant dense<0.000000e+00> : vector<64xf32>
    %113 = vector.multi_reduction <add>, %102, %cst_59 [0] : vector<2x64xf32> to vector<64xf32>
    %114 = vector.shape_cast %113 : vector<64xf32> to vector<1x64xf32>
    %115 = arith.addf %112, %114 : vector<1x64xf32>
    %cst_60 = arith.constant dense<0.000000e+00> : vector<64xf32>
    %116 = vector.multi_reduction <add>, %105, %cst_60 [0] : vector<2x64xf32> to vector<64xf32>
    %117 = vector.shape_cast %116 : vector<64xf32> to vector<1x64xf32>
    %118 = arith.addf %115, %117 : vector<1x64xf32>
    %cst_61 = arith.constant dense<0.000000e+00> : vector<64xf32>
    %119 = vector.multi_reduction <add>, %108, %cst_61 [0] : vector<2x64xf32> to vector<64xf32>
    %120 = vector.shape_cast %119 : vector<64xf32> to vector<1x64xf32>
    %121 = arith.addf %118, %120 : vector<1x64xf32>
    %cst_62 = arith.constant 8.000000e+00 : f32
    %122 = vector.broadcast %cst_62 : f32 to vector<1x64xf32>
    %123 = arith.divf %121, %122 : vector<1x64xf32>
    %124 = vector.broadcast %123 : vector<1x64xf32> to vector<2x64xf32>
    %125 = arith.subf %99, %124 : vector<2x64xf32>
    %126 = arith.mulf %125, %125 : vector<2x64xf32>
    %cst_63 = arith.constant dense<0.000000e+00> : vector<64xf32>
    %127 = vector.multi_reduction <add>, %126, %cst_63 [0] : vector<2x64xf32> to vector<64xf32>
    %128 = vector.shape_cast %127 : vector<64xf32> to vector<1x64xf32>
    %cst_64 = arith.constant 0.000000e+00 : f32
    %129 = vector.broadcast %cst_64 : f32 to vector<1x64xf32>
    %130 = arith.addf %129, %128 : vector<1x64xf32>
    %131 = vector.broadcast %123 : vector<1x64xf32> to vector<2x64xf32>
    %132 = arith.subf %102, %131 : vector<2x64xf32>
    %133 = arith.mulf %132, %132 : vector<2x64xf32>
    %cst_65 = arith.constant dense<0.000000e+00> : vector<64xf32>
    %134 = vector.multi_reduction <add>, %133, %cst_65 [0] : vector<2x64xf32> to vector<64xf32>
    %135 = vector.shape_cast %134 : vector<64xf32> to vector<1x64xf32>
    %136 = arith.addf %130, %135 : vector<1x64xf32>
    %137 = vector.broadcast %123 : vector<1x64xf32> to vector<2x64xf32>
    %138 = arith.subf %105, %137 : vector<2x64xf32>
    %139 = arith.mulf %138, %138 : vector<2x64xf32>
    %cst_66 = arith.constant dense<0.000000e+00> : vector<64xf32>
    %140 = vector.multi_reduction <add>, %139, %cst_66 [0] : vector<2x64xf32> to vector<64xf32>
    %141 = vector.shape_cast %140 : vector<64xf32> to vector<1x64xf32>
    %142 = arith.addf %136, %141 : vector<1x64xf32>
    %143 = vector.broadcast %123 : vector<1x64xf32> to vector<2x64xf32>
    %144 = arith.subf %108, %143 : vector<2x64xf32>
    %145 = arith.mulf %144, %144 : vector<2x64xf32>
    %cst_67 = arith.constant dense<0.000000e+00> : vector<64xf32>
    %146 = vector.multi_reduction <add>, %145, %cst_67 [0] : vector<2x64xf32> to vector<64xf32>
    %147 = vector.shape_cast %146 : vector<64xf32> to vector<1x64xf32>
    %148 = arith.addf %142, %147 : vector<1x64xf32>
    %cst_68 = arith.constant 8.000000e+00 : f32
    %149 = vector.broadcast %cst_68 : f32 to vector<1x64xf32>
    %150 = arith.divf %148, %149 : vector<1x64xf32>
    %cst_69 = arith.constant 9.99999974E-6 : f32
    %151 = vector.broadcast %cst_69 : f32 to vector<1x64xf32>
    %152 = arith.addf %150, %151 : vector<1x64xf32>
    %153 = math.rsqrt %152 : vector<1x64xf32>
    %154 = vector.broadcast %123 : vector<1x64xf32> to vector<2x64xf32>
    %155 = arith.subf %99, %154 : vector<2x64xf32>
    %156 = vector.broadcast %153 : vector<1x64xf32> to vector<2x64xf32>
    %157 = arith.mulf %155, %156 : vector<2x64xf32>
    %c0_70 = arith.constant 0 : index
    %c0_71 = arith.constant 0 : index
    %158 = vector.load %arg10[%c0_70, %c0_71] : memref<1x64xf32, #tpu.memory_space<vmem>>, vector<1x64xf32>
    %159 = vector.broadcast %158 : vector<1x64xf32> to vector<2x64xf32>
    %160 = arith.mulf %157, %159 : vector<2x64xf32>
    %c0_72 = arith.constant 0 : index
    %c0_73 = arith.constant 0 : index
    %161 = vector.load %arg11[%c0_72, %c0_73] : memref<1x64xf32, #tpu.memory_space<vmem>>, vector<1x64xf32>
    %162 = vector.broadcast %161 : vector<1x64xf32> to vector<2x64xf32>
    %163 = arith.addf %160, %162 : vector<2x64xf32>
    %164 = vector.broadcast %123 : vector<1x64xf32> to vector<2x64xf32>
    %165 = arith.subf %102, %164 : vector<2x64xf32>
    %166 = vector.broadcast %153 : vector<1x64xf32> to vector<2x64xf32>
    %167 = arith.mulf %165, %166 : vector<2x64xf32>
    %c0_74 = arith.constant 0 : index
    %c0_75 = arith.constant 0 : index
    %168 = vector.load %arg10[%c0_74, %c0_75] : memref<1x64xf32, #tpu.memory_space<vmem>>, vector<1x64xf32>
    %169 = vector.broadcast %168 : vector<1x64xf32> to vector<2x64xf32>
    %170 = arith.mulf %167, %169 : vector<2x64xf32>
    %c0_76 = arith.constant 0 : index
    %c0_77 = arith.constant 0 : index
    %171 = vector.load %arg11[%c0_76, %c0_77] : memref<1x64xf32, #tpu.memory_space<vmem>>, vector<1x64xf32>
    %172 = vector.broadcast %171 : vector<1x64xf32> to vector<2x64xf32>
    %173 = arith.addf %170, %172 : vector<2x64xf32>
    %174 = vector.broadcast %123 : vector<1x64xf32> to vector<2x64xf32>
    %175 = arith.subf %105, %174 : vector<2x64xf32>
    %176 = vector.broadcast %153 : vector<1x64xf32> to vector<2x64xf32>
    %177 = arith.mulf %175, %176 : vector<2x64xf32>
    %c0_78 = arith.constant 0 : index
    %c0_79 = arith.constant 0 : index
    %178 = vector.load %arg10[%c0_78, %c0_79] : memref<1x64xf32, #tpu.memory_space<vmem>>, vector<1x64xf32>
    %179 = vector.broadcast %178 : vector<1x64xf32> to vector<2x64xf32>
    %180 = arith.mulf %177, %179 : vector<2x64xf32>
    %c0_80 = arith.constant 0 : index
    %c0_81 = arith.constant 0 : index
    %181 = vector.load %arg11[%c0_80, %c0_81] : memref<1x64xf32, #tpu.memory_space<vmem>>, vector<1x64xf32>
    %182 = vector.broadcast %181 : vector<1x64xf32> to vector<2x64xf32>
    %183 = arith.addf %180, %182 : vector<2x64xf32>
    %184 = vector.broadcast %123 : vector<1x64xf32> to vector<2x64xf32>
    %185 = arith.subf %108, %184 : vector<2x64xf32>
    %186 = vector.broadcast %153 : vector<1x64xf32> to vector<2x64xf32>
    %187 = arith.mulf %185, %186 : vector<2x64xf32>
    %c0_82 = arith.constant 0 : index
    %c0_83 = arith.constant 0 : index
    %188 = vector.load %arg10[%c0_82, %c0_83] : memref<1x64xf32, #tpu.memory_space<vmem>>, vector<1x64xf32>
    %189 = vector.broadcast %188 : vector<1x64xf32> to vector<2x64xf32>
    %190 = arith.mulf %187, %189 : vector<2x64xf32>
    %c0_84 = arith.constant 0 : index
    %c0_85 = arith.constant 0 : index
    %191 = vector.load %arg11[%c0_84, %c0_85] : memref<1x64xf32, #tpu.memory_space<vmem>>, vector<1x64xf32>
    %192 = vector.broadcast %191 : vector<1x64xf32> to vector<2x64xf32>
    %193 = arith.addf %190, %192 : vector<2x64xf32>
    %cst_86 = arith.constant 0.000000e+00 : f32
    %194 = vector.broadcast %cst_86 : f32 to vector<2x64xf32>
    %195 = arith.cmpf ogt, %163, %194 : vector<2x64xf32>
    %cst_87 = arith.constant 2.000000e-01 : f32
    %196 = vector.broadcast %cst_87 : f32 to vector<2x64xf32>
    %197 = arith.mulf %196, %163 : vector<2x64xf32>
    %198 = arith.select %195, %163, %197 : vector<2x64xi1>, vector<2x64xf32>
    %cst_88 = arith.constant 0.000000e+00 : f32
    %199 = vector.broadcast %cst_88 : f32 to vector<2x64xf32>
    %200 = arith.cmpf ogt, %173, %199 : vector<2x64xf32>
    %cst_89 = arith.constant 2.000000e-01 : f32
    %201 = vector.broadcast %cst_89 : f32 to vector<2x64xf32>
    %202 = arith.mulf %201, %173 : vector<2x64xf32>
    %203 = arith.select %200, %173, %202 : vector<2x64xi1>, vector<2x64xf32>
    %cst_90 = arith.constant 0.000000e+00 : f32
    %204 = vector.broadcast %cst_90 : f32 to vector<2x64xf32>
    %205 = arith.cmpf ogt, %183, %204 : vector<2x64xf32>
    %cst_91 = arith.constant 2.000000e-01 : f32
    %206 = vector.broadcast %cst_91 : f32 to vector<2x64xf32>
    %207 = arith.mulf %206, %183 : vector<2x64xf32>
    %208 = arith.select %205, %183, %207 : vector<2x64xi1>, vector<2x64xf32>
    %cst_92 = arith.constant 0.000000e+00 : f32
    %209 = vector.broadcast %cst_92 : f32 to vector<2x64xf32>
    %210 = arith.cmpf ogt, %193, %209 : vector<2x64xf32>
    %cst_93 = arith.constant 2.000000e-01 : f32
    %211 = vector.broadcast %cst_93 : f32 to vector<2x64xf32>
    %212 = arith.mulf %211, %193 : vector<2x64xf32>
    %213 = arith.select %210, %193, %212 : vector<2x64xi1>, vector<2x64xf32>
    %c0_94 = arith.constant 0 : index
    %c0_95 = arith.constant 0 : index
    %c0_96 = arith.constant 0 : index
    %214 = vector.load %arg12[%c0_94, %c0_95, %c0_96] : memref<4x64x32xf32, #tpu.memory_space<vmem>>, vector<4x64x32xf32>
    %c0_97 = arith.constant 0 : index
    %c0_98 = arith.constant 0 : index
    %215 = vector.load %arg13[%c0_97, %c0_98] : memref<1x32xf32, #tpu.memory_space<vmem>>, vector<1x32xf32>
    %216 = vector.extract_strided_slice %214 {offsets = [0, 0, 0], sizes = [1, 64, 32], strides = [1, 1, 1]} : vector<4x64x32xf32> to vector<1x64x32xf32>
    %217 = vector.shape_cast %216 : vector<1x64x32xf32> to vector<64x32xf32>
    %cst_99 = arith.constant dense<0.000000e+00> : vector<2x32xf32>
    %218 = tpu.matmul %198, %217, %cst_99 {dimension_numbers = #tpu.dot_dimension_numbers<[1], [0], [0], [1], [0, 0, 1, 1], [], []>} : vector<2x64xf32>, vector<64x32xf32>, vector<2x32xf32> -> vector<2x32xf32>
    %219 = vector.broadcast %215 : vector<1x32xf32> to vector<2x32xf32>
    %220 = arith.addf %219, %218 : vector<2x32xf32>
    %221 = vector.extract_strided_slice %214 {offsets = [1, 0, 0], sizes = [1, 64, 32], strides = [1, 1, 1]} : vector<4x64x32xf32> to vector<1x64x32xf32>
    %222 = vector.shape_cast %221 : vector<1x64x32xf32> to vector<64x32xf32>
    %cst_100 = arith.constant dense<0.000000e+00> : vector<2x32xf32>
    %223 = tpu.matmul %203, %222, %cst_100 {dimension_numbers = #tpu.dot_dimension_numbers<[1], [0], [0], [1], [0, 0, 1, 1], [], []>} : vector<2x64xf32>, vector<64x32xf32>, vector<2x32xf32> -> vector<2x32xf32>
    %224 = arith.addf %220, %223 : vector<2x32xf32>
    %225 = vector.extract_strided_slice %214 {offsets = [2, 0, 0], sizes = [1, 64, 32], strides = [1, 1, 1]} : vector<4x64x32xf32> to vector<1x64x32xf32>
    %226 = vector.shape_cast %225 : vector<1x64x32xf32> to vector<64x32xf32>
    %cst_101 = arith.constant dense<0.000000e+00> : vector<2x32xf32>
    %227 = tpu.matmul %208, %226, %cst_101 {dimension_numbers = #tpu.dot_dimension_numbers<[1], [0], [0], [1], [0, 0, 1, 1], [], []>} : vector<2x64xf32>, vector<64x32xf32>, vector<2x32xf32> -> vector<2x32xf32>
    %228 = arith.addf %224, %227 : vector<2x32xf32>
    %229 = vector.extract_strided_slice %214 {offsets = [3, 0, 0], sizes = [1, 64, 32], strides = [1, 1, 1]} : vector<4x64x32xf32> to vector<1x64x32xf32>
    %230 = vector.shape_cast %229 : vector<1x64x32xf32> to vector<64x32xf32>
    %cst_102 = arith.constant dense<0.000000e+00> : vector<2x32xf32>
    %231 = tpu.matmul %213, %230, %cst_102 {dimension_numbers = #tpu.dot_dimension_numbers<[1], [0], [0], [1], [0, 0, 1, 1], [], []>} : vector<2x64xf32>, vector<64x32xf32>, vector<2x32xf32> -> vector<2x32xf32>
    %232 = arith.addf %228, %231 : vector<2x32xf32>
    %c0_103 = arith.constant 0 : index
    %c0_104 = arith.constant 0 : index
    %233 = vector.load %arg14[%c0_103, %c0_104] : memref<1x32xf32, #tpu.memory_space<vmem>>, vector<1x32xf32>
    %c0_105 = arith.constant 0 : index
    %c0_106 = arith.constant 0 : index
    %234 = vector.load %arg15[%c0_105, %c0_106] : memref<1x32xf32, #tpu.memory_space<vmem>>, vector<1x32xf32>
    %cst_107 = arith.constant dense<0.000000e+00> : vector<32xf32>
    %235 = vector.multi_reduction <add>, %232, %cst_107 [0] : vector<2x32xf32> to vector<32xf32>
    %236 = vector.shape_cast %235 : vector<32xf32> to vector<1x32xf32>
    %cst_108 = arith.constant 2.000000e+00 : f32
    %237 = vector.broadcast %cst_108 : f32 to vector<1x32xf32>
    %238 = arith.divf %236, %237 : vector<1x32xf32>
    %239 = vector.broadcast %238 : vector<1x32xf32> to vector<2x32xf32>
    %240 = arith.subf %232, %239 : vector<2x32xf32>
    %241 = arith.mulf %240, %240 : vector<2x32xf32>
    %cst_109 = arith.constant dense<0.000000e+00> : vector<32xf32>
    %242 = vector.multi_reduction <add>, %241, %cst_109 [0] : vector<2x32xf32> to vector<32xf32>
    %243 = vector.shape_cast %242 : vector<32xf32> to vector<1x32xf32>
    %cst_110 = arith.constant 2.000000e+00 : f32
    %244 = vector.broadcast %cst_110 : f32 to vector<1x32xf32>
    %245 = arith.divf %243, %244 : vector<1x32xf32>
    %246 = vector.broadcast %238 : vector<1x32xf32> to vector<2x32xf32>
    %247 = arith.subf %232, %246 : vector<2x32xf32>
    %cst_111 = arith.constant 9.99999974E-6 : f32
    %248 = vector.broadcast %cst_111 : f32 to vector<1x32xf32>
    %249 = arith.addf %245, %248 : vector<1x32xf32>
    %250 = math.rsqrt %249 : vector<1x32xf32>
    %251 = vector.broadcast %250 : vector<1x32xf32> to vector<2x32xf32>
    %252 = arith.mulf %247, %251 : vector<2x32xf32>
    %253 = vector.broadcast %233 : vector<1x32xf32> to vector<2x32xf32>
    %254 = arith.mulf %252, %253 : vector<2x32xf32>
    %255 = vector.broadcast %234 : vector<1x32xf32> to vector<2x32xf32>
    %256 = arith.addf %254, %255 : vector<2x32xf32>
    %257 = math.tanh %256 : vector<2x32xf32>
    %c0_112 = arith.constant 0 : index
    %c0_113 = arith.constant 0 : index
    %258 = vector.load %arg18[%c0_112, %c0_113] : memref<32x32xf32, #tpu.memory_space<vmem>>, vector<32x32xf32>
    %cst_114 = arith.constant dense<0.000000e+00> : vector<2x32xf32>
    %259 = tpu.matmul %31, %258, %cst_114 {dimension_numbers = #tpu.dot_dimension_numbers<[1], [0], [0], [1], [0, 0, 1, 1], [], []>} : vector<2x32xf32>, vector<32x32xf32>, vector<2x32xf32> -> vector<2x32xf32>
    %c0_115 = arith.constant 0 : index
    %c0_116 = arith.constant 0 : index
    %260 = vector.load %arg19[%c0_115, %c0_116] : memref<32x32xf32, #tpu.memory_space<vmem>>, vector<32x32xf32>
    %cst_117 = arith.constant dense<0.000000e+00> : vector<2x32xf32>
    %261 = tpu.matmul %257, %260, %cst_117 {dimension_numbers = #tpu.dot_dimension_numbers<[1], [0], [0], [1], [0, 0, 1, 1], [], []>} : vector<2x32xf32>, vector<32x32xf32>, vector<2x32xf32> -> vector<2x32xf32>
    %262 = arith.addf %259, %261 : vector<2x32xf32>
    %c0_118 = arith.constant 0 : index
    %c0_119 = arith.constant 0 : index
    %263 = vector.load %arg20[%c0_118, %c0_119] : memref<1x32xf32, #tpu.memory_space<vmem>>, vector<1x32xf32>
    %264 = vector.broadcast %263 : vector<1x32xf32> to vector<2x32xf32>
    %265 = arith.addf %262, %264 : vector<2x32xf32>
    %c0_120 = arith.constant 0 : index
    %c0_121 = arith.constant 0 : index
    %266 = vector.load %arg21[%c0_120, %c0_121] : memref<1x32xf32, #tpu.memory_space<vmem>>, vector<1x32xf32>
    %c0_122 = arith.constant 0 : index
    %c0_123 = arith.constant 0 : index
    %267 = vector.load %arg22[%c0_122, %c0_123] : memref<1x32xf32, #tpu.memory_space<vmem>>, vector<1x32xf32>
    %cst_124 = arith.constant dense<0.000000e+00> : vector<32xf32>
    %268 = vector.multi_reduction <add>, %265, %cst_124 [0] : vector<2x32xf32> to vector<32xf32>
    %269 = vector.shape_cast %268 : vector<32xf32> to vector<1x32xf32>
    %cst_125 = arith.constant 2.000000e+00 : f32
    %270 = vector.broadcast %cst_125 : f32 to vector<1x32xf32>
    %271 = arith.divf %269, %270 : vector<1x32xf32>
    %272 = vector.broadcast %271 : vector<1x32xf32> to vector<2x32xf32>
    %273 = arith.subf %265, %272 : vector<2x32xf32>
    %274 = arith.mulf %273, %273 : vector<2x32xf32>
    %cst_126 = arith.constant dense<0.000000e+00> : vector<32xf32>
    %275 = vector.multi_reduction <add>, %274, %cst_126 [0] : vector<2x32xf32> to vector<32xf32>
    %276 = vector.shape_cast %275 : vector<32xf32> to vector<1x32xf32>
    %cst_127 = arith.constant 2.000000e+00 : f32
    %277 = vector.broadcast %cst_127 : f32 to vector<1x32xf32>
    %278 = arith.divf %276, %277 : vector<1x32xf32>
    %279 = vector.broadcast %271 : vector<1x32xf32> to vector<2x32xf32>
    %280 = arith.subf %265, %279 : vector<2x32xf32>
    %cst_128 = arith.constant 9.99999974E-6 : f32
    %281 = vector.broadcast %cst_128 : f32 to vector<1x32xf32>
    %282 = arith.addf %278, %281 : vector<1x32xf32>
    %283 = math.rsqrt %282 : vector<1x32xf32>
    %284 = vector.broadcast %283 : vector<1x32xf32> to vector<2x32xf32>
    %285 = arith.mulf %280, %284 : vector<2x32xf32>
    %286 = vector.broadcast %266 : vector<1x32xf32> to vector<2x32xf32>
    %287 = arith.mulf %285, %286 : vector<2x32xf32>
    %288 = vector.broadcast %267 : vector<1x32xf32> to vector<2x32xf32>
    %289 = arith.addf %287, %288 : vector<2x32xf32>
    %290 = math.tanh %289 : vector<2x32xf32>
    %c0_129 = arith.constant 0 : index
    %c0_130 = arith.constant 0 : index
    %291 = vector.load %arg28[%c0_129, %c0_130] : memref<2x32xf32, #tpu.memory_space<vmem>>, vector<2x32xf32>
    tpu.vector_store %arg28[%c0_129, %c0_130], %290 {strides = array<i32>} : memref<2x32xf32, #tpu.memory_space<vmem>>, vector<2x32xf32>,
    %c0_131 = arith.constant 0 : index
    %c0_132 = arith.constant 0 : index
    %292 = vector.load %arg23[%c0_131, %c0_132] : memref<32x6xf32, #tpu.memory_space<vmem>>, vector<32x6xf32>
    %cst_133 = arith.constant dense<0.000000e+00> : vector<2x6xf32>
    %293 = tpu.matmul %290, %292, %cst_133 {dimension_numbers = #tpu.dot_dimension_numbers<[1], [0], [0], [1], [0, 0, 1, 1], [], []>} : vector<2x32xf32>, vector<32x6xf32>, vector<2x6xf32> -> vector<2x6xf32>
    %c0_134 = arith.constant 0 : index
    %c0_135 = arith.constant 0 : index
    %294 = vector.load %arg24[%c0_134, %c0_135] : memref<1x6xf32, #tpu.memory_space<vmem>>, vector<1x6xf32>
    %295 = vector.broadcast %294 : vector<1x6xf32> to vector<2x6xf32>
    %296 = arith.addf %293, %295 : vector<2x6xf32>
    %c0_136 = arith.constant 0 : index
    %c0_137 = arith.constant 0 : index
    %297 = vector.load %arg29[%c0_136, %c0_137] : memref<2x6xf32, #tpu.memory_space<vmem>>, vector<2x6xf32>
    tpu.vector_store %arg29[%c0_136, %c0_137], %296 {strides = array<i32>} : memref<2x6xf32, #tpu.memory_space<vmem>>, vector<2x6xf32>,
    %298 = arith.truncf %290 : vector<2x32xf32> to vector<2x32xbf16>
    %c0_138 = arith.constant 0 : index
    %c0_139 = arith.constant 0 : index
    %299 = vector.load %arg25[%c0_138, %c0_139] : memref<32x2048xbf16, #tpu.memory_space<vmem>>, vector<32x2048xbf16>
    %cst_140 = arith.constant dense<0.000000e+00> : vector<2x2048xf32>
    %300 = tpu.matmul %298, %299, %cst_140 {dimension_numbers = #tpu.dot_dimension_numbers<[1], [0], [0], [1], [0, 0, 1, 1], [], []>} : vector<2x32xbf16>, vector<32x2048xbf16>, vector<2x2048xf32> -> vector<2x2048xf32>
    %c0_141 = arith.constant 0 : index
    %c0_142 = arith.constant 0 : index
    %301 = vector.load %arg30[%c0_141, %c0_142] : memref<2x2048xf32, #tpu.memory_space<vmem>>, vector<2x2048xf32>
    tpu.vector_store %arg30[%c0_141, %c0_142], %300 {strides = array<i32>} : memref<2x2048xf32, #tpu.memory_space<vmem>>, vector<2x2048xf32>,
    return
  }
}

module attributes {stable_mosaic.version = 11 : i64} {
  func.func @_convt_mid_kernel(%arg0: memref<32x128xf32, #tpu.memory_space<vmem>>, %arg1: memref<1x128xf32, #tpu.memory_space<vmem>>, %arg2: memref<1x128xf32, #tpu.memory_space<vmem>>, %arg3: memref<128x1024xbf16, #tpu.memory_space<vmem>>, %arg4: memref<32x1024xf32, #tpu.memory_space<vmem>>) attributes {dimension_semantics = [], scalar_prefetch = 0 : i64, scratch_operands = 0 : i64, tpu.core_type = #tpu.core_type<tc>} {
    %c0 = arith.constant 0 : index
    %c0_0 = arith.constant 0 : index
    %0 = vector.load %arg0[%c0, %c0_0] : memref<32x128xf32, #tpu.memory_space<vmem>>, vector<32x128xf32>
    %c0_1 = arith.constant 0 : index
    %c0_2 = arith.constant 0 : index
    %1 = vector.load %arg1[%c0_1, %c0_2] : memref<1x128xf32, #tpu.memory_space<vmem>>, vector<1x128xf32>
    %c0_3 = arith.constant 0 : index
    %c0_4 = arith.constant 0 : index
    %2 = vector.load %arg2[%c0_3, %c0_4] : memref<1x128xf32, #tpu.memory_space<vmem>>, vector<1x128xf32>
    %cst = arith.constant dense<0.000000e+00> : vector<128xf32>
    %3 = vector.multi_reduction <add>, %0, %cst [0] : vector<32x128xf32> to vector<128xf32>
    %4 = vector.shape_cast %3 : vector<128xf32> to vector<1x128xf32>
    %cst_5 = arith.constant 3.200000e+01 : f32
    %5 = vector.broadcast %cst_5 : f32 to vector<1x128xf32>
    %6 = arith.divf %4, %5 : vector<1x128xf32>
    %7 = vector.broadcast %6 : vector<1x128xf32> to vector<32x128xf32>
    %8 = arith.subf %0, %7 : vector<32x128xf32>
    %9 = arith.mulf %8, %8 : vector<32x128xf32>
    %cst_6 = arith.constant dense<0.000000e+00> : vector<128xf32>
    %10 = vector.multi_reduction <add>, %9, %cst_6 [0] : vector<32x128xf32> to vector<128xf32>
    %11 = vector.shape_cast %10 : vector<128xf32> to vector<1x128xf32>
    %cst_7 = arith.constant 3.200000e+01 : f32
    %12 = vector.broadcast %cst_7 : f32 to vector<1x128xf32>
    %13 = arith.divf %11, %12 : vector<1x128xf32>
    %14 = vector.broadcast %6 : vector<1x128xf32> to vector<32x128xf32>
    %15 = arith.subf %0, %14 : vector<32x128xf32>
    %cst_8 = arith.constant 9.99999974E-6 : f32
    %16 = vector.broadcast %cst_8 : f32 to vector<1x128xf32>
    %17 = arith.addf %13, %16 : vector<1x128xf32>
    %18 = math.rsqrt %17 : vector<1x128xf32>
    %19 = vector.broadcast %18 : vector<1x128xf32> to vector<32x128xf32>
    %20 = arith.mulf %15, %19 : vector<32x128xf32>
    %21 = vector.broadcast %1 : vector<1x128xf32> to vector<32x128xf32>
    %22 = arith.mulf %20, %21 : vector<32x128xf32>
    %23 = vector.broadcast %2 : vector<1x128xf32> to vector<32x128xf32>
    %24 = arith.addf %22, %23 : vector<32x128xf32>
    %cst_9 = arith.constant 0.000000e+00 : f32
    %25 = vector.broadcast %cst_9 : f32 to vector<32x128xf32>
    %26 = arith.maximumf %24, %25 : vector<32x128xf32>
    %27 = arith.truncf %26 : vector<32x128xf32> to vector<32x128xbf16>
    %c0_10 = arith.constant 0 : index
    %c0_11 = arith.constant 0 : index
    %28 = vector.load %arg3[%c0_10, %c0_11] : memref<128x1024xbf16, #tpu.memory_space<vmem>>, vector<128x1024xbf16>
    %cst_12 = arith.constant dense<0.000000e+00> : vector<32x1024xf32>
    %29 = tpu.matmul %27, %28, %cst_12 {dimension_numbers = #tpu.dot_dimension_numbers<[1], [0], [0], [1], [0, 0, 1, 1], [], []>} : vector<32x128xbf16>, vector<128x1024xbf16>, vector<32x1024xf32> -> vector<32x1024xf32>
    %c0_13 = arith.constant 0 : index
    %c0_14 = arith.constant 0 : index
    %30 = vector.load %arg4[%c0_13, %c0_14] : memref<32x1024xf32, #tpu.memory_space<vmem>>, vector<32x1024xf32>
    tpu.vector_store %arg4[%c0_13, %c0_14], %29 {strides = array<i32>} : memref<32x1024xf32, #tpu.memory_space<vmem>>, vector<32x1024xf32>,
    return
  }
}

module attributes {stable_mosaic.version = 11 : i64} {
  func.func @_fg_step_kernel(%arg0: memref<2x64xf32, #tpu.memory_space<vmem>>, %arg1: memref<2x32xf32, #tpu.memory_space<vmem>>, %arg2: memref<512x64xf32, #tpu.memory_space<vmem>>, %arg3: memref<128x512xf32, #tpu.memory_space<vmem>>, %arg4: memref<32x128xf32, #tpu.memory_space<vmem>>, %arg5: memref<4x2x32xf32, #tpu.memory_space<vmem>>, %arg6: memref<1x64xf32, #tpu.memory_space<vmem>>, %arg7: memref<1x64xf32, #tpu.memory_space<vmem>>, %arg8: memref<1x64xf32, #tpu.memory_space<vmem>>, %arg9: memref<1x64xf32, #tpu.memory_space<vmem>>, %arg10: memref<1x64xf32, #tpu.memory_space<vmem>>, %arg11: memref<1x64xf32, #tpu.memory_space<vmem>>, %arg12: memref<4x64x32xf32, #tpu.memory_space<vmem>>, %arg13: memref<1x32xf32, #tpu.memory_space<vmem>>, %arg14: memref<1x32xf32, #tpu.memory_space<vmem>>, %arg15: memref<1x32xf32, #tpu.memory_space<vmem>>, %arg16: memref<64x128xf32, #tpu.memory_space<vmem>>, %arg17: memref<1x128xf32, #tpu.memory_space<vmem>>, %arg18: memref<32x32xf32, #tpu.memory_space<vmem>>, %arg19: memref<32x32xf32, #tpu.memory_space<vmem>>, %arg20: memref<1x32xf32, #tpu.memory_space<vmem>>, %arg21: memref<1x32xf32, #tpu.memory_space<vmem>>, %arg22: memref<1x32xf32, #tpu.memory_space<vmem>>, %arg23: memref<32x6xf32, #tpu.memory_space<vmem>>, %arg24: memref<1x6xf32, #tpu.memory_space<vmem>>, %arg25: memref<32x2048xbf16, #tpu.memory_space<vmem>>, %arg26: memref<2x32xf32, #tpu.memory_space<vmem>>, %arg27: memref<2x32xf32, #tpu.memory_space<vmem>>, %arg28: memref<2x32xf32, #tpu.memory_space<vmem>>, %arg29: memref<2x6xf32, #tpu.memory_space<vmem>>, %arg30: memref<2x2048xf32, #tpu.memory_space<vmem>>) attributes {dimension_semantics = [], scalar_prefetch = 0 : i64, scratch_operands = 0 : i64, tpu.core_type = #tpu.core_type<tc>} {
    %c0 = arith.constant 0 : index
    %c0_0 = arith.constant 0 : index
    %0 = vector.load %arg0[%c0, %c0_0] : memref<2x64xf32, #tpu.memory_space<vmem>>, vector<2x64xf32>
    %c0_1 = arith.constant 0 : index
    %c0_2 = arith.constant 0 : index
    %1 = vector.load %arg16[%c0_1, %c0_2] : memref<64x128xf32, #tpu.memory_space<vmem>>, vector<64x128xf32>
    %cst = arith.constant dense<0.000000e+00> : vector<2x128xf32>
    %2 = tpu.matmul %0, %1, %cst {dimension_numbers = #tpu.dot_dimension_numbers<[1], [0], [0], [1], [0, 0, 1, 1], [], []>} : vector<2x64xf32>, vector<64x128xf32>, vector<2x128xf32> -> vector<2x128xf32>
    %c0_3 = arith.constant 0 : index
    %c0_4 = arith.constant 0 : index
    %3 = vector.load %arg17[%c0_3, %c0_4] : memref<1x128xf32, #tpu.memory_space<vmem>>, vector<1x128xf32>
    %4 = vector.broadcast %3 : vector<1x128xf32> to vector<2x128xf32>
    %5 = arith.addf %2, %4 : vector<2x128xf32>
    %c0_5 = arith.constant 0 : index
    %c0_6 = arith.constant 0 : index
    %6 = vector.load %arg1[%c0_5, %c0_6] : memref<2x32xf32, #tpu.memory_space<vmem>>, vector<2x32xf32>
    %7 = vector.extract_strided_slice %5 {offsets = [0, 0], sizes = [2, 32], strides = [1, 1]} : vector<2x128xf32> to vector<2x32xf32>
    %8 = arith.negf %7 : vector<2x32xf32>
    %9 = math.exp %8 : vector<2x32xf32>
    %cst_7 = arith.constant 1.000000e+00 : f32
    %10 = vector.broadcast %cst_7 : f32 to vector<2x32xf32>
    %11 = arith.addf %10, %9 : vector<2x32xf32>
    %12 = arith.divf %10, %11 : vector<2x32xf32>
    %13 = vector.extract_strided_slice %5 {offsets = [0, 32], sizes = [2, 32], strides = [1, 1]} : vector<2x128xf32> to vector<2x32xf32>
    %14 = arith.negf %13 : vector<2x32xf32>
    %15 = math.exp %14 : vector<2x32xf32>
    %cst_8 = arith.constant 1.000000e+00 : f32
    %16 = vector.broadcast %cst_8 : f32 to vector<2x32xf32>
    %17 = arith.addf %16, %15 : vector<2x32xf32>
    %18 = arith.divf %16, %17 : vector<2x32xf32>
    %19 = vector.extract_strided_slice %5 {offsets = [0, 64], sizes = [2, 32], strides = [1, 1]} : vector<2x128xf32> to vector<2x32xf32>
    %20 = math.tanh %19 : vector<2x32xf32>
    %21 = vector.extract_strided_slice %5 {offsets = [0, 96], sizes = [2, 32], strides = [1, 1]} : vector<2x128xf32> to vector<2x32xf32>
    %22 = arith.negf %21 : vector<2x32xf32>
    %23 = math.exp %22 : vector<2x32xf32>
    %cst_9 = arith.constant 1.000000e+00 : f32
    %24 = vector.broadcast %cst_9 : f32 to vector<2x32xf32>
    %25 = arith.addf %24, %23 : vector<2x32xf32>
    %26 = arith.divf %24, %25 : vector<2x32xf32>
    %27 = arith.mulf %18, %6 : vector<2x32xf32>
    %28 = arith.mulf %12, %20 : vector<2x32xf32>
    %29 = arith.addf %27, %28 : vector<2x32xf32>
    %30 = math.tanh %29 : vector<2x32xf32>
    %31 = arith.mulf %26, %30 : vector<2x32xf32>
    %c0_10 = arith.constant 0 : index
    %c0_11 = arith.constant 0 : index
    %32 = vector.load %arg26[%c0_10, %c0_11] : memref<2x32xf32, #tpu.memory_space<vmem>>, vector<2x32xf32>
    tpu.vector_store %arg26[%c0_10, %c0_11], %31 {strides = array<i32>} : memref<2x32xf32, #tpu.memory_space<vmem>>, vector<2x32xf32>,
    %c0_12 = arith.constant 0 : index
    %c0_13 = arith.constant 0 : index
    %33 = vector.load %arg27[%c0_12, %c0_13] : memref<2x32xf32, #tpu.memory_space<vmem>>, vector<2x32xf32>
    tpu.vector_store %arg27[%c0_12, %c0_13], %29 {strides = array<i32>} : memref<2x32xf32, #tpu.memory_space<vmem>>, vector<2x32xf32>,
    %c0_14 = arith.constant 0 : index
    %c0_15 = arith.constant 0 : index
    %34 = vector.load %arg3[%c0_14, %c0_15] : memref<128x512xf32, #tpu.memory_space<vmem>>, vector<128x512xf32>
    %c0_16 = arith.constant 0 : index
    %c0_17 = arith.constant 0 : index
    %35 = vector.load %arg2[%c0_16, %c0_17] : memref<512x64xf32, #tpu.memory_space<vmem>>, vector<512x64xf32>
    %cst_18 = arith.constant dense<0.000000e+00> : vector<128x64xf32>
    %36 = tpu.matmul %34, %35, %cst_18 {dimension_numbers = #tpu.dot_dimension_numbers<[1], [0], [0], [1], [0, 0, 1, 1], [], []>} : vector<128x512xf32>, vector<512x64xf32>, vector<128x64xf32> -> vector<128x64xf32>
    %c0_19 = arith.constant 0 : index
    %c0_20 = arith.constant 0 : index
    %37 = vector.load %arg6[%c0_19, %c0_20] : memref<1x64xf32, #tpu.memory_space<vmem>>, vector<1x64xf32>
    %c0_21 = arith.constant 0 : index
    %c0_22 = arith.constant 0 : index
    %38 = vector.load %arg7[%c0_21, %c0_22] : memref<1x64xf32, #tpu.memory_space<vmem>>, vector<1x64xf32>
    %cst_23 = arith.constant dense<0.000000e+00> : vector<64xf32>
    %39 = vector.multi_reduction <add>, %36, %cst_23 [0] : vector<128x64xf32> to vector<64xf32>
    %40 = vector.shape_cast %39 : vector<64xf32> to vector<1x64xf32>
    %cst_24 = arith.constant 1.280000e+02 : f32
    %41 = vector.broadcast %cst_24 : f32 to vector<1x64xf32>
    %42 = arith.divf %40, %41 : vector<1x64xf32>
    %43 = vector.broadcast %42 : vector<1x64xf32> to vector<128x64xf32>
    %44 = arith.subf %36, %43 : vector<128x64xf32>
    %45 = arith.mulf %44, %44 : vector<128x64xf32>
    %cst_25 = arith.constant dense<0.000000e+00> : vector<64xf32>
    %46 = vector.multi_reduction <add>, %45, %cst_25 [0] : vector<128x64xf32> to vector<64xf32>
    %47 = vector.shape_cast %46 : vector<64xf32> to vector<1x64xf32>
    %cst_26 = arith.constant 1.280000e+02 : f32
    %48 = vector.broadcast %cst_26 : f32 to vector<1x64xf32>
    %49 = arith.divf %47, %48 : vector<1x64xf32>
    %50 = vector.broadcast %42 : vector<1x64xf32> to vector<128x64xf32>
    %51 = arith.subf %36, %50 : vector<128x64xf32>
    %cst_27 = arith.constant 9.99999974E-6 : f32
    %52 = vector.broadcast %cst_27 : f32 to vector<1x64xf32>
    %53 = arith.addf %49, %52 : vector<1x64xf32>
    %54 = math.rsqrt %53 : vector<1x64xf32>
    %55 = vector.broadcast %54 : vector<1x64xf32> to vector<128x64xf32>
    %56 = arith.mulf %51, %55 : vector<128x64xf32>
    %57 = vector.broadcast %37 : vector<1x64xf32> to vector<128x64xf32>
    %58 = arith.mulf %56, %57 : vector<128x64xf32>
    %59 = vector.broadcast %38 : vector<1x64xf32> to vector<128x64xf32>
    %60 = arith.addf %58, %59 : vector<128x64xf32>
    %cst_28 = arith.constant 0.000000e+00 : f32
    %61 = vector.broadcast %cst_28 : f32 to vector<128x64xf32>
    %62 = arith.cmpf ogt, %60, %61 : vector<128x64xf32>
    %cst_29 = arith.constant 2.000000e-01 : f32
    %63 = vector.broadcast %cst_29 : f32 to vector<128x64xf32>
    %64 = arith.mulf %63, %60 : vector<128x64xf32>
    %65 = arith.select %62, %60, %64 : vector<128x64xi1>, vector<128x64xf32>
    %c0_30 = arith.constant 0 : index
    %c0_31 = arith.constant 0 : index
    %66 = vector.load %arg4[%c0_30, %c0_31] : memref<32x128xf32, #tpu.memory_space<vmem>>, vector<32x128xf32>
    %cst_32 = arith.constant dense<0.000000e+00> : vector<32x64xf32>
    %67 = tpu.matmul %66, %65, %cst_32 {dimension_numbers = #tpu.dot_dimension_numbers<[1], [0], [0], [1], [0, 0, 1, 1], [], []>} : vector<32x128xf32>, vector<128x64xf32>, vector<32x64xf32> -> vector<32x64xf32>
    %c0_33 = arith.constant 0 : index
    %c0_34 = arith.constant 0 : index
    %68 = vector.load %arg8[%c0_33, %c0_34] : memref<1x64xf32, #tpu.memory_space<vmem>>, vector<1x64xf32>
    %c0_35 = arith.constant 0 : index
    %c0_36 = arith.constant 0 : index
    %69 = vector.load %arg9[%c0_35, %c0_36] : memref<1x64xf32, #tpu.memory_space<vmem>>, vector<1x64xf32>
    %cst_37 = arith.constant dense<0.000000e+00> : vector<64xf32>
    %70 = vector.multi_reduction <add>, %67, %cst_37 [0] : vector<32x64xf32> to vector<64xf32>
    %71 = vector.shape_cast %70 : vector<64xf32> to vector<1x64xf32>
    %cst_38 = arith.constant 3.200000e+01 : f32
    %72 = vector.broadcast %cst_38 : f32 to vector<1x64xf32>
    %73 = arith.divf %71, %72 : vector<1x64xf32>
    %74 = vector.broadcast %73 : vector<1x64xf32> to vector<32x64xf32>
    %75 = arith.subf %67, %74 : vector<32x64xf32>
    %76 = arith.mulf %75, %75 : vector<32x64xf32>
    %cst_39 = arith.constant dense<0.000000e+00> : vector<64xf32>
    %77 = vector.multi_reduction <add>, %76, %cst_39 [0] : vector<32x64xf32> to vector<64xf32>
    %78 = vector.shape_cast %77 : vector<64xf32> to vector<1x64xf32>
    %cst_40 = arith.constant 3.200000e+01 : f32
    %79 = vector.broadcast %cst_40 : f32 to vector<1x64xf32>
    %80 = arith.divf %78, %79 : vector<1x64xf32>
    %81 = vector.broadcast %73 : vector<1x64xf32> to vector<32x64xf32>
    %82 = arith.subf %67, %81 : vector<32x64xf32>
    %cst_41 = arith.constant 9.99999974E-6 : f32
    %83 = vector.broadcast %cst_41 : f32 to vector<1x64xf32>
    %84 = arith.addf %80, %83 : vector<1x64xf32>
    %85 = math.rsqrt %84 : vector<1x64xf32>
    %86 = vector.broadcast %85 : vector<1x64xf32> to vector<32x64xf32>
    %87 = arith.mulf %82, %86 : vector<32x64xf32>
    %88 = vector.broadcast %68 : vector<1x64xf32> to vector<32x64xf32>
    %89 = arith.mulf %87, %88 : vector<32x64xf32>
    %90 = vector.broadcast %69 : vector<1x64xf32> to vector<32x64xf32>
    %91 = arith.addf %89, %90 : vector<32x64xf32>
    %cst_42 = arith.constant 0.000000e+00 : f32
    %92 = vector.broadcast %cst_42 : f32 to vector<32x64xf32>
    %93 = arith.cmpf ogt, %91, %92 : vector<32x64xf32>
    %cst_43 = arith.constant 2.000000e-01 : f32
    %94 = vector.broadcast %cst_43 : f32 to vector<32x64xf32>
    %95 = arith.mulf %94, %91 : vector<32x64xf32>
    %96 = arith.select %93, %91, %95 : vector<32x64xi1>, vector<32x64xf32>
    %c0_44 = arith.constant 0 : index
    %c0_45 = arith.constant 0 : index
    %c0_46 = arith.constant 0 : index
    %97 = vector.load %arg5[%c0_44, %c0_45, %c0_46] : memref<4x2x32xf32, #tpu.memory_space<vmem>>, vector<1x2x32xf32>
    %98 = vector.shape_cast %97 : vector<1x2x32xf32> to vector<2x32xf32>
    %cst_47 = arith.constant dense<0.000000e+00> : vector<2x64xf32>
    %99 = tpu.matmul %98, %96, %cst_47 {dimension_numbers = #tpu.dot_dimension_numbers<[1], [0], [0], [1], [0, 0, 1, 1], [], []>} : vector<2x32xf32>, vector<32x64xf32>, vector<2x64xf32> -> vector<2x64xf32>
    %c1 = arith.constant 1 : index
    %c0_48 = arith.constant 0 : index
    %c0_49 = arith.constant 0 : index
    %100 = vector.load %arg5[%c1, %c0_48, %c0_49] : memref<4x2x32xf32, #tpu.memory_space<vmem>>, vector<1x2x32xf32>
    %101 = vector.shape_cast %100 : vector<1x2x32xf32> to vector<2x32xf32>
    %cst_50 = arith.constant dense<0.000000e+00> : vector<2x64xf32>
    %102 = tpu.matmul %101, %96, %cst_50 {dimension_numbers = #tpu.dot_dimension_numbers<[1], [0], [0], [1], [0, 0, 1, 1], [], []>} : vector<2x32xf32>, vector<32x64xf32>, vector<2x64xf32> -> vector<2x64xf32>
    %c2 = arith.constant 2 : index
    %c0_51 = arith.constant 0 : index
    %c0_52 = arith.constant 0 : index
    %103 = vector.load %arg5[%c2, %c0_51, %c0_52] : memref<4x2x32xf32, #tpu.memory_space<vmem>>, vector<1x2x32xf32>
    %104 = vector.shape_cast %103 : vector<1x2x32xf32> to vector<2x32xf32>
    %cst_53 = arith.constant dense<0.000000e+00> : vector<2x64xf32>
    %105 = tpu.matmul %104, %96, %cst_53 {dimension_numbers = #tpu.dot_dimension_numbers<[1], [0], [0], [1], [0, 0, 1, 1], [], []>} : vector<2x32xf32>, vector<32x64xf32>, vector<2x64xf32> -> vector<2x64xf32>
    %c3 = arith.constant 3 : index
    %c0_54 = arith.constant 0 : index
    %c0_55 = arith.constant 0 : index
    %106 = vector.load %arg5[%c3, %c0_54, %c0_55] : memref<4x2x32xf32, #tpu.memory_space<vmem>>, vector<1x2x32xf32>
    %107 = vector.shape_cast %106 : vector<1x2x32xf32> to vector<2x32xf32>
    %cst_56 = arith.constant dense<0.000000e+00> : vector<2x64xf32>
    %108 = tpu.matmul %107, %96, %cst_56 {dimension_numbers = #tpu.dot_dimension_numbers<[1], [0], [0], [1], [0, 0, 1, 1], [], []>} : vector<2x32xf32>, vector<32x64xf32>, vector<2x64xf32> -> vector<2x64xf32>
    %cst_57 = arith.constant dense<0.000000e+00> : vector<64xf32>
    %109 = vector.multi_reduction <add>, %99, %cst_57 [0] : vector<2x64xf32> to vector<64xf32>
    %110 = vector.shape_cast %109 : vector<64xf32> to vector<1x64xf32>
    %cst_58 = arith.constant 0.000000e+00 : f32
    %111 = vector.broadcast %cst_58 : f32 to vector<1x64xf32>
    %112 = arith.addf %111, %110 : vector<1x64xf32>
    %cst_59 = arith.constant dense<0.000000e+00> : vector<64xf32>
    %113 = vector.multi_reduction <add>, %102, %cst_59 [0] : vector<2x64xf32> to vector<64xf32>
    %114 = vector.shape_cast %113 : vector<64xf32> to vector<1x64xf32>
    %115 = arith.addf %112, %114 : vector<1x64xf32>
    %cst_60 = arith.constant dense<0.000000e+00> : vector<64xf32>
    %116 = vector.multi_reduction <add>, %105, %cst_60 [0] : vector<2x64xf32> to vector<64xf32>
    %117 = vector.shape_cast %116 : vector<64xf32> to vector<1x64xf32>
    %118 = arith.addf %115, %117 : vector<1x64xf32>
    %cst_61 = arith.constant dense<0.000000e+00> : vector<64xf32>
    %119 = vector.multi_reduction <add>, %108, %cst_61 [0] : vector<2x64xf32> to vector<64xf32>
    %120 = vector.shape_cast %119 : vector<64xf32> to vector<1x64xf32>
    %121 = arith.addf %118, %120 : vector<1x64xf32>
    %cst_62 = arith.constant 8.000000e+00 : f32
    %122 = vector.broadcast %cst_62 : f32 to vector<1x64xf32>
    %123 = arith.divf %121, %122 : vector<1x64xf32>
    %124 = vector.broadcast %123 : vector<1x64xf32> to vector<2x64xf32>
    %125 = arith.subf %99, %124 : vector<2x64xf32>
    %126 = arith.mulf %125, %125 : vector<2x64xf32>
    %cst_63 = arith.constant dense<0.000000e+00> : vector<64xf32>
    %127 = vector.multi_reduction <add>, %126, %cst_63 [0] : vector<2x64xf32> to vector<64xf32>
    %128 = vector.shape_cast %127 : vector<64xf32> to vector<1x64xf32>
    %cst_64 = arith.constant 0.000000e+00 : f32
    %129 = vector.broadcast %cst_64 : f32 to vector<1x64xf32>
    %130 = arith.addf %129, %128 : vector<1x64xf32>
    %131 = vector.broadcast %123 : vector<1x64xf32> to vector<2x64xf32>
    %132 = arith.subf %102, %131 : vector<2x64xf32>
    %133 = arith.mulf %132, %132 : vector<2x64xf32>
    %cst_65 = arith.constant dense<0.000000e+00> : vector<64xf32>
    %134 = vector.multi_reduction <add>, %133, %cst_65 [0] : vector<2x64xf32> to vector<64xf32>
    %135 = vector.shape_cast %134 : vector<64xf32> to vector<1x64xf32>
    %136 = arith.addf %130, %135 : vector<1x64xf32>
    %137 = vector.broadcast %123 : vector<1x64xf32> to vector<2x64xf32>
    %138 = arith.subf %105, %137 : vector<2x64xf32>
    %139 = arith.mulf %138, %138 : vector<2x64xf32>
    %cst_66 = arith.constant dense<0.000000e+00> : vector<64xf32>
    %140 = vector.multi_reduction <add>, %139, %cst_66 [0] : vector<2x64xf32> to vector<64xf32>
    %141 = vector.shape_cast %140 : vector<64xf32> to vector<1x64xf32>
    %142 = arith.addf %136, %141 : vector<1x64xf32>
    %143 = vector.broadcast %123 : vector<1x64xf32> to vector<2x64xf32>
    %144 = arith.subf %108, %143 : vector<2x64xf32>
    %145 = arith.mulf %144, %144 : vector<2x64xf32>
    %cst_67 = arith.constant dense<0.000000e+00> : vector<64xf32>
    %146 = vector.multi_reduction <add>, %145, %cst_67 [0] : vector<2x64xf32> to vector<64xf32>
    %147 = vector.shape_cast %146 : vector<64xf32> to vector<1x64xf32>
    %148 = arith.addf %142, %147 : vector<1x64xf32>
    %cst_68 = arith.constant 8.000000e+00 : f32
    %149 = vector.broadcast %cst_68 : f32 to vector<1x64xf32>
    %150 = arith.divf %148, %149 : vector<1x64xf32>
    %cst_69 = arith.constant 9.99999974E-6 : f32
    %151 = vector.broadcast %cst_69 : f32 to vector<1x64xf32>
    %152 = arith.addf %150, %151 : vector<1x64xf32>
    %153 = math.rsqrt %152 : vector<1x64xf32>
    %154 = vector.broadcast %123 : vector<1x64xf32> to vector<2x64xf32>
    %155 = arith.subf %99, %154 : vector<2x64xf32>
    %156 = vector.broadcast %153 : vector<1x64xf32> to vector<2x64xf32>
    %157 = arith.mulf %155, %156 : vector<2x64xf32>
    %c0_70 = arith.constant 0 : index
    %c0_71 = arith.constant 0 : index
    %158 = vector.load %arg10[%c0_70, %c0_71] : memref<1x64xf32, #tpu.memory_space<vmem>>, vector<1x64xf32>
    %159 = vector.broadcast %158 : vector<1x64xf32> to vector<2x64xf32>
    %160 = arith.mulf %157, %159 : vector<2x64xf32>
    %c0_72 = arith.constant 0 : index
    %c0_73 = arith.constant 0 : index
    %161 = vector.load %arg11[%c0_72, %c0_73] : memref<1x64xf32, #tpu.memory_space<vmem>>, vector<1x64xf32>
    %162 = vector.broadcast %161 : vector<1x64xf32> to vector<2x64xf32>
    %163 = arith.addf %160, %162 : vector<2x64xf32>
    %164 = vector.broadcast %123 : vector<1x64xf32> to vector<2x64xf32>
    %165 = arith.subf %102, %164 : vector<2x64xf32>
    %166 = vector.broadcast %153 : vector<1x64xf32> to vector<2x64xf32>
    %167 = arith.mulf %165, %166 : vector<2x64xf32>
    %c0_74 = arith.constant 0 : index
    %c0_75 = arith.constant 0 : index
    %168 = vector.load %arg10[%c0_74, %c0_75] : memref<1x64xf32, #tpu.memory_space<vmem>>, vector<1x64xf32>
    %169 = vector.broadcast %168 : vector<1x64xf32> to vector<2x64xf32>
    %170 = arith.mulf %167, %169 : vector<2x64xf32>
    %c0_76 = arith.constant 0 : index
    %c0_77 = arith.constant 0 : index
    %171 = vector.load %arg11[%c0_76, %c0_77] : memref<1x64xf32, #tpu.memory_space<vmem>>, vector<1x64xf32>
    %172 = vector.broadcast %171 : vector<1x64xf32> to vector<2x64xf32>
    %173 = arith.addf %170, %172 : vector<2x64xf32>
    %174 = vector.broadcast %123 : vector<1x64xf32> to vector<2x64xf32>
    %175 = arith.subf %105, %174 : vector<2x64xf32>
    %176 = vector.broadcast %153 : vector<1x64xf32> to vector<2x64xf32>
    %177 = arith.mulf %175, %176 : vector<2x64xf32>
    %c0_78 = arith.constant 0 : index
    %c0_79 = arith.constant 0 : index
    %178 = vector.load %arg10[%c0_78, %c0_79] : memref<1x64xf32, #tpu.memory_space<vmem>>, vector<1x64xf32>
    %179 = vector.broadcast %178 : vector<1x64xf32> to vector<2x64xf32>
    %180 = arith.mulf %177, %179 : vector<2x64xf32>
    %c0_80 = arith.constant 0 : index
    %c0_81 = arith.constant 0 : index
    %181 = vector.load %arg11[%c0_80, %c0_81] : memref<1x64xf32, #tpu.memory_space<vmem>>, vector<1x64xf32>
    %182 = vector.broadcast %181 : vector<1x64xf32> to vector<2x64xf32>
    %183 = arith.addf %180, %182 : vector<2x64xf32>
    %184 = vector.broadcast %123 : vector<1x64xf32> to vector<2x64xf32>
    %185 = arith.subf %108, %184 : vector<2x64xf32>
    %186 = vector.broadcast %153 : vector<1x64xf32> to vector<2x64xf32>
    %187 = arith.mulf %185, %186 : vector<2x64xf32>
    %c0_82 = arith.constant 0 : index
    %c0_83 = arith.constant 0 : index
    %188 = vector.load %arg10[%c0_82, %c0_83] : memref<1x64xf32, #tpu.memory_space<vmem>>, vector<1x64xf32>
    %189 = vector.broadcast %188 : vector<1x64xf32> to vector<2x64xf32>
    %190 = arith.mulf %187, %189 : vector<2x64xf32>
    %c0_84 = arith.constant 0 : index
    %c0_85 = arith.constant 0 : index
    %191 = vector.load %arg11[%c0_84, %c0_85] : memref<1x64xf32, #tpu.memory_space<vmem>>, vector<1x64xf32>
    %192 = vector.broadcast %191 : vector<1x64xf32> to vector<2x64xf32>
    %193 = arith.addf %190, %192 : vector<2x64xf32>
    %cst_86 = arith.constant 0.000000e+00 : f32
    %194 = vector.broadcast %cst_86 : f32 to vector<2x64xf32>
    %195 = arith.cmpf ogt, %163, %194 : vector<2x64xf32>
    %cst_87 = arith.constant 2.000000e-01 : f32
    %196 = vector.broadcast %cst_87 : f32 to vector<2x64xf32>
    %197 = arith.mulf %196, %163 : vector<2x64xf32>
    %198 = arith.select %195, %163, %197 : vector<2x64xi1>, vector<2x64xf32>
    %cst_88 = arith.constant 0.000000e+00 : f32
    %199 = vector.broadcast %cst_88 : f32 to vector<2x64xf32>
    %200 = arith.cmpf ogt, %173, %199 : vector<2x64xf32>
    %cst_89 = arith.constant 2.000000e-01 : f32
    %201 = vector.broadcast %cst_89 : f32 to vector<2x64xf32>
    %202 = arith.mulf %201, %173 : vector<2x64xf32>
    %203 = arith.select %200, %173, %202 : vector<2x64xi1>, vector<2x64xf32>
    %cst_90 = arith.constant 0.000000e+00 : f32
    %204 = vector.broadcast %cst_90 : f32 to vector<2x64xf32>
    %205 = arith.cmpf ogt, %183, %204 : vector<2x64xf32>
    %cst_91 = arith.constant 2.000000e-01 : f32
    %206 = vector.broadcast %cst_91 : f32 to vector<2x64xf32>
    %207 = arith.mulf %206, %183 : vector<2x64xf32>
    %208 = arith.select %205, %183, %207 : vector<2x64xi1>, vector<2x64xf32>
    %cst_92 = arith.constant 0.000000e+00 : f32
    %209 = vector.broadcast %cst_92 : f32 to vector<2x64xf32>
    %210 = arith.cmpf ogt, %193, %209 : vector<2x64xf32>
    %cst_93 = arith.constant 2.000000e-01 : f32
    %211 = vector.broadcast %cst_93 : f32 to vector<2x64xf32>
    %212 = arith.mulf %211, %193 : vector<2x64xf32>
    %213 = arith.select %210, %193, %212 : vector<2x64xi1>, vector<2x64xf32>
    %c0_94 = arith.constant 0 : index
    %c0_95 = arith.constant 0 : index
    %c0_96 = arith.constant 0 : index
    %214 = vector.load %arg12[%c0_94, %c0_95, %c0_96] : memref<4x64x32xf32, #tpu.memory_space<vmem>>, vector<4x64x32xf32>
    %c0_97 = arith.constant 0 : index
    %c0_98 = arith.constant 0 : index
    %215 = vector.load %arg13[%c0_97, %c0_98] : memref<1x32xf32, #tpu.memory_space<vmem>>, vector<1x32xf32>
    %216 = vector.extract_strided_slice %214 {offsets = [0, 0, 0], sizes = [1, 64, 32], strides = [1, 1, 1]} : vector<4x64x32xf32> to vector<1x64x32xf32>
    %217 = vector.shape_cast %216 : vector<1x64x32xf32> to vector<64x32xf32>
    %cst_99 = arith.constant dense<0.000000e+00> : vector<2x32xf32>
    %218 = tpu.matmul %198, %217, %cst_99 {dimension_numbers = #tpu.dot_dimension_numbers<[1], [0], [0], [1], [0, 0, 1, 1], [], []>} : vector<2x64xf32>, vector<64x32xf32>, vector<2x32xf32> -> vector<2x32xf32>
    %219 = vector.broadcast %215 : vector<1x32xf32> to vector<2x32xf32>
    %220 = arith.addf %219, %218 : vector<2x32xf32>
    %221 = vector.extract_strided_slice %214 {offsets = [1, 0, 0], sizes = [1, 64, 32], strides = [1, 1, 1]} : vector<4x64x32xf32> to vector<1x64x32xf32>
    %222 = vector.shape_cast %221 : vector<1x64x32xf32> to vector<64x32xf32>
    %cst_100 = arith.constant dense<0.000000e+00> : vector<2x32xf32>
    %223 = tpu.matmul %203, %222, %cst_100 {dimension_numbers = #tpu.dot_dimension_numbers<[1], [0], [0], [1], [0, 0, 1, 1], [], []>} : vector<2x64xf32>, vector<64x32xf32>, vector<2x32xf32> -> vector<2x32xf32>
    %224 = arith.addf %220, %223 : vector<2x32xf32>
    %225 = vector.extract_strided_slice %214 {offsets = [2, 0, 0], sizes = [1, 64, 32], strides = [1, 1, 1]} : vector<4x64x32xf32> to vector<1x64x32xf32>
    %226 = vector.shape_cast %225 : vector<1x64x32xf32> to vector<64x32xf32>
    %cst_101 = arith.constant dense<0.000000e+00> : vector<2x32xf32>
    %227 = tpu.matmul %208, %226, %cst_101 {dimension_numbers = #tpu.dot_dimension_numbers<[1], [0], [0], [1], [0, 0, 1, 1], [], []>} : vector<2x64xf32>, vector<64x32xf32>, vector<2x32xf32> -> vector<2x32xf32>
    %228 = arith.addf %224, %227 : vector<2x32xf32>
    %229 = vector.extract_strided_slice %214 {offsets = [3, 0, 0], sizes = [1, 64, 32], strides = [1, 1, 1]} : vector<4x64x32xf32> to vector<1x64x32xf32>
    %230 = vector.shape_cast %229 : vector<1x64x32xf32> to vector<64x32xf32>
    %cst_102 = arith.constant dense<0.000000e+00> : vector<2x32xf32>
    %231 = tpu.matmul %213, %230, %cst_102 {dimension_numbers = #tpu.dot_dimension_numbers<[1], [0], [0], [1], [0, 0, 1, 1], [], []>} : vector<2x64xf32>, vector<64x32xf32>, vector<2x32xf32> -> vector<2x32xf32>
    %232 = arith.addf %228, %231 : vector<2x32xf32>
    %c0_103 = arith.constant 0 : index
    %c0_104 = arith.constant 0 : index
    %233 = vector.load %arg14[%c0_103, %c0_104] : memref<1x32xf32, #tpu.memory_space<vmem>>, vector<1x32xf32>
    %c0_105 = arith.constant 0 : index
    %c0_106 = arith.constant 0 : index
    %234 = vector.load %arg15[%c0_105, %c0_106] : memref<1x32xf32, #tpu.memory_space<vmem>>, vector<1x32xf32>
    %cst_107 = arith.constant dense<0.000000e+00> : vector<32xf32>
    %235 = vector.multi_reduction <add>, %232, %cst_107 [0] : vector<2x32xf32> to vector<32xf32>
    %236 = vector.shape_cast %235 : vector<32xf32> to vector<1x32xf32>
    %cst_108 = arith.constant 2.000000e+00 : f32
    %237 = vector.broadcast %cst_108 : f32 to vector<1x32xf32>
    %238 = arith.divf %236, %237 : vector<1x32xf32>
    %239 = vector.broadcast %238 : vector<1x32xf32> to vector<2x32xf32>
    %240 = arith.subf %232, %239 : vector<2x32xf32>
    %241 = arith.mulf %240, %240 : vector<2x32xf32>
    %cst_109 = arith.constant dense<0.000000e+00> : vector<32xf32>
    %242 = vector.multi_reduction <add>, %241, %cst_109 [0] : vector<2x32xf32> to vector<32xf32>
    %243 = vector.shape_cast %242 : vector<32xf32> to vector<1x32xf32>
    %cst_110 = arith.constant 2.000000e+00 : f32
    %244 = vector.broadcast %cst_110 : f32 to vector<1x32xf32>
    %245 = arith.divf %243, %244 : vector<1x32xf32>
    %246 = vector.broadcast %238 : vector<1x32xf32> to vector<2x32xf32>
    %247 = arith.subf %232, %246 : vector<2x32xf32>
    %cst_111 = arith.constant 9.99999974E-6 : f32
    %248 = vector.broadcast %cst_111 : f32 to vector<1x32xf32>
    %249 = arith.addf %245, %248 : vector<1x32xf32>
    %250 = math.rsqrt %249 : vector<1x32xf32>
    %251 = vector.broadcast %250 : vector<1x32xf32> to vector<2x32xf32>
    %252 = arith.mulf %247, %251 : vector<2x32xf32>
    %253 = vector.broadcast %233 : vector<1x32xf32> to vector<2x32xf32>
    %254 = arith.mulf %252, %253 : vector<2x32xf32>
    %255 = vector.broadcast %234 : vector<1x32xf32> to vector<2x32xf32>
    %256 = arith.addf %254, %255 : vector<2x32xf32>
    %257 = math.tanh %256 : vector<2x32xf32>
    %c0_112 = arith.constant 0 : index
    %c0_113 = arith.constant 0 : index
    %258 = vector.load %arg18[%c0_112, %c0_113] : memref<32x32xf32, #tpu.memory_space<vmem>>, vector<32x32xf32>
    %cst_114 = arith.constant dense<0.000000e+00> : vector<2x32xf32>
    %259 = tpu.matmul %31, %258, %cst_114 {dimension_numbers = #tpu.dot_dimension_numbers<[1], [0], [0], [1], [0, 0, 1, 1], [], []>} : vector<2x32xf32>, vector<32x32xf32>, vector<2x32xf32> -> vector<2x32xf32>
    %c0_115 = arith.constant 0 : index
    %c0_116 = arith.constant 0 : index
    %260 = vector.load %arg19[%c0_115, %c0_116] : memref<32x32xf32, #tpu.memory_space<vmem>>, vector<32x32xf32>
    %cst_117 = arith.constant dense<0.000000e+00> : vector<2x32xf32>
    %261 = tpu.matmul %257, %260, %cst_117 {dimension_numbers = #tpu.dot_dimension_numbers<[1], [0], [0], [1], [0, 0, 1, 1], [], []>} : vector<2x32xf32>, vector<32x32xf32>, vector<2x32xf32> -> vector<2x32xf32>
    %262 = arith.addf %259, %261 : vector<2x32xf32>
    %c0_118 = arith.constant 0 : index
    %c0_119 = arith.constant 0 : index
    %263 = vector.load %arg20[%c0_118, %c0_119] : memref<1x32xf32, #tpu.memory_space<vmem>>, vector<1x32xf32>
    %264 = vector.broadcast %263 : vector<1x32xf32> to vector<2x32xf32>
    %265 = arith.addf %262, %264 : vector<2x32xf32>
    %c0_120 = arith.constant 0 : index
    %c0_121 = arith.constant 0 : index
    %266 = vector.load %arg21[%c0_120, %c0_121] : memref<1x32xf32, #tpu.memory_space<vmem>>, vector<1x32xf32>
    %c0_122 = arith.constant 0 : index
    %c0_123 = arith.constant 0 : index
    %267 = vector.load %arg22[%c0_122, %c0_123] : memref<1x32xf32, #tpu.memory_space<vmem>>, vector<1x32xf32>
    %cst_124 = arith.constant dense<0.000000e+00> : vector<32xf32>
    %268 = vector.multi_reduction <add>, %265, %cst_124 [0] : vector<2x32xf32> to vector<32xf32>
    %269 = vector.shape_cast %268 : vector<32xf32> to vector<1x32xf32>
    %cst_125 = arith.constant 2.000000e+00 : f32
    %270 = vector.broadcast %cst_125 : f32 to vector<1x32xf32>
    %271 = arith.divf %269, %270 : vector<1x32xf32>
    %272 = vector.broadcast %271 : vector<1x32xf32> to vector<2x32xf32>
    %273 = arith.subf %265, %272 : vector<2x32xf32>
    %274 = arith.mulf %273, %273 : vector<2x32xf32>
    %cst_126 = arith.constant dense<0.000000e+00> : vector<32xf32>
    %275 = vector.multi_reduction <add>, %274, %cst_126 [0] : vector<2x32xf32> to vector<32xf32>
    %276 = vector.shape_cast %275 : vector<32xf32> to vector<1x32xf32>
    %cst_127 = arith.constant 2.000000e+00 : f32
    %277 = vector.broadcast %cst_127 : f32 to vector<1x32xf32>
    %278 = arith.divf %276, %277 : vector<1x32xf32>
    %279 = vector.broadcast %271 : vector<1x32xf32> to vector<2x32xf32>
    %280 = arith.subf %265, %279 : vector<2x32xf32>
    %cst_128 = arith.constant 9.99999974E-6 : f32
    %281 = vector.broadcast %cst_128 : f32 to vector<1x32xf32>
    %282 = arith.addf %278, %281 : vector<1x32xf32>
    %283 = math.rsqrt %282 : vector<1x32xf32>
    %284 = vector.broadcast %283 : vector<1x32xf32> to vector<2x32xf32>
    %285 = arith.mulf %280, %284 : vector<2x32xf32>
    %286 = vector.broadcast %266 : vector<1x32xf32> to vector<2x32xf32>
    %287 = arith.mulf %285, %286 : vector<2x32xf32>
    %288 = vector.broadcast %267 : vector<1x32xf32> to vector<2x32xf32>
    %289 = arith.addf %287, %288 : vector<2x32xf32>
    %290 = math.tanh %289 : vector<2x32xf32>
    %c0_129 = arith.constant 0 : index
    %c0_130 = arith.constant 0 : index
    %291 = vector.load %arg28[%c0_129, %c0_130] : memref<2x32xf32, #tpu.memory_space<vmem>>, vector<2x32xf32>
    tpu.vector_store %arg28[%c0_129, %c0_130], %290 {strides = array<i32>} : memref<2x32xf32, #tpu.memory_space<vmem>>, vector<2x32xf32>,
    %c0_131 = arith.constant 0 : index
    %c0_132 = arith.constant 0 : index
    %292 = vector.load %arg23[%c0_131, %c0_132] : memref<32x6xf32, #tpu.memory_space<vmem>>, vector<32x6xf32>
    %cst_133 = arith.constant dense<0.000000e+00> : vector<2x6xf32>
    %293 = tpu.matmul %290, %292, %cst_133 {dimension_numbers = #tpu.dot_dimension_numbers<[1], [0], [0], [1], [0, 0, 1, 1], [], []>} : vector<2x32xf32>, vector<32x6xf32>, vector<2x6xf32> -> vector<2x6xf32>
    %c0_134 = arith.constant 0 : index
    %c0_135 = arith.constant 0 : index
    %294 = vector.load %arg24[%c0_134, %c0_135] : memref<1x6xf32, #tpu.memory_space<vmem>>, vector<1x6xf32>
    %295 = vector.broadcast %294 : vector<1x6xf32> to vector<2x6xf32>
    %296 = arith.addf %293, %295 : vector<2x6xf32>
    %c0_136 = arith.constant 0 : index
    %c0_137 = arith.constant 0 : index
    %297 = vector.load %arg29[%c0_136, %c0_137] : memref<2x6xf32, #tpu.memory_space<vmem>>, vector<2x6xf32>
    tpu.vector_store %arg29[%c0_136, %c0_137], %296 {strides = array<i32>} : memref<2x6xf32, #tpu.memory_space<vmem>>, vector<2x6xf32>,
    %298 = arith.truncf %290 : vector<2x32xf32> to vector<2x32xbf16>
    %c0_138 = arith.constant 0 : index
    %c0_139 = arith.constant 0 : index
    %299 = vector.load %arg25[%c0_138, %c0_139] : memref<32x2048xbf16, #tpu.memory_space<vmem>>, vector<32x2048xbf16>
    %cst_140 = arith.constant dense<0.000000e+00> : vector<2x2048xf32>
    %300 = tpu.matmul %298, %299, %cst_140 {dimension_numbers = #tpu.dot_dimension_numbers<[1], [0], [0], [1], [0, 0, 1, 1], [], []>} : vector<2x32xbf16>, vector<32x2048xbf16>, vector<2x2048xf32> -> vector<2x2048xf32>
    %c0_141 = arith.constant 0 : index
    %c0_142 = arith.constant 0 : index
    %301 = vector.load %arg30[%c0_141, %c0_142] : memref<2x2048xf32, #tpu.memory_space<vmem>>, vector<2x2048xf32>
    tpu.vector_store %arg30[%c0_141, %c0_142], %300 {strides = array<i32>} : memref<2x2048xf32, #tpu.memory_space<vmem>>, vector<2x2048xf32>,
    return
  }
}

module attributes {stable_mosaic.version = 11 : i64} {
  func.func @_convt_mid_kernel(%arg0: memref<128x64xf32, #tpu.memory_space<vmem>>, %arg1: memref<1x64xf32, #tpu.memory_space<vmem>>, %arg2: memref<1x64xf32, #tpu.memory_space<vmem>>, %arg3: memref<64x1024xbf16, #tpu.memory_space<vmem>>, %arg4: memref<128x1024xf32, #tpu.memory_space<vmem>>) attributes {dimension_semantics = [], scalar_prefetch = 0 : i64, scratch_operands = 0 : i64, tpu.core_type = #tpu.core_type<tc>} {
    %c0 = arith.constant 0 : index
    %c0_0 = arith.constant 0 : index
    %0 = vector.load %arg0[%c0, %c0_0] : memref<128x64xf32, #tpu.memory_space<vmem>>, vector<128x64xf32>
    %c0_1 = arith.constant 0 : index
    %c0_2 = arith.constant 0 : index
    %1 = vector.load %arg1[%c0_1, %c0_2] : memref<1x64xf32, #tpu.memory_space<vmem>>, vector<1x64xf32>
    %c0_3 = arith.constant 0 : index
    %c0_4 = arith.constant 0 : index
    %2 = vector.load %arg2[%c0_3, %c0_4] : memref<1x64xf32, #tpu.memory_space<vmem>>, vector<1x64xf32>
    %cst = arith.constant dense<0.000000e+00> : vector<64xf32>
    %3 = vector.multi_reduction <add>, %0, %cst [0] : vector<128x64xf32> to vector<64xf32>
    %4 = vector.shape_cast %3 : vector<64xf32> to vector<1x64xf32>
    %cst_5 = arith.constant 1.280000e+02 : f32
    %5 = vector.broadcast %cst_5 : f32 to vector<1x64xf32>
    %6 = arith.divf %4, %5 : vector<1x64xf32>
    %7 = vector.broadcast %6 : vector<1x64xf32> to vector<128x64xf32>
    %8 = arith.subf %0, %7 : vector<128x64xf32>
    %9 = arith.mulf %8, %8 : vector<128x64xf32>
    %cst_6 = arith.constant dense<0.000000e+00> : vector<64xf32>
    %10 = vector.multi_reduction <add>, %9, %cst_6 [0] : vector<128x64xf32> to vector<64xf32>
    %11 = vector.shape_cast %10 : vector<64xf32> to vector<1x64xf32>
    %cst_7 = arith.constant 1.280000e+02 : f32
    %12 = vector.broadcast %cst_7 : f32 to vector<1x64xf32>
    %13 = arith.divf %11, %12 : vector<1x64xf32>
    %14 = vector.broadcast %6 : vector<1x64xf32> to vector<128x64xf32>
    %15 = arith.subf %0, %14 : vector<128x64xf32>
    %cst_8 = arith.constant 9.99999974E-6 : f32
    %16 = vector.broadcast %cst_8 : f32 to vector<1x64xf32>
    %17 = arith.addf %13, %16 : vector<1x64xf32>
    %18 = math.rsqrt %17 : vector<1x64xf32>
    %19 = vector.broadcast %18 : vector<1x64xf32> to vector<128x64xf32>
    %20 = arith.mulf %15, %19 : vector<128x64xf32>
    %21 = vector.broadcast %1 : vector<1x64xf32> to vector<128x64xf32>
    %22 = arith.mulf %20, %21 : vector<128x64xf32>
    %23 = vector.broadcast %2 : vector<1x64xf32> to vector<128x64xf32>
    %24 = arith.addf %22, %23 : vector<128x64xf32>
    %cst_9 = arith.constant 0.000000e+00 : f32
    %25 = vector.broadcast %cst_9 : f32 to vector<128x64xf32>
    %26 = arith.maximumf %24, %25 : vector<128x64xf32>
    %27 = arith.truncf %26 : vector<128x64xf32> to vector<128x64xbf16>
    %c0_10 = arith.constant 0 : index
    %c0_11 = arith.constant 0 : index
    %28 = vector.load %arg3[%c0_10, %c0_11] : memref<64x1024xbf16, #tpu.memory_space<vmem>>, vector<64x1024xbf16>
    %cst_12 = arith.constant dense<0.000000e+00> : vector<128x1024xf32>
    %29 = tpu.matmul %27, %28, %cst_12 {dimension_numbers = #tpu.dot_dimension_numbers<[1], [0], [0], [1], [0, 0, 1, 1], [], []>} : vector<128x64xbf16>, vector<64x1024xbf16>, vector<128x1024xf32> -> vector<128x1024xf32>
    %c0_13 = arith.constant 0 : index
    %c0_14 = arith.constant 0 : index
    %30 = vector.load %arg4[%c0_13, %c0_14] : memref<128x1024xf32, #tpu.memory_space<vmem>>, vector<128x1024xf32>
    tpu.vector_store %arg4[%c0_13, %c0_14], %29 {strides = array<i32>} : memref<128x1024xf32, #tpu.memory_space<vmem>>, vector<128x1024xf32>,
    return
  }
}

module attributes {stable_mosaic.version = 11 : i64} {
  func.func @_convt_head_kernel(%arg0: memref<512x64xf32, #tpu.memory_space<vmem>>, %arg1: memref<1x64xf32, #tpu.memory_space<vmem>>, %arg2: memref<1x64xf32, #tpu.memory_space<vmem>>, %arg3: memref<64x128xbf16, #tpu.memory_space<vmem>>, %arg4: memref<512x128xf32, #tpu.memory_space<vmem>>, %arg5: memref<512x64xf32, #tpu.memory_space<vmem>>) attributes {dimension_semantics = [], scalar_prefetch = 0 : i64, scratch_operands = 0 : i64, tpu.core_type = #tpu.core_type<tc>} {
    %c0 = arith.constant 0 : index
    %c0_0 = arith.constant 0 : index
    %0 = vector.load %arg0[%c0, %c0_0] : memref<512x64xf32, #tpu.memory_space<vmem>>, vector<512x64xf32>
    %c0_1 = arith.constant 0 : index
    %c0_2 = arith.constant 0 : index
    %1 = vector.load %arg1[%c0_1, %c0_2] : memref<1x64xf32, #tpu.memory_space<vmem>>, vector<1x64xf32>
    %c0_3 = arith.constant 0 : index
    %c0_4 = arith.constant 0 : index
    %2 = vector.load %arg2[%c0_3, %c0_4] : memref<1x64xf32, #tpu.memory_space<vmem>>, vector<1x64xf32>
    %cst = arith.constant dense<0.000000e+00> : vector<64xf32>
    %3 = vector.multi_reduction <add>, %0, %cst [0] : vector<512x64xf32> to vector<64xf32>
    %4 = vector.shape_cast %3 : vector<64xf32> to vector<1x64xf32>
    %cst_5 = arith.constant 5.120000e+02 : f32
    %5 = vector.broadcast %cst_5 : f32 to vector<1x64xf32>
    %6 = arith.divf %4, %5 : vector<1x64xf32>
    %7 = vector.broadcast %6 : vector<1x64xf32> to vector<512x64xf32>
    %8 = arith.subf %0, %7 : vector<512x64xf32>
    %9 = arith.mulf %8, %8 : vector<512x64xf32>
    %cst_6 = arith.constant dense<0.000000e+00> : vector<64xf32>
    %10 = vector.multi_reduction <add>, %9, %cst_6 [0] : vector<512x64xf32> to vector<64xf32>
    %11 = vector.shape_cast %10 : vector<64xf32> to vector<1x64xf32>
    %cst_7 = arith.constant 5.120000e+02 : f32
    %12 = vector.broadcast %cst_7 : f32 to vector<1x64xf32>
    %13 = arith.divf %11, %12 : vector<1x64xf32>
    %14 = vector.broadcast %6 : vector<1x64xf32> to vector<512x64xf32>
    %15 = arith.subf %0, %14 : vector<512x64xf32>
    %cst_8 = arith.constant 9.99999974E-6 : f32
    %16 = vector.broadcast %cst_8 : f32 to vector<1x64xf32>
    %17 = arith.addf %13, %16 : vector<1x64xf32>
    %18 = math.rsqrt %17 : vector<1x64xf32>
    %19 = vector.broadcast %18 : vector<1x64xf32> to vector<512x64xf32>
    %20 = arith.mulf %15, %19 : vector<512x64xf32>
    %21 = vector.broadcast %1 : vector<1x64xf32> to vector<512x64xf32>
    %22 = arith.mulf %20, %21 : vector<512x64xf32>
    %23 = vector.broadcast %2 : vector<1x64xf32> to vector<512x64xf32>
    %24 = arith.addf %22, %23 : vector<512x64xf32>
    %cst_9 = arith.constant 0.000000e+00 : f32
    %25 = vector.broadcast %cst_9 : f32 to vector<512x64xf32>
    %26 = arith.maximumf %24, %25 : vector<512x64xf32>
    %c0_10 = arith.constant 0 : index
    %c0_11 = arith.constant 0 : index
    %27 = vector.load %arg5[%c0_10, %c0_11] : memref<512x64xf32, #tpu.memory_space<vmem>>, vector<512x64xf32>
    tpu.vector_store %arg5[%c0_10, %c0_11], %26 {strides = array<i32>} : memref<512x64xf32, #tpu.memory_space<vmem>>, vector<512x64xf32>,
    %28 = arith.truncf %26 : vector<512x64xf32> to vector<512x64xbf16>
    %c0_12 = arith.constant 0 : index
    %c0_13 = arith.constant 0 : index
    %29 = vector.load %arg3[%c0_12, %c0_13] : memref<64x128xbf16, #tpu.memory_space<vmem>>, vector<64x128xbf16>
    %cst_14 = arith.constant dense<0.000000e+00> : vector<512x128xf32>
    %30 = tpu.matmul %28, %29, %cst_14 {dimension_numbers = #tpu.dot_dimension_numbers<[1], [0], [0], [1], [0, 0, 1, 1], [], []>} : vector<512x64xbf16>, vector<64x128xbf16>, vector<512x128xf32> -> vector<512x128xf32>
    %c0_15 = arith.constant 0 : index
    %c0_16 = arith.constant 0 : index
    %31 = vector.load %arg4[%c0_15, %c0_16] : memref<512x128xf32, #tpu.memory_space<vmem>>, vector<512x128xf32>
    tpu.vector_store %arg4[%c0_15, %c0_16], %30 {strides = array<i32>} : memref<512x128xf32, #tpu.memory_space<vmem>>, vector<512x128xf32>,
    return
  }
}

</mosaic_0001>

<llo_original>
// kernel: netG_forward.12
$region0: #{netG_forward.12}
  #allocation0 [shape = 'u32[]', space=smem, size = 0x4, offset = 0x4, fixed_abs, tag = 'smem constant byte address 0x4 - core index']
  #allocation1 [shape = 'u32[72,128]{1,0:T(1,128)}', space=vmem, size = 0x9000, scoped, tag = 'internal scratch']
  %s0 = inlined_call_operand.vmem [shape: f32[2,64], index: 0, kind: input, shape index: {}]
  %s1 = inlined_call_operand.vmem [shape: f32[2,32], index: 1, kind: input, shape index: {}]
  %s2 = inlined_call_operand.vmem [shape: f32[64,128], index: 2, kind: input, shape index: {}]
  %s3 = inlined_call_operand.vmem [shape: f32[1,128], index: 3, kind: input, shape index: {}]
  %s4 = inlined_call_operand.vmem [shape: bf16[32,1024], index: 4, kind: input, shape index: {}]
  %s5 = inlined_call_operand.vmem [shape: f32[2,32], index: 5, kind: output, shape index: {0}]
  %s6 = inlined_call_operand.vmem [shape: f32[2,32], index: 6, kind: output, shape index: {1}]
  %s7 = inlined_call_operand.vmem [shape: f32[2,1024], index: 7, kind: output, shape index: {2}]
  %8 = xla_tuple %s5, %s6, %s7
  %s9 = sld [smem:[#allocation0]]
  $region46: #{netG_forward.12} parent=0
    _
  %s11 = ssub.s32 1, %s9
  %s12 = scalar_select 0, %s11, %s9
  // Predicated region
  $region2: #{netG_forward.12} parent=0 // pred_check
    _
  $region3: #{netG_forward.12} parent=0 // pred_check_branch
    %14 = sbr.rel (0) target = $region5
  $region4: #{netG_forward.12} parent=0 // pred_region
    _
  $region5: #{netG_forward.12} parent=0 // pred_fallthru
    _
  // Predicated region
  $region6: #{netG_forward.12} parent=0 // pred_check
    _
  $region7: #{netG_forward.12} parent=0 // pred_check_branch
    %16 = sbr.rel (0) target = $region9
  $region8: #{netG_forward.12} parent=0 // pred_region
    _
  $region9: #{netG_forward.12} parent=0 // pred_fallthru
    _
  // Predicated region
  $region10: #{netG_forward.12} parent=0 // pred_check
    _
  $region11: #{netG_forward.12} parent=0 // pred_check_branch
    %18 = sbr.rel (0) target = $region13
  $region12: #{netG_forward.12} parent=0 // pred_region
    _
  $region13: #{netG_forward.12} parent=0 // pred_fallthru
    _
  // Predicated region
  $region14: #{netG_forward.12} parent=0 // pred_check
    _
  $region15: #{netG_forward.12} parent=0 // pred_check_branch
    %20 = sbr.rel (0) target = $region17
  $region16: #{netG_forward.12} parent=0 // pred_region
    _
  $region17: #{netG_forward.12} parent=0 // pred_fallthru
    _
  // Predicated region
  $region18: #{netG_forward.12} parent=0 // pred_check
    _
  $region19: #{netG_forward.12} parent=0 // pred_check_branch
    %22 = sbr.rel (0) target = $region21
  $region20: #{netG_forward.12} parent=0 // pred_region
    _
  $region21: #{netG_forward.12} parent=0 // pred_fallthru
    _
  %v24 = vld [vmem:[%s0] sm:$0x3]
  %v25 = vld [vmem:[%s2] sm:$0xff]
  %v26 = vld [vmem:[%s2 + $0x8] sm:$0xff]
  %v27 = vld [vmem:[%s2 + $0x10] sm:$0xff]
  %v28 = vld [vmem:[%s2 + $0x18] sm:$0xff]
  %v29 = vld [vmem:[%s2 + $0x20] sm:$0xff]
  %v30 = vld [vmem:[%s2 + $0x28] sm:$0xff]
  %v31 = vld [vmem:[%s2 + $0x30] sm:$0xff]
  %v32 = vld [vmem:[%s2 + $0x38] sm:$0xff]
  %v33 = vld [vmem:[%s3] sm:$0x1]
  %v35 = vperm.slane %v33, 0
  %vm37 = vcmask 523264
  %v39 = vsel %vm37, %v24, 0
  %41 = vmatpush.msra.mxu0 0.0
  %42 = vmatpush.msra.mxu0 0.0
  %43 = vmatpush.msra.mxu0 0.0
  %44 = vmatpush.msra.mxu0 0.0
  %45 = vmatpush.msra.mxu0 0.0
  %46 = vmatpush.msra.mxu0 0.0
  %47 = vmatpush.msra.mxu0 0.0
  %48 = vmatpush.msra.mxu0 0.0
  %49 = vmatpush.msra.mxu0 %v32
  %50 = vmatpush.msra.mxu0 %v31
  %51 = vmatpush.msra.mxu0 %v30
  %52 = vmatpush.msra.mxu0 %v29
  %53 = vmatpush.msra.mxu0 %v28
  %54 = vmatpush.msra.mxu0 %v27
  %55 = vmatpush.msra.mxu0 %v26
  %56 = vmatpush.msra.mxu0 %v25
  %57 = vmatmul.f32.gmra.mxu0 %v39
  %v58 = vpop.f32.mrf.mxu0
  %v59 = vadd.f32 %v35, %v58
  %60 = vdwg.mxu0
  %v61 = vld [vmem:[%s1] sm:$0x3]
  %v62 = vxor.u32 %v59, 2147483648
  %v63 = vmul.f32 %v62, 1.442695
  %v64 = vpow.pop %v63
  %v65 = vadd.f32 %v64, 1.0
  %v66 = vrcp.pop %v65
  %v67 = vmul.f32 %v65, %v66
  %v68 = vsub.f32 1.0, %v67
  %v69 = vmul.f32 %v66, %v68
  %v70 = vadd.f32 %v66, %v69
  %vm71 = vweird.f32 %v65
  %vm72 = vweird.f32 %v66
  %vm73 = vmor %vm71, %vm72
  %v74 = vsel %vm73, %v66, %v70
  %v75 = vand.u32 2147483647, %v65
  %vm76 = vcmp.eq.f32.partialorder %v75, 8.507059e+37
  %v77 = vand.u32 %v65, 2147483648
  %v78 = vor.u32 1.1754944e-38, %v77
  %v79 = vsel %vm76, %v78, %v74
  %v80 = vmul.f32 1.0, %v79
  %v81 = vtanh.pop %v59
  %83 = vrot.lane.b32.xlu0 %v61, 32
  %v84 = vpop.permute.xlu0 %83
  %v86 = vmul.f32 %v80, %v84
  %88 = vrot.lane.b32.xlu0 %v81, 64
  %v89 = vpop.permute.xlu0 %88
  %v91 = vmul.f32 %v80, %v89
  %93 = vrot.lane.b32.xlu0 %v91, 32
  %v94 = vpop.permute.xlu0 %93
  %v96 = vadd.f32 %v86, %v94
  %v97 = vtanh.pop %v96
  %99 = vrot.lane.b32.xlu0 %v97, 64
  %v100 = vpop.permute.xlu0 %99
  %v102 = vmul.f32 %v80, %v100
  %104 = vrot.lane.b32.xlu0 %v102, 32
  %v105 = vpop.permute.xlu0 %104
  %vm107 = vcmask 254976
  %108 = vst.msk [vmem:[%s5] sm:$0x3] %vm107, %v105
  %110 = vrot.lane.b32.xlu0 %v96, 96
  %v111 = vpop.permute.xlu0 %110
  %113 = vst.msk [vmem:[%s6] sm:$0x3] %vm107, %v111
  %v114 = vld [vmem:[%s0] sm:$0x3]
  %v115 = vpack.c.bf16 %v114, %v114
  %v116 = vld [vmem:[%s4] sm:$0xff]
  %v117 = vld [vmem:[%s4 + $0x8] sm:$0xff]
  %v118 = vld [vmem:[%s4 + $0x10] sm:$0xff]
  %v119 = vld [vmem:[%s4 + $0x18] sm:$0xff]
  %v120 = vld [vmem:[%s4 + $0x20] sm:$0xff]
  %v121 = vld [vmem:[%s4 + $0x28] sm:$0xff]
  %v122 = vld [vmem:[%s4 + $0x30] sm:$0xff]
  %v123 = vld [vmem:[%s4 + $0x38] sm:$0xff]
  %v124 = vld [vmem:[%s4 + $0x40] sm:$0xff]
  %v125 = vld [vmem:[%s4 + $0x48] sm:$0xff]
  %v126 = vld [vmem:[%s4 + $0x50] sm:$0xff]
  %v127 = vld [vmem:[%s4 + $0x58] sm:$0xff]
  %v128 = vld [vmem:[%s4 + $0x60] sm:$0xff]
  %v129 = vld [vmem:[%s4 + $0x68] sm:$0xff]
  %v130 = vld [vmem:[%s4 + $0x70] sm:$0xff]
  %v131 = vld [vmem:[%s4 + $0x78] sm:$0xff]
  %v148 = vunpack.c.l.b16 %v116
  %v149 = vunpack.c.h.b16 %v116
  %v150 = vunpack.c.l.b16 %v117
  %v151 = vunpack.c.h.b16 %v117
  %v152 = vunpack.c.l.b16 %v118
  %v153 = vunpack.c.h.b16 %v118
  %v154 = vunpack.c.l.b16 %v119
  %v155 = vunpack.c.h.b16 %v119
  %v156 = vunpack.c.l.b16 %v120
  %v157 = vunpack.c.h.b16 %v120
  %v158 = vunpack.c.l.b16 %v121
  %v159 = vunpack.c.h.b16 %v121
  %v160 = vunpack.c.l.b16 %v122
  %v161 = vunpack.c.h.b16 %v122
  %v162 = vunpack.c.l.b16 %v123
  %v163 = vunpack.c.h.b16 %v123
  %v164 = vunpack.c.l.b16 %v124
  %v165 = vunpack.c.h.b16 %v124
  %v166 = vunpack.c.l.b16 %v125
  %v167 = vunpack.c.h.b16 %v125
  %v168 = vunpack.c.l.b16 %v126
  %v169 = vunpack.c.h.b16 %v126
  %v170 = vunpack.c.l.b16 %v127
  %v171 = vunpack.c.h.b16 %v127
  %v172 = vunpack.c.l.b16 %v128
  %v173 = vunpack.c.h.b16 %v128
  %v174 = vunpack.c.l.b16 %v129
  %v175 = vunpack.c.h.b16 %v129
  %v176 = vunpack.c.l.b16 %v130
  %v177 = vunpack.c.h.b16 %v130
  %v178 = vunpack.c.l.b16 %v131
  %v179 = vunpack.c.h.b16 %v131
  %v180 = vpack.c.b16 %v156, %v148
  %v181 = vpack.c.b16 %v157, %v149
  %v182 = vpack.c.b16 %v158, %v150
  %v183 = vpack.c.b16 %v159, %v151
  %v184 = vpack.c.b16 %v160, %v152
  %v185 = vpack.c.b16 %v161, %v153
  %v186 = vpack.c.b16 %v162, %v154
  %v187 = vpack.c.b16 %v163, %v155
  %v188 = vpack.c.b16 %v172, %v164
  %v189 = vpack.c.b16 %v173, %v165
  %v190 = vpack.c.b16 %v174, %v166
  %v191 = vpack.c.b16 %v175, %v167
  %v192 = vpack.c.b16 %v176, %v168
  %v193 = vpack.c.b16 %v177, %v169
  %v194 = vpack.c.b16 %v178, %v170
  %v195 = vpack.c.b16 %v179, %v171
  %vm212 = vcmask 261120
  %v214 = vsel %vm212, %v115, 0
  %216 = vmatpush.bf16.msra.mxu0 0
  %217 = vmatpush.bf16.msra.mxu0 0
  %218 = vmatpush.bf16.msra.mxu0 0
  %219 = vmatpush.bf16.msra.mxu0 0
  %220 = vmatpush.bf16.msra.mxu0 0
  %221 = vmatpush.bf16.msra.mxu0 0
  %222 = vmatpush.bf16.msra.mxu0 %v188
  %223 = vmatpush.bf16.msra.mxu0 %v180
  %224 = vmatmul.bf16.gmra.mxu0 %v214
  %v225 = vpop.f32.mrf.mxu0
  %v226 = vadd.f32 0.0, %v225
  %v227 = vpop.f32.mrf.mxu0
  %228 = vdwg.mxu0
  %229 = vmatpush.bf16.msra.mxu0 0
  %230 = vmatpush.bf16.msra.mxu0 0
  %231 = vmatpush.bf16.msra.mxu0 0
  %232 = vmatpush.bf16.msra.mxu0 0
  %233 = vmatpush.bf16.msra.mxu0 0
  %234 = vmatpush.bf16.msra.mxu0 0
  %235 = vmatpush.bf16.msra.mxu0 %v189
  %236 = vmatpush.bf16.msra.mxu0 %v181
  %237 = vmatmul.bf16.gmra.mxu0 %v214
  %v238 = vpop.f32.mrf.mxu0
  %v239 = vadd.f32 0.0, %v238
  %v240 = vpop.f32.mrf.mxu0
  %241 = vdwg.mxu0
  %242 = vmatpush.bf16.msra.mxu0 0
  %243 = vmatpush.bf16.msra.mxu0 0
  %244 = vmatpush.bf16.msra.mxu0 0
  %245 = vmatpush.bf16.msra.mxu0 0
  %246 = vmatpush.bf16.msra.mxu0 0
  %247 = vmatpush.bf16.msra.mxu0 0
  %248 = vmatpush.bf16.msra.mxu0 %v190
  %249 = vmatpush.bf16.msra.mxu0 %v182
  %250 = vmatmul.bf16.gmra.mxu0 %v214
  %v251 = vpop.f32.mrf.mxu0
  %v252 = vadd.f32 0.0, %v251
  %v253 = vpop.f32.mrf.mxu0
  %254 = vdwg.mxu0
  %255 = vmatpush.bf16.msra.mxu0 0
  %256 = vmatpush.bf16.msra.mxu0 0
  %257 = vmatpush.bf16.msra.mxu0 0
  %258 = vmatpush.bf16.msra.mxu0 0
  %259 = vmatpush.bf16.msra.mxu0 0
  %260 = vmatpush.bf16.msra.mxu0 0
  %261 = vmatpush.bf16.msra.mxu0 %v191
  %262 = vmatpush.bf16.msra.mxu0 %v183
  %263 = vmatmul.bf16.gmra.mxu0 %v214
  %v264 = vpop.f32.mrf.mxu0
  %v265 = vadd.f32 0.0, %v264
  %v266 = vpop.f32.mrf.mxu0
  %267 = vdwg.mxu0
  %268 = vmatpush.bf16.msra.mxu0 0
  %269 = vmatpush.bf16.msra.mxu0 0
  %270 = vmatpush.bf16.msra.mxu0 0
  %271 = vmatpush.bf16.msra.mxu0 0
  %272 = vmatpush.bf16.msra.mxu0 0
  %273 = vmatpush.bf16.msra.mxu0 0
  %274 = vmatpush.bf16.msra.mxu0 %v192
  %275 = vmatpush.bf16.msra.mxu0 %v184
  %276 = vmatmul.bf16.gmra.mxu0 %v214
  %v277 = vpop.f32.mrf.mxu0
  %v278 = vadd.f32 0.0, %v277
  %v279 = vpop.f32.mrf.mxu0
  %280 = vdwg.mxu0
  %281 = vmatpush.bf16.msra.mxu0 0
  %282 = vmatpush.bf16.msra.mxu0 0
  %283 = vmatpush.bf16.msra.mxu0 0
  %284 = vmatpush.bf16.msra.mxu0 0
  %285 = vmatpush.bf16.msra.mxu0 0
  %286 = vmatpush.bf16.msra.mxu0 0
  %287 = vmatpush.bf16.msra.mxu0 %v193
  %288 = vmatpush.bf16.msra.mxu0 %v185
  %289 = vmatmul.bf16.gmra.mxu0 %v214
  %v290 = vpop.f32.mrf.mxu0
  %v291 = vadd.f32 0.0, %v290
  %v292 = vpop.f32.mrf.mxu0
  %293 = vdwg.mxu0
  %294 = vmatpush.bf16.msra.mxu0 0
  %295 = vmatpush.bf16.msra.mxu0 0
  %296 = vmatpush.bf16.msra.mxu0 0
  %297 = vmatpush.bf16.msra.mxu0 0
  %298 = vmatpush.bf16.msra.mxu0 0
  %299 = vmatpush.bf16.msra.mxu0 0
  %300 = vmatpush.bf16.msra.mxu0 %v194
  %301 = vmatpush.bf16.msra.mxu0 %v186
  %302 = vmatmul.bf16.gmra.mxu0 %v214
  %v303 = vpop.f32.mrf.mxu0
  %v304 = vadd.f32 0.0, %v303
  %v305 = vpop.f32.mrf.mxu0
  %306 = vdwg.mxu0
  %307 = vmatpush.bf16.msra.mxu0 0
  %308 = vmatpush.bf16.msra.mxu0 0
  %309 = vmatpush.bf16.msra.mxu0 0
  %310 = vmatpush.bf16.msra.mxu0 0
  %311 = vmatpush.bf16.msra.mxu0 0
  %312 = vmatpush.bf16.msra.mxu0 0
  %313 = vmatpush.bf16.msra.mxu0 %v195
  %314 = vmatpush.bf16.msra.mxu0 %v187
  %315 = vmatmul.bf16.gmra.mxu0 %v214
  %v316 = vpop.f32.mrf.mxu0
  %v317 = vadd.f32 0.0, %v316
  %v318 = vpop.f32.mrf.mxu0
  %319 = vdwg.mxu0
  %v328 = vrot.slane %v239, 6
  %v329 = vrot.slane %v252, 4
  %v330 = vrot.slane %v265, 2
  %v331 = vrot.slane %v291, 6
  %v332 = vrot.slane %v304, 4
  %v333 = vrot.slane %v317, 2
  %vm334 = vcmask 1041408
  %v335 = vsel %vm334, %v226, %v328
  %vm336 = vcmask 1045508
  %v337 = vsel %vm336, %v329, %v330
  %vm338 = vcmask 1043456
  %v339 = vsel %vm338, %v335, %v337
  %v340 = vsel %vm334, %v278, %v331
  %v341 = vsel %vm336, %v332, %v333
  %v342 = vsel %vm338, %v340, %v341
  %345 = vst [vmem:[%s7] sm:$0xff] %v339
  %346 = vst [vmem:[%s7 + $0x8] sm:$0xff] %v342
  // Predicated region
  $region22: #{netG_forward.12} parent=0 // pred_check
    _
  $region23: #{netG_forward.12} parent=0 // pred_check_branch
    %348 = sbr.rel (0) target = $region25
  $region24: #{netG_forward.12} parent=0 // pred_region
    _
  $region25: #{netG_forward.12} parent=0 // pred_fallthru
    _
  // Predicated region
  $region26: #{netG_forward.12} parent=0 // pred_check
    _
  $region27: #{netG_forward.12} parent=0 // pred_check_branch
    %350 = sbr.rel (0) target = $region29
  $region28: #{netG_forward.12} parent=0 // pred_region
    _
  $region29: #{netG_forward.12} parent=0 // pred_fallthru
    _
  // Predicated region
  $region30: #{netG_forward.12} parent=0 // pred_check
    _
  $region31: #{netG_forward.12} parent=0 // pred_check_branch
    %352 = sbr.rel (0) target = $region33
  $region32: #{netG_forward.12} parent=0 // pred_region
    _
  $region33: #{netG_forward.12} parent=0 // pred_fallthru
    _
  // Predicated region
  $region34: #{netG_forward.12} parent=0 // pred_check
    _
  $region35: #{netG_forward.12} parent=0 // pred_check_branch
    %354 = sbr.rel (0) target = $region37
  $region36: #{netG_forward.12} parent=0 // pred_region
    _
  $region37: #{netG_forward.12} parent=0 // pred_fallthru
    _
  // Predicated region
  $region38: #{netG_forward.12} parent=0 // pred_check
    _
  $region39: #{netG_forward.12} parent=0 // pred_check_branch
    %356 = sbr.rel (0) target = $region41
  $region40: #{netG_forward.12} parent=0 // pred_region
    _
  $region41: #{netG_forward.12} parent=0 // pred_fallthru
    _
  // Predicated region
  $region42: #{netG_forward.12} parent=0 // pred_check
    _
  $region43: #{netG_forward.12} parent=0 // pred_check_branch
    %358 = sbr.rel (0) target = $region45
  $region44: #{netG_forward.12} parent=0 // pred_region
    _
  $region45: #{netG_forward.12} parent=0 // pred_fallthru
    _

// kernel: netG_forward.13
$region0: #{netG_forward.13}
  #allocation0 [shape = 'u32[]', space=smem, size = 0x4, offset = 0x4, fixed_abs, tag = 'smem constant byte address 0x4 - core index']
  #allocation1 [shape = 'u32[72,128]{1,0:T(1,128)}', space=vmem, size = 0x9000, scoped, tag = 'internal scratch']
  %s0 = inlined_call_operand.vmem [shape: f32[32,64], index: 0, kind: input, shape index: {}]
  %s1 = inlined_call_operand.hbm [shape: f32[1,64], index: 1, kind: input, shape index: {}]
  %s2 = inlined_call_operand.hbm [shape: f32[1,64], index: 2, kind: input, shape index: {}]
  %s3 = inlined_call_operand.vmem [shape: bf16[64,512], index: 3, kind: input, shape index: {}]
  %s4 = inlined_call_operand.vmem [shape: f32[32,512], index: 4, kind: output, shape index: {}]
  %s5 = sld [smem:[#allocation0]]
  $region34: #{netG_forward.13} parent=0
    _
  %s7 = ssub.s32 1, %s5
  %s8 = scalar_select 0, %s7, %s5
  $region1: #{netG_forward.13} parent=0
    #allocation2 [shape = 'u8[512]{0}', space=vmem, size = 0x400, scoped, tag = 'input window, operand 1, single buffered']
    #allocation3 [shape = 's32[1]{0}', space=sflag, size = 0x4, scoped, tag = 'scoped memory for netG_forward.13']
    #allocation4 [shape = 'u8[512]{0}', space=vmem, size = 0x400, scoped, tag = 'input window, operand 2, single buffered']
    #allocation5 [shape = 's32[1]{0}', space=sflag, size = 0x4, scoped, tag = 'scoped memory for netG_forward.13']
    %9 = vsyncpa [#allocation3], 0
    %10 = vsyncpa [#allocation5], 0
    // Predicated region
    $region2: #{netG_forward.13} parent=1 // pred_check
      _
    $region3: #{netG_forward.13} parent=1 // pred_check_branch
      %12 = sbr.rel (0) target = $region5
    $region4: #{netG_forward.13} parent=1 // pred_region
      _
    $region5: #{netG_forward.13} parent=1 // pred_fallthru
      _
    // Predicated region
    $region6: #{netG_forward.13} parent=1 // pred_check
      _
    $region7: #{netG_forward.13} parent=1 // pred_check_branch
      %14 = sbr.rel (0) target = $region9
    $region8: #{netG_forward.13} parent=1 // pred_region
      %16 = vsyncadd [#allocation3], 0
      %s18 = sshll.u32 %s1, 4
      %s19 = int_to_ptr.hbm [resolvable:$true] %s18
      %s20 = sshll.u32 [#allocation2], 4
      %s21 = int_to_ptr.vmem [resolvable:$true] %s20
      %23 = dma.hbm_to_vmem [thread:$0]  %s19, 16, %s21, [#allocation3]
    $region9: #{netG_forward.13} parent=1 // pred_fallthru
      _
    // Predicated region
    $region10: #{netG_forward.13} parent=1 // pred_check
      _
    $region11: #{netG_forward.13} parent=1 // pred_check_branch
      %25 = sbr.rel (0) target = $region13
    $region12: #{netG_forward.13} parent=1 // pred_region
      %27 = vsyncadd [#allocation5], 0
      %s29 = sshll.u32 %s2, 4
      %s30 = int_to_ptr.hbm [resolvable:$true] %s29
      %s31 = sshll.u32 [#allocation4], 4
      %s32 = int_to_ptr.vmem [resolvable:$true] %s31
      %34 = dma.hbm_to_vmem [thread:$0]  %s30, 16, %s32, [#allocation5]
    $region13: #{netG_forward.13} parent=1 // pred_fallthru
      _
    // Predicated region
    $region14: #{netG_forward.13} parent=1 // pred_check
      _
    $region15: #{netG_forward.13} parent=1 // pred_check_branch
      %36 = sbr.rel (0) target = $region17
    $region16: #{netG_forward.13} parent=1 // pred_region
      _
    $region17: #{netG_forward.13} parent=1 // pred_fallthru
      _
    // Predicated region
    $region18: #{netG_forward.13} parent=1 // pred_check
      _
    $region19: #{netG_forward.13} parent=1 // pred_check_branch
      %38 = sbr.rel (0) target = $region21
    $region20: #{netG_forward.13} parent=1 // pred_region
      %40 = dma.done [#allocation3], 16
    $region21: #{netG_forward.13} parent=1 // pred_fallthru
      _
    // Predicated region
    $region22: #{netG_forward.13} parent=1 // pred_check
      _
    $region23: #{netG_forward.13} parent=1 // pred_check_branch
      %42 = sbr.rel (0) target = $region25
    $region24: #{netG_forward.13} parent=1 // pred_region
      %44 = dma.done [#allocation5], 16
    $region25: #{netG_forward.13} parent=1 // pred_fallthru
      _
    %v46 = vld [vmem:[%s0] sm:$0xff]
    %v47 = vld [vmem:[%s0 + $0x8] sm:$0xff]
    %v48 = vld [vmem:[%s0 + $0x10] sm:$0xff]
    %v49 = vld [vmem:[%s0 + $0x18] sm:$0xff]
    %v50 = vld [vmem:[#allocation2] sm:$0x1]
    %v51 = vld [vmem:[#allocation4] sm:$0x1]
    %vm52 = vcmask 523264
    %v53 = vsel %vm52, %v46, 0.0
    %v54 = vsel %vm52, %v47, 0.0
    %v55 = vadd.f32 %v53, %v54
    %v56 = vsel %vm52, %v48, 0.0
    %v57 = vadd.f32 %v55, %v56
    %v58 = vsel %vm52, %v49, 0.0
    %v59 = vadd.f32 %v57, %v58
    %v60 = vrot.slane %v59, 4
    %v61 = vadd.f32 %v59, %v60
    %v62 = vrot.slane %v61, 2
    %v63 = vadd.f32 %v61, %v62
    %v64 = vrot.slane %v63, 1
    %v65 = vadd.f32 %v63, %v64
    %v66 = vrcp.pop 32.0
    %v67 = vmul.f32 32.0, %v66
    %v68 = vsub.f32 1.0, %v67
    %v69 = vmul.f32 %v66, %v68
    %v70 = vadd.f32 %v66, %v69
    %vm71 = vweird.f32 %v66
    %v72 = vsel %vm71, %v66, %v70
    %v73 = vmul.f32 %v65, %v72
    %v74 = vsub.f32 %v46, %v73
    %v75 = vsub.f32 %v47, %v73
    %v76 = vsub.f32 %v48, %v73
    %v77 = vsub.f32 %v49, %v73
    %v78 = vmul.f32 %v74, %v74
    %v79 = vmul.f32 %v75, %v75
    %v80 = vmul.f32 %v76, %v76
    %v81 = vmul.f32 %v77, %v77
    %v82 = vsel %vm52, %v78, 0.0
    %v83 = vsel %vm52, %v79, 0.0
    %v84 = vadd.f32 %v82, %v83
    %v85 = vsel %vm52, %v80, 0.0
    %v86 = vadd.f32 %v84, %v85
    %v87 = vsel %vm52, %v81, 0.0
    %v88 = vadd.f32 %v86, %v87
    %v89 = vrot.slane %v88, 4
    %v90 = vadd.f32 %v88, %v89
    %v91 = vrot.slane %v90, 2
    %v92 = vadd.f32 %v90, %v91
    %v93 = vrot.slane %v92, 1
    %v94 = vadd.f32 %v92, %v93
    %v95 = vmul.f32 %v94, %v72
    %v96 = vadd.f32 %v95, 1e-05
    %v97 = vrsqrt.pop %v96
    %v98 = vmul.f32 %v97, %v96
    %v99 = vmul.f32 %v98, %v97
    %v100 = vmul.f32 0.5, %v99
    %v101 = vsub.f32 1.5, %v100
    %v102 = vmul.f32 %v97, %v101
    %vm103 = vweird.f32 %v96
    %vm104 = vweird.f32 %v97
    %vm105 = vmor %vm103, %vm104
    %v106 = vsel %vm105, %v97, %v102
    %v107 = vmul.f32 %v74, %v106
    %v108 = vmul.f32 %v75, %v106
    %v109 = vmul.f32 %v76, %v106
    %v110 = vmul.f32 %v77, %v106
    %v112 = vperm.slane %v50, 0
    %v114 = vmul.f32 %v107, %v112
    %v115 = vmul.f32 %v108, %v112
    %v116 = vmul.f32 %v109, %v112
    %v117 = vmul.f32 %v110, %v112
    %v119 = vperm.slane %v51, 0
    %v121 = vadd.f32 %v114, %v119
    %v122 = vadd.f32 %v115, %v119
    %v123 = vadd.f32 %v116, %v119
    %v124 = vadd.f32 %v117, %v119
    %v125 = vmax.f32 %v121, 0.0
    %v126 = vmax.f32 %v122, 0.0
    %v127 = vmax.f32 %v123, 0.0
    %v128 = vmax.f32 %v124, 0.0
    %v129 = vpack.c.bf16 %v126, %v125
    %v130 = vpack.c.bf16 %v128, %v127
    %v131 = vld [vmem:[%s3] sm:$0xff]
    %v132 = vld [vmem:[%s3 + $0x8] sm:$0xff]
    %v133 = vld [vmem:[%s3 + $0x10] sm:$0xff]
    %v134 = vld [vmem:[%s3 + $0x18] sm:$0xff]
    %v135 = vld [vmem:[%s3 + $0x20] sm:$0xff]
    %v136 = vld [vmem:[%s3 + $0x28] sm:$0xff]
    %v137 = vld [vmem:[%s3 + $0x30] sm:$0xff]
    %v138 = vld [vmem:[%s3 + $0x38] sm:$0xff]
    %v139 = vld [vmem:[%s3 + $0x40] sm:$0xff]
    %v140 = vld [vmem:[%s3 + $0x48] sm:$0xff]
    %v141 = vld [vmem:[%s3 + $0x50] sm:$0xff]
    %v142 = vld [vmem:[%s3 + $0x58] sm:$0xff]
    %v143 = vld [vmem:[%s3 + $0x60] sm:$0xff]
    %v144 = vld [vmem:[%s3 + $0x68] sm:$0xff]
    %v145 = vld [vmem:[%s3 + $0x70] sm:$0xff]
    %v146 = vld [vmem:[%s3 + $0x78] sm:$0xff]
    %v163 = vunpack.c.l.b16 %v131
    %v164 = vunpack.c.h.b16 %v131
    %v165 = vunpack.c.l.b16 %v132
    %v166 = vunpack.c.h.b16 %v132
    %v167 = vunpack.c.l.b16 %v133
    %v168 = vunpack.c.h.b16 %v133
    %v169 = vunpack.c.l.b16 %v134
    %v170 = vunpack.c.h.b16 %v134
    %v171 = vunpack.c.l.b16 %v135
    %v172 = vunpack.c.h.b16 %v135
    %v173 = vunpack.c.l.b16 %v136
    %v174 = vunpack.c.h.b16 %v136
    %v175 = vunpack.c.l.b16 %v137
    %v176 = vunpack.c.h.b16 %v137
    %v177 = vunpack.c.l.b16 %v138
    %v178 = vunpack.c.h.b16 %v138
    %v179 = vunpack.c.l.b16 %v139
    %v180 = vunpack.c.h.b16 %v139
    %v181 = vunpack.c.l.b16 %v140
    %v182 = vunpack.c.h.b16 %v140
    %v183 = vunpack.c.l.b16 %v141
    %v184 = vunpack.c.h.b16 %v141
    %v185 = vunpack.c.l.b16 %v142
    %v186 = vunpack.c.h.b16 %v142
    %v187 = vunpack.c.l.b16 %v143
    %v188 = vunpack.c.h.b16 %v143
    %v189 = vunpack.c.l.b16 %v144
    %v190 = vunpack.c.h.b16 %v144
    %v191 = vunpack.c.l.b16 %v145
    %v192 = vunpack.c.h.b16 %v145
    %v193 = vunpack.c.l.b16 %v146
    %v194 = vunpack.c.h.b16 %v146
    %v195 = vpack.c.b16 %v167, %v163
    %v196 = vpack.c.b16 %v168, %v164
    %v197 = vpack.c.b16 %v169, %v165
    %v198 = vpack.c.b16 %v170, %v166
    %v199 = vpack.c.b16 %v175, %v171
    %v200 = vpack.c.b16 %v176, %v172
    %v201 = vpack.c.b16 %v177, %v173
    %v202 = vpack.c.b16 %v178, %v174
    %v203 = vpack.c.b16 %v183, %v179
    %v204 = vpack.c.b16 %v184, %v180
    %v205 = vpack.c.b16 %v185, %v181
    %v206 = vpack.c.b16 %v186, %v182
    %v207 = vpack.c.b16 %v191, %v187
    %v208 = vpack.c.b16 %v192, %v188
    %v209 = vpack.c.b16 %v193, %v189
    %v210 = vpack.c.b16 %v194, %v190
    %v228 = vsel %vm52, %v129, 0
    %v231 = vsel %vm52, %v130, 0
    %233 = vmatpush.bf16.msra.mxu0 0
    %234 = vmatpush.bf16.msra.mxu0 0
    %235 = vmatpush.bf16.msra.mxu0 0
    %236 = vmatpush.bf16.msra.mxu0 0
    %237 = vmatpush.bf16.msra.mxu0 %v207
    %238 = vmatpush.bf16.msra.mxu0 %v203
    %239 = vmatpush.bf16.msra.mxu0 %v199
    %240 = vmatpush.bf16.msra.mxu0 %v195
    %241 = vmatmul.bf16.gmra.mxu0 %v228
    %v242 = vpop.f32.mrf.mxu0
    %v243 = vadd.f32 0.0, %v242
    %v244 = vpop.f32.mrf.mxu0
    %v245 = vadd.f32 0.0, %v244
    %246 = vmatmul.bf16.gmra.mxu0 %v231
    %v247 = vpop.f32.mrf.mxu0
    %v248 = vadd.f32 0.0, %v247
    %v249 = vpop.f32.mrf.mxu0
    %v250 = vadd.f32 0.0, %v249
    %251 = vdwg.mxu0
    %252 = vmatpush.bf16.msra.mxu0 0
    %253 = vmatpush.bf16.msra.mxu0 0
    %254 = vmatpush.bf16.msra.mxu0 0
    %255 = vmatpush.bf16.msra.mxu0 0
    %256 = vmatpush.bf16.msra.mxu0 %v208
    %257 = vmatpush.bf16.msra.mxu0 %v204
    %258 = vmatpush.bf16.msra.mxu0 %v200
    %259 = vmatpush.bf16.msra.mxu0 %v196
    %260 = vmatmul.bf16.gmra.mxu0 %v228
    %v261 = vpop.f32.mrf.mxu0
    %v262 = vadd.f32 0.0, %v261
    %v263 = vpop.f32.mrf.mxu0
    %v264 = vadd.f32 0.0, %v263
    %265 = vmatmul.bf16.gmra.mxu0 %v231
    %v266 = vpop.f32.mrf.mxu0
    %v267 = vadd.f32 0.0, %v266
    %v268 = vpop.f32.mrf.mxu0
    %v269 = vadd.f32 0.0, %v268
    %270 = vdwg.mxu0
    %271 = vmatpush.bf16.msra.mxu0 0
    %272 = vmatpush.bf16.msra.mxu0 0
    %273 = vmatpush.bf16.msra.mxu0 0
    %274 = vmatpush.bf16.msra.mxu0 0
    %275 = vmatpush.bf16.msra.mxu0 %v209
    %276 = vmatpush.bf16.msra.mxu0 %v205
    %277 = vmatpush.bf16.msra.mxu0 %v201
    %278 = vmatpush.bf16.msra.mxu0 %v197
    %279 = vmatmul.bf16.gmra.mxu0 %v228
    %v280 = vpop.f32.mrf.mxu0
    %v281 = vadd.f32 0.0, %v280
    %v282 = vpop.f32.mrf.mxu0
    %v283 = vadd.f32 0.0, %v282
    %284 = vmatmul.bf16.gmra.mxu0 %v231
    %v285 = vpop.f32.mrf.mxu0
    %v286 = vadd.f32 0.0, %v285
    %v287 = vpop.f32.mrf.mxu0
    %v288 = vadd.f32 0.0, %v287
    %289 = vdwg.mxu0
    %290 = vmatpush.bf16.msra.mxu0 0
    %291 = vmatpush.bf16.msra.mxu0 0
    %292 = vmatpush.bf16.msra.mxu0 0
    %293 = vmatpush.bf16.msra.mxu0 0
    %294 = vmatpush.bf16.msra.mxu0 %v210
    %295 = vmatpush.bf16.msra.mxu0 %v206
    %296 = vmatpush.bf16.msra.mxu0 %v202
    %297 = vmatpush.bf16.msra.mxu0 %v198
    %298 = vmatmul.bf16.gmra.mxu0 %v228
    %v299 = vpop.f32.mrf.mxu0
    %v300 = vadd.f32 0.0, %v299
    %v301 = vpop.f32.mrf.mxu0
    %v302 = vadd.f32 0.0, %v301
    %303 = vmatmul.bf16.gmra.mxu0 %v231
    %v304 = vpop.f32.mrf.mxu0
    %v305 = vadd.f32 0.0, %v304
    %v306 = vpop.f32.mrf.mxu0
    %v307 = vadd.f32 0.0, %v306
    %308 = vdwg.mxu0
    %309 = vst [vmem:[%s4] sm:$0xff] %v243
    %310 = vst [vmem:[%s4 + $0x8] sm:$0xff] %v262
    %311 = vst [vmem:[%s4 + $0x10] sm:$0xff] %v281
    %312 = vst [vmem:[%s4 + $0x18] sm:$0xff] %v300
    %313 = vst [vmem:[%s4 + $0x20] sm:$0xff] %v245
    %314 = vst [vmem:[%s4 + $0x28] sm:$0xff] %v264
    %315 = vst [vmem:[%s4 + $0x30] sm:$0xff] %v283
    %316 = vst [vmem:[%s4 + $0x38] sm:$0xff] %v302
    %317 = vst [vmem:[%s4 + $0x40] sm:$0xff] %v248
    %318 = vst [vmem:[%s4 + $0x48] sm:$0xff] %v267
    %319 = vst [vmem:[%s4 + $0x50] sm:$0xff] %v286
    %320 = vst [vmem:[%s4 + $0x58] sm:$0xff] %v305
    %321 = vst [vmem:[%s4 + $0x60] sm:$0xff] %v250
    %322 = vst [vmem:[%s4 + $0x68] sm:$0xff] %v269
    %323 = vst [vmem:[%s4 + $0x70] sm:$0xff] %v288
    %324 = vst [vmem:[%s4 + $0x78] sm:$0xff] %v307
    // Predicated region
    $region26: #{netG_forward.13} parent=1 // pred_check
      _
    $region27: #{netG_forward.13} parent=1 // pred_check_branch
      %326 = sbr.rel (0) target = $region29
    $region28: #{netG_forward.13} parent=1 // pred_region
      _
    $region29: #{netG_forward.13} parent=1 // pred_fallthru
      _
    // Predicated region
    $region30: #{netG_forward.13} parent=1 // pred_check
      _
    $region31: #{netG_forward.13} parent=1 // pred_check_branch
      %328 = sbr.rel (0) target = $region33
    $region32: #{netG_forward.13} parent=1 // pred_region
      _
    $region33: #{netG_forward.13} parent=1 // pred_fallthru
      _
    %329 = vsyncpa [#allocation3], 1
    %330 = vsyncpa [#allocation5], 1

// kernel: netG_forward.14
$region0: #{netG_forward.14}
  #allocation0 [shape = 'u32[]', space=smem, size = 0x4, offset = 0x4, fixed_abs, tag = 'smem constant byte address 0x4 - core index']
  #allocation1 [shape = 'u32[72,128]{1,0:T(1,128)}', space=vmem, size = 0x9000, scoped, tag = 'internal scratch']
  %s0 = inlined_call_operand.vmem [shape: f32[128,32], index: 0, kind: input, shape index: {}]
  %s1 = inlined_call_operand.vmem [shape: f32[1,32], index: 1, kind: input, shape index: {}]
  %s2 = inlined_call_operand.vmem [shape: f32[1,32], index: 2, kind: input, shape index: {}]
  %s3 = inlined_call_operand.vmem [shape: bf16[32,1024], index: 3, kind: input, shape index: {}]
  %s4 = inlined_call_operand.vmem [shape: f32[128,1024], index: 4, kind: output, shape index: {}]
  %s5 = sld [smem:[#allocation0]]
  $region26: #{netG_forward.14} parent=0
    _
  %s7 = ssub.s32 1, %s5
  %s8 = scalar_select 0, %s7, %s5
  // Predicated region
  $region2: #{netG_forward.14} parent=0 // pred_check
    _
  $region3: #{netG_forward.14} parent=0 // pred_check_branch
    %10 = sbr.rel (0) target = $region5
  $region4: #{netG_forward.14} parent=0 // pred_region
    _
  $region5: #{netG_forward.14} parent=0 // pred_fallthru
    _
  // Predicated region
  $region6: #{netG_forward.14} parent=0 // pred_check
    _
  $region7: #{netG_forward.14} parent=0 // pred_check_branch
    %12 = sbr.rel (0) target = $region9
  $region8: #{netG_forward.14} parent=0 // pred_region
    _
  $region9: #{netG_forward.14} parent=0 // pred_fallthru
    _
  // Predicated region
  $region10: #{netG_forward.14} parent=0 // pred_check
    _
  $region11: #{netG_forward.14} parent=0 // pred_check_branch
    %14 = sbr.rel (0) target = $region13
  $region12: #{netG_forward.14} parent=0 // pred_region
    _
  $region13: #{netG_forward.14} parent=0 // pred_fallthru
    _
  // Predicated region
  $region14: #{netG_forward.14} parent=0 // pred_check
    _
  $region15: #{netG_forward.14} parent=0 // pred_check_branch
    %16 = sbr.rel (0) target = $region17
  $region16: #{netG_forward.14} parent=0 // pred_region
    _
  $region17: #{netG_forward.14} parent=0 // pred_fallthru
    _
  %v18 = vld [vmem:[%s0] sm:$0xff]
  %v19 = vld [vmem:[%s0 + $0x8] sm:$0xff]
  %v20 = vld [vmem:[%s0 + $0x10] sm:$0xff]
  %v21 = vld [vmem:[%s0 + $0x18] sm:$0xff]
  %v22 = vld [vmem:[%s0 + $0x20] sm:$0xff]
  %v23 = vld [vmem:[%s0 + $0x28] sm:$0xff]
  %v24 = vld [vmem:[%s0 + $0x30] sm:$0xff]
  %v25 = vld [vmem:[%s0 + $0x38] sm:$0xff]
  %v26 = vld [vmem:[%s0 + $0x40] sm:$0xff]
  %v27 = vld [vmem:[%s0 + $0x48] sm:$0xff]
  %v28 = vld [vmem:[%s0 + $0x50] sm:$0xff]
  %v29 = vld [vmem:[%s0 + $0x58] sm:$0xff]
  %v30 = vld [vmem:[%s0 + $0x60] sm:$0xff]
  %v31 = vld [vmem:[%s0 + $0x68] sm:$0xff]
  %v32 = vld [vmem:[%s0 + $0x70] sm:$0xff]
  %v33 = vld [vmem:[%s0 + $0x78] sm:$0xff]
  %v34 = vld [vmem:[%s1] sm:$0x1]
  %v35 = vld [vmem:[%s2] sm:$0x1]
  %vm36 = vcmask 261120
  %v37 = vsel %vm36, %v18, 0.0
  %v38 = vsel %vm36, %v19, 0.0
  %v39 = vadd.f32 %v37, %v38
  %v40 = vsel %vm36, %v20, 0.0
  %v41 = vadd.f32 %v39, %v40
  %v42 = vsel %vm36, %v21, 0.0
  %v43 = vadd.f32 %v41, %v42
  %v44 = vsel %vm36, %v22, 0.0
  %v45 = vadd.f32 %v43, %v44
  %v46 = vsel %vm36, %v23, 0.0
  %v47 = vadd.f32 %v45, %v46
  %v48 = vsel %vm36, %v24, 0.0
  %v49 = vadd.f32 %v47, %v48
  %v50 = vsel %vm36, %v25, 0.0
  %v51 = vadd.f32 %v49, %v50
  %v52 = vsel %vm36, %v26, 0.0
  %v53 = vadd.f32 %v51, %v52
  %v54 = vsel %vm36, %v27, 0.0
  %v55 = vadd.f32 %v53, %v54
  %v56 = vsel %vm36, %v28, 0.0
  %v57 = vadd.f32 %v55, %v56
  %v58 = vsel %vm36, %v29, 0.0
  %v59 = vadd.f32 %v57, %v58
  %v60 = vsel %vm36, %v30, 0.0
  %v61 = vadd.f32 %v59, %v60
  %v62 = vsel %vm36, %v31, 0.0
  %v63 = vadd.f32 %v61, %v62
  %v64 = vsel %vm36, %v32, 0.0
  %v65 = vadd.f32 %v63, %v64
  %v66 = vsel %vm36, %v33, 0.0
  %v67 = vadd.f32 %v65, %v66
  %v68 = vrot.slane %v67, 4
  %v69 = vadd.f32 %v67, %v68
  %v70 = vrot.slane %v69, 2
  %v71 = vadd.f32 %v69, %v70
  %v72 = vrot.slane %v71, 1
  %v73 = vadd.f32 %v71, %v72
  %v74 = vrcp.pop 128.0
  %v75 = vmul.f32 128.0, %v74
  %v76 = vsub.f32 1.0, %v75
  %v77 = vmul.f32 %v74, %v76
  %v78 = vadd.f32 %v74, %v77
  %vm79 = vweird.f32 %v74
  %v80 = vsel %vm79, %v74, %v78
  %v81 = vmul.f32 %v73, %v80
  %v82 = vsub.f32 %v18, %v81
  %v83 = vsub.f32 %v19, %v81
  %v84 = vsub.f32 %v20, %v81
  %v85 = vsub.f32 %v21, %v81
  %v86 = vsub.f32 %v22, %v81
  %v87 = vsub.f32 %v23, %v81
  %v88 = vsub.f32 %v24, %v81
  %v89 = vsub.f32 %v25, %v81
  %v90 = vsub.f32 %v26, %v81
  %v91 = vsub.f32 %v27, %v81
  %v92 = vsub.f32 %v28, %v81
  %v93 = vsub.f32 %v29, %v81
  %v94 = vsub.f32 %v30, %v81
  %v95 = vsub.f32 %v31, %v81
  %v96 = vsub.f32 %v32, %v81
  %v97 = vsub.f32 %v33, %v81
  %v98 = vmul.f32 %v82, %v82
  %v99 = vmul.f32 %v83, %v83
  %v100 = vmul.f32 %v84, %v84
  %v101 = vmul.f32 %v85, %v85
  %v102 = vmul.f32 %v86, %v86
  %v103 = vmul.f32 %v87, %v87
  %v104 = vmul.f32 %v88, %v88
  %v105 = vmul.f32 %v89, %v89
  %v106 = vmul.f32 %v90, %v90
  %v107 = vmul.f32 %v91, %v91
  %v108 = vmul.f32 %v92, %v92
  %v109 = vmul.f32 %v93, %v93
  %v110 = vmul.f32 %v94, %v94
  %v111 = vmul.f32 %v95, %v95
  %v112 = vmul.f32 %v96, %v96
  %v113 = vmul.f32 %v97, %v97
  %v114 = vsel %vm36, %v98, 0.0
  %v115 = vsel %vm36, %v99, 0.0
  %v116 = vadd.f32 %v114, %v115
  %v117 = vsel %vm36, %v100, 0.0
  %v118 = vadd.f32 %v116, %v117
  %v119 = vsel %vm36, %v101, 0.0
  %v120 = vadd.f32 %v118, %v119
  %v121 = vsel %vm36, %v102, 0.0
  %v122 = vadd.f32 %v120, %v121
  %v123 = vsel %vm36, %v103, 0.0
  %v124 = vadd.f32 %v122, %v123
  %v125 = vsel %vm36, %v104, 0.0
  %v126 = vadd.f32 %v124, %v125
  %v127 = vsel %vm36, %v105, 0.0
  %v128 = vadd.f32 %v126, %v127
  %v129 = vsel %vm36, %v106, 0.0
  %v130 = vadd.f32 %v128, %v129
  %v131 = vsel %vm36, %v107, 0.0
  %v132 = vadd.f32 %v130, %v131
  %v133 = vsel %vm36, %v108, 0.0
  %v134 = vadd.f32 %v132, %v133
  %v135 = vsel %vm36, %v109, 0.0
  %v136 = vadd.f32 %v134, %v135
  %v137 = vsel %vm36, %v110, 0.0
  %v138 = vadd.f32 %v136, %v137
  %v139 = vsel %vm36, %v111, 0.0
  %v140 = vadd.f32 %v138, %v139
  %v141 = vsel %vm36, %v112, 0.0
  %v142 = vadd.f32 %v140, %v141
  %v143 = vsel %vm36, %v113, 0.0
  %v144 = vadd.f32 %v142, %v143
  %v145 = vrot.slane %v144, 4
  %v146 = vadd.f32 %v144, %v145
  %v147 = vrot.slane %v146, 2
  %v148 = vadd.f32 %v146, %v147
  %v149 = vrot.slane %v148, 1
  %v150 = vadd.f32 %v148, %v149
  %v151 = vmul.f32 %v150, %v80
  %v152 = vadd.f32 %v151, 1e-05
  %v153 = vrsqrt.pop %v152
  %v154 = vmul.f32 %v153, %v152
  %v155 = vmul.f32 %v154, %v153
  %v156 = vmul.f32 0.5, %v155
  %v157 = vsub.f32 1.5, %v156
  %v158 = vmul.f32 %v153, %v157
  %vm159 = vweird.f32 %v152
  %vm160 = vweird.f32 %v153
  %vm161 = vmor %vm159, %vm160
  %v162 = vsel %vm161, %v153, %v158
  %v163 = vmul.f32 %v82, %v162
  %v164 = vmul.f32 %v83, %v162
  %v165 = vmul.f32 %v84, %v162
  %v166 = vmul.f32 %v85, %v162
  %v167 = vmul.f32 %v86, %v162
  %v168 = vmul.f32 %v87, %v162
  %v169 = vmul.f32 %v88, %v162
  %v170 = vmul.f32 %v89, %v162
  %v171 = vmul.f32 %v90, %v162
  %v172 = vmul.f32 %v91, %v162
  %v173 = vmul.f32 %v92, %v162
  %v174 = vmul.f32 %v93, %v162
  %v175 = vmul.f32 %v94, %v162
  %v176 = vmul.f32 %v95, %v162
  %v177 = vmul.f32 %v96, %v162
  %v178 = vmul.f32 %v97, %v162
  %v180 = vperm.slane %v34, 0
  %v182 = vmul.f32 %v163, %v180
  %v183 = vmul.f32 %v164, %v180
  %v184 = vmul.f32 %v165, %v180
  %v185 = vmul.f32 %v166, %v180
  %v186 = vmul.f32 %v167, %v180
  %v187 = vmul.f32 %v168, %v180
  %v188 = vmul.f32 %v169, %v180
  %v189 = vmul.f32 %v170, %v180
  %v190 = vmul.f32 %v171, %v180
  %v191 = vmul.f32 %v172, %v180
  %v192 = vmul.f32 %v173, %v180
  %v193 = vmul.f32 %v174, %v180
  %v194 = vmul.f32 %v175, %v180
  %v195 = vmul.f32 %v176, %v180
  %v196 = vmul.f32 %v177, %v180
  %v197 = vmul.f32 %v178, %v180
  %v199 = vperm.slane %v35, 0
  %v201 = vadd.f32 %v182, %v199
  %v202 = vadd.f32 %v183, %v199
  %v203 = vadd.f32 %v184, %v199
  %v204 = vadd.f32 %v185, %v199
  %v205 = vadd.f32 %v186, %v199
  %v206 = vadd.f32 %v187, %v199
  %v207 = vadd.f32 %v188, %v199
  %v208 = vadd.f32 %v189, %v199
  %v209 = vadd.f32 %v190, %v199
  %v210 = vadd.f32 %v191, %v199
  %v211 = vadd.f32 %v192, %v199
  %v212 = vadd.f32 %v193, %v199
  %v213 = vadd.f32 %v194, %v199
  %v214 = vadd.f32 %v195, %v199
  %v215 = vadd.f32 %v196, %v199
  %v216 = vadd.f32 %v197, %v199
  %v217 = vmax.f32 %v201, 0.0
  %v218 = vmax.f32 %v202, 0.0
  %v219 = vmax.f32 %v203, 0.0
  %v220 = vmax.f32 %v204, 0.0
  %v221 = vmax.f32 %v205, 0.0
  %v222 = vmax.f32 %v206, 0.0
  %v223 = vmax.f32 %v207, 0.0
  %v224 = vmax.f32 %v208, 0.0
  %v225 = vmax.f32 %v209, 0.0
  %v226 = vmax.f32 %v210, 0.0
  %v227 = vmax.f32 %v211, 0.0
  %v228 = vmax.f32 %v212, 0.0
  %v229 = vmax.f32 %v213, 0.0
  %v230 = vmax.f32 %v214, 0.0
  %v231 = vmax.f32 %v215, 0.0
  %v232 = vmax.f32 %v216, 0.0
  %v233 = vpack.c.bf16 %v218, %v217
  %v234 = vpack.c.bf16 %v220, %v219
  %v235 = vpack.c.bf16 %v222, %v221
  %v236 = vpack.c.bf16 %v224, %v223
  %v237 = vpack.c.bf16 %v226, %v225
  %v238 = vpack.c.bf16 %v228, %v227
  %v239 = vpack.c.bf16 %v230, %v229
  %v240 = vpack.c.bf16 %v232, %v231
  %v241 = vld [vmem:[%s3] sm:$0xff]
  %v242 = vld [vmem:[%s3 + $0x8] sm:$0xff]
  %v243 = vld [vmem:[%s3 + $0x10] sm:$0xff]
  %v244 = vld [vmem:[%s3 + $0x18] sm:$0xff]
  %v245 = vld [vmem:[%s3 + $0x20] sm:$0xff]
  %v246 = vld [vmem:[%s3 + $0x28] sm:$0xff]
  %v247 = vld [vmem:[%s3 + $0x30] sm:$0xff]
  %v248 = vld [vmem:[%s3 + $0x38] sm:$0xff]
  %v249 = vld [vmem:[%s3 + $0x40] sm:$0xff]
  %v250 = vld [vmem:[%s3 + $0x48] sm:$0xff]
  %v251 = vld [vmem:[%s3 + $0x50] sm:$0xff]
  %v252 = vld [vmem:[%s3 + $0x58] sm:$0xff]
  %v253 = vld [vmem:[%s3 + $0x60] sm:$0xff]
  %v254 = vld [vmem:[%s3 + $0x68] sm:$0xff]
  %v255 = vld [vmem:[%s3 + $0x70] sm:$0xff]
  %v256 = vld [vmem:[%s3 + $0x78] sm:$0xff]
  %v273 = vunpack.c.l.b16 %v241
  %v274 = vunpack.c.h.b16 %v241
  %v275 = vunpack.c.l.b16 %v242
  %v276 = vunpack.c.h.b16 %v242
  %v277 = vunpack.c.l.b16 %v243
  %v278 = vunpack.c.h.b16 %v243
  %v279 = vunpack.c.l.b16 %v244
  %v280 = vunpack.c.h.b16 %v244
  %v281 = vunpack.c.l.b16 %v245
  %v282 = vunpack.c.h.b16 %v245
  %v283 = vunpack.c.l.b16 %v246
  %v284 = vunpack.c.h.b16 %v246
  %v285 = vunpack.c.l.b16 %v247
  %v286 = vunpack.c.h.b16 %v247
  %v287 = vunpack.c.l.b16 %v248
  %v288 = vunpack.c.h.b16 %v248
  %v289 = vunpack.c.l.b16 %v249
  %v290 = vunpack.c.h.b16 %v249
  %v291 = vunpack.c.l.b16 %v250
  %v292 = vunpack.c.h.b16 %v250
  %v293 = vunpack.c.l.b16 %v251
  %v294 = vunpack.c.h.b16 %v251
  %v295 = vunpack.c.l.b16 %v252
  %v296 = vunpack.c.h.b16 %v252
  %v297 = vunpack.c.l.b16 %v253
  %v298 = vunpack.c.h.b16 %v253
  %v299 = vunpack.c.l.b16 %v254
  %v300 = vunpack.c.h.b16 %v254
  %v301 = vunpack.c.l.b16 %v255
  %v302 = vunpack.c.h.b16 %v255
  %v303 = vunpack.c.l.b16 %v256
  %v304 = vunpack.c.h.b16 %v256
  %v305 = vpack.c.b16 %v281, %v273
  %v306 = vpack.c.b16 %v282, %v274
  %v307 = vpack.c.b16 %v283, %v275
  %v308 = vpack.c.b16 %v284, %v276
  %v309 = vpack.c.b16 %v285, %v277
  %v310 = vpack.c.b16 %v286, %v278
  %v311 = vpack.c.b16 %v287, %v279
  %v312 = vpack.c.b16 %v288, %v280
  %v313 = vpack.c.b16 %v297, %v289
  %v314 = vpack.c.b16 %v298, %v290
  %v315 = vpack.c.b16 %v299, %v291
  %v316 = vpack.c.b16 %v300, %v292
  %v317 = vpack.c.b16 %v301, %v293
  %v318 = vpack.c.b16 %v302, %v294
  %v319 = vpack.c.b16 %v303, %v295
  %v320 = vpack.c.b16 %v304, %v296
  %v338 = vsel %vm36, %v233, 0
  %v341 = vsel %vm36, %v234, 0
  %v344 = vsel %vm36, %v235, 0
  %v347 = vsel %vm36, %v236, 0
  %v350 = vsel %vm36, %v237, 0
  %v353 = vsel %vm36, %v238, 0
  %v356 = vsel %vm36, %v239, 0
  %v359 = vsel %vm36, %v240, 0
  %361 = vmatpush.bf16.msra.mxu0 0
  %362 = vmatpush.bf16.msra.mxu0 0
  %363 = vmatpush.bf16.msra.mxu0 0
  %364 = vmatpush.bf16.msra.mxu0 0
  %365 = vmatpush.bf16.msra.mxu0 0
  %366 = vmatpush.bf16.msra.mxu0 0
  %367 = vmatpush.bf16.msra.mxu0 %v313
  %368 = vmatpush.bf16.msra.mxu0 %v305
  %369 = vmatmul.bf16.gmra.mxu0 %v338
  %v370 = vpop.f32.mrf.mxu0
  %v371 = vadd.f32 0.0, %v370
  %v372 = vpop.f32.mrf.mxu0
  %v373 = vadd.f32 0.0, %v372
  %374 = vmatmul.bf16.gmra.mxu0 %v341
  %v375 = vpop.f32.mrf.mxu0
  %v376 = vadd.f32 0.0, %v375
  %v377 = vpop.f32.mrf.mxu0
  %v378 = vadd.f32 0.0, %v377
  %379 = vmatmul.bf16.gmra.mxu0 %v344
  %v380 = vpop.f32.mrf.mxu0
  %v381 = vadd.f32 0.0, %v380
  %v382 = vpop.f32.mrf.mxu0
  %v383 = vadd.f32 0.0, %v382
  %384 = vmatmul.bf16.gmra.mxu0 %v347
  %v385 = vpop.f32.mrf.mxu0
  %v386 = vadd.f32 0.0, %v385
  %v387 = vpop.f32.mrf.mxu0
  %v388 = vadd.f32 0.0, %v387
  %389 = vmatmul.bf16.gmra.mxu0 %v350
  %v390 = vpop.f32.mrf.mxu0
  %v391 = vadd.f32 0.0, %v390
  %v392 = vpop.f32.mrf.mxu0
  %v393 = vadd.f32 0.0, %v392
  %394 = vmatmul.bf16.gmra.mxu0 %v353
  %v395 = vpop.f32.mrf.mxu0
  %v396 = vadd.f32 0.0, %v395
  %v397 = vpop.f32.mrf.mxu0
  %v398 = vadd.f32 0.0, %v397
  %399 = vmatmul.bf16.gmra.mxu0 %v356
  %v400 = vpop.f32.mrf.mxu0
  %v401 = vadd.f32 0.0, %v400
  %v402 = vpop.f32.mrf.mxu0
  %v403 = vadd.f32 0.0, %v402
  %404 = vmatmul.bf16.gmra.mxu0 %v359
  %v405 = vpop.f32.mrf.mxu0
  %v406 = vadd.f32 0.0, %v405
  %v407 = vpop.f32.mrf.mxu0
  %v408 = vadd.f32 0.0, %v407
  %409 = vdwg.mxu0
  %410 = vmatpush.bf16.msra.mxu0 0
  %411 = vmatpush.bf16.msra.mxu0 0
  %412 = vmatpush.bf16.msra.mxu0 0
  %413 = vmatpush.bf16.msra.mxu0 0
  %414 = vmatpush.bf16.msra.mxu0 0
  %415 = vmatpush.bf16.msra.mxu0 0
  %416 = vmatpush.bf16.msra.mxu0 %v314
  %417 = vmatpush.bf16.msra.mxu0 %v306
  %418 = vmatmul.bf16.gmra.mxu0 %v338
  %v419 = vpop.f32.mrf.mxu0
  %v420 = vadd.f32 0.0, %v419
  %v421 = vpop.f32.mrf.mxu0
  %v422 = vadd.f32 0.0, %v421
  %423 = vmatmul.bf16.gmra.mxu0 %v341
  %v424 = vpop.f32.mrf.mxu0
  %v425 = vadd.f32 0.0, %v424
  %v426 = vpop.f32.mrf.mxu0
  %v427 = vadd.f32 0.0, %v426
  %428 = vmatmul.bf16.gmra.mxu0 %v344
  %v429 = vpop.f32.mrf.mxu0
  %v430 = vadd.f32 0.0, %v429
  %v431 = vpop.f32.mrf.mxu0
  %v432 = vadd.f32 0.0, %v431
  %433 = vmatmul.bf16.gmra.mxu0 %v347
  %v434 = vpop.f32.mrf.mxu0
  %v435 = vadd.f32 0.0, %v434
  %v436 = vpop.f32.mrf.mxu0
  %v437 = vadd.f32 0.0, %v436
  %438 = vmatmul.bf16.gmra.mxu0 %v350
  %v439 = vpop.f32.mrf.mxu0
  %v440 = vadd.f32 0.0, %v439
  %v441 = vpop.f32.mrf.mxu0
  %v442 = vadd.f32 0.0, %v441
  %443 = vmatmul.bf16.gmra.mxu0 %v353
  %v444 = vpop.f32.mrf.mxu0
  %v445 = vadd.f32 0.0, %v444
  %v446 = vpop.f32.mrf.mxu0
  %v447 = vadd.f32 0.0, %v446
  %448 = vmatmul.bf16.gmra.mxu0 %v356
  %v449 = vpop.f32.mrf.mxu0
  %v450 = vadd.f32 0.0, %v449
  %v451 = vpop.f32.mrf.mxu0
  %v452 = vadd.f32 0.0, %v451
  %453 = vmatmul.bf16.gmra.mxu0 %v359
  %v454 = vpop.f32.mrf.mxu0
  %v455 = vadd.f32 0.0, %v454
  %v456 = vpop.f32.mrf.mxu0
  %v457 = vadd.f32 0.0, %v456
  %458 = vdwg.mxu0
  %459 = vmatpush.bf16.msra.mxu0 0
  %460 = vmatpush.bf16.msra.mxu0 0
  %461 = vmatpush.bf16.msra.mxu0 0
  %462 = vmatpush.bf16.msra.mxu0 0
  %463 = vmatpush.bf16.msra.mxu0 0
  %464 = vmatpush.bf16.msra.mxu0 0
  %465 = vmatpush.bf16.msra.mxu0 %v315
  %466 = vmatpush.bf16.msra.mxu0 %v307
  %467 = vmatmul.bf16.gmra.mxu0 %v338
  %v468 = vpop.f32.mrf.mxu0
  %v469 = vadd.f32 0.0, %v468
  %v470 = vpop.f32.mrf.mxu0
  %v471 = vadd.f32 0.0, %v470
  %472 = vmatmul.bf16.gmra.mxu0 %v341
  %v473 = vpop.f32.mrf.mxu0
  %v474 = vadd.f32 0.0, %v473
  %v475 = vpop.f32.mrf.mxu0
  %v476 = vadd.f32 0.0, %v475
  %477 = vmatmul.bf16.gmra.mxu0 %v344
  %v478 = vpop.f32.mrf.mxu0
  %v479 = vadd.f32 0.0, %v478
  %v480 = vpop.f32.mrf.mxu0
  %v481 = vadd.f32 0.0, %v480
  %482 = vmatmul.bf16.gmra.mxu0 %v347
  %v483 = vpop.f32.mrf.mxu0
  %v484 = vadd.f32 0.0, %v483
  %v485 = vpop.f32.mrf.mxu0
  %v486 = vadd.f32 0.0, %v485
  %487 = vmatmul.bf16.gmra.mxu0 %v350
  %v488 = vpop.f32.mrf.mxu0
  %v489 = vadd.f32 0.0, %v488
  %v490 = vpop.f32.mrf.mxu0
  %v491 = vadd.f32 0.0, %v490
  %492 = vmatmul.bf16.gmra.mxu0 %v353
  %v493 = vpop.f32.mrf.mxu0
  %v494 = vadd.f32 0.0, %v493
  %v495 = vpop.f32.mrf.mxu0
  %v496 = vadd.f32 0.0, %v495
  %497 = vmatmul.bf16.gmra.mxu0 %v356
  %v498 = vpop.f32.mrf.mxu0
  %v499 = vadd.f32 0.0, %v498
  %v500 = vpop.f32.mrf.mxu0
  %v501 = vadd.f32 0.0, %v500
  %502 = vmatmul.bf16.gmra.mxu0 %v359
  %v503 = vpop.f32.mrf.mxu0
  %v504 = vadd.f32 0.0, %v503
  %v505 = vpop.f32.mrf.mxu0
  %v506 = vadd.f32 0.0, %v505
  %507 = vdwg.mxu0
  %508 = vmatpush.bf16.msra.mxu0 0
  %509 = vmatpush.bf16.msra.mxu0 0
  %510 = vmatpush.bf16.msra.mxu0 0
  %511 = vmatpush.bf16.msra.mxu0 0
  %512 = vmatpush.bf16.msra.mxu0 0
  %513 = vmatpush.bf16.msra.mxu0 0
  %514 = vmatpush.bf16.msra.mxu0 %v316
  %515 = vmatpush.bf16.msra.mxu0 %v308
  %516 = vmatmul.bf16.gmra.mxu0 %v338
  %v517 = vpop.f32.mrf.mxu0
  %v518 = vadd.f32 0.0, %v517
  %v519 = vpop.f32.mrf.mxu0
  %v520 = vadd.f32 0.0, %v519
  %521 = vmatmul.bf16.gmra.mxu0 %v341
  %v522 = vpop.f32.mrf.mxu0
  %v523 = vadd.f32 0.0, %v522
  %v524 = vpop.f32.mrf.mxu0
  %v525 = vadd.f32 0.0, %v524
  %526 = vmatmul.bf16.gmra.mxu0 %v344
  %v527 = vpop.f32.mrf.mxu0
  %v528 = vadd.f32 0.0, %v527
  %v529 = vpop.f32.mrf.mxu0
  %v530 = vadd.f32 0.0, %v529
  %531 = vmatmul.bf16.gmra.mxu0 %v347
  %v532 = vpop.f32.mrf.mxu0
  %v533 = vadd.f32 0.0, %v532
  %v534 = vpop.f32.mrf.mxu0
  %v535 = vadd.f32 0.0, %v534
  %536 = vmatmul.bf16.gmra.mxu0 %v350
  %v537 = vpop.f32.mrf.mxu0
  %v538 = vadd.f32 0.0, %v537
  %v539 = vpop.f32.mrf.mxu0
  %v540 = vadd.f32 0.0, %v539
  %541 = vmatmul.bf16.gmra.mxu0 %v353
  %v542 = vpop.f32.mrf.mxu0
  %v543 = vadd.f32 0.0, %v542
  %v544 = vpop.f32.mrf.mxu0
  %v545 = vadd.f32 0.0, %v544
  %546 = vmatmul.bf16.gmra.mxu0 %v356
  %v547 = vpop.f32.mrf.mxu0
  %v548 = vadd.f32 0.0, %v547
  %v549 = vpop.f32.mrf.mxu0
  %v550 = vadd.f32 0.0, %v549
  %551 = vmatmul.bf16.gmra.mxu0 %v359
  %v552 = vpop.f32.mrf.mxu0
  %v553 = vadd.f32 0.0, %v552
  %v554 = vpop.f32.mrf.mxu0
  %v555 = vadd.f32 0.0, %v554
  %556 = vdwg.mxu0
  %557 = vmatpush.bf16.msra.mxu0 0
  %558 = vmatpush.bf16.msra.mxu0 0
  %559 = vmatpush.bf16.msra.mxu0 0
  %560 = vmatpush.bf16.msra.mxu0 0
  %561 = vmatpush.bf16.msra.mxu0 0
  %562 = vmatpush.bf16.msra.mxu0 0
  %563 = vmatpush.bf16.msra.mxu0 %v317
  %564 = vmatpush.bf16.msra.mxu0 %v309
  %565 = vmatmul.bf16.gmra.mxu0 %v338
  %v566 = vpop.f32.mrf.mxu0
  %v567 = vadd.f32 0.0, %v566
  %v568 = vpop.f32.mrf.mxu0
  %v569 = vadd.f32 0.0, %v568
  %570 = vmatmul.bf16.gmra.mxu0 %v341
  %v571 = vpop.f32.mrf.mxu0
  %v572 = vadd.f32 0.0, %v571
  %v573 = vpop.f32.mrf.mxu0
  %v574 = vadd.f32 0.0, %v573
  %575 = vmatmul.bf16.gmra.mxu0 %v344
  %v576 = vpop.f32.mrf.mxu0
  %v577 = vadd.f32 0.0, %v576
  %v578 = vpop.f32.mrf.mxu0
  %v579 = vadd.f32 0.0, %v578
  %580 = vmatmul.bf16.gmra.mxu0 %v347
  %v581 = vpop.f32.mrf.mxu0
  %v582 = vadd.f32 0.0, %v581
  %v583 = vpop.f32.mrf.mxu0
  %v584 = vadd.f32 0.0, %v583
  %585 = vmatmul.bf16.gmra.mxu0 %v350
  %v586 = vpop.f32.mrf.mxu0
  %v587 = vadd.f32 0.0, %v586
  %v588 = vpop.f32.mrf.mxu0
  %v589 = vadd.f32 0.0, %v588
  %590 = vmatmul.bf16.gmra.mxu0 %v353
  %v591 = vpop.f32.mrf.mxu0
  %v592 = vadd.f32 0.0, %v591
  %v593 = vpop.f32.mrf.mxu0
  %v594 = vadd.f32 0.0, %v593
  %595 = vmatmul.bf16.gmra.mxu0 %v356
  %v596 = vpop.f32.mrf.mxu0
  %v597 = vadd.f32 0.0, %v596
  %v598 = vpop.f32.mrf.mxu0
  %v599 = vadd.f32 0.0, %v598
  %600 = vmatmul.bf16.gmra.mxu0 %v359
  %v601 = vpop.f32.mrf.mxu0
  %v602 = vadd.f32 0.0, %v601
  %v603 = vpop.f32.mrf.mxu0
  %v604 = vadd.f32 0.0, %v603
  %605 = vdwg.mxu0
  %606 = vmatpush.bf16.msra.mxu0 0
  %607 = vmatpush.bf16.msra.mxu0 0
  %608 = vmatpush.bf16.msra.mxu0 0
  %609 = vmatpush.bf16.msra.mxu0 0
  %610 = vmatpush.bf16.msra.mxu0 0
  %611 = vmatpush.bf16.msra.mxu0 0
  %612 = vmatpush.bf16.msra.mxu0 %v318
  %613 = vmatpush.bf16.msra.mxu0 %v310
  %614 = vmatmul.bf16.gmra.mxu0 %v338
  %v615 = vpop.f32.mrf.mxu0
  %v616 = vadd.f32 0.0, %v615
  %v617 = vpop.f32.mrf.mxu0
  %v618 = vadd.f32 0.0, %v617
  %619 = vmatmul.bf16.gmra.mxu0 %v341
  %v620 = vpop.f32.mrf.mxu0
  %v621 = vadd.f32 0.0, %v620
  %v622 = vpop.f32.mrf.mxu0
  %v623 = vadd.f32 0.0, %v622
  %624 = vmatmul.bf16.gmra.mxu0 %v344
  %v625 = vpop.f32.mrf.mxu0
  %v626 = vadd.f32 0.0, %v625
  %v627 = vpop.f32.mrf.mxu0
  %v628 = vadd.f32 0.0, %v627
  %629 = vmatmul.bf16.gmra.mxu0 %v347
  %v630 = vpop.f32.mrf.mxu0
  %v631 = vadd.f32 0.0, %v630
  %v632 = vpop.f32.mrf.mxu0
  %v633 = vadd.f32 0.0, %v632
  %634 = vmatmul.bf16.gmra.mxu0 %v350
  %v635 = vpop.f32.mrf.mxu0
  %v636 = vadd.f32 0.0, %v635
  %v637 = vpop.f32.mrf.mxu0
  %v638 = vadd.f32 0.0, %v637
  %639 = vmatmul.bf16.gmra.mxu0 %v353
  %v640 = vpop.f32.mrf.mxu0
  %v641 = vadd.f32 0.0, %v640
  %v642 = vpop.f32.mrf.mxu0
  %v643 = vadd.f32 0.0, %v642
  %644 = vmatmul.bf16.gmra.mxu0 %v356
  %v645 = vpop.f32.mrf.mxu0
  %v646 = vadd.f32 0.0, %v645
  %v647 = vpop.f32.mrf.mxu0
  %v648 = vadd.f32 0.0, %v647
  %649 = vmatmul.bf16.gmra.mxu0 %v359
  %v650 = vpop.f32.mrf.mxu0
  %v651 = vadd.f32 0.0, %v650
  %v652 = vpop.f32.mrf.mxu0
  %v653 = vadd.f32 0.0, %v652
  %654 = vdwg.mxu0
  %655 = vmatpush.bf16.msra.mxu0 0
  %656 = vmatpush.bf16.msra.mxu0 0
  %657 = vmatpush.bf16.msra.mxu0 0
  %658 = vmatpush.bf16.msra.mxu0 0
  %659 = vmatpush.bf16.msra.mxu0 0
  %660 = vmatpush.bf16.msra.mxu0 0
  %661 = vmatpush.bf16.msra.mxu0 %v319
  %662 = vmatpush.bf16.msra.mxu0 %v311
  %663 = vmatmul.bf16.gmra.mxu0 %v338
  %v664 = vpop.f32.mrf.mxu0
  %v665 = vadd.f32 0.0, %v664
  %v666 = vpop.f32.mrf.mxu0
  %v667 = vadd.f32 0.0, %v666
  %668 = vmatmul.bf16.gmra.mxu0 %v341
  %v669 = vpop.f32.mrf.mxu0
  %v670 = vadd.f32 0.0, %v669
  %v671 = vpop.f32.mrf.mxu0
  %v672 = vadd.f32 0.0, %v671
  %673 = vmatmul.bf16.gmra.mxu0 %v344
  %v674 = vpop.f32.mrf.mxu0
  %v675 = vadd.f32 0.0, %v674
  %v676 = vpop.f32.mrf.mxu0
  %v677 = vadd.f32 0.0, %v676
  %678 = vmatmul.bf16.gmra.mxu0 %v347
  %v679 = vpop.f32.mrf.mxu0
  %v680 = vadd.f32 0.0, %v679
  %v681 = vpop.f32.mrf.mxu0
  %v682 = vadd.f32 0.0, %v681
  %683 = vmatmul.bf16.gmra.mxu0 %v350
  %v684 = vpop.f32.mrf.mxu0
  %v685 = vadd.f32 0.0, %v684
  %v686 = vpop.f32.mrf.mxu0
  %v687 = vadd.f32 0.0, %v686
  %688 = vmatmul.bf16.gmra.mxu0 %v353
  %v689 = vpop.f32.mrf.mxu0
  %v690 = vadd.f32 0.0, %v689
  %v691 = vpop.f32.mrf.mxu0
  %v692 = vadd.f32 0.0, %v691
  %693 = vmatmul.bf16.gmra.mxu0 %v356
  %v694 = vpop.f32.mrf.mxu0
  %v695 = vadd.f32 0.0, %v694
  %v696 = vpop.f32.mrf.mxu0
  %v697 = vadd.f32 0.0, %v696
  %698 = vmatmul.bf16.gmra.mxu0 %v359
  %v699 = vpop.f32.mrf.mxu0
  %v700 = vadd.f32 0.0, %v699
  %v701 = vpop.f32.mrf.mxu0
  %v702 = vadd.f32 0.0, %v701
  %703 = vdwg.mxu0
  %704 = vmatpush.bf16.msra.mxu0 0
  %705 = vmatpush.bf16.msra.mxu0 0
  %706 = vmatpush.bf16.msra.mxu0 0
  %707 = vmatpush.bf16.msra.mxu0 0
  %708 = vmatpush.bf16.msra.mxu0 0
  %709 = vmatpush.bf16.msra.mxu0 0
  %710 = vmatpush.bf16.msra.mxu0 %v320
  %711 = vmatpush.bf16.msra.mxu0 %v312
  %712 = vmatmul.bf16.gmra.mxu0 %v338
  %v713 = vpop.f32.mrf.mxu0
  %v714 = vadd.f32 0.0, %v713
  %v715 = vpop.f32.mrf.mxu0
  %v716 = vadd.f32 0.0, %v715
  %717 = vmatmul.bf16.gmra.mxu0 %v341
  %v718 = vpop.f32.mrf.mxu0
  %v719 = vadd.f32 0.0, %v718
  %v720 = vpop.f32.mrf.mxu0
  %v721 = vadd.f32 0.0, %v720
  %722 = vmatmul.bf16.gmra.mxu0 %v344
  %v723 = vpop.f32.mrf.mxu0
  %v724 = vadd.f32 0.0, %v723
  %v725 = vpop.f32.mrf.mxu0
  %v726 = vadd.f32 0.0, %v725
  %727 = vmatmul.bf16.gmra.mxu0 %v347
  %v728 = vpop.f32.mrf.mxu0
  %v729 = vadd.f32 0.0, %v728
  %v730 = vpop.f32.mrf.mxu0
  %v731 = vadd.f32 0.0, %v730
  %732 = vmatmul.bf16.gmra.mxu0 %v350
  %v733 = vpop.f32.mrf.mxu0
  %v734 = vadd.f32 0.0, %v733
  %v735 = vpop.f32.mrf.mxu0
  %v736 = vadd.f32 0.0, %v735
  %737 = vmatmul.bf16.gmra.mxu0 %v353
  %v738 = vpop.f32.mrf.mxu0
  %v739 = vadd.f32 0.0, %v738
  %v740 = vpop.f32.mrf.mxu0
  %v741 = vadd.f32 0.0, %v740
  %742 = vmatmul.bf16.gmra.mxu0 %v356
  %v743 = vpop.f32.mrf.mxu0
  %v744 = vadd.f32 0.0, %v743
  %v745 = vpop.f32.mrf.mxu0
  %v746 = vadd.f32 0.0, %v745
  %747 = vmatmul.bf16.gmra.mxu0 %v359
  %v748 = vpop.f32.mrf.mxu0
  %v749 = vadd.f32 0.0, %v748
  %v750 = vpop.f32.mrf.mxu0
  %v751 = vadd.f32 0.0, %v750
  %752 = vdwg.mxu0
  %753 = vst [vmem:[%s4] sm:$0xff] %v371
  %754 = vst [vmem:[%s4 + $0x8] sm:$0xff] %v420
  %755 = vst [vmem:[%s4 + $0x10] sm:$0xff] %v469
  %756 = vst [vmem:[%s4 + $0x18] sm:$0xff] %v518
  %757 = vst [vmem:[%s4 + $0x20] sm:$0xff] %v567
  %758 = vst [vmem:[%s4 + $0x28] sm:$0xff] %v616
  %759 = vst [vmem:[%s4 + $0x30] sm:$0xff] %v665
  %760 = vst [vmem:[%s4 + $0x38] sm:$0xff] %v714
  %761 = vst [vmem:[%s4 + $0x40] sm:$0xff] %v373
  %762 = vst [vmem:[%s4 + $0x48] sm:$0xff] %v422
  %763 = vst [vmem:[%s4 + $0x50] sm:$0xff] %v471
  %764 = vst [vmem:[%s4 + $0x58] sm:$0xff] %v520
  %765 = vst [vmem:[%s4 + $0x60] sm:$0xff] %v569
  %766 = vst [vmem:[%s4 + $0x68] sm:$0xff] %v618
  %767 = vst [vmem:[%s4 + $0x70] sm:$0xff] %v667
  %768 = vst [vmem:[%s4 + $0x78] sm:$0xff] %v716
  %769 = vst [vmem:[%s4 + $0x80] sm:$0xff] %v376
  %770 = vst [vmem:[%s4 + $0x88] sm:$0xff] %v425
  %771 = vst [vmem:[%s4 + $0x90] sm:$0xff] %v474
  %772 = vst [vmem:[%s4 + $0x98] sm:$0xff] %v523
  %773 = vst [vmem:[%s4 + $0xa0] sm:$0xff] %v572
  %774 = vst [vmem:[%s4 + $0xa8] sm:$0xff] %v621
  %775 = vst [vmem:[%s4 + $0xb0] sm:$0xff] %v670
  %776 = vst [vmem:[%s4 + $0xb8] sm:$0xff] %v719
  %777 = vst [vmem:[%s4 + $0xc0] sm:$0xff] %v378
  %778 = vst [vmem:[%s4 + $0xc8] sm:$0xff] %v427
  %779 = vst [vmem:[%s4 + $0xd0] sm:$0xff] %v476
  %780 = vst [vmem:[%s4 + $0xd8] sm:$0xff] %v525
  %781 = vst [vmem:[%s4 + $0xe0] sm:$0xff] %v574
  %782 = vst [vmem:[%s4 + $0xe8] sm:$0xff] %v623
  %783 = vst [vmem:[%s4 + $0xf0] sm:$0xff] %v672
  %784 = vst [vmem:[%s4 + $0xf8] sm:$0xff] %v721
  %785 = vst [vmem:[%s4 + $0x100] sm:$0xff] %v381
  %786 = vst [vmem:[%s4 + $0x108] sm:$0xff] %v430
  %787 = vst [vmem:[%s4 + $0x110] sm:$0xff] %v479
  %788 = vst [vmem:[%s4 + $0x118] sm:$0xff] %v528
  %789 = vst [vmem:[%s4 + $0x120] sm:$0xff] %v577
  %790 = vst [vmem:[%s4 + $0x128] sm:$0xff] %v626
  %791 = vst [vmem:[%s4 + $0x130] sm:$0xff] %v675
  %792 = vst [vmem:[%s4 + $0x138] sm:$0xff] %v724
  %793 = vst [vmem:[%s4 + $0x140] sm:$0xff] %v383
  %794 = vst [vmem:[%s4 + $0x148] sm:$0xff] %v432
  %795 = vst [vmem:[%s4 + $0x150] sm:$0xff] %v481
  %796 = vst [vmem:[%s4 + $0x158] sm:$0xff] %v530
  %797 = vst [vmem:[%s4 + $0x160] sm:$0xff] %v579
  %798 = vst [vmem:[%s4 + $0x168] sm:$0xff] %v628
  %799 = vst [vmem:[%s4 + $0x170] sm:$0xff] %v677
  %800 = vst [vmem:[%s4 + $0x178] sm:$0xff] %v726
  %801 = vst [vmem:[%s4 + $0x180] sm:$0xff] %v386
  %802 = vst [vmem:[%s4 + $0x188] sm:$0xff] %v435
  %803 = vst [vmem:[%s4 + $0x190] sm:$0xff] %v484
  %804 = vst [vmem:[%s4 + $0x198] sm:$0xff] %v533
  %805 = vst [vmem:[%s4 + $0x1a0] sm:$0xff] %v582
  %806 = vst [vmem:[%s4 + $0x1a8] sm:$0xff] %v631
  %807 = vst [vmem:[%s4 + $0x1b0] sm:$0xff] %v680
  %808 = vst [vmem:[%s4 + $0x1b8] sm:$0xff] %v729
  %809 = vst [vmem:[%s4 + $0x1c0] sm:$0xff] %v388
  %810 = vst [vmem:[%s4 + $0x1c8] sm:$0xff] %v437
  %811 = vst [vmem:[%s4 + $0x1d0] sm:$0xff] %v486
  %812 = vst [vmem:[%s4 + $0x1d8] sm:$0xff] %v535
  %813 = vst [vmem:[%s4 + $0x1e0] sm:$0xff] %v584
  %814 = vst [vmem:[%s4 + $0x1e8] sm:$0xff] %v633
  %815 = vst [vmem:[%s4 + $0x1f0] sm:$0xff] %v682
  %816 = vst [vmem:[%s4 + $0x1f8] sm:$0xff] %v731
  %817 = vst [vmem:[%s4 + $0x200] sm:$0xff] %v391
  %818 = vst [vmem:[%s4 + $0x208] sm:$0xff] %v440
  %819 = vst [vmem:[%s4 + $0x210] sm:$0xff] %v489
  %820 = vst [vmem:[%s4 + $0x218] sm:$0xff] %v538
  %821 = vst [vmem:[%s4 + $0x220] sm:$0xff] %v587
  %822 = vst [vmem:[%s4 + $0x228] sm:$0xff] %v636
  %823 = vst [vmem:[%s4 + $0x230] sm:$0xff] %v685
  %824 = vst [vmem:[%s4 + $0x238] sm:$0xff] %v734
  %825 = vst [vmem:[%s4 + $0x240] sm:$0xff] %v393
  %826 = vst [vmem:[%s4 + $0x248] sm:$0xff] %v442
  %827 = vst [vmem:[%s4 + $0x250] sm:$0xff] %v491
  %828 = vst [vmem:[%s4 + $0x258] sm:$0xff] %v540
  %829 = vst [vmem:[%s4 + $0x260] sm:$0xff] %v589
  %830 = vst [vmem:[%s4 + $0x268] sm:$0xff] %v638
  %831 = vst [vmem:[%s4 + $0x270] sm:$0xff] %v687
  %832 = vst [vmem:[%s4 + $0x278] sm:$0xff] %v736
  %833 = vst [vmem:[%s4 + $0x280] sm:$0xff] %v396
  %834 = vst [vmem:[%s4 + $0x288] sm:$0xff] %v445
  %835 = vst [vmem:[%s4 + $0x290] sm:$0xff] %v494
  %836 = vst [vmem:[%s4 + $0x298] sm:$0xff] %v543
  %837 = vst [vmem:[%s4 + $0x2a0] sm:$0xff] %v592
  %838 = vst [vmem:[%s4 + $0x2a8] sm:$0xff] %v641
  %839 = vst [vmem:[%s4 + $0x2b0] sm:$0xff] %v690
  %840 = vst [vmem:[%s4 + $0x2b8] sm:$0xff] %v739
  %841 = vst [vmem:[%s4 + $0x2c0] sm:$0xff] %v398
  %842 = vst [vmem:[%s4 + $0x2c8] sm:$0xff] %v447
  %843 = vst [vmem:[%s4 + $0x2d0] sm:$0xff] %v496
  %844 = vst [vmem:[%s4 + $0x2d8] sm:$0xff] %v545
  %845 = vst [vmem:[%s4 + $0x2e0] sm:$0xff] %v594
  %846 = vst [vmem:[%s4 + $0x2e8] sm:$0xff] %v643
  %847 = vst [vmem:[%s4 + $0x2f0] sm:$0xff] %v692
  %848 = vst [vmem:[%s4 + $0x2f8] sm:$0xff] %v741
  %849 = vst [vmem:[%s4 + $0x300] sm:$0xff] %v401
  %850 = vst [vmem:[%s4 + $0x308] sm:$0xff] %v450
  %851 = vst [vmem:[%s4 + $0x310] sm:$0xff] %v499
  %852 = vst [vmem:[%s4 + $0x318] sm:$0xff] %v548
  %853 = vst [vmem:[%s4 + $0x320] sm:$0xff] %v597
  %854 = vst [vmem:[%s4 + $0x328] sm:$0xff] %v646
  %855 = vst [vmem:[%s4 + $0x330] sm:$0xff] %v695
  %856 = vst [vmem:[%s4 + $0x338] sm:$0xff] %v744
  %857 = vst [vmem:[%s4 + $0x340] sm:$0xff] %v403
  %858 = vst [vmem:[%s4 + $0x348] sm:$0xff] %v452
  %859 = vst [vmem:[%s4 + $0x350] sm:$0xff] %v501
  %860 = vst [vmem:[%s4 + $0x358] sm:$0xff] %v550
  %861 = vst [vmem:[%s4 + $0x360] sm:$0xff] %v599
  %862 = vst [vmem:[%s4 + $0x368] sm:$0xff] %v648
  %863 = vst [vmem:[%s4 + $0x370] sm:$0xff] %v697
  %864 = vst [vmem:[%s4 + $0x378] sm:$0xff] %v746
  %865 = vst [vmem:[%s4 + $0x380] sm:$0xff] %v406
  %866 = vst [vmem:[%s4 + $0x388] sm:$0xff] %v455
  %867 = vst [vmem:[%s4 + $0x390] sm:$0xff] %v504
  %868 = vst [vmem:[%s4 + $0x398] sm:$0xff] %v553
  %869 = vst [vmem:[%s4 + $0x3a0] sm:$0xff] %v602
  %870 = vst [vmem:[%s4 + $0x3a8] sm:$0xff] %v651
  %871 = vst [vmem:[%s4 + $0x3b0] sm:$0xff] %v700
  %872 = vst [vmem:[%s4 + $0x3b8] sm:$0xff] %v749
  %873 = vst [vmem:[%s4 + $0x3c0] sm:$0xff] %v408
  %874 = vst [vmem:[%s4 + $0x3c8] sm:$0xff] %v457
  %875 = vst [vmem:[%s4 + $0x3d0] sm:$0xff] %v506
  %876 = vst [vmem:[%s4 + $0x3d8] sm:$0xff] %v555
  %877 = vst [vmem:[%s4 + $0x3e0] sm:$0xff] %v604
  %878 = vst [vmem:[%s4 + $0x3e8] sm:$0xff] %v653
  %879 = vst [vmem:[%s4 + $0x3f0] sm:$0xff] %v702
  %880 = vst [vmem:[%s4 + $0x3f8] sm:$0xff] %v751
  // Predicated region
  $region18: #{netG_forward.14} parent=0 // pred_check
    _
  $region19: #{netG_forward.14} parent=0 // pred_check_branch
    %882 = sbr.rel (0) target = $region21
  $region20: #{netG_forward.14} parent=0 // pred_region
    _
  $region21: #{netG_forward.14} parent=0 // pred_fallthru
    _
  // Predicated region
  $region22: #{netG_forward.14} parent=0 // pred_check
    _
  $region23: #{netG_forward.14} parent=0 // pred_check_branch
    %884 = sbr.rel (0) target = $region25
  $region24: #{netG_forward.14} parent=0 // pred_region
    _
  $region25: #{netG_forward.14} parent=0 // pred_fallthru
    _

// kernel: netG_forward.15
$region0: #{netG_forward.15}
  #allocation0 [shape = 'u32[]', space=smem, size = 0x4, offset = 0x4, fixed_abs, tag = 'smem constant byte address 0x4 - core index']
  #allocation1 [shape = 'u32[72,128]{1,0:T(1,128)}', space=vmem, size = 0x9000, scoped, tag = 'internal scratch']
  %s0 = inlined_call_operand.vmem [shape: f32[512,64], index: 0, kind: input, shape index: {}]
  %s1 = inlined_call_operand.vmem [shape: f32[1,64], index: 1, kind: input, shape index: {}]
  %s2 = inlined_call_operand.vmem [shape: f32[1,64], index: 2, kind: input, shape index: {}]
  %s3 = inlined_call_operand.vmem [shape: bf16[64,128], index: 3, kind: input, shape index: {}]
  %s4 = inlined_call_operand.vmem [shape: f32[512,128], index: 4, kind: output, shape index: {0}]
  %s5 = inlined_call_operand.vmem [shape: f32[512,64], index: 5, kind: output, shape index: {1}]
  %6 = xla_tuple %s4, %s5
  %s7 = sld [smem:[#allocation0]]
  $region34: #{netG_forward.15} parent=0
    _
  %s9 = ssub.s32 1, %s7
  %s10 = scalar_select 0, %s9, %s7
  // Predicated region
  $region2: #{netG_forward.15} parent=0 // pred_check
    _
  $region3: #{netG_forward.15} parent=0 // pred_check_branch
    %12 = sbr.rel (0) target = $region5
  $region4: #{netG_forward.15} parent=0 // pred_region
    _
  $region5: #{netG_forward.15} parent=0 // pred_fallthru
    _
  // Predicated region
  $region6: #{netG_forward.15} parent=0 // pred_check
    _
  $region7: #{netG_forward.15} parent=0 // pred_check_branch
    %14 = sbr.rel (0) target = $region9
  $region8: #{netG_forward.15} parent=0 // pred_region
    _
  $region9: #{netG_forward.15} parent=0 // pred_fallthru
    _
  // Predicated region
  $region10: #{netG_forward.15} parent=0 // pred_check
    _
  $region11: #{netG_forward.15} parent=0 // pred_check_branch
    %16 = sbr.rel (0) target = $region13
  $region12: #{netG_forward.15} parent=0 // pred_region
    _
  $region13: #{netG_forward.15} parent=0 // pred_fallthru
    _
  // Predicated region
  $region14: #{netG_forward.15} parent=0 // pred_check
    _
  $region15: #{netG_forward.15} parent=0 // pred_check_branch
    %18 = sbr.rel (0) target = $region17
  $region16: #{netG_forward.15} parent=0 // pred_region
    _
  $region17: #{netG_forward.15} parent=0 // pred_fallthru
    _
  %v20 = vld [vmem:[%s0] sm:$0xff]
  %v21 = vld [vmem:[%s0 + $0x8] sm:$0xff]
  %v22 = vld [vmem:[%s0 + $0x10] sm:$0xff]
  %v23 = vld [vmem:[%s0 + $0x18] sm:$0xff]
  %v24 = vld [vmem:[%s0 + $0x20] sm:$0xff]
  %v25 = vld [vmem:[%s0 + $0x28] sm:$0xff]
  %v26 = vld [vmem:[%s0 + $0x30] sm:$0xff]
  %v27 = vld [vmem:[%s0 + $0x38] sm:$0xff]
  %v28 = vld [vmem:[%s0 + $0x40] sm:$0xff]
  %v29 = vld [vmem:[%s0 + $0x48] sm:$0xff]
  %v30 = vld [vmem:[%s0 + $0x50] sm:$0xff]
  %v31 = vld [vmem:[%s0 + $0x58] sm:$0xff]
  %v32 = vld [vmem:[%s0 + $0x60] sm:$0xff]
  %v33 = vld [vmem:[%s0 + $0x68] sm:$0xff]
  %v34 = vld [vmem:[%s0 + $0x70] sm:$0xff]
  %v35 = vld [vmem:[%s0 + $0x78] sm:$0xff]
  %v36 = vld [vmem:[%s0 + $0x80] sm:$0xff]
  %v37 = vld [vmem:[%s0 + $0x88] sm:$0xff]
  %v38 = vld [vmem:[%s0 + $0x90] sm:$0xff]
  %v39 = vld [vmem:[%s0 + $0x98] sm:$0xff]
  %v40 = vld [vmem:[%s0 + $0xa0] sm:$0xff]
  %v41 = vld [vmem:[%s0 + $0xa8] sm:$0xff]
  %v42 = vld [vmem:[%s0 + $0xb0] sm:$0xff]
  %v43 = vld [vmem:[%s0 + $0xb8] sm:$0xff]
  %v44 = vld [vmem:[%s0 + $0xc0] sm:$0xff]
  %v45 = vld [vmem:[%s0 + $0xc8] sm:$0xff]
  %v46 = vld [vmem:[%s0 + $0xd0] sm:$0xff]
  %v47 = vld [vmem:[%s0 + $0xd8] sm:$0xff]
  %v48 = vld [vmem:[%s0 + $0xe0] sm:$0xff]
  %v49 = vld [vmem:[%s0 + $0xe8] sm:$0xff]
  %v50 = vld [vmem:[%s0 + $0xf0] sm:$0xff]
  %v51 = vld [vmem:[%s0 + $0xf8] sm:$0xff]
  %v52 = vld [vmem:[%s0 + $0x100] sm:$0xff]
  %v53 = vld [vmem:[%s0 + $0x108] sm:$0xff]
  %v54 = vld [vmem:[%s0 + $0x110] sm:$0xff]
  %v55 = vld [vmem:[%s0 + $0x118] sm:$0xff]
  %v56 = vld [vmem:[%s0 + $0x120] sm:$0xff]
  %v57 = vld [vmem:[%s0 + $0x128] sm:$0xff]
  %v58 = vld [vmem:[%s0 + $0x130] sm:$0xff]
  %v59 = vld [vmem:[%s0 + $0x138] sm:$0xff]
  %v60 = vld [vmem:[%s0 + $0x140] sm:$0xff]
  %v61 = vld [vmem:[%s0 + $0x148] sm:$0xff]
  %v62 = vld [vmem:[%s0 + $0x150] sm:$0xff]
  %v63 = vld [vmem:[%s0 + $0x158] sm:$0xff]
  %v64 = vld [vmem:[%s0 + $0x160] sm:$0xff]
  %v65 = vld [vmem:[%s0 + $0x168] sm:$0xff]
  %v66 = vld [vmem:[%s0 + $0x170] sm:$0xff]
  %v67 = vld [vmem:[%s0 + $0x178] sm:$0xff]
  %v68 = vld [vmem:[%s0 + $0x180] sm:$0xff]
  %v69 = vld [vmem:[%s0 + $0x188] sm:$0xff]
  %v70 = vld [vmem:[%s0 + $0x190] sm:$0xff]
  %v71 = vld [vmem:[%s0 + $0x198] sm:$0xff]
  %v72 = vld [vmem:[%s0 + $0x1a0] sm:$0xff]
  %v73 = vld [vmem:[%s0 + $0x1a8] sm:$0xff]
  %v74 = vld [vmem:[%s0 + $0x1b0] sm:$0xff]
  %v75 = vld [vmem:[%s0 + $0x1b8] sm:$0xff]
  %v76 = vld [vmem:[%s0 + $0x1c0] sm:$0xff]
  %v77 = vld [vmem:[%s0 + $0x1c8] sm:$0xff]
  %v78 = vld [vmem:[%s0 + $0x1d0] sm:$0xff]
  %v79 = vld [vmem:[%s0 + $0x1d8] sm:$0xff]
  %v80 = vld [vmem:[%s0 + $0x1e0] sm:$0xff]
  %v81 = vld [vmem:[%s0 + $0x1e8] sm:$0xff]
  %v82 = vld [vmem:[%s0 + $0x1f0] sm:$0xff]
  %v83 = vld [vmem:[%s0 + $0x1f8] sm:$0xff]
  %v84 = vld [vmem:[%s1] sm:$0x1]
  %v85 = vld [vmem:[%s2] sm:$0x1]
  %vm86 = vcmask 523264
  %v87 = vsel %vm86, %v20, 0.0
  %v88 = vsel %vm86, %v21, 0.0
  %v89 = vadd.f32 %v87, %v88
  %v90 = vsel %vm86, %v22, 0.0
  %v91 = vadd.f32 %v89, %v90
  %v92 = vsel %vm86, %v23, 0.0
  %v93 = vadd.f32 %v91, %v92
  %v94 = vsel %vm86, %v24, 0.0
  %v95 = vadd.f32 %v93, %v94
  %v96 = vsel %vm86, %v25, 0.0
  %v97 = vadd.f32 %v95, %v96
  %v98 = vsel %vm86, %v26, 0.0
  %v99 = vadd.f32 %v97, %v98
  %v100 = vsel %vm86, %v27, 0.0
  %v101 = vadd.f32 %v99, %v100
  %v102 = vsel %vm86, %v28, 0.0
  %v103 = vadd.f32 %v101, %v102
  %v104 = vsel %vm86, %v29, 0.0
  %v105 = vadd.f32 %v103, %v104
  %v106 = vsel %vm86, %v30, 0.0
  %v107 = vadd.f32 %v105, %v106
  %v108 = vsel %vm86, %v31, 0.0
  %v109 = vadd.f32 %v107, %v108
  %v110 = vsel %vm86, %v32, 0.0
  %v111 = vadd.f32 %v109, %v110
  %v112 = vsel %vm86, %v33, 0.0
  %v113 = vadd.f32 %v111, %v112
  %v114 = vsel %vm86, %v34, 0.0
  %v115 = vadd.f32 %v113, %v114
  %v116 = vsel %vm86, %v35, 0.0
  %v117 = vadd.f32 %v115, %v116
  %v118 = vsel %vm86, %v36, 0.0
  %v119 = vadd.f32 %v117, %v118
  %v120 = vsel %vm86, %v37, 0.0
  %v121 = vadd.f32 %v119, %v120
  %v122 = vsel %vm86, %v38, 0.0
  %v123 = vadd.f32 %v121, %v122
  %v124 = vsel %vm86, %v39, 0.0
  %v125 = vadd.f32 %v123, %v124
  %v126 = vsel %vm86, %v40, 0.0
  %v127 = vadd.f32 %v125, %v126
  %v128 = vsel %vm86, %v41, 0.0
  %v129 = vadd.f32 %v127, %v128
  %v130 = vsel %vm86, %v42, 0.0
  %v131 = vadd.f32 %v129, %v130
  %v132 = vsel %vm86, %v43, 0.0
  %v133 = vadd.f32 %v131, %v132
  %v134 = vsel %vm86, %v44, 0.0
  %v135 = vadd.f32 %v133, %v134
  %v136 = vsel %vm86, %v45, 0.0
  %v137 = vadd.f32 %v135, %v136
  %v138 = vsel %vm86, %v46, 0.0
  %v139 = vadd.f32 %v137, %v138
  %v140 = vsel %vm86, %v47, 0.0
  %v141 = vadd.f32 %v139, %v140
  %v142 = vsel %vm86, %v48, 0.0
  %v143 = vadd.f32 %v141, %v142
  %v144 = vsel %vm86, %v49, 0.0
  %v145 = vadd.f32 %v143, %v144
  %v146 = vsel %vm86, %v50, 0.0
  %v147 = vadd.f32 %v145, %v146
  %v148 = vsel %vm86, %v51, 0.0
  %v149 = vadd.f32 %v147, %v148
  %v150 = vsel %vm86, %v52, 0.0
  %v151 = vadd.f32 %v149, %v150
  %v152 = vsel %vm86, %v53, 0.0
  %v153 = vadd.f32 %v151, %v152
  %v154 = vsel %vm86, %v54, 0.0
  %v155 = vadd.f32 %v153, %v154
  %v156 = vsel %vm86, %v55, 0.0
  %v157 = vadd.f32 %v155, %v156
  %v158 = vsel %vm86, %v56, 0.0
  %v159 = vadd.f32 %v157, %v158
  %v160 = vsel %vm86, %v57, 0.0
  %v161 = vadd.f32 %v159, %v160
  %v162 = vsel %vm86, %v58, 0.0
  %v163 = vadd.f32 %v161, %v162
  %v164 = vsel %vm86, %v59, 0.0
  %v165 = vadd.f32 %v163, %v164
  %v166 = vsel %vm86, %v60, 0.0
  %v167 = vadd.f32 %v165, %v166
  %v168 = vsel %vm86, %v61, 0.0
  %v169 = vadd.f32 %v167, %v168
  %v170 = vsel %vm86, %v62, 0.0
  %v171 = vadd.f32 %v169, %v170
  %v172 = vsel %vm86, %v63, 0.0
  %v173 = vadd.f32 %v171, %v172
  %v174 = vsel %vm86, %v64, 0.0
  %v175 = vadd.f32 %v173, %v174
  %v176 = vsel %vm86, %v65, 0.0
  %v177 = vadd.f32 %v175, %v176
  %v178 = vsel %vm86, %v66, 0.0
  %v179 = vadd.f32 %v177, %v178
  %v180 = vsel %vm86, %v67, 0.0
  %v181 = vadd.f32 %v179, %v180
  %v182 = vsel %vm86, %v68, 0.0
  %v183 = vadd.f32 %v181, %v182
  %v184 = vsel %vm86, %v69, 0.0
  %v185 = vadd.f32 %v183, %v184
  %v186 = vsel %vm86, %v70, 0.0
  %v187 = vadd.f32 %v185, %v186
  %v188 = vsel %vm86, %v71, 0.0
  %v189 = vadd.f32 %v187, %v188
  %v190 = vsel %vm86, %v72, 0.0
  %v191 = vadd.f32 %v189, %v190
  %v192 = vsel %vm86, %v73, 0.0
  %v193 = vadd.f32 %v191, %v192
  %v194 = vsel %vm86, %v74, 0.0
  %v195 = vadd.f32 %v193, %v194
  %v196 = vsel %vm86, %v75, 0.0
  %v197 = vadd.f32 %v195, %v196
  %v198 = vsel %vm86, %v76, 0.0
  %v199 = vadd.f32 %v197, %v198
  %v200 = vsel %vm86, %v77, 0.0
  %v201 = vadd.f32 %v199, %v200
  %v202 = vsel %vm86, %v78, 0.0
  %v203 = vadd.f32 %v201, %v202
  %v204 = vsel %vm86, %v79, 0.0
  %v205 = vadd.f32 %v203, %v204
  %v206 = vsel %vm86, %v80, 0.0
  %v207 = vadd.f32 %v205, %v206
  %v208 = vsel %vm86, %v81, 0.0
  %v209 = vadd.f32 %v207, %v208
  %v210 = vsel %vm86, %v82, 0.0
  %v211 = vadd.f32 %v209, %v210
  %v212 = vsel %vm86, %v83, 0.0
  %v213 = vadd.f32 %v211, %v212
  %v214 = vrot.slane %v213, 4
  %v215 = vadd.f32 %v213, %v214
  %v216 = vrot.slane %v215, 2
  %v217 = vadd.f32 %v215, %v216
  %v218 = vrot.slane %v217, 1
  %v219 = vadd.f32 %v217, %v218
  %v220 = vrcp.pop 512.0
  %v221 = vmul.f32 512.0, %v220
  %v222 = vsub.f32 1.0, %v221
  %v223 = vmul.f32 %v220, %v222
  %v224 = vadd.f32 %v220, %v223
  %vm225 = vweird.f32 %v220
  %v226 = vsel %vm225, %v220, %v224
  %v227 = vmul.f32 %v219, %v226
  %v228 = vsub.f32 %v20, %v227
  %v229 = vsub.f32 %v21, %v227
  %v230 = vsub.f32 %v22, %v227
  %v231 = vsub.f32 %v23, %v227
  %v232 = vsub.f32 %v24, %v227
  %v233 = vsub.f32 %v25, %v227
  %v234 = vsub.f32 %v26, %v227
  %v235 = vsub.f32 %v27, %v227
  %v236 = vsub.f32 %v28, %v227
  %v237 = vsub.f32 %v29, %v227
  %v238 = vsub.f32 %v30, %v227
  %v239 = vsub.f32 %v31, %v227
  %v240 = vsub.f32 %v32, %v227
  %v241 = vsub.f32 %v33, %v227
  %v242 = vsub.f32 %v34, %v227
  %v243 = vsub.f32 %v35, %v227
  %v244 = vsub.f32 %v36, %v227
  %v245 = vsub.f32 %v37, %v227
  %v246 = vsub.f32 %v38, %v227
  %v247 = vsub.f32 %v39, %v227
  %v248 = vsub.f32 %v40, %v227
  %v249 = vsub.f32 %v41, %v227
  %v250 = vsub.f32 %v42, %v227
  %v251 = vsub.f32 %v43, %v227
  %v252 = vsub.f32 %v44, %v227
  %v253 = vsub.f32 %v45, %v227
  %v254 = vsub.f32 %v46, %v227
  %v255 = vsub.f32 %v47, %v227
  %v256 = vsub.f32 %v48, %v227
  %v257 = vsub.f32 %v49, %v227
  %v258 = vsub.f32 %v50, %v227
  %v259 = vsub.f32 %v51, %v227
  %v260 = vsub.f32 %v52, %v227
  %v261 = vsub.f32 %v53, %v227
  %v262 = vsub.f32 %v54, %v227
  %v263 = vsub.f32 %v55, %v227
  %v264 = vsub.f32 %v56, %v227
  %v265 = vsub.f32 %v57, %v227
  %v266 = vsub.f32 %v58, %v227
  %v267 = vsub.f32 %v59, %v227
  %v268 = vsub.f32 %v60, %v227
  %v269 = vsub.f32 %v61, %v227
  %v270 = vsub.f32 %v62, %v227
  %v271 = vsub.f32 %v63, %v227
  %v272 = vsub.f32 %v64, %v227
  %v273 = vsub.f32 %v65, %v227
  %v274 = vsub.f32 %v66, %v227
  %v275 = vsub.f32 %v67, %v227
  %v276 = vsub.f32 %v68, %v227
  %v277 = vsub.f32 %v69, %v227
  %v278 = vsub.f32 %v70, %v227
  %v279 = vsub.f32 %v71, %v227
  %v280 = vsub.f32 %v72, %v227
  %v281 = vsub.f32 %v73, %v227
  %v282 = vsub.f32 %v74, %v227
  %v283 = vsub.f32 %v75, %v227
  %v284 = vsub.f32 %v76, %v227
  %v285 = vsub.f32 %v77, %v227
  %v286 = vsub.f32 %v78, %v227
  %v287 = vsub.f32 %v79, %v227
  %v288 = vsub.f32 %v80, %v227
  %v289 = vsub.f32 %v81, %v227
  %v290 = vsub.f32 %v82, %v227
  %v291 = vsub.f32 %v83, %v227
  %v292 = vmul.f32 %v228, %v228
  %v293 = vmul.f32 %v229, %v229
  %v294 = vmul.f32 %v230, %v230
  %v295 = vmul.f32 %v231, %v231
  %v296 = vmul.f32 %v232, %v232
  %v297 = vmul.f32 %v233, %v233
  %v298 = vmul.f32 %v234, %v234
  %v299 = vmul.f32 %v235, %v235
  %v300 = vmul.f32 %v236, %v236
  %v301 = vmul.f32 %v237, %v237
  %v302 = vmul.f32 %v238, %v238
  %v303 = vmul.f32 %v239, %v239
  %v304 = vmul.f32 %v240, %v240
  %v305 = vmul.f32 %v241, %v241
  %v306 = vmul.f32 %v242, %v242
  %v307 = vmul.f32 %v243, %v243
  %v308 = vmul.f32 %v244, %v244
  %v309 = vmul.f32 %v245, %v245
  %v310 = vmul.f32 %v246, %v246
  %v311 = vmul.f32 %v247, %v247
  %v312 = vmul.f32 %v248, %v248
  %v313 = vmul.f32 %v249, %v249
  %v314 = vmul.f32 %v250, %v250
  %v315 = vmul.f32 %v251, %v251
  %v316 = vmul.f32 %v252, %v252
  %v317 = vmul.f32 %v253, %v253
  %v318 = vmul.f32 %v254, %v254
  %v319 = vmul.f32 %v255, %v255
  %v320 = vmul.f32 %v256, %v256
  %v321 = vmul.f32 %v257, %v257
  %v322 = vmul.f32 %v258, %v258
  %v323 = vmul.f32 %v259, %v259
  %v324 = vmul.f32 %v260, %v260
  %v325 = vmul.f32 %v261, %v261
  %v326 = vmul.f32 %v262, %v262
  %v327 = vmul.f32 %v263, %v263
  %v328 = vmul.f32 %v264, %v264
  %v329 = vmul.f32 %v265, %v265
  %v330 = vmul.f32 %v266, %v266
  %v331 = vmul.f32 %v267, %v267
  %v332 = vmul.f32 %v268, %v268
  %v333 = vmul.f32 %v269, %v269
  %v334 = vmul.f32 %v270, %v270
  %v335 = vmul.f32 %v271, %v271
  %v336 = vmul.f32 %v272, %v272
  %v337 = vmul.f32 %v273, %v273
  %v338 = vmul.f32 %v274, %v274
  %v339 = vmul.f32 %v275, %v275
  %v340 = vmul.f32 %v276, %v276
  %v341 = vmul.f32 %v277, %v277
  %v342 = vmul.f32 %v278, %v278
  %v343 = vmul.f32 %v279, %v279
  %v344 = vmul.f32 %v280, %v280
  %v345 = vmul.f32 %v281, %v281
  %v346 = vmul.f32 %v282, %v282
  %v347 = vmul.f32 %v283, %v283
  %v348 = vmul.f32 %v284, %v284
  %v349 = vmul.f32 %v285, %v285
  %v350 = vmul.f32 %v286, %v286
  %v351 = vmul.f32 %v287, %v287
  %v352 = vmul.f32 %v288, %v288
  %v353 = vmul.f32 %v289, %v289
  %v354 = vmul.f32 %v290, %v290
  %v355 = vmul.f32 %v291, %v291
  %v356 = vsel %vm86, %v292, 0.0
  %v357 = vsel %vm86, %v293, 0.0
  %v358 = vadd.f32 %v356, %v357
  %v359 = vsel %vm86, %v294, 0.0
  %v360 = vadd.f32 %v358, %v359
  %v361 = vsel %vm86, %v295, 0.0
  %v362 = vadd.f32 %v360, %v361
  %v363 = vsel %vm86, %v296, 0.0
  %v364 = vadd.f32 %v362, %v363
  %v365 = vsel %vm86, %v297, 0.0
  %v366 = vadd.f32 %v364, %v365
  %v367 = vsel %vm86, %v298, 0.0
  %v368 = vadd.f32 %v366, %v367
  %v369 = vsel %vm86, %v299, 0.0
  %v370 = vadd.f32 %v368, %v369
  %v371 = vsel %vm86, %v300, 0.0
  %v372 = vadd.f32 %v370, %v371
  %v373 = vsel %vm86, %v301, 0.0
  %v374 = vadd.f32 %v372, %v373
  %v375 = vsel %vm86, %v302, 0.0
  %v376 = vadd.f32 %v374, %v375
  %v377 = vsel %vm86, %v303, 0.0
  %v378 = vadd.f32 %v376, %v377
  %v379 = vsel %vm86, %v304, 0.0
  %v380 = vadd.f32 %v378, %v379
  %v381 = vsel %vm86, %v305, 0.0
  %v382 = vadd.f32 %v380, %v381
  %v383 = vsel %vm86, %v306, 0.0
  %v384 = vadd.f32 %v382, %v383
  %v385 = vsel %vm86, %v307, 0.0
  %v386 = vadd.f32 %v384, %v385
  %v387 = vsel %vm86, %v308, 0.0
  %v388 = vadd.f32 %v386, %v387
  %v389 = vsel %vm86, %v309, 0.0
  %v390 = vadd.f32 %v388, %v389
  %v391 = vsel %vm86, %v310, 0.0
  %v392 = vadd.f32 %v390, %v391
  %v393 = vsel %vm86, %v311, 0.0
  %v394 = vadd.f32 %v392, %v393
  %v395 = vsel %vm86, %v312, 0.0
  %v396 = vadd.f32 %v394, %v395
  %v397 = vsel %vm86, %v313, 0.0
  %v398 = vadd.f32 %v396, %v397
  %v399 = vsel %vm86, %v314, 0.0
  %v400 = vadd.f32 %v398, %v399
  %v401 = vsel %vm86, %v315, 0.0
  %v402 = vadd.f32 %v400, %v401
  %v403 = vsel %vm86, %v316, 0.0
  %v404 = vadd.f32 %v402, %v403
  %v405 = vsel %vm86, %v317, 0.0
  %v406 = vadd.f32 %v404, %v405
  %v407 = vsel %vm86, %v318, 0.0
  %v408 = vadd.f32 %v406, %v407
  %v409 = vsel %vm86, %v319, 0.0
  %v410 = vadd.f32 %v408, %v409
  %v411 = vsel %vm86, %v320, 0.0
  %v412 = vadd.f32 %v410, %v411
  %v413 = vsel %vm86, %v321, 0.0
  %v414 = vadd.f32 %v412, %v413
  %v415 = vsel %vm86, %v322, 0.0
  %v416 = vadd.f32 %v414, %v415
  %v417 = vsel %vm86, %v323, 0.0
  %v418 = vadd.f32 %v416, %v417
  %v419 = vsel %vm86, %v324, 0.0
  %v420 = vadd.f32 %v418, %v419
  %v421 = vsel %vm86, %v325, 0.0
  %v422 = vadd.f32 %v420, %v421
  %v423 = vsel %vm86, %v326, 0.0
  %v424 = vadd.f32 %v422, %v423
  %v425 = vsel %vm86, %v327, 0.0
  %v426 = vadd.f32 %v424, %v425
  %v427 = vsel %vm86, %v328, 0.0
  %v428 = vadd.f32 %v426, %v427
  %v429 = vsel %vm86, %v329, 0.0
  %v430 = vadd.f32 %v428, %v429
  %v431 = vsel %vm86, %v330, 0.0
  %v432 = vadd.f32 %v430, %v431
  %v433 = vsel %vm86, %v331, 0.0
  %v434 = vadd.f32 %v432, %v433
  %v435 = vsel %vm86, %v332, 0.0
  %v436 = vadd.f32 %v434, %v435
  %v437 = vsel %vm86, %v333, 0.0
  %v438 = vadd.f32 %v436, %v437
  %v439 = vsel %vm86, %v334, 0.0
  %v440 = vadd.f32 %v438, %v439
  %v441 = vsel %vm86, %v335, 0.0
  %v442 = vadd.f32 %v440, %v441
  %v443 = vsel %vm86, %v336, 0.0
  %v444 = vadd.f32 %v442, %v443
  %v445 = vsel %vm86, %v337, 0.0
  %v446 = vadd.f32 %v444, %v445
  %v447 = vsel %vm86, %v338, 0.0
  %v448 = vadd.f32 %v446, %v447
  %v449 = vsel %vm86, %v339, 0.0
  %v450 = vadd.f32 %v448, %v449
  %v451 = vsel %vm86, %v340, 0.0
  %v452 = vadd.f32 %v450, %v451
  %v453 = vsel %vm86, %v341, 0.0
  %v454 = vadd.f32 %v452, %v453
  %v455 = vsel %vm86, %v342, 0.0
  %v456 = vadd.f32 %v454, %v455
  %v457 = vsel %vm86, %v343, 0.0
  %v458 = vadd.f32 %v456, %v457
  %v459 = vsel %vm86, %v344, 0.0
  %v460 = vadd.f32 %v458, %v459
  %v461 = vsel %vm86, %v345, 0.0
  %v462 = vadd.f32 %v460, %v461
  %v463 = vsel %vm86, %v346, 0.0
  %v464 = vadd.f32 %v462, %v463
  %v465 = vsel %vm86, %v347, 0.0
  %v466 = vadd.f32 %v464, %v465
  %v467 = vsel %vm86, %v348, 0.0
  %v468 = vadd.f32 %v466, %v467
  %v469 = vsel %vm86, %v349, 0.0
  %v470 = vadd.f32 %v468, %v469
  %v471 = vsel %vm86, %v350, 0.0
  %v472 = vadd.f32 %v470, %v471
  %v473 = vsel %vm86, %v351, 0.0
  %v474 = vadd.f32 %v472, %v473
  %v475 = vsel %vm86, %v352, 0.0
  %v476 = vadd.f32 %v474, %v475
  %v477 = vsel %vm86, %v353, 0.0
  %v478 = vadd.f32 %v476, %v477
  %v479 = vsel %vm86, %v354, 0.0
  %v480 = vadd.f32 %v478, %v479
  %v481 = vsel %vm86, %v355, 0.0
  %v482 = vadd.f32 %v480, %v481
  %v483 = vrot.slane %v482, 4
  %v484 = vadd.f32 %v482, %v483
  %v485 = vrot.slane %v484, 2
  %v486 = vadd.f32 %v484, %v485
  %v487 = vrot.slane %v486, 1
  %v488 = vadd.f32 %v486, %v487
  %v489 = vmul.f32 %v488, %v226
  %v490 = vadd.f32 %v489, 1e-05
  %v491 = vrsqrt.pop %v490
  %v492 = vmul.f32 %v491, %v490
  %v493 = vmul.f32 %v492, %v491
  %v494 = vmul.f32 0.5, %v493
  %v495 = vsub.f32 1.5, %v494
  %v496 = vmul.f32 %v491, %v495
  %vm497 = vweird.f32 %v490
  %vm498 = vweird.f32 %v491
  %vm499 = vmor %vm497, %vm498
  %v500 = vsel %vm499, %v491, %v496
  %v501 = vmul.f32 %v228, %v500
  %v502 = vmul.f32 %v229, %v500
  %v503 = vmul.f32 %v230, %v500
  %v504 = vmul.f32 %v231, %v500
  %v505 = vmul.f32 %v232, %v500
  %v506 = vmul.f32 %v233, %v500
  %v507 = vmul.f32 %v234, %v500
  %v508 = vmul.f32 %v235, %v500
  %v509 = vmul.f32 %v236, %v500
  %v510 = vmul.f32 %v237, %v500
  %v511 = vmul.f32 %v238, %v500
  %v512 = vmul.f32 %v239, %v500
  %v513 = vmul.f32 %v240, %v500
  %v514 = vmul.f32 %v241, %v500
  %v515 = vmul.f32 %v242, %v500
  %v516 = vmul.f32 %v243, %v500
  %v517 = vmul.f32 %v244, %v500
  %v518 = vmul.f32 %v245, %v500
  %v519 = vmul.f32 %v246, %v500
  %v520 = vmul.f32 %v247, %v500
  %v521 = vmul.f32 %v248, %v500
  %v522 = vmul.f32 %v249, %v500
  %v523 = vmul.f32 %v250, %v500
  %v524 = vmul.f32 %v251, %v500
  %v525 = vmul.f32 %v252, %v500
  %v526 = vmul.f32 %v253, %v500
  %v527 = vmul.f32 %v254, %v500
  %v528 = vmul.f32 %v255, %v500
  %v529 = vmul.f32 %v256, %v500
  %v530 = vmul.f32 %v257, %v500
  %v531 = vmul.f32 %v258, %v500
  %v532 = vmul.f32 %v259, %v500
  %v533 = vmul.f32 %v260, %v500
  %v534 = vmul.f32 %v261, %v500
  %v535 = vmul.f32 %v262, %v500
  %v536 = vmul.f32 %v263, %v500
  %v537 = vmul.f32 %v264, %v500
  %v538 = vmul.f32 %v265, %v500
  %v539 = vmul.f32 %v266, %v500
  %v540 = vmul.f32 %v267, %v500
  %v541 = vmul.f32 %v268, %v500
  %v542 = vmul.f32 %v269, %v500
  %v543 = vmul.f32 %v270, %v500
  %v544 = vmul.f32 %v271, %v500
  %v545 = vmul.f32 %v272, %v500
  %v546 = vmul.f32 %v273, %v500
  %v547 = vmul.f32 %v274, %v500
  %v548 = vmul.f32 %v275, %v500
  %v549 = vmul.f32 %v276, %v500
  %v550 = vmul.f32 %v277, %v500
  %v551 = vmul.f32 %v278, %v500
  %v552 = vmul.f32 %v279, %v500
  %v553 = vmul.f32 %v280, %v500
  %v554 = vmul.f32 %v281, %v500
  %v555 = vmul.f32 %v282, %v500
  %v556 = vmul.f32 %v283, %v500
  %v557 = vmul.f32 %v284, %v500
  %v558 = vmul.f32 %v285, %v500
  %v559 = vmul.f32 %v286, %v500
  %v560 = vmul.f32 %v287, %v500
  %v561 = vmul.f32 %v288, %v500
  %v562 = vmul.f32 %v289, %v500
  %v563 = vmul.f32 %v290, %v500
  %v564 = vmul.f32 %v291, %v500
  %v566 = vperm.slane %v84, 0
  %v568 = vmul.f32 %v501, %v566
  %v569 = vmul.f32 %v502, %v566
  %v570 = vmul.f32 %v503, %v566
  %v571 = vmul.f32 %v504, %v566
  %v572 = vmul.f32 %v505, %v566
  %v573 = vmul.f32 %v506, %v566
  %v574 = vmul.f32 %v507, %v566
  %v575 = vmul.f32 %v508, %v566
  %v576 = vmul.f32 %v509, %v566
  %v577 = vmul.f32 %v510, %v566
  %v578 = vmul.f32 %v511, %v566
  %v579 = vmul.f32 %v512, %v566
  %v580 = vmul.f32 %v513, %v566
  %v581 = vmul.f32 %v514, %v566
  %v582 = vmul.f32 %v515, %v566
  %v583 = vmul.f32 %v516, %v566
  %v584 = vmul.f32 %v517, %v566
  %v585 = vmul.f32 %v518, %v566
  %v586 = vmul.f32 %v519, %v566
  %v587 = vmul.f32 %v520, %v566
  %v588 = vmul.f32 %v521, %v566
  %v589 = vmul.f32 %v522, %v566
  %v590 = vmul.f32 %v523, %v566
  %v591 = vmul.f32 %v524, %v566
  %v592 = vmul.f32 %v525, %v566
  %v593 = vmul.f32 %v526, %v566
  %v594 = vmul.f32 %v527, %v566
  %v595 = vmul.f32 %v528, %v566
  %v596 = vmul.f32 %v529, %v566
  %v597 = vmul.f32 %v530, %v566
  %v598 = vmul.f32 %v531, %v566
  %v599 = vmul.f32 %v532, %v566
  %v600 = vmul.f32 %v533, %v566
  %v601 = vmul.f32 %v534, %v566
  %v602 = vmul.f32 %v535, %v566
  %v603 = vmul.f32 %v536, %v566
  %v604 = vmul.f32 %v537, %v566
  %v605 = vmul.f32 %v538, %v566
  %v606 = vmul.f32 %v539, %v566
  %v607 = vmul.f32 %v540, %v566
  %v608 = vmul.f32 %v541, %v566
  %v609 = vmul.f32 %v542, %v566
  %v610 = vmul.f32 %v543, %v566
  %v611 = vmul.f32 %v544, %v566
  %v612 = vmul.f32 %v545, %v566
  %v613 = vmul.f32 %v546, %v566
  %v614 = vmul.f32 %v547, %v566
  %v615 = vmul.f32 %v548, %v566
  %v616 = vmul.f32 %v549, %v566
  %v617 = vmul.f32 %v550, %v566
  %v618 = vmul.f32 %v551, %v566
  %v619 = vmul.f32 %v552, %v566
  %v620 = vmul.f32 %v553, %v566
  %v621 = vmul.f32 %v554, %v566
  %v622 = vmul.f32 %v555, %v566
  %v623 = vmul.f32 %v556, %v566
  %v624 = vmul.f32 %v557, %v566
  %v625 = vmul.f32 %v558, %v566
  %v626 = vmul.f32 %v559, %v566
  %v627 = vmul.f32 %v560, %v566
  %v628 = vmul.f32 %v561, %v566
  %v629 = vmul.f32 %v562, %v566
  %v630 = vmul.f32 %v563, %v566
  %v631 = vmul.f32 %v564, %v566
  %v633 = vperm.slane %v85, 0
  %v635 = vadd.f32 %v568, %v633
  %v636 = vadd.f32 %v569, %v633
  %v637 = vadd.f32 %v570, %v633
  %v638 = vadd.f32 %v571, %v633
  %v639 = vadd.f32 %v572, %v633
  %v640 = vadd.f32 %v573, %v633
  %v641 = vadd.f32 %v574, %v633
  %v642 = vadd.f32 %v575, %v633
  %v643 = vadd.f32 %v576, %v633
  %v644 = vadd.f32 %v577, %v633
  %v645 = vadd.f32 %v578, %v633
  %v646 = vadd.f32 %v579, %v633
  %v647 = vadd.f32 %v580, %v633
  %v648 = vadd.f32 %v581, %v633
  %v649 = vadd.f32 %v582, %v633
  %v650 = vadd.f32 %v583, %v633
  %v651 = vadd.f32 %v584, %v633
  %v652 = vadd.f32 %v585, %v633
  %v653 = vadd.f32 %v586, %v633
  %v654 = vadd.f32 %v587, %v633
  %v655 = vadd.f32 %v588, %v633
  %v656 = vadd.f32 %v589, %v633
  %v657 = vadd.f32 %v590, %v633
  %v658 = vadd.f32 %v591, %v633
  %v659 = vadd.f32 %v592, %v633
  %v660 = vadd.f32 %v593, %v633
  %v661 = vadd.f32 %v594, %v633
  %v662 = vadd.f32 %v595, %v633
  %v663 = vadd.f32 %v596, %v633
  %v664 = vadd.f32 %v597, %v633
  %v665 = vadd.f32 %v598, %v633
  %v666 = vadd.f32 %v599, %v633
  %v667 = vadd.f32 %v600, %v633
  %v668 = vadd.f32 %v601, %v633
  %v669 = vadd.f32 %v602, %v633
  %v670 = vadd.f32 %v603, %v633
  %v671 = vadd.f32 %v604, %v633
  %v672 = vadd.f32 %v605, %v633
  %v673 = vadd.f32 %v606, %v633
  %v674 = vadd.f32 %v607, %v633
  %v675 = vadd.f32 %v608, %v633
  %v676 = vadd.f32 %v609, %v633
  %v677 = vadd.f32 %v610, %v633
  %v678 = vadd.f32 %v611, %v633
  %v679 = vadd.f32 %v612, %v633
  %v680 = vadd.f32 %v613, %v633
  %v681 = vadd.f32 %v614, %v633
  %v682 = vadd.f32 %v615, %v633
  %v683 = vadd.f32 %v616, %v633
  %v684 = vadd.f32 %v617, %v633
  %v685 = vadd.f32 %v618, %v633
  %v686 = vadd.f32 %v619, %v633
  %v687 = vadd.f32 %v620, %v633
  %v688 = vadd.f32 %v621, %v633
  %v689 = vadd.f32 %v622, %v633
  %v690 = vadd.f32 %v623, %v633
  %v691 = vadd.f32 %v624, %v633
  %v692 = vadd.f32 %v625, %v633
  %v693 = vadd.f32 %v626, %v633
  %v694 = vadd.f32 %v627, %v633
  %v695 = vadd.f32 %v628, %v633
  %v696 = vadd.f32 %v629, %v633
  %v697 = vadd.f32 %v630, %v633
  %v698 = vadd.f32 %v631, %v633
  %v699 = vmax.f32 %v635, 0.0
  %v700 = vmax.f32 %v636, 0.0
  %v701 = vmax.f32 %v637, 0.0
  %v702 = vmax.f32 %v638, 0.0
  %v703 = vmax.f32 %v639, 0.0
  %v704 = vmax.f32 %v640, 0.0
  %v705 = vmax.f32 %v641, 0.0
  %v706 = vmax.f32 %v642, 0.0
  %v707 = vmax.f32 %v643, 0.0
  %v708 = vmax.f32 %v644, 0.0
  %v709 = vmax.f32 %v645, 0.0
  %v710 = vmax.f32 %v646, 0.0
  %v711 = vmax.f32 %v647, 0.0
  %v712 = vmax.f32 %v648, 0.0
  %v713 = vmax.f32 %v649, 0.0
  %v714 = vmax.f32 %v650, 0.0
  %v715 = vmax.f32 %v651, 0.0
  %v716 = vmax.f32 %v652, 0.0
  %v717 = vmax.f32 %v653, 0.0
  %v718 = vmax.f32 %v654, 0.0
  %v719 = vmax.f32 %v655, 0.0
  %v720 = vmax.f32 %v656, 0.0
  %v721 = vmax.f32 %v657, 0.0
  %v722 = vmax.f32 %v658, 0.0
  %v723 = vmax.f32 %v659, 0.0
  %v724 = vmax.f32 %v660, 0.0
  %v725 = vmax.f32 %v661, 0.0
  %v726 = vmax.f32 %v662, 0.0
  %v727 = vmax.f32 %v663, 0.0
  %v728 = vmax.f32 %v664, 0.0
  %v729 = vmax.f32 %v665, 0.0
  %v730 = vmax.f32 %v666, 0.0
  %v731 = vmax.f32 %v667, 0.0
  %v732 = vmax.f32 %v668, 0.0
  %v733 = vmax.f32 %v669, 0.0
  %v734 = vmax.f32 %v670, 0.0
  %v735 = vmax.f32 %v671, 0.0
  %v736 = vmax.f32 %v672, 0.0
  %v737 = vmax.f32 %v673, 0.0
  %v738 = vmax.f32 %v674, 0.0
  %v739 = vmax.f32 %v675, 0.0
  %v740 = vmax.f32 %v676, 0.0
  %v741 = vmax.f32 %v677, 0.0
  %v742 = vmax.f32 %v678, 0.0
  %v743 = vmax.f32 %v679, 0.0
  %v744 = vmax.f32 %v680, 0.0
  %v745 = vmax.f32 %v681, 0.0
  %v746 = vmax.f32 %v682, 0.0
  %v747 = vmax.f32 %v683, 0.0
  %v748 = vmax.f32 %v684, 0.0
  %v749 = vmax.f32 %v685, 0.0
  %v750 = vmax.f32 %v686, 0.0
  %v751 = vmax.f32 %v687, 0.0
  %v752 = vmax.f32 %v688, 0.0
  %v753 = vmax.f32 %v689, 0.0
  %v754 = vmax.f32 %v690, 0.0
  %v755 = vmax.f32 %v691, 0.0
  %v756 = vmax.f32 %v692, 0.0
  %v757 = vmax.f32 %v693, 0.0
  %v758 = vmax.f32 %v694, 0.0
  %v759 = vmax.f32 %v695, 0.0
  %v760 = vmax.f32 %v696, 0.0
  %v761 = vmax.f32 %v697, 0.0
  %v762 = vmax.f32 %v698, 0.0
  %763 = vst.msk [vmem:[%s5] sm:$0xff] %vm86, %v699
  %764 = vst.msk [vmem:[%s5 + $0x8] sm:$0xff] %vm86, %v700
  %765 = vst.msk [vmem:[%s5 + $0x10] sm:$0xff] %vm86, %v701
  %766 = vst.msk [vmem:[%s5 + $0x18] sm:$0xff] %vm86, %v702
  %767 = vst.msk [vmem:[%s5 + $0x20] sm:$0xff] %vm86, %v703
  %768 = vst.msk [vmem:[%s5 + $0x28] sm:$0xff] %vm86, %v704
  %769 = vst.msk [vmem:[%s5 + $0x30] sm:$0xff] %vm86, %v705
  %770 = vst.msk [vmem:[%s5 + $0x38] sm:$0xff] %vm86, %v706
  %771 = vst.msk [vmem:[%s5 + $0x40] sm:$0xff] %vm86, %v707
  %772 = vst.msk [vmem:[%s5 + $0x48] sm:$0xff] %vm86, %v708
  %773 = vst.msk [vmem:[%s5 + $0x50] sm:$0xff] %vm86, %v709
  %774 = vst.msk [vmem:[%s5 + $0x58] sm:$0xff] %vm86, %v710
  %775 = vst.msk [vmem:[%s5 + $0x60] sm:$0xff] %vm86, %v711
  %776 = vst.msk [vmem:[%s5 + $0x68] sm:$0xff] %vm86, %v712
  %777 = vst.msk [vmem:[%s5 + $0x70] sm:$0xff] %vm86, %v713
  %778 = vst.msk [vmem:[%s5 + $0x78] sm:$0xff] %vm86, %v714
  %779 = vst.msk [vmem:[%s5 + $0x80] sm:$0xff] %vm86, %v715
  %780 = vst.msk [vmem:[%s5 + $0x88] sm:$0xff] %vm86, %v716
  %781 = vst.msk [vmem:[%s5 + $0x90] sm:$0xff] %vm86, %v717
  %782 = vst.msk [vmem:[%s5 + $0x98] sm:$0xff] %vm86, %v718
  %783 = vst.msk [vmem:[%s5 + $0xa0] sm:$0xff] %vm86, %v719
  %784 = vst.msk [vmem:[%s5 + $0xa8] sm:$0xff] %vm86, %v720
  %785 = vst.msk [vmem:[%s5 + $0xb0] sm:$0xff] %vm86, %v721
  %786 = vst.msk [vmem:[%s5 + $0xb8] sm:$0xff] %vm86, %v722
  %787 = vst.msk [vmem:[%s5 + $0xc0] sm:$0xff] %vm86, %v723
  %788 = vst.msk [vmem:[%s5 + $0xc8] sm:$0xff] %vm86, %v724
  %789 = vst.msk [vmem:[%s5 + $0xd0] sm:$0xff] %vm86, %v725
  %790 = vst.msk [vmem:[%s5 + $0xd8] sm:$0xff] %vm86, %v726
  %791 = vst.msk [vmem:[%s5 + $0xe0] sm:$0xff] %vm86, %v727
  %792 = vst.msk [vmem:[%s5 + $0xe8] sm:$0xff] %vm86, %v728
  %793 = vst.msk [vmem:[%s5 + $0xf0] sm:$0xff] %vm86, %v729
  %794 = vst.msk [vmem:[%s5 + $0xf8] sm:$0xff] %vm86, %v730
  %795 = vst.msk [vmem:[%s5 + $0x100] sm:$0xff] %vm86, %v731
  %796 = vst.msk [vmem:[%s5 + $0x108] sm:$0xff] %vm86, %v732
  %797 = vst.msk [vmem:[%s5 + $0x110] sm:$0xff] %vm86, %v733
  %798 = vst.msk [vmem:[%s5 + $0x118] sm:$0xff] %vm86, %v734
  %799 = vst.msk [vmem:[%s5 + $0x120] sm:$0xff] %vm86, %v735
  %800 = vst.msk [vmem:[%s5 + $0x128] sm:$0xff] %vm86, %v736
  %801 = vst.msk [vmem:[%s5 + $0x130] sm:$0xff] %vm86, %v737
  %802 = vst.msk [vmem:[%s5 + $0x138] sm:$0xff] %vm86, %v738
  %803 = vst.msk [vmem:[%s5 + $0x140] sm:$0xff] %vm86, %v739
  %804 = vst.msk [vmem:[%s5 + $0x148] sm:$0xff] %vm86, %v740
  %805 = vst.msk [vmem:[%s5 + $0x150] sm:$0xff] %vm86, %v741
  %806 = vst.msk [vmem:[%s5 + $0x158] sm:$0xff] %vm86, %v742
  %807 = vst.msk [vmem:[%s5 + $0x160] sm:$0xff] %vm86, %v743
  %808 = vst.msk [vmem:[%s5 + $0x168] sm:$0xff] %vm86, %v744
  %809 = vst.msk [vmem:[%s5 + $0x170] sm:$0xff] %vm86, %v745
  %810 = vst.msk [vmem:[%s5 + $0x178] sm:$0xff] %vm86, %v746
  %811 = vst.msk [vmem:[%s5 + $0x180] sm:$0xff] %vm86, %v747
  %812 = vst.msk [vmem:[%s5 + $0x188] sm:$0xff] %vm86, %v748
  %813 = vst.msk [vmem:[%s5 + $0x190] sm:$0xff] %vm86, %v749
  %814 = vst.msk [vmem:[%s5 + $0x198] sm:$0xff] %vm86, %v750
  %815 = vst.msk [vmem:[%s5 + $0x1a0] sm:$0xff] %vm86, %v751
  %816 = vst.msk [vmem:[%s5 + $0x1a8] sm:$0xff] %vm86, %v752
  %817 = vst.msk [vmem:[%s5 + $0x1b0] sm:$0xff] %vm86, %v753
  %818 = vst.msk [vmem:[%s5 + $0x1b8] sm:$0xff] %vm86, %v754
  %819 = vst.msk [vmem:[%s5 + $0x1c0] sm:$0xff] %vm86, %v755
  %820 = vst.msk [vmem:[%s5 + $0x1c8] sm:$0xff] %vm86, %v756
  %821 = vst.msk [vmem:[%s5 + $0x1d0] sm:$0xff] %vm86, %v757
  %822 = vst.msk [vmem:[%s5 + $0x1d8] sm:$0xff] %vm86, %v758
  %823 = vst.msk [vmem:[%s5 + $0x1e0] sm:$0xff] %vm86, %v759
  %824 = vst.msk [vmem:[%s5 + $0x1e8] sm:$0xff] %vm86, %v760
  %825 = vst.msk [vmem:[%s5 + $0x1f0] sm:$0xff] %vm86, %v761
  %826 = vst.msk [vmem:[%s5 + $0x1f8] sm:$0xff] %vm86, %v762
  %v827 = vpack.c.bf16 %v700, %v699
  %v828 = vpack.c.bf16 %v702, %v701
  %v829 = vpack.c.bf16 %v704, %v703
  %v830 = vpack.c.bf16 %v706, %v705
  %v831 = vpack.c.bf16 %v708, %v707
  %v832 = vpack.c.bf16 %v710, %v709
  %v833 = vpack.c.bf16 %v712, %v711
  %v834 = vpack.c.bf16 %v714, %v713
  %v835 = vpack.c.bf16 %v716, %v715
  %v836 = vpack.c.bf16 %v718, %v717
  %v837 = vpack.c.bf16 %v720, %v719
  %v838 = vpack.c.bf16 %v722, %v721
  %v839 = vpack.c.bf16 %v724, %v723
  %v840 = vpack.c.bf16 %v726, %v725
  %v841 = vpack.c.bf16 %v728, %v727
  %v842 = vpack.c.bf16 %v730, %v729
  %v843 = vpack.c.bf16 %v732, %v731
  %v844 = vpack.c.bf16 %v734, %v733
  %v845 = vpack.c.bf16 %v736, %v735
  %v846 = vpack.c.bf16 %v738, %v737
  %v847 = vpack.c.bf16 %v740, %v739
  %v848 = vpack.c.bf16 %v742, %v741
  %v849 = vpack.c.bf16 %v744, %v743
  %v850 = vpack.c.bf16 %v746, %v745
  %v851 = vpack.c.bf16 %v748, %v747
  %v852 = vpack.c.bf16 %v750, %v749
  %v853 = vpack.c.bf16 %v752, %v751
  %v854 = vpack.c.bf16 %v754, %v753
  %v855 = vpack.c.bf16 %v756, %v755
  %v856 = vpack.c.bf16 %v758, %v757
  %v857 = vpack.c.bf16 %v760, %v759
  %v858 = vpack.c.bf16 %v762, %v761
  %v859 = vld [vmem:[%s3] sm:$0xf]
  %v860 = vld [vmem:[%s3 + $0x4] sm:$0xf]
  %v861 = vld [vmem:[%s3 + $0x8] sm:$0xf]
  %v862 = vld [vmem:[%s3 + $0xc] sm:$0xf]
  %v863 = vld [vmem:[%s3 + $0x10] sm:$0xf]
  %v864 = vld [vmem:[%s3 + $0x14] sm:$0xf]
  %v865 = vld [vmem:[%s3 + $0x18] sm:$0xf]
  %v866 = vld [vmem:[%s3 + $0x1c] sm:$0xf]
  %v875 = vunpack.c.l.b16 %v859
  %v876 = vunpack.c.l.b16 %v860
  %v877 = vunpack.c.l.b16 %v861
  %v878 = vunpack.c.l.b16 %v862
  %v879 = vunpack.c.l.b16 %v863
  %v880 = vunpack.c.l.b16 %v864
  %v881 = vunpack.c.l.b16 %v865
  %v882 = vunpack.c.l.b16 %v866
  %v883 = vpack.c.b16 %v876, %v875
  %v884 = vpack.c.b16 %v878, %v877
  %v885 = vpack.c.b16 %v880, %v879
  %v886 = vpack.c.b16 %v882, %v881
  %v892 = vsel %vm86, %v827, 0
  %v895 = vsel %vm86, %v828, 0
  %v898 = vsel %vm86, %v829, 0
  %v901 = vsel %vm86, %v830, 0
  %v904 = vsel %vm86, %v831, 0
  %v907 = vsel %vm86, %v832, 0
  %v910 = vsel %vm86, %v833, 0
  %v913 = vsel %vm86, %v834, 0
  %v916 = vsel %vm86, %v835, 0
  %v919 = vsel %vm86, %v836, 0
  %v922 = vsel %vm86, %v837, 0
  %v925 = vsel %vm86, %v838, 0
  %v928 = vsel %vm86, %v839, 0
  %v931 = vsel %vm86, %v840, 0
  %v934 = vsel %vm86, %v841, 0
  %v937 = vsel %vm86, %v842, 0
  %v940 = vsel %vm86, %v843, 0
  %v943 = vsel %vm86, %v844, 0
  %v946 = vsel %vm86, %v845, 0
  %v949 = vsel %vm86, %v846, 0
  %v952 = vsel %vm86, %v847, 0
  %v955 = vsel %vm86, %v848, 0
  %v958 = vsel %vm86, %v849, 0
  %v961 = vsel %vm86, %v850, 0
  %v964 = vsel %vm86, %v851, 0
  %v967 = vsel %vm86, %v852, 0
  %v970 = vsel %vm86, %v853, 0
  %v973 = vsel %vm86, %v854, 0
  %v976 = vsel %vm86, %v855, 0
  %v979 = vsel %vm86, %v856, 0
  %v982 = vsel %vm86, %v857, 0
  %v985 = vsel %vm86, %v858, 0
  %987 = vmatpush.bf16.msra.mxu0 0
  %988 = vmatpush.bf16.msra.mxu0 0
  %989 = vmatpush.bf16.msra.mxu0 0
  %990 = vmatpush.bf16.msra.mxu0 0
  %991 = vmatpush.bf16.msra.mxu0 %v886
  %992 = vmatpush.bf16.msra.mxu0 %v885
  %993 = vmatpush.bf16.msra.mxu0 %v884
  %994 = vmatpush.bf16.msra.mxu0 %v883
  %995 = vmatmul.bf16.gmra.mxu0 %v892
  %v996 = vpop.f32.mrf.mxu0
  %v997 = vadd.f32 0.0, %v996
  %v998 = vpop.f32.mrf.mxu0
  %v999 = vadd.f32 0.0, %v998
  %1000 = vmatmul.bf16.gmra.mxu0 %v895
  %v1001 = vpop.f32.mrf.mxu0
  %v1002 = vadd.f32 0.0, %v1001
  %v1003 = vpop.f32.mrf.mxu0
  %v1004 = vadd.f32 0.0, %v1003
  %1005 = vmatmul.bf16.gmra.mxu0 %v898
  %v1006 = vpop.f32.mrf.mxu0
  %v1007 = vadd.f32 0.0, %v1006
  %v1008 = vpop.f32.mrf.mxu0
  %v1009 = vadd.f32 0.0, %v1008
  %1010 = vmatmul.bf16.gmra.mxu0 %v901
  %v1011 = vpop.f32.mrf.mxu0
  %v1012 = vadd.f32 0.0, %v1011
  %v1013 = vpop.f32.mrf.mxu0
  %v1014 = vadd.f32 0.0, %v1013
  %1015 = vmatmul.bf16.gmra.mxu0 %v904
  %v1016 = vpop.f32.mrf.mxu0
  %v1017 = vadd.f32 0.0, %v1016
  %v1018 = vpop.f32.mrf.mxu0
  %v1019 = vadd.f32 0.0, %v1018
  %1020 = vmatmul.bf16.gmra.mxu0 %v907
  %v1021 = vpop.f32.mrf.mxu0
  %v1022 = vadd.f32 0.0, %v1021
  %v1023 = vpop.f32.mrf.mxu0
  %v1024 = vadd.f32 0.0, %v1023
  %1025 = vmatmul.bf16.gmra.mxu0 %v910
  %v1026 = vpop.f32.mrf.mxu0
  %v1027 = vadd.f32 0.0, %v1026
  %v1028 = vpop.f32.mrf.mxu0
  %v1029 = vadd.f32 0.0, %v1028
  %1030 = vmatmul.bf16.gmra.mxu0 %v913
  %v1031 = vpop.f32.mrf.mxu0
  %v1032 = vadd.f32 0.0, %v1031
  %v1033 = vpop.f32.mrf.mxu0
  %v1034 = vadd.f32 0.0, %v1033
  %1035 = vmatmul.bf16.gmra.mxu0 %v916
  %v1036 = vpop.f32.mrf.mxu0
  %v1037 = vadd.f32 0.0, %v1036
  %v1038 = vpop.f32.mrf.mxu0
  %v1039 = vadd.f32 0.0, %v1038
  %1040 = vmatmul.bf16.gmra.mxu0 %v919
  %v1041 = vpop.f32.mrf.mxu0
  %v1042 = vadd.f32 0.0, %v1041
  %v1043 = vpop.f32.mrf.mxu0
  %v1044 = vadd.f32 0.0, %v1043
  %1045 = vmatmul.bf16.gmra.mxu0 %v922
  %v1046 = vpop.f32.mrf.mxu0
  %v1047 = vadd.f32 0.0, %v1046
  %v1048 = vpop.f32.mrf.mxu0
  %v1049 = vadd.f32 0.0, %v1048
  %1050 = vmatmul.bf16.gmra.mxu0 %v925
  %v1051 = vpop.f32.mrf.mxu0
  %v1052 = vadd.f32 0.0, %v1051
  %v1053 = vpop.f32.mrf.mxu0
  %v1054 = vadd.f32 0.0, %v1053
  %1055 = vmatmul.bf16.gmra.mxu0 %v928
  %v1056 = vpop.f32.mrf.mxu0
  %v1057 = vadd.f32 0.0, %v1056
  %v1058 = vpop.f32.mrf.mxu0
  %v1059 = vadd.f32 0.0, %v1058
  %1060 = vmatmul.bf16.gmra.mxu0 %v931
  %v1061 = vpop.f32.mrf.mxu0
  %v1062 = vadd.f32 0.0, %v1061
  %v1063 = vpop.f32.mrf.mxu0
  %v1064 = vadd.f32 0.0, %v1063
  %1065 = vmatmul.bf16.gmra.mxu0 %v934
  %v1066 = vpop.f32.mrf.mxu0
  %v1067 = vadd.f32 0.0, %v1066
  %v1068 = vpop.f32.mrf.mxu0
  %v1069 = vadd.f32 0.0, %v1068
  %1070 = vmatmul.bf16.gmra.mxu0 %v937
  %v1071 = vpop.f32.mrf.mxu0
  %v1072 = vadd.f32 0.0, %v1071
  %v1073 = vpop.f32.mrf.mxu0
  %v1074 = vadd.f32 0.0, %v1073
  %1075 = vmatmul.bf16.gmra.mxu0 %v940
  %v1076 = vpop.f32.mrf.mxu0
  %v1077 = vadd.f32 0.0, %v1076
  %v1078 = vpop.f32.mrf.mxu0
  %v1079 = vadd.f32 0.0, %v1078
  %1080 = vmatmul.bf16.gmra.mxu0 %v943
  %v1081 = vpop.f32.mrf.mxu0
  %v1082 = vadd.f32 0.0, %v1081
  %v1083 = vpop.f32.mrf.mxu0
  %v1084 = vadd.f32 0.0, %v1083
  %1085 = vmatmul.bf16.gmra.mxu0 %v946
  %v1086 = vpop.f32.mrf.mxu0
  %v1087 = vadd.f32 0.0, %v1086
  %v1088 = vpop.f32.mrf.mxu0
  %v1089 = vadd.f32 0.0, %v1088
  %1090 = vmatmul.bf16.gmra.mxu0 %v949
  %v1091 = vpop.f32.mrf.mxu0
  %v1092 = vadd.f32 0.0, %v1091
  %v1093 = vpop.f32.mrf.mxu0
  %v1094 = vadd.f32 0.0, %v1093
  %1095 = vmatmul.bf16.gmra.mxu0 %v952
  %v1096 = vpop.f32.mrf.mxu0
  %v1097 = vadd.f32 0.0, %v1096
  %v1098 = vpop.f32.mrf.mxu0
  %v1099 = vadd.f32 0.0, %v1098
  %1100 = vmatmul.bf16.gmra.mxu0 %v955
  %v1101 = vpop.f32.mrf.mxu0
  %v1102 = vadd.f32 0.0, %v1101
  %v1103 = vpop.f32.mrf.mxu0
  %v1104 = vadd.f32 0.0, %v1103
  %1105 = vmatmul.bf16.gmra.mxu0 %v958
  %v1106 = vpop.f32.mrf.mxu0
  %v1107 = vadd.f32 0.0, %v1106
  %v1108 = vpop.f32.mrf.mxu0
  %v1109 = vadd.f32 0.0, %v1108
  %1110 = vmatmul.bf16.gmra.mxu0 %v961
  %v1111 = vpop.f32.mrf.mxu0
  %v1112 = vadd.f32 0.0, %v1111
  %v1113 = vpop.f32.mrf.mxu0
  %v1114 = vadd.f32 0.0, %v1113
  %1115 = vmatmul.bf16.gmra.mxu0 %v964
  %v1116 = vpop.f32.mrf.mxu0
  %v1117 = vadd.f32 0.0, %v1116
  %v1118 = vpop.f32.mrf.mxu0
  %v1119 = vadd.f32 0.0, %v1118
  %1120 = vmatmul.bf16.gmra.mxu0 %v967
  %v1121 = vpop.f32.mrf.mxu0
  %v1122 = vadd.f32 0.0, %v1121
  %v1123 = vpop.f32.mrf.mxu0
  %v1124 = vadd.f32 0.0, %v1123
  %1125 = vmatmul.bf16.gmra.mxu0 %v970
  %v1126 = vpop.f32.mrf.mxu0
  %v1127 = vadd.f32 0.0, %v1126
  %v1128 = vpop.f32.mrf.mxu0
  %v1129 = vadd.f32 0.0, %v1128
  %1130 = vmatmul.bf16.gmra.mxu0 %v973
  %v1131 = vpop.f32.mrf.mxu0
  %v1132 = vadd.f32 0.0, %v1131
  %v1133 = vpop.f32.mrf.mxu0
  %v1134 = vadd.f32 0.0, %v1133
  %1135 = vmatmul.bf16.gmra.mxu0 %v976
  %v1136 = vpop.f32.mrf.mxu0
  %v1137 = vadd.f32 0.0, %v1136
  %v1138 = vpop.f32.mrf.mxu0
  %v1139 = vadd.f32 0.0, %v1138
  %1140 = vmatmul.bf16.gmra.mxu0 %v979
  %v1141 = vpop.f32.mrf.mxu0
  %v1142 = vadd.f32 0.0, %v1141
  %v1143 = vpop.f32.mrf.mxu0
  %v1144 = vadd.f32 0.0, %v1143
  %1145 = vmatmul.bf16.gmra.mxu0 %v982
  %v1146 = vpop.f32.mrf.mxu0
  %v1147 = vadd.f32 0.0, %v1146
  %v1148 = vpop.f32.mrf.mxu0
  %v1149 = vadd.f32 0.0, %v1148
  %1150 = vmatmul.bf16.gmra.mxu0 %v985
  %v1151 = vpop.f32.mrf.mxu0
  %v1152 = vadd.f32 0.0, %v1151
  %v1153 = vpop.f32.mrf.mxu0
  %v1154 = vadd.f32 0.0, %v1153
  %1155 = vdwg.mxu0
  %1156 = vst [vmem:[%s4] sm:$0xff] %v997
  %1157 = vst [vmem:[%s4 + $0x8] sm:$0xff] %v999
  %1158 = vst [vmem:[%s4 + $0x10] sm:$0xff] %v1002
  %1159 = vst [vmem:[%s4 + $0x18] sm:$0xff] %v1004
  %1160 = vst [vmem:[%s4 + $0x20] sm:$0xff] %v1007
  %1161 = vst [vmem:[%s4 + $0x28] sm:$0xff] %v1009
  %1162 = vst [vmem:[%s4 + $0x30] sm:$0xff] %v1012
  %1163 = vst [vmem:[%s4 + $0x38] sm:$0xff] %v1014
  %1164 = vst [vmem:[%s4 + $0x40] sm:$0xff] %v1017
  %1165 = vst [vmem:[%s4 + $0x48] sm:$0xff] %v1019
  %1166 = vst [vmem:[%s4 + $0x50] sm:$0xff] %v1022
  %1167 = vst [vmem:[%s4 + $0x58] sm:$0xff] %v1024
  %1168 = vst [vmem:[%s4 + $0x60] sm:$0xff] %v1027
  %1169 = vst [vmem:[%s4 + $0x68] sm:$0xff] %v1029
  %1170 = vst [vmem:[%s4 + $0x70] sm:$0xff] %v1032
  %1171 = vst [vmem:[%s4 + $0x78] sm:$0xff] %v1034
  %1172 = vst [vmem:[%s4 + $0x80] sm:$0xff] %v1037
  %1173 = vst [vmem:[%s4 + $0x88] sm:$0xff] %v1039
  %1174 = vst [vmem:[%s4 + $0x90] sm:$0xff] %v1042
  %1175 = vst [vmem:[%s4 + $0x98] sm:$0xff] %v1044
  %1176 = vst [vmem:[%s4 + $0xa0] sm:$0xff] %v1047
  %1177 = vst [vmem:[%s4 + $0xa8] sm:$0xff] %v1049
  %1178 = vst [vmem:[%s4 + $0xb0] sm:$0xff] %v1052
  %1179 = vst [vmem:[%s4 + $0xb8] sm:$0xff] %v1054
  %1180 = vst [vmem:[%s4 + $0xc0] sm:$0xff] %v1057
  %1181 = vst [vmem:[%s4 + $0xc8] sm:$0xff] %v1059
  %1182 = vst [vmem:[%s4 + $0xd0] sm:$0xff] %v1062
  %1183 = vst [vmem:[%s4 + $0xd8] sm:$0xff] %v1064
  %1184 = vst [vmem:[%s4 + $0xe0] sm:$0xff] %v1067
  %1185 = vst [vmem:[%s4 + $0xe8] sm:$0xff] %v1069
  %1186 = vst [vmem:[%s4 + $0xf0] sm:$0xff] %v1072
  %1187 = vst [vmem:[%s4 + $0xf8] sm:$0xff] %v1074
  %1188 = vst [vmem:[%s4 + $0x100] sm:$0xff] %v1077
  %1189 = vst [vmem:[%s4 + $0x108] sm:$0xff] %v1079
  %1190 = vst [vmem:[%s4 + $0x110] sm:$0xff] %v1082
  %1191 = vst [vmem:[%s4 + $0x118] sm:$0xff] %v1084
  %1192 = vst [vmem:[%s4 + $0x120] sm:$0xff] %v1087
  %1193 = vst [vmem:[%s4 + $0x128] sm:$0xff] %v1089
  %1194 = vst [vmem:[%s4 + $0x130] sm:$0xff] %v1092
  %1195 = vst [vmem:[%s4 + $0x138] sm:$0xff] %v1094
  %1196 = vst [vmem:[%s4 + $0x140] sm:$0xff] %v1097
  %1197 = vst [vmem:[%s4 + $0x148] sm:$0xff] %v1099
  %1198 = vst [vmem:[%s4 + $0x150] sm:$0xff] %v1102
  %1199 = vst [vmem:[%s4 + $0x158] sm:$0xff] %v1104
  %1200 = vst [vmem:[%s4 + $0x160] sm:$0xff] %v1107
  %1201 = vst [vmem:[%s4 + $0x168] sm:$0xff] %v1109
  %1202 = vst [vmem:[%s4 + $0x170] sm:$0xff] %v1112
  %1203 = vst [vmem:[%s4 + $0x178] sm:$0xff] %v1114
  %1204 = vst [vmem:[%s4 + $0x180] sm:$0xff] %v1117
  %1205 = vst [vmem:[%s4 + $0x188] sm:$0xff] %v1119
  %1206 = vst [vmem:[%s4 + $0x190] sm:$0xff] %v1122
  %1207 = vst [vmem:[%s4 + $0x198] sm:$0xff] %v1124
  %1208 = vst [vmem:[%s4 + $0x1a0] sm:$0xff] %v1127
  %1209 = vst [vmem:[%s4 + $0x1a8] sm:$0xff] %v1129
  %1210 = vst [vmem:[%s4 + $0x1b0] sm:$0xff] %v1132
  %1211 = vst [vmem:[%s4 + $0x1b8] sm:$0xff] %v1134
  %1212 = vst [vmem:[%s4 + $0x1c0] sm:$0xff] %v1137
  %1213 = vst [vmem:[%s4 + $0x1c8] sm:$0xff] %v1139
  %1214 = vst [vmem:[%s4 + $0x1d0] sm:$0xff] %v1142
  %1215 = vst [vmem:[%s4 + $0x1d8] sm:$0xff] %v1144
  %1216 = vst [vmem:[%s4 + $0x1e0] sm:$0xff] %v1147
  %1217 = vst [vmem:[%s4 + $0x1e8] sm:$0xff] %v1149
  %1218 = vst [vmem:[%s4 + $0x1f0] sm:$0xff] %v1152
  %1219 = vst [vmem:[%s4 + $0x1f8] sm:$0xff] %v1154
  // Predicated region
  $region18: #{netG_forward.15} parent=0 // pred_check
    _
  $region19: #{netG_forward.15} parent=0 // pred_check_branch
    %1221 = sbr.rel (0) target = $region21
  $region20: #{netG_forward.15} parent=0 // pred_region
    _
  $region21: #{netG_forward.15} parent=0 // pred_fallthru
    _
  // Predicated region
  $region22: #{netG_forward.15} parent=0 // pred_check
    _
  $region23: #{netG_forward.15} parent=0 // pred_check_branch
    %1223 = sbr.rel (0) target = $region25
  $region24: #{netG_forward.15} parent=0 // pred_region
    _
  $region25: #{netG_forward.15} parent=0 // pred_fallthru
    _
  // Predicated region
  $region26: #{netG_forward.15} parent=0 // pred_check
    _
  $region27: #{netG_forward.15} parent=0 // pred_check_branch
    %1225 = sbr.rel (0) target = $region29
  $region28: #{netG_forward.15} parent=0 // pred_region
    _
  $region29: #{netG_forward.15} parent=0 // pred_fallthru
    _
  // Predicated region
  $region30: #{netG_forward.15} parent=0 // pred_check
    _
  $region31: #{netG_forward.15} parent=0 // pred_check_branch
    %1227 = sbr.rel (0) target = $region33
  $region32: #{netG_forward.15} parent=0 // pred_region
    _
  $region33: #{netG_forward.15} parent=0 // pred_fallthru
    _

// kernel: netG_forward.16
$region0: #{netG_forward.16}
  #allocation0 [shape = 'u32[]', space=smem, size = 0x4, offset = 0x4, fixed_abs, tag = 'smem constant byte address 0x4 - core index']
  #allocation1 [shape = 'u32[72,128]{1,0:T(1,128)}', space=vmem, size = 0x9000, scoped, tag = 'internal scratch']
  %s0 = inlined_call_operand.smem [shape: u32[31], index: -1, kind: input, shape index: {}]
  %s1 = sld [smem:[%s0]]
  %s2 = scalar_lea.smem %s0, 1
  %s3 = sld [smem:[%s2]]
  %s4 = scalar_lea.smem %s0, 2
  %s5 = sld [smem:[%s4]]
  %s6 = scalar_lea.smem %s0, 3
  %s7 = sld [smem:[%s6]]
  %s8 = scalar_lea.smem %s0, 4
  %s9 = sld [smem:[%s8]]
  %s10 = scalar_lea.smem %s0, 5
  %s11 = sld [smem:[%s10]]
  %s12 = scalar_lea.smem %s0, 6
  %s13 = sld [smem:[%s12]]
  %s14 = scalar_lea.smem %s0, 7
  %s15 = sld [smem:[%s14]]
  %s16 = scalar_lea.smem %s0, 8
  %s17 = sld [smem:[%s16]]
  %s18 = scalar_lea.smem %s0, 9
  %s19 = sld [smem:[%s18]]
  %s20 = scalar_lea.smem %s0, 10
  %s21 = sld [smem:[%s20]]
  %s22 = scalar_lea.smem %s0, 11
  %s23 = sld [smem:[%s22]]
  %s24 = scalar_lea.smem %s0, 12
  %s25 = sld [smem:[%s24]]
  %s26 = scalar_lea.smem %s0, 13
  %s27 = sld [smem:[%s26]]
  %s28 = scalar_lea.smem %s0, 14
  %s29 = sld [smem:[%s28]]
  %s30 = scalar_lea.smem %s0, 15
  %s31 = sld [smem:[%s30]]
  %s32 = scalar_lea.smem %s0, 16
  %s33 = sld [smem:[%s32]]
  %s34 = scalar_lea.smem %s0, 17
  %s35 = sld [smem:[%s34]]
  %s36 = scalar_lea.smem %s0, 18
  %s37 = sld [smem:[%s36]]
  %s38 = scalar_lea.smem %s0, 19
  %s39 = sld [smem:[%s38]]
  %s40 = scalar_lea.smem %s0, 20
  %s41 = sld [smem:[%s40]]
  %s42 = scalar_lea.smem %s0, 21
  %s43 = sld [smem:[%s42]]
  %s44 = scalar_lea.smem %s0, 22
  %s45 = sld [smem:[%s44]]
  %s46 = scalar_lea.smem %s0, 23
  %s47 = sld [smem:[%s46]]
  %s48 = scalar_lea.smem %s0, 24
  %s49 = sld [smem:[%s48]]
  %s50 = scalar_lea.smem %s0, 25
  %s51 = sld [smem:[%s50]]
  %s52 = scalar_lea.smem %s0, 26
  %s53 = sld [smem:[%s52]]
  %s54 = scalar_lea.smem %s0, 27
  %s55 = sld [smem:[%s54]]
  %s56 = scalar_lea.smem %s0, 28
  %s57 = sld [smem:[%s56]]
  %s58 = scalar_lea.smem %s0, 29
  %s59 = sld [smem:[%s58]]
  %s60 = scalar_lea.smem %s0, 30
  %s61 = sld [smem:[%s60]]
  %62 = xla_tuple %s53, %s55, %s57, %s59, %s61
  %s63 = sld [smem:[#allocation0]]
  $region146: #{netG_forward.16} parent=0
    _
  %s65 = ssub.s32 1, %s63
  %s66 = scalar_select 0, %s65, %s63
  $region1: #{netG_forward.16} parent=0
    #allocation2 [shape = 'u8[1024]{0}', space=vmem, size = 0x400, scoped, tag = 'output window, operand 2, single buffered']
    #allocation3 [shape = 's32[1]{0}', space=sflag, size = 0x4, scoped, tag = 'scoped memory for netG_forward.16']
    %67 = vsyncpa [#allocation3], 0
    // Predicated region
    $region2: #{netG_forward.16} parent=1 // pred_check
      _
    $region3: #{netG_forward.16} parent=1 // pred_check_branch
      %69 = sbr.rel (0) target = $region5
    $region4: #{netG_forward.16} parent=1 // pred_region
      _
    $region5: #{netG_forward.16} parent=1 // pred_fallthru
      _
    // Predicated region
    $region6: #{netG_forward.16} parent=1 // pred_check
      _
    $region7: #{netG_forward.16} parent=1 // pred_check_branch
      %71 = sbr.rel (0) target = $region9
    $region8: #{netG_forward.16} parent=1 // pred_region
      _
    $region9: #{netG_forward.16} parent=1 // pred_fallthru
      _
    // Predicated region
    $region10: #{netG_forward.16} parent=1 // pred_check
      _
    $region11: #{netG_forward.16} parent=1 // pred_check_branch
      %73 = sbr.rel (0) target = $region13
    $region12: #{netG_forward.16} parent=1 // pred_region
      _
    $region13: #{netG_forward.16} parent=1 // pred_fallthru
      _
    // Predicated region
    $region14: #{netG_forward.16} parent=1 // pred_check
      _
    $region15: #{netG_forward.16} parent=1 // pred_check_branch
      %75 = sbr.rel (0) target = $region17
    $region16: #{netG_forward.16} parent=1 // pred_region
      _
    $region17: #{netG_forward.16} parent=1 // pred_fallthru
      _
    // Predicated region
    $region18: #{netG_forward.16} parent=1 // pred_check
      _
    $region19: #{netG_forward.16} parent=1 // pred_check_branch
      %77 = sbr.rel (0) target = $region21
    $region20: #{netG_forward.16} parent=1 // pred_region
      _
    $region21: #{netG_forward.16} parent=1 // pred_fallthru
      _
    // Predicated region
    $region22: #{netG_forward.16} parent=1 // pred_check
      _
    $region23: #{netG_forward.16} parent=1 // pred_check_branch
      %79 = sbr.rel (0) target = $region25
    $region24: #{netG_forward.16} parent=1 // pred_region
      _
    $region25: #{netG_forward.16} parent=1 // pred_fallthru
      _
    // Predicated region
    $region26: #{netG_forward.16} parent=1 // pred_check
      _
    $region27: #{netG_forward.16} parent=1 // pred_check_branch
      %81 = sbr.rel (0) target = $region29
    $region28: #{netG_forward.16} parent=1 // pred_region
      _
    $region29: #{netG_forward.16} parent=1 // pred_fallthru
      _
    // Predicated region
    $region30: #{netG_forward.16} parent=1 // pred_check
      _
    $region31: #{netG_forward.16} parent=1 // pred_check_branch
      %83 = sbr.rel (0) target = $region33
    $region32: #{netG_forward.16} parent=1 // pred_region
      _
    $region33: #{netG_forward.16} parent=1 // pred_fallthru
      _
    // Predicated region
    $region34: #{netG_forward.16} parent=1 // pred_check
      _
    $region35: #{netG_forward.16} parent=1 // pred_check_branch
      %85 = sbr.rel (0) target = $region37
    $region36: #{netG_forward.16} parent=1 // pred_region
      _
    $region37: #{netG_forward.16} parent=1 // pred_fallthru
      _
    // Predicated region
    $region38: #{netG_forward.16} parent=1 // pred_check
      _
    $region39: #{netG_forward.16} parent=1 // pred_check_branch
      %87 = sbr.rel (0) target = $region41
    $region40: #{netG_forward.16} parent=1 // pred_region
      _
    $region41: #{netG_forward.16} parent=1 // pred_fallthru
      _
    // Predicated region
    $region42: #{netG_forward.16} parent=1 // pred_check
      _
    $region43: #{netG_forward.16} parent=1 // pred_check_branch
      %89 = sbr.rel (0) target = $region45
    $region44: #{netG_forward.16} parent=1 // pred_region
      _
    $region45: #{netG_forward.16} parent=1 // pred_fallthru
      _
    // Predicated region
    $region46: #{netG_forward.16} parent=1 // pred_check
      _
    $region47: #{netG_forward.16} parent=1 // pred_check_branch
      %91 = sbr.rel (0) target = $region49
    $region48: #{netG_forward.16} parent=1 // pred_region
      _
    $region49: #{netG_forward.16} parent=1 // pred_fallthru
      _
    // Predicated region
    $region50: #{netG_forward.16} parent=1 // pred_check
      _
    $region51: #{netG_forward.16} parent=1 // pred_check_branch
      %93 = sbr.rel (0) target = $region53
    $region52: #{netG_forward.16} parent=1 // pred_region
      _
    $region53: #{netG_forward.16} parent=1 // pred_fallthru
      _
    // Predicated region
    $region54: #{netG_forward.16} parent=1 // pred_check
      _
    $region55: #{netG_forward.16} parent=1 // pred_check_branch
      %95 = sbr.rel (0) target = $region57
    $region56: #{netG_forward.16} parent=1 // pred_region
      _
    $region57: #{netG_forward.16} parent=1 // pred_fallthru
      _
    // Predicated region
    $region58: #{netG_forward.16} parent=1 // pred_check
      _
    $region59: #{netG_forward.16} parent=1 // pred_check_branch
      %97 = sbr.rel (0) target = $region61
    $region60: #{netG_forward.16} parent=1 // pred_region
      _
    $region61: #{netG_forward.16} parent=1 // pred_fallthru
      _
    // Predicated region
    $region62: #{netG_forward.16} parent=1 // pred_check
      _
    $region63: #{netG_forward.16} parent=1 // pred_check_branch
      %99 = sbr.rel (0) target = $region65
    $region64: #{netG_forward.16} parent=1 // pred_region
      _
    $region65: #{netG_forward.16} parent=1 // pred_fallthru
      _
    // Predicated region
    $region66: #{netG_forward.16} parent=1 // pred_check
      _
    $region67: #{netG_forward.16} parent=1 // pred_check_branch
      %101 = sbr.rel (0) target = $region69
    $region68: #{netG_forward.16} parent=1 // pred_region
      _
    $region69: #{netG_forward.16} parent=1 // pred_fallthru
      _
    // Predicated region
    $region70: #{netG_forward.16} parent=1 // pred_check
      _
    $region71: #{netG_forward.16} parent=1 // pred_check_branch
      %103 = sbr.rel (0) target = $region73
    $region72: #{netG_forward.16} parent=1 // pred_region
      _
    $region73: #{netG_forward.16} parent=1 // pred_fallthru
      _
    // Predicated region
    $region74: #{netG_forward.16} parent=1 // pred_check
      _
    $region75: #{netG_forward.16} parent=1 // pred_check_branch
      %105 = sbr.rel (0) target = $region77
    $region76: #{netG_forward.16} parent=1 // pred_region
      _
    $region77: #{netG_forward.16} parent=1 // pred_fallthru
      _
    // Predicated region
    $region78: #{netG_forward.16} parent=1 // pred_check
      _
    $region79: #{netG_forward.16} parent=1 // pred_check_branch
      %107 = sbr.rel (0) target = $region81
    $region80: #{netG_forward.16} parent=1 // pred_region
      _
    $region81: #{netG_forward.16} parent=1 // pred_fallthru
      _
    // Predicated region
    $region82: #{netG_forward.16} parent=1 // pred_check
      _
    $region83: #{netG_forward.16} parent=1 // pred_check_branch
      %109 = sbr.rel (0) target = $region85
    $region84: #{netG_forward.16} parent=1 // pred_region
      _
    $region85: #{netG_forward.16} parent=1 // pred_fallthru
      _
    // Predicated region
    $region86: #{netG_forward.16} parent=1 // pred_check
      _
    $region87: #{netG_forward.16} parent=1 // pred_check_branch
      %111 = sbr.rel (0) target = $region89
    $region88: #{netG_forward.16} parent=1 // pred_region
      _
    $region89: #{netG_forward.16} parent=1 // pred_fallthru
      _
    // Predicated region
    $region90: #{netG_forward.16} parent=1 // pred_check
      _
    $region91: #{netG_forward.16} parent=1 // pred_check_branch
      %113 = sbr.rel (0) target = $region93
    $region92: #{netG_forward.16} parent=1 // pred_region
      _
    $region93: #{netG_forward.16} parent=1 // pred_fallthru
      _
    // Predicated region
    $region94: #{netG_forward.16} parent=1 // pred_check
      _
    $region95: #{netG_forward.16} parent=1 // pred_check_branch
      %115 = sbr.rel (0) target = $region97
    $region96: #{netG_forward.16} parent=1 // pred_region
      _
    $region97: #{netG_forward.16} parent=1 // pred_fallthru
      _
    // Predicated region
    $region98: #{netG_forward.16} parent=1 // pred_check
      _
    $region99: #{netG_forward.16} parent=1 // pred_check_branch
      %117 = sbr.rel (0) target = $region101
    $region100: #{netG_forward.16} parent=1 // pred_region
      _
    $region101: #{netG_forward.16} parent=1 // pred_fallthru
      _
    // Predicated region
    $region102: #{netG_forward.16} parent=1 // pred_check
      _
    $region103: #{netG_forward.16} parent=1 // pred_check_branch
      %119 = sbr.rel (0) target = $region105
    $region104: #{netG_forward.16} parent=1 // pred_region
      _
    $region105: #{netG_forward.16} parent=1 // pred_fallthru
      _
    %v121 = vld [vmem:[%s1] sm:$0x3]
    %v122 = vld [vmem:[%s33] sm:$0xff]
    %v123 = vld [vmem:[%s33 + $0x8] sm:$0xff]
    %v124 = vld [vmem:[%s33 + $0x10] sm:$0xff]
    %v125 = vld [vmem:[%s33 + $0x18] sm:$0xff]
    %v126 = vld [vmem:[%s33 + $0x20] sm:$0xff]
    %v127 = vld [vmem:[%s33 + $0x28] sm:$0xff]
    %v128 = vld [vmem:[%s33 + $0x30] sm:$0xff]
    %v129 = vld [vmem:[%s33 + $0x38] sm:$0xff]
    %v130 = vld [vmem:[%s35] sm:$0x1]
    %v132 = vperm.slane %v130, 0
    %vm134 = vcmask 523264
    %v136 = vsel %vm134, %v121, 0
    %138 = vmatpush.msra.mxu0 0.0
    %139 = vmatpush.msra.mxu0 0.0
    %140 = vmatpush.msra.mxu0 0.0
    %141 = vmatpush.msra.mxu0 0.0
    %142 = vmatpush.msra.mxu0 0.0
    %143 = vmatpush.msra.mxu0 0.0
    %144 = vmatpush.msra.mxu0 0.0
    %145 = vmatpush.msra.mxu0 0.0
    %146 = vmatpush.msra.mxu0 %v129
    %147 = vmatpush.msra.mxu0 %v128
    %148 = vmatpush.msra.mxu0 %v127
    %149 = vmatpush.msra.mxu0 %v126
    %150 = vmatpush.msra.mxu0 %v125
    %151 = vmatpush.msra.mxu0 %v124
    %152 = vmatpush.msra.mxu0 %v123
    %153 = vmatpush.msra.mxu0 %v122
    %154 = vmatmul.f32.gmra.mxu0 %v136
    %v155 = vpop.f32.mrf.mxu0
    %v156 = vadd.f32 %v132, %v155
    %157 = vdwg.mxu0
    %v158 = vld [vmem:[%s3] sm:$0x3]
    %v159 = vxor.u32 %v156, 2147483648
    %v160 = vmul.f32 %v159, 1.442695
    %v161 = vpow.pop %v160
    %v162 = vadd.f32 %v161, 1.0
    %v163 = vrcp.pop %v162
    %v164 = vmul.f32 %v162, %v163
    %v165 = vsub.f32 1.0, %v164
    %v166 = vmul.f32 %v163, %v165
    %v167 = vadd.f32 %v163, %v166
    %vm168 = vweird.f32 %v162
    %vm169 = vweird.f32 %v163
    %vm170 = vmor %vm168, %vm169
    %v171 = vsel %vm170, %v163, %v167
    %v172 = vand.u32 2147483647, %v162
    %vm173 = vcmp.eq.f32.partialorder %v172, 8.507059e+37
    %v174 = vand.u32 %v162, 2147483648
    %v175 = vor.u32 1.1754944e-38, %v174
    %v176 = vsel %vm173, %v175, %v171
    %v177 = vmul.f32 1.0, %v176
    %v178 = vtanh.pop %v156
    %180 = vrot.lane.b32.xlu0 %v158, 32
    %v181 = vpop.permute.xlu0 %180
    %v183 = vmul.f32 %v177, %v181
    %185 = vrot.lane.b32.xlu0 %v178, 64
    %v186 = vpop.permute.xlu0 %185
    %v188 = vmul.f32 %v177, %v186
    %190 = vrot.lane.b32.xlu0 %v188, 32
    %v191 = vpop.permute.xlu0 %190
    %v193 = vadd.f32 %v183, %v191
    %v194 = vtanh.pop %v193
    %196 = vrot.lane.b32.xlu0 %v194, 64
    %v197 = vpop.permute.xlu0 %196
    %v199 = vmul.f32 %v177, %v197
    %201 = vrot.lane.b32.xlu0 %v199, 32
    %v202 = vpop.permute.xlu0 %201
    %vm204 = vcmask 254976
    %205 = vst.msk [vmem:[%s53] sm:$0x3] %vm204, %v202
    %207 = vrot.lane.b32.xlu0 %v193, 96
    %v208 = vpop.permute.xlu0 %207
    %210 = vst.msk [vmem:[%s55] sm:$0x3] %vm204, %v208
    %v211 = vld [vmem:[%s7] sm:$0xff]
    %v212 = vld [vmem:[%s7 + $0x8] sm:$0xff]
    %v213 = vld [vmem:[%s7 + $0x10] sm:$0xff]
    %v214 = vld [vmem:[%s7 + $0x18] sm:$0xff]
    %v215 = vld [vmem:[%s7 + $0x20] sm:$0xff]
    %v216 = vld [vmem:[%s7 + $0x28] sm:$0xff]
    %v217 = vld [vmem:[%s7 + $0x30] sm:$0xff]
    %v218 = vld [vmem:[%s7 + $0x38] sm:$0xff]
    %v219 = vld [vmem:[%s7 + $0x40] sm:$0xff]
    %v220 = vld [vmem:[%s7 + $0x48] sm:$0xff]
    %v221 = vld [vmem:[%s7 + $0x50] sm:$0xff]
    %v222 = vld [vmem:[%s7 + $0x58] sm:$0xff]
    %v223 = vld [vmem:[%s7 + $0x60] sm:$0xff]
    %v224 = vld [vmem:[%s7 + $0x68] sm:$0xff]
    %v225 = vld [vmem:[%s7 + $0x70] sm:$0xff]
    %v226 = vld [vmem:[%s7 + $0x78] sm:$0xff]
    %v227 = vld [vmem:[%s7 + $0x80] sm:$0xff]
    %v228 = vld [vmem:[%s7 + $0x88] sm:$0xff]
    %v229 = vld [vmem:[%s7 + $0x90] sm:$0xff]
    %v230 = vld [vmem:[%s7 + $0x98] sm:$0xff]
    %v231 = vld [vmem:[%s7 + $0xa0] sm:$0xff]
    %v232 = vld [vmem:[%s7 + $0xa8] sm:$0xff]
    %v233 = vld [vmem:[%s7 + $0xb0] sm:$0xff]
    %v234 = vld [vmem:[%s7 + $0xb8] sm:$0xff]
    %v235 = vld [vmem:[%s7 + $0xc0] sm:$0xff]
    %v236 = vld [vmem:[%s7 + $0xc8] sm:$0xff]
    %v237 = vld [vmem:[%s7 + $0xd0] sm:$0xff]
    %v238 = vld [vmem:[%s7 + $0xd8] sm:$0xff]
    %v239 = vld [vmem:[%s7 + $0xe0] sm:$0xff]
    %v240 = vld [vmem:[%s7 + $0xe8] sm:$0xff]
    %v241 = vld [vmem:[%s7 + $0xf0] sm:$0xff]
    %v242 = vld [vmem:[%s7 + $0xf8] sm:$0xff]
    %v243 = vld [vmem:[%s7 + $0x100] sm:$0xff]
    %v244 = vld [vmem:[%s7 + $0x108] sm:$0xff]
    %v245 = vld [vmem:[%s7 + $0x110] sm:$0xff]
    %v246 = vld [vmem:[%s7 + $0x118] sm:$0xff]
    %v247 = vld [vmem:[%s7 + $0x120] sm:$0xff]
    %v248 = vld [vmem:[%s7 + $0x128] sm:$0xff]
    %v249 = vld [vmem:[%s7 + $0x130] sm:$0xff]
    %v250 = vld [vmem:[%s7 + $0x138] sm:$0xff]
    %v251 = vld [vmem:[%s7 + $0x140] sm:$0xff]
    %v252 = vld [vmem:[%s7 + $0x148] sm:$0xff]
    %v253 = vld [vmem:[%s7 + $0x150] sm:$0xff]
    %v254 = vld [vmem:[%s7 + $0x158] sm:$0xff]
    %v255 = vld [vmem:[%s7 + $0x160] sm:$0xff]
    %v256 = vld [vmem:[%s7 + $0x168] sm:$0xff]
    %v257 = vld [vmem:[%s7 + $0x170] sm:$0xff]
    %v258 = vld [vmem:[%s7 + $0x178] sm:$0xff]
    %v259 = vld [vmem:[%s7 + $0x180] sm:$0xff]
    %v260 = vld [vmem:[%s7 + $0x188] sm:$0xff]
    %v261 = vld [vmem:[%s7 + $0x190] sm:$0xff]
    %v262 = vld [vmem:[%s7 + $0x198] sm:$0xff]
    %v263 = vld [vmem:[%s7 + $0x1a0] sm:$0xff]
    %v264 = vld [vmem:[%s7 + $0x1a8] sm:$0xff]
    %v265 = vld [vmem:[%s7 + $0x1b0] sm:$0xff]
    %v266 = vld [vmem:[%s7 + $0x1b8] sm:$0xff]
    %v267 = vld [vmem:[%s7 + $0x1c0] sm:$0xff]
    %v268 = vld [vmem:[%s7 + $0x1c8] sm:$0xff]
    %v269 = vld [vmem:[%s7 + $0x1d0] sm:$0xff]
    %v270 = vld [vmem:[%s7 + $0x1d8] sm:$0xff]
    %v271 = vld [vmem:[%s7 + $0x1e0] sm:$0xff]
    %v272 = vld [vmem:[%s7 + $0x1e8] sm:$0xff]
    %v273 = vld [vmem:[%s7 + $0x1f0] sm:$0xff]
    %v274 = vld [vmem:[%s7 + $0x1f8] sm:$0xff]
    %v275 = vld [vmem:[%s5] sm:$0xff]
    %v276 = vld [vmem:[%s5 + $0x8] sm:$0xff]
    %v277 = vld [vmem:[%s5 + $0x10] sm:$0xff]
    %v278 = vld [vmem:[%s5 + $0x18] sm:$0xff]
    %v279 = vld [vmem:[%s5 + $0x20] sm:$0xff]
    %v280 = vld [vmem:[%s5 + $0x28] sm:$0xff]
    %v281 = vld [vmem:[%s5 + $0x30] sm:$0xff]
    %v282 = vld [vmem:[%s5 + $0x38] sm:$0xff]
    %v283 = vld [vmem:[%s5 + $0x40] sm:$0xff]
    %v284 = vld [vmem:[%s5 + $0x48] sm:$0xff]
    %v285 = vld [vmem:[%s5 + $0x50] sm:$0xff]
    %v286 = vld [vmem:[%s5 + $0x58] sm:$0xff]
    %v287 = vld [vmem:[%s5 + $0x60] sm:$0xff]
    %v288 = vld [vmem:[%s5 + $0x68] sm:$0xff]
    %v289 = vld [vmem:[%s5 + $0x70] sm:$0xff]
    %v290 = vld [vmem:[%s5 + $0x78] sm:$0xff]
    %v291 = vld [vmem:[%s5 + $0x80] sm:$0xff]
    %v292 = vld [vmem:[%s5 + $0x88] sm:$0xff]
    %v293 = vld [vmem:[%s5 + $0x90] sm:$0xff]
    %v294 = vld [vmem:[%s5 + $0x98] sm:$0xff]
    %v295 = vld [vmem:[%s5 + $0xa0] sm:$0xff]
    %v296 = vld [vmem:[%s5 + $0xa8] sm:$0xff]
    %v297 = vld [vmem:[%s5 + $0xb0] sm:$0xff]
    %v298 = vld [vmem:[%s5 + $0xb8] sm:$0xff]
    %v299 = vld [vmem:[%s5 + $0xc0] sm:$0xff]
    %v300 = vld [vmem:[%s5 + $0xc8] sm:$0xff]
    %v301 = vld [vmem:[%s5 + $0xd0] sm:$0xff]
    %v302 = vld [vmem:[%s5 + $0xd8] sm:$0xff]
    %v303 = vld [vmem:[%s5 + $0xe0] sm:$0xff]
    %v304 = vld [vmem:[%s5 + $0xe8] sm:$0xff]
    %v305 = vld [vmem:[%s5 + $0xf0] sm:$0xff]
    %v306 = vld [vmem:[%s5 + $0xf8] sm:$0xff]
    %v307 = vld [vmem:[%s5 + $0x100] sm:$0xff]
    %v308 = vld [vmem:[%s5 + $0x108] sm:$0xff]
    %v309 = vld [vmem:[%s5 + $0x110] sm:$0xff]
    %v310 = vld [vmem:[%s5 + $0x118] sm:$0xff]
    %v311 = vld [vmem:[%s5 + $0x120] sm:$0xff]
    %v312 = vld [vmem:[%s5 + $0x128] sm:$0xff]
    %v313 = vld [vmem:[%s5 + $0x130] sm:$0xff]
    %v314 = vld [vmem:[%s5 + $0x138] sm:$0xff]
    %v315 = vld [vmem:[%s5 + $0x140] sm:$0xff]
    %v316 = vld [vmem:[%s5 + $0x148] sm:$0xff]
    %v317 = vld [vmem:[%s5 + $0x150] sm:$0xff]
    %v318 = vld [vmem:[%s5 + $0x158] sm:$0xff]
    %v319 = vld [vmem:[%s5 + $0x160] sm:$0xff]
    %v320 = vld [vmem:[%s5 + $0x168] sm:$0xff]
    %v321 = vld [vmem:[%s5 + $0x170] sm:$0xff]
    %v322 = vld [vmem:[%s5 + $0x178] sm:$0xff]
    %v323 = vld [vmem:[%s5 + $0x180] sm:$0xff]
    %v324 = vld [vmem:[%s5 + $0x188] sm:$0xff]
    %v325 = vld [vmem:[%s5 + $0x190] sm:$0xff]
    %v326 = vld [vmem:[%s5 + $0x198] sm:$0xff]
    %v327 = vld [vmem:[%s5 + $0x1a0] sm:$0xff]
    %v328 = vld [vmem:[%s5 + $0x1a8] sm:$0xff]
    %v329 = vld [vmem:[%s5 + $0x1b0] sm:$0xff]
    %v330 = vld [vmem:[%s5 + $0x1b8] sm:$0xff]
    %v331 = vld [vmem:[%s5 + $0x1c0] sm:$0xff]
    %v332 = vld [vmem:[%s5 + $0x1c8] sm:$0xff]
    %v333 = vld [vmem:[%s5 + $0x1d0] sm:$0xff]
    %v334 = vld [vmem:[%s5 + $0x1d8] sm:$0xff]
    %v335 = vld [vmem:[%s5 + $0x1e0] sm:$0xff]
    %v336 = vld [vmem:[%s5 + $0x1e8] sm:$0xff]
    %v337 = vld [vmem:[%s5 + $0x1f0] sm:$0xff]
    %v338 = vld [vmem:[%s5 + $0x1f8] sm:$0xff]
    %339 = vmatpush.msra.mxu0 %v290
    %340 = vmatpush.msra.mxu0 %v289
    %341 = vmatpush.msra.mxu0 %v288
    %342 = vmatpush.msra.mxu0 %v287
    %343 = vmatpush.msra.mxu0 %v286
    %344 = vmatpush.msra.mxu0 %v285
    %345 = vmatpush.msra.mxu0 %v284
    %346 = vmatpush.msra.mxu0 %v283
    %347 = vmatpush.msra.mxu0 %v282
    %348 = vmatpush.msra.mxu0 %v281
    %349 = vmatpush.msra.mxu0 %v280
    %350 = vmatpush.msra.mxu0 %v279
    %351 = vmatpush.msra.mxu0 %v278
    %352 = vmatpush.msra.mxu0 %v277
    %353 = vmatpush.msra.mxu0 %v276
    %354 = vmatpush.msra.mxu0 %v275
    %355 = vmatmul.f32.gmra.mxu0 %v211
    %v356 = vpop.f32.mrf.mxu0
    %v357 = vadd.f32 0.0, %v356
    %358 = vmatmul.f32.gmra.mxu0 %v215
    %v359 = vpop.f32.mrf.mxu0
    %v360 = vadd.f32 0.0, %v359
    %361 = vmatmul.f32.gmra.mxu0 %v219
    %v362 = vpop.f32.mrf.mxu0
    %v363 = vadd.f32 0.0, %v362
    %364 = vmatmul.f32.gmra.mxu0 %v223
    %v365 = vpop.f32.mrf.mxu0
    %v366 = vadd.f32 0.0, %v365
    %367 = vmatmul.f32.gmra.mxu0 %v227
    %v368 = vpop.f32.mrf.mxu0
    %v369 = vadd.f32 0.0, %v368
    %370 = vmatmul.f32.gmra.mxu0 %v231
    %v371 = vpop.f32.mrf.mxu0
    %v372 = vadd.f32 0.0, %v371
    %373 = vmatmul.f32.gmra.mxu0 %v235
    %v374 = vpop.f32.mrf.mxu0
    %v375 = vadd.f32 0.0, %v374
    %376 = vmatmul.f32.gmra.mxu0 %v239
    %v377 = vpop.f32.mrf.mxu0
    %v378 = vadd.f32 0.0, %v377
    %379 = vmatmul.f32.gmra.mxu0 %v243
    %v380 = vpop.f32.mrf.mxu0
    %v381 = vadd.f32 0.0, %v380
    %382 = vmatmul.f32.gmra.mxu0 %v247
    %v383 = vpop.f32.mrf.mxu0
    %v384 = vadd.f32 0.0, %v383
    %385 = vmatmul.f32.gmra.mxu0 %v251
    %v386 = vpop.f32.mrf.mxu0
    %v387 = vadd.f32 0.0, %v386
    %388 = vmatmul.f32.gmra.mxu0 %v255
    %v389 = vpop.f32.mrf.mxu0
    %v390 = vadd.f32 0.0, %v389
    %391 = vmatmul.f32.gmra.mxu0 %v259
    %v392 = vpop.f32.mrf.mxu0
    %v393 = vadd.f32 0.0, %v392
    %394 = vmatmul.f32.gmra.mxu0 %v263
    %v395 = vpop.f32.mrf.mxu0
    %v396 = vadd.f32 0.0, %v395
    %397 = vmatmul.f32.gmra.mxu0 %v267
    %v398 = vpop.f32.mrf.mxu0
    %v399 = vadd.f32 0.0, %v398
    %400 = vmatmul.f32.gmra.mxu0 %v271
    %v401 = vpop.f32.mrf.mxu0
    %v402 = vadd.f32 0.0, %v401
    %403 = vdwg.mxu0
    %404 = vmatpush.msra.mxu0 %v306
    %405 = vmatpush.msra.mxu0 %v305
    %406 = vmatpush.msra.mxu0 %v304
    %407 = vmatpush.msra.mxu0 %v303
    %408 = vmatpush.msra.mxu0 %v302
    %409 = vmatpush.msra.mxu0 %v301
    %410 = vmatpush.msra.mxu0 %v300
    %411 = vmatpush.msra.mxu0 %v299
    %412 = vmatpush.msra.mxu0 %v298
    %413 = vmatpush.msra.mxu0 %v297
    %414 = vmatpush.msra.mxu0 %v296
    %415 = vmatpush.msra.mxu0 %v295
    %416 = vmatpush.msra.mxu0 %v294
    %417 = vmatpush.msra.mxu0 %v293
    %418 = vmatpush.msra.mxu0 %v292
    %419 = vmatpush.msra.mxu0 %v291
    %420 = vmatmul.f32.gmra.mxu0 %v212
    %v421 = vpop.f32.mrf.mxu0
    %v422 = vadd.f32 %v357, %v421
    %423 = vmatmul.f32.gmra.mxu0 %v216
    %v424 = vpop.f32.mrf.mxu0
    %v425 = vadd.f32 %v360, %v424
    %426 = vmatmul.f32.gmra.mxu0 %v220
    %v427 = vpop.f32.mrf.mxu0
    %v428 = vadd.f32 %v363, %v427
    %429 = vmatmul.f32.gmra.mxu0 %v224
    %v430 = vpop.f32.mrf.mxu0
    %v431 = vadd.f32 %v366, %v430
    %432 = vmatmul.f32.gmra.mxu0 %v228
    %v433 = vpop.f32.mrf.mxu0
    %v434 = vadd.f32 %v369, %v433
    %435 = vmatmul.f32.gmra.mxu0 %v232
    %v436 = vpop.f32.mrf.mxu0
    %v437 = vadd.f32 %v372, %v436
    %438 = vmatmul.f32.gmra.mxu0 %v236
    %v439 = vpop.f32.mrf.mxu0
    %v440 = vadd.f32 %v375, %v439
    %441 = vmatmul.f32.gmra.mxu0 %v240
    %v442 = vpop.f32.mrf.mxu0
    %v443 = vadd.f32 %v378, %v442
    %444 = vmatmul.f32.gmra.mxu0 %v244
    %v445 = vpop.f32.mrf.mxu0
    %v446 = vadd.f32 %v381, %v445
    %447 = vmatmul.f32.gmra.mxu0 %v248
    %v448 = vpop.f32.mrf.mxu0
    %v449 = vadd.f32 %v384, %v448
    %450 = vmatmul.f32.gmra.mxu0 %v252
    %v451 = vpop.f32.mrf.mxu0
    %v452 = vadd.f32 %v387, %v451
    %453 = vmatmul.f32.gmra.mxu0 %v256
    %v454 = vpop.f32.mrf.mxu0
    %v455 = vadd.f32 %v390, %v454
    %456 = vmatmul.f32.gmra.mxu0 %v260
    %v457 = vpop.f32.mrf.mxu0
    %v458 = vadd.f32 %v393, %v457
    %459 = vmatmul.f32.gmra.mxu0 %v264
    %v460 = vpop.f32.mrf.mxu0
    %v461 = vadd.f32 %v396, %v460
    %462 = vmatmul.f32.gmra.mxu0 %v268
    %v463 = vpop.f32.mrf.mxu0
    %v464 = vadd.f32 %v399, %v463
    %465 = vmatmul.f32.gmra.mxu0 %v272
    %v466 = vpop.f32.mrf.mxu0
    %v467 = vadd.f32 %v402, %v466
    %468 = vdwg.mxu0
    %469 = vmatpush.msra.mxu0 %v322
    %470 = vmatpush.msra.mxu0 %v321
    %471 = vmatpush.msra.mxu0 %v320
    %472 = vmatpush.msra.mxu0 %v319
    %473 = vmatpush.msra.mxu0 %v318
    %474 = vmatpush.msra.mxu0 %v317
    %475 = vmatpush.msra.mxu0 %v316
    %476 = vmatpush.msra.mxu0 %v315
    %477 = vmatpush.msra.mxu0 %v314
    %478 = vmatpush.msra.mxu0 %v313
    %479 = vmatpush.msra.mxu0 %v312
    %480 = vmatpush.msra.mxu0 %v311
    %481 = vmatpush.msra.mxu0 %v310
    %482 = vmatpush.msra.mxu0 %v309
    %483 = vmatpush.msra.mxu0 %v308
    %484 = vmatpush.msra.mxu0 %v307
    %485 = vmatmul.f32.gmra.mxu0 %v213
    %v486 = vpop.f32.mrf.mxu0
    %v487 = vadd.f32 %v422, %v486
    %488 = vmatmul.f32.gmra.mxu0 %v217
    %v489 = vpop.f32.mrf.mxu0
    %v490 = vadd.f32 %v425, %v489
    %491 = vmatmul.f32.gmra.mxu0 %v221
    %v492 = vpop.f32.mrf.mxu0
    %v493 = vadd.f32 %v428, %v492
    %494 = vmatmul.f32.gmra.mxu0 %v225
    %v495 = vpop.f32.mrf.mxu0
    %v496 = vadd.f32 %v431, %v495
    %497 = vmatmul.f32.gmra.mxu0 %v229
    %v498 = vpop.f32.mrf.mxu0
    %v499 = vadd.f32 %v434, %v498
    %500 = vmatmul.f32.gmra.mxu0 %v233
    %v501 = vpop.f32.mrf.mxu0
    %v502 = vadd.f32 %v437, %v501
    %503 = vmatmul.f32.gmra.mxu0 %v237
    %v504 = vpop.f32.mrf.mxu0
    %v505 = vadd.f32 %v440, %v504
    %506 = vmatmul.f32.gmra.mxu0 %v241
    %v507 = vpop.f32.mrf.mxu0
    %v508 = vadd.f32 %v443, %v507
    %509 = vmatmul.f32.gmra.mxu0 %v245
    %v510 = vpop.f32.mrf.mxu0
    %v511 = vadd.f32 %v446, %v510
    %512 = vmatmul.f32.gmra.mxu0 %v249
    %v513 = vpop.f32.mrf.mxu0
    %v514 = vadd.f32 %v449, %v513
    %515 = vmatmul.f32.gmra.mxu0 %v253
    %v516 = vpop.f32.mrf.mxu0
    %v517 = vadd.f32 %v452, %v516
    %518 = vmatmul.f32.gmra.mxu0 %v257
    %v519 = vpop.f32.mrf.mxu0
    %v520 = vadd.f32 %v455, %v519
    %521 = vmatmul.f32.gmra.mxu0 %v261
    %v522 = vpop.f32.mrf.mxu0
    %v523 = vadd.f32 %v458, %v522
    %524 = vmatmul.f32.gmra.mxu0 %v265
    %v525 = vpop.f32.mrf.mxu0
    %v526 = vadd.f32 %v461, %v525
    %527 = vmatmul.f32.gmra.mxu0 %v269
    %v528 = vpop.f32.mrf.mxu0
    %v529 = vadd.f32 %v464, %v528
    %530 = vmatmul.f32.gmra.mxu0 %v273
    %v531 = vpop.f32.mrf.mxu0
    %v532 = vadd.f32 %v467, %v531
    %533 = vdwg.mxu0
    %534 = vmatpush.msra.mxu0 %v338
    %535 = vmatpush.msra.mxu0 %v337
    %536 = vmatpush.msra.mxu0 %v336
    %537 = vmatpush.msra.mxu0 %v335
    %538 = vmatpush.msra.mxu0 %v334
    %539 = vmatpush.msra.mxu0 %v333
    %540 = vmatpush.msra.mxu0 %v332
    %541 = vmatpush.msra.mxu0 %v331
    %542 = vmatpush.msra.mxu0 %v330
    %543 = vmatpush.msra.mxu0 %v329
    %544 = vmatpush.msra.mxu0 %v328
    %545 = vmatpush.msra.mxu0 %v327
    %546 = vmatpush.msra.mxu0 %v326
    %547 = vmatpush.msra.mxu0 %v325
    %548 = vmatpush.msra.mxu0 %v324
    %549 = vmatpush.msra.mxu0 %v323
    %550 = vmatmul.f32.gmra.mxu0 %v214
    %v551 = vpop.f32.mrf.mxu0
    %v552 = vadd.f32 %v487, %v551
    %553 = vmatmul.f32.gmra.mxu0 %v218
    %v554 = vpop.f32.mrf.mxu0
    %v555 = vadd.f32 %v490, %v554
    %556 = vmatmul.f32.gmra.mxu0 %v222
    %v557 = vpop.f32.mrf.mxu0
    %v558 = vadd.f32 %v493, %v557
    %559 = vmatmul.f32.gmra.mxu0 %v226
    %v560 = vpop.f32.mrf.mxu0
    %v561 = vadd.f32 %v496, %v560
    %562 = vmatmul.f32.gmra.mxu0 %v230
    %v563 = vpop.f32.mrf.mxu0
    %v564 = vadd.f32 %v499, %v563
    %565 = vmatmul.f32.gmra.mxu0 %v234
    %v566 = vpop.f32.mrf.mxu0
    %v567 = vadd.f32 %v502, %v566
    %568 = vmatmul.f32.gmra.mxu0 %v238
    %v569 = vpop.f32.mrf.mxu0
    %v570 = vadd.f32 %v505, %v569
    %571 = vmatmul.f32.gmra.mxu0 %v242
    %v572 = vpop.f32.mrf.mxu0
    %v573 = vadd.f32 %v508, %v572
    %574 = vmatmul.f32.gmra.mxu0 %v246
    %v575 = vpop.f32.mrf.mxu0
    %v576 = vadd.f32 %v511, %v575
    %577 = vmatmul.f32.gmra.mxu0 %v250
    %v578 = vpop.f32.mrf.mxu0
    %v579 = vadd.f32 %v514, %v578
    %580 = vmatmul.f32.gmra.mxu0 %v254
    %v581 = vpop.f32.mrf.mxu0
    %v582 = vadd.f32 %v517, %v581
    %583 = vmatmul.f32.gmra.mxu0 %v258
    %v584 = vpop.f32.mrf.mxu0
    %v585 = vadd.f32 %v520, %v584
    %586 = vmatmul.f32.gmra.mxu0 %v262
    %v587 = vpop.f32.mrf.mxu0
    %v588 = vadd.f32 %v523, %v587
    %589 = vmatmul.f32.gmra.mxu0 %v266
    %v590 = vpop.f32.mrf.mxu0
    %v591 = vadd.f32 %v526, %v590
    %592 = vmatmul.f32.gmra.mxu0 %v270
    %v593 = vpop.f32.mrf.mxu0
    %v594 = vadd.f32 %v529, %v593
    %595 = vmatmul.f32.gmra.mxu0 %v274
    %v596 = vpop.f32.mrf.mxu0
    %v597 = vadd.f32 %v532, %v596
    %598 = vdwg.mxu0
    %v599 = vld [vmem:[%s13] sm:$0x1]
    %v600 = vld [vmem:[%s15] sm:$0x1]
    %v601 = vsel %vm134, %v552, 0.0
    %v602 = vsel %vm134, %v555, 0.0
    %v603 = vadd.f32 %v601, %v602
    %v604 = vsel %vm134, %v558, 0.0
    %v605 = vadd.f32 %v603, %v604
    %v606 = vsel %vm134, %v561, 0.0
    %v607 = vadd.f32 %v605, %v606
    %v608 = vsel %vm134, %v564, 0.0
    %v609 = vadd.f32 %v607, %v608
    %v610 = vsel %vm134, %v567, 0.0
    %v611 = vadd.f32 %v609, %v610
    %v612 = vsel %vm134, %v570, 0.0
    %v613 = vadd.f32 %v611, %v612
    %v614 = vsel %vm134, %v573, 0.0
    %v615 = vadd.f32 %v613, %v614
    %v616 = vsel %vm134, %v576, 0.0
    %v617 = vadd.f32 %v615, %v616
    %v618 = vsel %vm134, %v579, 0.0
    %v619 = vadd.f32 %v617, %v618
    %v620 = vsel %vm134, %v582, 0.0
    %v621 = vadd.f32 %v619, %v620
    %v622 = vsel %vm134, %v585, 0.0
    %v623 = vadd.f32 %v621, %v622
    %v624 = vsel %vm134, %v588, 0.0
    %v625 = vadd.f32 %v623, %v624
    %v626 = vsel %vm134, %v591, 0.0
    %v627 = vadd.f32 %v625, %v626
    %v628 = vsel %vm134, %v594, 0.0
    %v629 = vadd.f32 %v627, %v628
    %v630 = vsel %vm134, %v597, 0.0
    %v631 = vadd.f32 %v629, %v630
    %v632 = vrot.slane %v631, 4
    %v633 = vadd.f32 %v631, %v632
    %v634 = vrot.slane %v633, 2
    %v635 = vadd.f32 %v633, %v634
    %v636 = vrot.slane %v635, 1
    %v637 = vadd.f32 %v635, %v636
    %v638 = vrcp.pop 128.0
    %v639 = vmul.f32 128.0, %v638
    %v640 = vsub.f32 1.0, %v639
    %v641 = vmul.f32 %v638, %v640
    %v642 = vadd.f32 %v638, %v641
    %vm643 = vweird.f32 %v638
    %v644 = vsel %vm643, %v638, %v642
    %v645 = vmul.f32 %v637, %v644
    %v646 = vsub.f32 %v552, %v645
    %v647 = vsub.f32 %v555, %v645
    %v648 = vsub.f32 %v558, %v645
    %v649 = vsub.f32 %v561, %v645
    %v650 = vsub.f32 %v564, %v645
    %v651 = vsub.f32 %v567, %v645
    %v652 = vsub.f32 %v570, %v645
    %v653 = vsub.f32 %v573, %v645
    %v654 = vsub.f32 %v576, %v645
    %v655 = vsub.f32 %v579, %v645
    %v656 = vsub.f32 %v582, %v645
    %v657 = vsub.f32 %v585, %v645
    %v658 = vsub.f32 %v588, %v645
    %v659 = vsub.f32 %v591, %v645
    %v660 = vsub.f32 %v594, %v645
    %v661 = vsub.f32 %v597, %v645
    %v662 = vmul.f32 %v646, %v646
    %v663 = vmul.f32 %v647, %v647
    %v664 = vmul.f32 %v648, %v648
    %v665 = vmul.f32 %v649, %v649
    %v666 = vmul.f32 %v650, %v650
    %v667 = vmul.f32 %v651, %v651
    %v668 = vmul.f32 %v652, %v652
    %v669 = vmul.f32 %v653, %v653
    %v670 = vmul.f32 %v654, %v654
    %v671 = vmul.f32 %v655, %v655
    %v672 = vmul.f32 %v656, %v656
    %v673 = vmul.f32 %v657, %v657
    %v674 = vmul.f32 %v658, %v658
    %v675 = vmul.f32 %v659, %v659
    %v676 = vmul.f32 %v660, %v660
    %v677 = vmul.f32 %v661, %v661
    %v678 = vsel %vm134, %v662, 0.0
    %v679 = vsel %vm134, %v663, 0.0
    %v680 = vadd.f32 %v678, %v679
    %v681 = vsel %vm134, %v664, 0.0
    %v682 = vadd.f32 %v680, %v681
    %v683 = vsel %vm134, %v665, 0.0
    %v684 = vadd.f32 %v682, %v683
    %v685 = vsel %vm134, %v666, 0.0
    %v686 = vadd.f32 %v684, %v685
    %v687 = vsel %vm134, %v667, 0.0
    %v688 = vadd.f32 %v686, %v687
    %v689 = vsel %vm134, %v668, 0.0
    %v690 = vadd.f32 %v688, %v689
    %v691 = vsel %vm134, %v669, 0.0
    %v692 = vadd.f32 %v690, %v691
    %v693 = vsel %vm134, %v670, 0.0
    %v694 = vadd.f32 %v692, %v693
    %v695 = vsel %vm134, %v671, 0.0
    %v696 = vadd.f32 %v694, %v695
    %v697 = vsel %vm134, %v672, 0.0
    %v698 = vadd.f32 %v696, %v697
    %v699 = vsel %vm134, %v673, 0.0
    %v700 = vadd.f32 %v698, %v699
    %v701 = vsel %vm134, %v674, 0.0
    %v702 = vadd.f32 %v700, %v701
    %v703 = vsel %vm134, %v675, 0.0
    %v704 = vadd.f32 %v702, %v703
    %v705 = vsel %vm134, %v676, 0.0
    %v706 = vadd.f32 %v704, %v705
    %v707 = vsel %vm134, %v677, 0.0
    %v708 = vadd.f32 %v706, %v707
    %v709 = vrot.slane %v708, 4
    %v710 = vadd.f32 %v708, %v709
    %v711 = vrot.slane %v710, 2
    %v712 = vadd.f32 %v710, %v711
    %v713 = vrot.slane %v712, 1
    %v714 = vadd.f32 %v712, %v713
    %v715 = vmul.f32 %v714, %v644
    %v716 = vadd.f32 %v715, 1e-05
    %v717 = vrsqrt.pop %v716
    %v718 = vmul.f32 %v717, %v716
    %v719 = vmul.f32 %v718, %v717
    %v720 = vmul.f32 0.5, %v719
    %v721 = vsub.f32 1.5, %v720
    %v722 = vmul.f32 %v717, %v721
    %vm723 = vweird.f32 %v716
    %vm724 = vweird.f32 %v717
    %vm725 = vmor %vm723, %vm724
    %v726 = vsel %vm725, %v717, %v722
    %v727 = vmul.f32 %v646, %v726
    %v728 = vmul.f32 %v647, %v726
    %v729 = vmul.f32 %v648, %v726
    %v730 = vmul.f32 %v649, %v726
    %v731 = vmul.f32 %v650, %v726
    %v732 = vmul.f32 %v651, %v726
    %v733 = vmul.f32 %v652, %v726
    %v734 = vmul.f32 %v653, %v726
    %v735 = vmul.f32 %v654, %v726
    %v736 = vmul.f32 %v655, %v726
    %v737 = vmul.f32 %v656, %v726
    %v738 = vmul.f32 %v657, %v726
    %v739 = vmul.f32 %v658, %v726
    %v740 = vmul.f32 %v659, %v726
    %v741 = vmul.f32 %v660, %v726
    %v742 = vmul.f32 %v661, %v726
    %v744 = vperm.slane %v599, 0
    %v746 = vmul.f32 %v727, %v744
    %v747 = vmul.f32 %v728, %v744
    %v748 = vmul.f32 %v729, %v744
    %v749 = vmul.f32 %v730, %v744
    %v750 = vmul.f32 %v731, %v744
    %v751 = vmul.f32 %v732, %v744
    %v752 = vmul.f32 %v733, %v744
    %v753 = vmul.f32 %v734, %v744
    %v754 = vmul.f32 %v735, %v744
    %v755 = vmul.f32 %v736, %v744
    %v756 = vmul.f32 %v737, %v744
    %v757 = vmul.f32 %v738, %v744
    %v758 = vmul.f32 %v739, %v744
    %v759 = vmul.f32 %v740, %v744
    %v760 = vmul.f32 %v741, %v744
    %v761 = vmul.f32 %v742, %v744
    %v763 = vperm.slane %v600, 0
    %v765 = vadd.f32 %v746, %v763
    %v766 = vadd.f32 %v747, %v763
    %v767 = vadd.f32 %v748, %v763
    %v768 = vadd.f32 %v749, %v763
    %v769 = vadd.f32 %v750, %v763
    %v770 = vadd.f32 %v751, %v763
    %v771 = vadd.f32 %v752, %v763
    %v772 = vadd.f32 %v753, %v763
    %v773 = vadd.f32 %v754, %v763
    %v774 = vadd.f32 %v755, %v763
    %v775 = vadd.f32 %v756, %v763
    %v776 = vadd.f32 %v757, %v763
    %v777 = vadd.f32 %v758, %v763
    %v778 = vadd.f32 %v759, %v763
    %v779 = vadd.f32 %v760, %v763
    %v780 = vadd.f32 %v761, %v763
    %vm781 = vcmp.gt.f32.partialorder %v765, 0.0
    %vm782 = vcmp.gt.f32.partialorder %v766, 0.0
    %vm783 = vcmp.gt.f32.partialorder %v767, 0.0
    %vm784 = vcmp.gt.f32.partialorder %v768, 0.0
    %vm785 = vcmp.gt.f32.partialorder %v769, 0.0
    %vm786 = vcmp.gt.f32.partialorder %v770, 0.0
    %vm787 = vcmp.gt.f32.partialorder %v771, 0.0
    %vm788 = vcmp.gt.f32.partialorder %v772, 0.0
    %vm789 = vcmp.gt.f32.partialorder %v773, 0.0
    %vm790 = vcmp.gt.f32.partialorder %v774, 0.0
    %vm791 = vcmp.gt.f32.partialorder %v775, 0.0
    %vm792 = vcmp.gt.f32.partialorder %v776, 0.0
    %vm793 = vcmp.gt.f32.partialorder %v777, 0.0
    %vm794 = vcmp.gt.f32.partialorder %v778, 0.0
    %vm795 = vcmp.gt.f32.partialorder %v779, 0.0
    %vm796 = vcmp.gt.f32.partialorder %v780, 0.0
    %v797 = vmul.f32 %v765, 0.2
    %v798 = vmul.f32 %v766, 0.2
    %v799 = vmul.f32 %v767, 0.2
    %v800 = vmul.f32 %v768, 0.2
    %v801 = vmul.f32 %v769, 0.2
    %v802 = vmul.f32 %v770, 0.2
    %v803 = vmul.f32 %v771, 0.2
    %v804 = vmul.f32 %v772, 0.2
    %v805 = vmul.f32 %v773, 0.2
    %v806 = vmul.f32 %v774, 0.2
    %v807 = vmul.f32 %v775, 0.2
    %v808 = vmul.f32 %v776, 0.2
    %v809 = vmul.f32 %v777, 0.2
    %v810 = vmul.f32 %v778, 0.2
    %v811 = vmul.f32 %v779, 0.2
    %v812 = vmul.f32 %v780, 0.2
    %v813 = vsel %vm781, %v765, %v797
    %v814 = vsel %vm782, %v766, %v798
    %v815 = vsel %vm783, %v767, %v799
    %v816 = vsel %vm784, %v768, %v800
    %v817 = vsel %vm785, %v769, %v801
    %v818 = vsel %vm786, %v770, %v802
    %v819 = vsel %vm787, %v771, %v803
    %v820 = vsel %vm788, %v772, %v804
    %v821 = vsel %vm789, %v773, %v805
    %v822 = vsel %vm790, %v774, %v806
    %v823 = vsel %vm791, %v775, %v807
    %v824 = vsel %vm792, %v776, %v808
    %v825 = vsel %vm793, %v777, %v809
    %v826 = vsel %vm794, %v778, %v810
    %v827 = vsel %vm795, %v779, %v811
    %v828 = vsel %vm796, %v780, %v812
    %v829 = vld [vmem:[%s9] sm:$0xff]
    %v830 = vld [vmem:[%s9 + $0x8] sm:$0xff]
    %v831 = vld [vmem:[%s9 + $0x10] sm:$0xff]
    %v832 = vld [vmem:[%s9 + $0x18] sm:$0xff]
    %833 = vmatpush.msra.mxu0 %v828
    %834 = vmatpush.msra.mxu0 %v827
    %835 = vmatpush.msra.mxu0 %v826
    %836 = vmatpush.msra.mxu0 %v825
    %837 = vmatpush.msra.mxu0 %v824
    %838 = vmatpush.msra.mxu0 %v823
    %839 = vmatpush.msra.mxu0 %v822
    %840 = vmatpush.msra.mxu0 %v821
    %841 = vmatpush.msra.mxu0 %v820
    %842 = vmatpush.msra.mxu0 %v819
    %843 = vmatpush.msra.mxu0 %v818
    %844 = vmatpush.msra.mxu0 %v817
    %845 = vmatpush.msra.mxu0 %v816
    %846 = vmatpush.msra.mxu0 %v815
    %847 = vmatpush.msra.mxu0 %v814
    %848 = vmatpush.msra.mxu0 %v813
    %849 = vmatmul.f32.gmra.mxu0 %v829
    %v850 = vpop.f32.mrf.mxu0
    %v851 = vadd.f32 0.0, %v850
    %852 = vmatmul.f32.gmra.mxu0 %v830
    %v853 = vpop.f32.mrf.mxu0
    %v854 = vadd.f32 0.0, %v853
    %855 = vmatmul.f32.gmra.mxu0 %v831
    %v856 = vpop.f32.mrf.mxu0
    %v857 = vadd.f32 0.0, %v856
    %858 = vmatmul.f32.gmra.mxu0 %v832
    %v859 = vpop.f32.mrf.mxu0
    %v860 = vadd.f32 0.0, %v859
    %861 = vdwg.mxu0
    %v862 = vld [vmem:[%s17] sm:$0x1]
    %v863 = vld [vmem:[%s19] sm:$0x1]
    %v864 = vsel %vm134, %v851, 0.0
    %v865 = vsel %vm134, %v854, 0.0
    %v866 = vadd.f32 %v864, %v865
    %v867 = vsel %vm134, %v857, 0.0
    %v868 = vadd.f32 %v866, %v867
    %v869 = vsel %vm134, %v860, 0.0
    %v870 = vadd.f32 %v868, %v869
    %v871 = vrot.slane %v870, 4
    %v872 = vadd.f32 %v870, %v871
    %v873 = vrot.slane %v872, 2
    %v874 = vadd.f32 %v872, %v873
    %v875 = vrot.slane %v874, 1
    %v876 = vadd.f32 %v874, %v875
    %v877 = vrcp.pop 32.0
    %v878 = vmul.f32 32.0, %v877
    %v879 = vsub.f32 1.0, %v878
    %v880 = vmul.f32 %v877, %v879
    %v881 = vadd.f32 %v877, %v880
    %vm882 = vweird.f32 %v877
    %v883 = vsel %vm882, %v877, %v881
    %v884 = vmul.f32 %v876, %v883
    %v885 = vsub.f32 %v851, %v884
    %v886 = vsub.f32 %v854, %v884
    %v887 = vsub.f32 %v857, %v884
    %v888 = vsub.f32 %v860, %v884
    %v889 = vmul.f32 %v885, %v885
    %v890 = vmul.f32 %v886, %v886
    %v891 = vmul.f32 %v887, %v887
    %v892 = vmul.f32 %v888, %v888
    %v893 = vsel %vm134, %v889, 0.0
    %v894 = vsel %vm134, %v890, 0.0
    %v895 = vadd.f32 %v893, %v894
    %v896 = vsel %vm134, %v891, 0.0
    %v897 = vadd.f32 %v895, %v896
    %v898 = vsel %vm134, %v892, 0.0
    %v899 = vadd.f32 %v897, %v898
    %v900 = vrot.slane %v899, 4
    %v901 = vadd.f32 %v899, %v900
    %v902 = vrot.slane %v901, 2
    %v903 = vadd.f32 %v901, %v902
    %v904 = vrot.slane %v903, 1
    %v905 = vadd.f32 %v903, %v904
    %v906 = vmul.f32 %v905, %v883
    %v907 = vadd.f32 %v906, 1e-05
    %v908 = vrsqrt.pop %v907
    %v909 = vmul.f32 %v908, %v907
    %v910 = vmul.f32 %v909, %v908
    %v911 = vmul.f32 0.5, %v910
    %v912 = vsub.f32 1.5, %v911
    %v913 = vmul.f32 %v908, %v912
    %vm914 = vweird.f32 %v907
    %vm915 = vweird.f32 %v908
    %vm916 = vmor %vm914, %vm915
    %v917 = vsel %vm916, %v908, %v913
    %v918 = vmul.f32 %v885, %v917
    %v919 = vmul.f32 %v886, %v917
    %v920 = vmul.f32 %v887, %v917
    %v921 = vmul.f32 %v888, %v917
    %v923 = vperm.slane %v862, 0
    %v925 = vmul.f32 %v918, %v923
    %v926 = vmul.f32 %v919, %v923
    %v927 = vmul.f32 %v920, %v923
    %v928 = vmul.f32 %v921, %v923
    %v930 = vperm.slane %v863, 0
    %v932 = vadd.f32 %v925, %v930
    %v933 = vadd.f32 %v926, %v930
    %v934 = vadd.f32 %v927, %v930
    %v935 = vadd.f32 %v928, %v930
    %vm936 = vcmp.gt.f32.partialorder %v932, 0.0
    %vm937 = vcmp.gt.f32.partialorder %v933, 0.0
    %vm938 = vcmp.gt.f32.partialorder %v934, 0.0
    %vm939 = vcmp.gt.f32.partialorder %v935, 0.0
    %v940 = vmul.f32 %v932, 0.2
    %v941 = vmul.f32 %v933, 0.2
    %v942 = vmul.f32 %v934, 0.2
    %v943 = vmul.f32 %v935, 0.2
    %v944 = vsel %vm936, %v932, %v940
    %v945 = vsel %vm937, %v933, %v941
    %v946 = vsel %vm938, %v934, %v942
    %v947 = vsel %vm939, %v935, %v943
    %v948 = vld [vmem:[%s11] sm:$0x3]
    %vm949 = vcmask 261120
    %v951 = vsel %vm949, %v948, 0
    %953 = vmatpush.msra.mxu0 0.0
    %954 = vmatpush.msra.mxu0 0.0
    %955 = vmatpush.msra.mxu0 0.0
    %956 = vmatpush.msra.mxu0 0.0
    %957 = vmatpush.msra.mxu0 0.0
    %958 = vmatpush.msra.mxu0 0.0
    %959 = vmatpush.msra.mxu0 0.0
    %960 = vmatpush.msra.mxu0 0.0
    %961 = vmatpush.msra.mxu0 0.0
    %962 = vmatpush.msra.mxu0 0.0
    %963 = vmatpush.msra.mxu0 0.0
    %964 = vmatpush.msra.mxu0 0.0
    %965 = vmatpush.msra.mxu0 %v947
    %966 = vmatpush.msra.mxu0 %v946
    %967 = vmatpush.msra.mxu0 %v945
    %968 = vmatpush.msra.mxu0 %v944
    %969 = vmatmul.f32.gmra.mxu0 %v951
    %v970 = vpop.f32.mrf.mxu0
    %v971 = vadd.f32 0.0, %v970
    %972 = vdwg.mxu0
    %s973 = scalar_lea.vmem %s11, 2
    %v974 = vld [vmem:[%s973] sm:$0x3]
    %v976 = vsel %vm949, %v974, 0
    %978 = vmatpush.msra.mxu0 0.0
    %979 = vmatpush.msra.mxu0 0.0
    %980 = vmatpush.msra.mxu0 0.0
    %981 = vmatpush.msra.mxu0 0.0
    %982 = vmatpush.msra.mxu0 0.0
    %983 = vmatpush.msra.mxu0 0.0
    %984 = vmatpush.msra.mxu0 0.0
    %985 = vmatpush.msra.mxu0 0.0
    %986 = vmatpush.msra.mxu0 0.0
    %987 = vmatpush.msra.mxu0 0.0
    %988 = vmatpush.msra.mxu0 0.0
    %989 = vmatpush.msra.mxu0 0.0
    %990 = vmatpush.msra.mxu0 %v947
    %991 = vmatpush.msra.mxu0 %v946
    %992 = vmatpush.msra.mxu0 %v945
    %993 = vmatpush.msra.mxu0 %v944
    %994 = vmatmul.f32.gmra.mxu0 %v976
    %v995 = vpop.f32.mrf.mxu0
    %v996 = vadd.f32 0.0, %v995
    %997 = vdwg.mxu0
    %s998 = scalar_lea.vmem %s11, 4
    %v999 = vld [vmem:[%s998] sm:$0x3]
    %v1001 = vsel %vm949, %v999, 0
    %1003 = vmatpush.msra.mxu0 0.0
    %1004 = vmatpush.msra.mxu0 0.0
    %1005 = vmatpush.msra.mxu0 0.0
    %1006 = vmatpush.msra.mxu0 0.0
    %1007 = vmatpush.msra.mxu0 0.0
    %1008 = vmatpush.msra.mxu0 0.0
    %1009 = vmatpush.msra.mxu0 0.0
    %1010 = vmatpush.msra.mxu0 0.0
    %1011 = vmatpush.msra.mxu0 0.0
    %1012 = vmatpush.msra.mxu0 0.0
    %1013 = vmatpush.msra.mxu0 0.0
    %1014 = vmatpush.msra.mxu0 0.0
    %1015 = vmatpush.msra.mxu0 %v947
    %1016 = vmatpush.msra.mxu0 %v946
    %1017 = vmatpush.msra.mxu0 %v945
    %1018 = vmatpush.msra.mxu0 %v944
    %1019 = vmatmul.f32.gmra.mxu0 %v1001
    %v1020 = vpop.f32.mrf.mxu0
    %v1021 = vadd.f32 0.0, %v1020
    %1022 = vdwg.mxu0
    %s1023 = scalar_lea.vmem %s11, 6
    %v1024 = vld [vmem:[%s1023] sm:$0x3]
    %v1026 = vsel %vm949, %v1024, 0
    %1028 = vmatpush.msra.mxu0 0.0
    %1029 = vmatpush.msra.mxu0 0.0
    %1030 = vmatpush.msra.mxu0 0.0
    %1031 = vmatpush.msra.mxu0 0.0
    %1032 = vmatpush.msra.mxu0 0.0
    %1033 = vmatpush.msra.mxu0 0.0
    %1034 = vmatpush.msra.mxu0 0.0
    %1035 = vmatpush.msra.mxu0 0.0
    %1036 = vmatpush.msra.mxu0 0.0
    %1037 = vmatpush.msra.mxu0 0.0
    %1038 = vmatpush.msra.mxu0 0.0
    %1039 = vmatpush.msra.mxu0 0.0
    %1040 = vmatpush.msra.mxu0 %v947
    %1041 = vmatpush.msra.mxu0 %v946
    %1042 = vmatpush.msra.mxu0 %v945
    %1043 = vmatpush.msra.mxu0 %v944
    %1044 = vmatmul.f32.gmra.mxu0 %v1026
    %v1045 = vpop.f32.mrf.mxu0
    %v1046 = vadd.f32 0.0, %v1045
    %1047 = vdwg.mxu0
    %vm1048 = vcmask 517120
    %v1049 = vsel %vm1048, %v971, 0.0
    %v1050 = vrot.slane %v1049, 4
    %v1051 = vadd.f32 %v1049, %v1050
    %v1052 = vrot.slane %v1051, 2
    %v1053 = vadd.f32 %v1051, %v1052
    %v1054 = vrot.slane %v1053, 1
    %v1055 = vadd.f32 %v1053, %v1054
    %v1056 = vadd.f32 %v1055, 0.0
    %v1057 = vsel %vm1048, %v996, 0.0
    %v1058 = vrot.slane %v1057, 4
    %v1059 = vadd.f32 %v1057, %v1058
    %v1060 = vrot.slane %v1059, 2
    %v1061 = vadd.f32 %v1059, %v1060
    %v1062 = vrot.slane %v1061, 1
    %v1063 = vadd.f32 %v1061, %v1062
    %v1064 = vadd.f32 %v1056, %v1063
    %v1065 = vsel %vm1048, %v1021, 0.0
    %v1066 = vrot.slane %v1065, 4
    %v1067 = vadd.f32 %v1065, %v1066
    %v1068 = vrot.slane %v1067, 2
    %v1069 = vadd.f32 %v1067, %v1068
    %v1070 = vrot.slane %v1069, 1
    %v1071 = vadd.f32 %v1069, %v1070
    %v1072 = vadd.f32 %v1064, %v1071
    %v1073 = vsel %vm1048, %v1046, 0.0
    %v1074 = vrot.slane %v1073, 4
    %v1075 = vadd.f32 %v1073, %v1074
    %v1076 = vrot.slane %v1075, 2
    %v1077 = vadd.f32 %v1075, %v1076
    %v1078 = vrot.slane %v1077, 1
    %v1079 = vadd.f32 %v1077, %v1078
    %v1080 = vadd.f32 %v1072, %v1079
    %v1081 = vrcp.pop 8.0
    %v1082 = vmul.f32 8.0, %v1081
    %v1083 = vsub.f32 1.0, %v1082
    %v1084 = vmul.f32 %v1081, %v1083
    %v1085 = vadd.f32 %v1081, %v1084
    %vm1086 = vweird.f32 %v1081
    %v1087 = vsel %vm1086, %v1081, %v1085
    %v1088 = vmul.f32 %v1080, %v1087
    %v1089 = vsub.f32 %v971, %v1088
    %v1090 = vmul.f32 %v1089, %v1089
    %v1091 = vsel %vm1048, %v1090, 0.0
    %v1092 = vrot.slane %v1091, 4
    %v1093 = vadd.f32 %v1091, %v1092
    %v1094 = vrot.slane %v1093, 2
    %v1095 = vadd.f32 %v1093, %v1094
    %v1096 = vrot.slane %v1095, 1
    %v1097 = vadd.f32 %v1095, %v1096
    %v1098 = vadd.f32 %v1097, 0.0
    %v1099 = vsub.f32 %v996, %v1088
    %v1100 = vmul.f32 %v1099, %v1099
    %v1101 = vsel %vm1048, %v1100, 0.0
    %v1102 = vrot.slane %v1101, 4
    %v1103 = vadd.f32 %v1101, %v1102
    %v1104 = vrot.slane %v1103, 2
    %v1105 = vadd.f32 %v1103, %v1104
    %v1106 = vrot.slane %v1105, 1
    %v1107 = vadd.f32 %v1105, %v1106
    %v1108 = vadd.f32 %v1098, %v1107
    %v1109 = vsub.f32 %v1021, %v1088
    %v1110 = vmul.f32 %v1109, %v1109
    %v1111 = vsel %vm1048, %v1110, 0.0
    %v1112 = vrot.slane %v1111, 4
    %v1113 = vadd.f32 %v1111, %v1112
    %v1114 = vrot.slane %v1113, 2
    %v1115 = vadd.f32 %v1113, %v1114
    %v1116 = vrot.slane %v1115, 1
    %v1117 = vadd.f32 %v1115, %v1116
    %v1118 = vadd.f32 %v1108, %v1117
    %v1119 = vsub.f32 %v1046, %v1088
    %v1120 = vmul.f32 %v1119, %v1119
    %v1121 = vsel %vm1048, %v1120, 0.0
    %v1122 = vrot.slane %v1121, 4
    %v1123 = vadd.f32 %v1121, %v1122
    %v1124 = vrot.slane %v1123, 2
    %v1125 = vadd.f32 %v1123, %v1124
    %v1126 = vrot.slane %v1125, 1
    %v1127 = vadd.f32 %v1125, %v1126
    %v1128 = vadd.f32 %v1118, %v1127
    %v1129 = vmul.f32 %v1128, %v1087
    %v1130 = vadd.f32 %v1129, 1e-05
    %v1131 = vrsqrt.pop %v1130
    %v1132 = vmul.f32 %v1131, %v1130
    %v1133 = vmul.f32 %v1132, %v1131
    %v1134 = vmul.f32 0.5, %v1133
    %v1135 = vsub.f32 1.5, %v1134
    %v1136 = vmul.f32 %v1131, %v1135
    %vm1137 = vweird.f32 %v1130
    %vm1138 = vweird.f32 %v1131
    %vm1139 = vmor %vm1137, %vm1138
    %v1140 = vsel %vm1139, %v1131, %v1136
    %v1141 = vmul.f32 %v1089, %v1140
    %v1142 = vld [vmem:[%s21] sm:$0x1]
    %v1144 = vperm.slane %v1142, 0
    %v1146 = vmul.f32 %v1141, %v1144
    %v1147 = vld [vmem:[%s23] sm:$0x1]
    %v1149 = vperm.slane %v1147, 0
    %v1151 = vadd.f32 %v1146, %v1149
    %v1152 = vmul.f32 %v1099, %v1140
    %v1153 = vmul.f32 %v1152, %v1144
    %v1154 = vadd.f32 %v1153, %v1149
    %v1155 = vmul.f32 %v1109, %v1140
    %v1156 = vmul.f32 %v1155, %v1144
    %v1157 = vadd.f32 %v1156, %v1149
    %v1158 = vmul.f32 %v1119, %v1140
    %v1159 = vmul.f32 %v1158, %v1144
    %v1160 = vadd.f32 %v1159, %v1149
    %vm1161 = vcmp.gt.f32.partialorder %v1151, 0.0
    %v1162 = vmul.f32 %v1151, 0.2
    %v1163 = vsel %vm1161, %v1151, %v1162
    %vm1164 = vcmp.gt.f32.partialorder %v1154, 0.0
    %v1165 = vmul.f32 %v1154, 0.2
    %v1166 = vsel %vm1164, %v1154, %v1165
    %vm1167 = vcmp.gt.f32.partialorder %v1157, 0.0
    %v1168 = vmul.f32 %v1157, 0.2
    %v1169 = vsel %vm1167, %v1157, %v1168
    %vm1170 = vcmp.gt.f32.partialorder %v1160, 0.0
    %v1171 = vmul.f32 %v1160, 0.2
    %v1172 = vsel %vm1170, %v1160, %v1171
    %v1173 = vld [vmem:[%s25] sm:$0xff]
    %v1174 = vld [vmem:[%s25 + $0x8] sm:$0xff]
    %v1175 = vld [vmem:[%s25 + $0x10] sm:$0xff]
    %v1176 = vld [vmem:[%s25 + $0x18] sm:$0xff]
    %v1177 = vld [vmem:[%s25 + $0x20] sm:$0xff]
    %v1178 = vld [vmem:[%s25 + $0x28] sm:$0xff]
    %v1179 = vld [vmem:[%s25 + $0x30] sm:$0xff]
    %v1180 = vld [vmem:[%s25 + $0x38] sm:$0xff]
    %v1181 = vld [vmem:[%s25 + $0x40] sm:$0xff]
    %v1182 = vld [vmem:[%s25 + $0x48] sm:$0xff]
    %v1183 = vld [vmem:[%s25 + $0x50] sm:$0xff]
    %v1184 = vld [vmem:[%s25 + $0x58] sm:$0xff]
    %v1185 = vld [vmem:[%s25 + $0x60] sm:$0xff]
    %v1186 = vld [vmem:[%s25 + $0x68] sm:$0xff]
    %v1187 = vld [vmem:[%s25 + $0x70] sm:$0xff]
    %v1188 = vld [vmem:[%s25 + $0x78] sm:$0xff]
    %v1189 = vld [vmem:[%s25 + $0x80] sm:$0xff]
    %v1190 = vld [vmem:[%s25 + $0x88] sm:$0xff]
    %v1191 = vld [vmem:[%s25 + $0x90] sm:$0xff]
    %v1192 = vld [vmem:[%s25 + $0x98] sm:$0xff]
    %v1193 = vld [vmem:[%s25 + $0xa0] sm:$0xff]
    %v1194 = vld [vmem:[%s25 + $0xa8] sm:$0xff]
    %v1195 = vld [vmem:[%s25 + $0xb0] sm:$0xff]
    %v1196 = vld [vmem:[%s25 + $0xb8] sm:$0xff]
    %v1197 = vld [vmem:[%s25 + $0xc0] sm:$0xff]
    %v1198 = vld [vmem:[%s25 + $0xc8] sm:$0xff]
    %v1199 = vld [vmem:[%s25 + $0xd0] sm:$0xff]
    %v1200 = vld [vmem:[%s25 + $0xd8] sm:$0xff]
    %v1201 = vld [vmem:[%s25 + $0xe0] sm:$0xff]
    %v1202 = vld [vmem:[%s25 + $0xe8] sm:$0xff]
    %v1203 = vld [vmem:[%s25 + $0xf0] sm:$0xff]
    %v1204 = vld [vmem:[%s25 + $0xf8] sm:$0xff]
    %v1205 = vld [vmem:[%s27] sm:$0x1]
    %v1207 = vsel %vm134, %v1163, 0
    %1209 = vmatpush.msra.mxu0 0.0
    %1210 = vmatpush.msra.mxu0 0.0
    %1211 = vmatpush.msra.mxu0 0.0
    %1212 = vmatpush.msra.mxu0 0.0
    %1213 = vmatpush.msra.mxu0 0.0
    %1214 = vmatpush.msra.mxu0 0.0
    %1215 = vmatpush.msra.mxu0 0.0
    %1216 = vmatpush.msra.mxu0 0.0
    %1217 = vmatpush.msra.mxu0 %v1180
    %1218 = vmatpush.msra.mxu0 %v1179
    %1219 = vmatpush.msra.mxu0 %v1178
    %1220 = vmatpush.msra.mxu0 %v1177
    %1221 = vmatpush.msra.mxu0 %v1176
    %1222 = vmatpush.msra.mxu0 %v1175
    %1223 = vmatpush.msra.mxu0 %v1174
    %1224 = vmatpush.msra.mxu0 %v1173
    %1225 = vmatmul.f32.gmra.mxu0 %v1207
    %v1226 = vpop.f32.mrf.mxu0
    %v1227 = vadd.f32 0.0, %v1226
    %1228 = vdwg.mxu0
    %v1230 = vperm.slane %v1205, 0
    %v1232 = vadd.f32 %v1230, %v1227
    %v1234 = vsel %vm134, %v1166, 0
    %1236 = vmatpush.msra.mxu0 0.0
    %1237 = vmatpush.msra.mxu0 0.0
    %1238 = vmatpush.msra.mxu0 0.0
    %1239 = vmatpush.msra.mxu0 0.0
    %1240 = vmatpush.msra.mxu0 0.0
    %1241 = vmatpush.msra.mxu0 0.0
    %1242 = vmatpush.msra.mxu0 0.0
    %1243 = vmatpush.msra.mxu0 0.0
    %1244 = vmatpush.msra.mxu0 %v1188
    %1245 = vmatpush.msra.mxu0 %v1187
    %1246 = vmatpush.msra.mxu0 %v1186
    %1247 = vmatpush.msra.mxu0 %v1185
    %1248 = vmatpush.msra.mxu0 %v1184
    %1249 = vmatpush.msra.mxu0 %v1183
    %1250 = vmatpush.msra.mxu0 %v1182
    %1251 = vmatpush.msra.mxu0 %v1181
    %1252 = vmatmul.f32.gmra.mxu0 %v1234
    %v1253 = vpop.f32.mrf.mxu0
    %v1254 = vadd.f32 0.0, %v1253
    %1255 = vdwg.mxu0
    %v1256 = vadd.f32 %v1232, %v1254
    %v1258 = vsel %vm134, %v1169, 0
    %1260 = vmatpush.msra.mxu0 0.0
    %1261 = vmatpush.msra.mxu0 0.0
    %1262 = vmatpush.msra.mxu0 0.0
    %1263 = vmatpush.msra.mxu0 0.0
    %1264 = vmatpush.msra.mxu0 0.0
    %1265 = vmatpush.msra.mxu0 0.0
    %1266 = vmatpush.msra.mxu0 0.0
    %1267 = vmatpush.msra.mxu0 0.0
    %1268 = vmatpush.msra.mxu0 %v1196
    %1269 = vmatpush.msra.mxu0 %v1195
    %1270 = vmatpush.msra.mxu0 %v1194
    %1271 = vmatpush.msra.mxu0 %v1193
    %1272 = vmatpush.msra.mxu0 %v1192
    %1273 = vmatpush.msra.mxu0 %v1191
    %1274 = vmatpush.msra.mxu0 %v1190
    %1275 = vmatpush.msra.mxu0 %v1189
    %1276 = vmatmul.f32.gmra.mxu0 %v1258
    %v1277 = vpop.f32.mrf.mxu0
    %v1278 = vadd.f32 0.0, %v1277
    %1279 = vdwg.mxu0
    %v1280 = vadd.f32 %v1256, %v1278
    %v1282 = vsel %vm134, %v1172, 0
    %1284 = vmatpush.msra.mxu0 0.0
    %1285 = vmatpush.msra.mxu0 0.0
    %1286 = vmatpush.msra.mxu0 0.0
    %1287 = vmatpush.msra.mxu0 0.0
    %1288 = vmatpush.msra.mxu0 0.0
    %1289 = vmatpush.msra.mxu0 0.0
    %1290 = vmatpush.msra.mxu0 0.0
    %1291 = vmatpush.msra.mxu0 0.0
    %1292 = vmatpush.msra.mxu0 %v1204
    %1293 = vmatpush.msra.mxu0 %v1203
    %1294 = vmatpush.msra.mxu0 %v1202
    %1295 = vmatpush.msra.mxu0 %v1201
    %1296 = vmatpush.msra.mxu0 %v1200
    %1297 = vmatpush.msra.mxu0 %v1199
    %1298 = vmatpush.msra.mxu0 %v1198
    %1299 = vmatpush.msra.mxu0 %v1197
    %1300 = vmatmul.f32.gmra.mxu0 %v1282
    %v1301 = vpop.f32.mrf.mxu0
    %v1302 = vadd.f32 0.0, %v1301
    %1303 = vdwg.mxu0
    %v1304 = vadd.f32 %v1280, %v1302
    %v1305 = vld [vmem:[%s29] sm:$0x1]
    %v1306 = vld [vmem:[%s31] sm:$0x1]
    %v1307 = vsel %vm204, %v1304, 0.0
    %v1308 = vrot.slane %v1307, 4
    %v1309 = vadd.f32 %v1307, %v1308
    %v1310 = vrot.slane %v1309, 2
    %v1311 = vadd.f32 %v1309, %v1310
    %v1312 = vrot.slane %v1311, 1
    %v1313 = vadd.f32 %v1311, %v1312
    %v1314 = vrcp.pop 2.0
    %v1315 = vmul.f32 2.0, %v1314
    %v1316 = vsub.f32 1.0, %v1315
    %v1317 = vmul.f32 %v1314, %v1316
    %v1318 = vadd.f32 %v1314, %v1317
    %vm1319 = vweird.f32 %v1314
    %v1320 = vsel %vm1319, %v1314, %v1318
    %v1321 = vmul.f32 %v1313, %v1320
    %v1322 = vsub.f32 %v1304, %v1321
    %v1323 = vmul.f32 %v1322, %v1322
    %v1324 = vsel %vm204, %v1323, 0.0
    %v1325 = vrot.slane %v1324, 4
    %v1326 = vadd.f32 %v1324, %v1325
    %v1327 = vrot.slane %v1326, 2
    %v1328 = vadd.f32 %v1326, %v1327
    %v1329 = vrot.slane %v1328, 1
    %v1330 = vadd.f32 %v1328, %v1329
    %v1331 = vmul.f32 %v1330, %v1320
    %v1332 = vadd.f32 %v1331, 1e-05
    %v1333 = vrsqrt.pop %v1332
    %v1334 = vmul.f32 %v1333, %v1332
    %v1335 = vmul.f32 %v1334, %v1333
    %v1336 = vmul.f32 0.5, %v1335
    %v1337 = vsub.f32 1.5, %v1336
    %v1338 = vmul.f32 %v1333, %v1337
    %vm1339 = vweird.f32 %v1332
    %vm1340 = vweird.f32 %v1333
    %vm1341 = vmor %vm1339, %vm1340
    %v1342 = vsel %vm1341, %v1333, %v1338
    %v1343 = vmul.f32 %v1322, %v1342
    %v1345 = vperm.slane %v1305, 0
    %v1347 = vmul.f32 %v1343, %v1345
    %v1349 = vperm.slane %v1306, 0
    %v1351 = vadd.f32 %v1347, %v1349
    %v1352 = vtanh.pop %v1351
    %v1353 = vld [vmem:[%s37] sm:$0xff]
    %v1354 = vld [vmem:[%s37 + $0x8] sm:$0xff]
    %v1355 = vld [vmem:[%s37 + $0x10] sm:$0xff]
    %v1356 = vld [vmem:[%s37 + $0x18] sm:$0xff]
    %v1357 = vld [vmem:[%s39] sm:$0xff]
    %v1358 = vld [vmem:[%s39 + $0x8] sm:$0xff]
    %v1359 = vld [vmem:[%s39 + $0x10] sm:$0xff]
    %v1360 = vld [vmem:[%s39 + $0x18] sm:$0xff]
    %v1362 = vsel %vm949, %v1352, 0
    %1364 = vmatpush.msra.mxu0 0.0
    %1365 = vmatpush.msra.mxu0 0.0
    %1366 = vmatpush.msra.mxu0 0.0
    %1367 = vmatpush.msra.mxu0 0.0
    %1368 = vmatpush.msra.mxu0 0.0
    %1369 = vmatpush.msra.mxu0 0.0
    %1370 = vmatpush.msra.mxu0 0.0
    %1371 = vmatpush.msra.mxu0 0.0
    %1372 = vmatpush.msra.mxu0 0.0
    %1373 = vmatpush.msra.mxu0 0.0
    %1374 = vmatpush.msra.mxu0 0.0
    %1375 = vmatpush.msra.mxu0 0.0
    %1376 = vmatpush.msra.mxu0 %v1360
    %1377 = vmatpush.msra.mxu0 %v1359
    %1378 = vmatpush.msra.mxu0 %v1358
    %1379 = vmatpush.msra.mxu0 %v1357
    %1380 = vmatmul.f32.gmra.mxu0 %v1362
    %v1381 = vpop.f32.mrf.mxu0
    %v1382 = vadd.f32 0.0, %v1381
    %1383 = vdwg.mxu0
    %v1384 = vsel %vm949, %v202, 0
    %1386 = vmatpush.msra.mxu0 0.0
    %1387 = vmatpush.msra.mxu0 0.0
    %1388 = vmatpush.msra.mxu0 0.0
    %1389 = vmatpush.msra.mxu0 0.0
    %1390 = vmatpush.msra.mxu0 0.0
    %1391 = vmatpush.msra.mxu0 0.0
    %1392 = vmatpush.msra.mxu0 0.0
    %1393 = vmatpush.msra.mxu0 0.0
    %1394 = vmatpush.msra.mxu0 0.0
    %1395 = vmatpush.msra.mxu0 0.0
    %1396 = vmatpush.msra.mxu0 0.0
    %1397 = vmatpush.msra.mxu0 0.0
    %1398 = vmatpush.msra.mxu0 %v1356
    %1399 = vmatpush.msra.mxu0 %v1355
    %1400 = vmatpush.msra.mxu0 %v1354
    %1401 = vmatpush.msra.mxu0 %v1353
    %1402 = vmatmul.f32.gmra.mxu0 %v1384
    %v1403 = vpop.f32.mrf.mxu0
    %v1404 = vadd.f32 %v1382, %v1403
    %1405 = vdwg.mxu0
    %v1406 = vld [vmem:[%s41] sm:$0x1]
    %v1408 = vperm.slane %v1406, 0
    %v1410 = vadd.f32 %v1404, %v1408
    %v1411 = vld [vmem:[%s43] sm:$0x1]
    %v1412 = vld [vmem:[%s45] sm:$0x1]
    %v1413 = vsel %vm204, %v1410, 0.0
    %v1414 = vrot.slane %v1413, 4
    %v1415 = vadd.f32 %v1413, %v1414
    %v1416 = vrot.slane %v1415, 2
    %v1417 = vadd.f32 %v1415, %v1416
    %v1418 = vrot.slane %v1417, 1
    %v1419 = vadd.f32 %v1417, %v1418
    %v1420 = vmul.f32 %v1419, %v1320
    %v1421 = vsub.f32 %v1410, %v1420
    %v1422 = vmul.f32 %v1421, %v1421
    %v1423 = vsel %vm204, %v1422, 0.0
    %v1424 = vrot.slane %v1423, 4
    %v1425 = vadd.f32 %v1423, %v1424
    %v1426 = vrot.slane %v1425, 2
    %v1427 = vadd.f32 %v1425, %v1426
    %v1428 = vrot.slane %v1427, 1
    %v1429 = vadd.f32 %v1427, %v1428
    %v1430 = vmul.f32 %v1429, %v1320
    %v1431 = vadd.f32 %v1430, 1e-05
    %v1432 = vrsqrt.pop %v1431
    %v1433 = vmul.f32 %v1432, %v1431
    %v1434 = vmul.f32 %v1433, %v1432
    %v1435 = vmul.f32 0.5, %v1434
    %v1436 = vsub.f32 1.5, %v1435
    %v1437 = vmul.f32 %v1432, %v1436
    %vm1438 = vweird.f32 %v1431
    %vm1439 = vweird.f32 %v1432
    %vm1440 = vmor %vm1438, %vm1439
    %v1441 = vsel %vm1440, %v1432, %v1437
    %v1442 = vmul.f32 %v1421, %v1441
    %v1444 = vperm.slane %v1411, 0
    %v1446 = vmul.f32 %v1442, %v1444
    %v1448 = vperm.slane %v1412, 0
    %v1450 = vadd.f32 %v1446, %v1448
    %v1451 = vtanh.pop %v1450
    %1452 = vst.msk [vmem:[#allocation2] sm:$0x3] %vm204, %v1451
    %v1453 = vld [vmem:[%s47] sm:$0xff]
    %v1454 = vld [vmem:[%s47 + $0x8] sm:$0xff]
    %v1455 = vld [vmem:[%s47 + $0x10] sm:$0xff]
    %v1456 = vld [vmem:[%s47 + $0x18] sm:$0xff]
    %v1457 = vld [vmem:[%s49] sm:$0x1]
    %v1459 = vperm.slane %v1457, 0
    %v1462 = vsel %vm949, %v1451, 0
    %1464 = vmatpush.msra.mxu0 0.0
    %1465 = vmatpush.msra.mxu0 0.0
    %1466 = vmatpush.msra.mxu0 0.0
    %1467 = vmatpush.msra.mxu0 0.0
    %1468 = vmatpush.msra.mxu0 0.0
    %1469 = vmatpush.msra.mxu0 0.0
    %1470 = vmatpush.msra.mxu0 0.0
    %1471 = vmatpush.msra.mxu0 0.0
    %1472 = vmatpush.msra.mxu0 0.0
    %1473 = vmatpush.msra.mxu0 0.0
    %1474 = vmatpush.msra.mxu0 0.0
    %1475 = vmatpush.msra.mxu0 0.0
    %1476 = vmatpush.msra.mxu0 %v1456
    %1477 = vmatpush.msra.mxu0 %v1455
    %1478 = vmatpush.msra.mxu0 %v1454
    %1479 = vmatpush.msra.mxu0 %v1453
    %1480 = vmatmul.f32.gmra.mxu0 %v1462
    %v1481 = vpop.f32.mrf.mxu0
    %v1482 = vadd.f32 %v1459, %v1481
    %1483 = vdwg.mxu0
    %vm1484 = vcmask 41984
    %1485 = vst.msk [vmem:[%s59] sm:$0x3] %vm1484, %v1482
    %v1486 = vpack.c.bf16 %v1451, %v1451
    %v1487 = vld [vmem:[%s51] sm:$0xff]
    %v1488 = vld [vmem:[%s51 + $0x8] sm:$0xff]
    %v1489 = vld [vmem:[%s51 + $0x10] sm:$0xff]
    %v1490 = vld [vmem:[%s51 + $0x18] sm:$0xff]
    %v1491 = vld [vmem:[%s51 + $0x20] sm:$0xff]
    %v1492 = vld [vmem:[%s51 + $0x28] sm:$0xff]
    %v1493 = vld [vmem:[%s51 + $0x30] sm:$0xff]
    %v1494 = vld [vmem:[%s51 + $0x38] sm:$0xff]
    %v1495 = vld [vmem:[%s51 + $0x40] sm:$0xff]
    %v1496 = vld [vmem:[%s51 + $0x48] sm:$0xff]
    %v1497 = vld [vmem:[%s51 + $0x50] sm:$0xff]
    %v1498 = vld [vmem:[%s51 + $0x58] sm:$0xff]
    %v1499 = vld [vmem:[%s51 + $0x60] sm:$0xff]
    %v1500 = vld [vmem:[%s51 + $0x68] sm:$0xff]
    %v1501 = vld [vmem:[%s51 + $0x70] sm:$0xff]
    %v1502 = vld [vmem:[%s51 + $0x78] sm:$0xff]
    %v1503 = vld [vmem:[%s51 + $0x80] sm:$0xff]
    %v1504 = vld [vmem:[%s51 + $0x88] sm:$0xff]
    %v1505 = vld [vmem:[%s51 + $0x90] sm:$0xff]
    %v1506 = vld [vmem:[%s51 + $0x98] sm:$0xff]
    %v1507 = vld [vmem:[%s51 + $0xa0] sm:$0xff]
    %v1508 = vld [vmem:[%s51 + $0xa8] sm:$0xff]
    %v1509 = vld [vmem:[%s51 + $0xb0] sm:$0xff]
    %v1510 = vld [vmem:[%s51 + $0xb8] sm:$0xff]
    %v1511 = vld [vmem:[%s51 + $0xc0] sm:$0xff]
    %v1512 = vld [vmem:[%s51 + $0xc8] sm:$0xff]
    %v1513 = vld [vmem:[%s51 + $0xd0] sm:$0xff]
    %v1514 = vld [vmem:[%s51 + $0xd8] sm:$0xff]
    %v1515 = vld [vmem:[%s51 + $0xe0] sm:$0xff]
    %v1516 = vld [vmem:[%s51 + $0xe8] sm:$0xff]
    %v1517 = vld [vmem:[%s51 + $0xf0] sm:$0xff]
    %v1518 = vld [vmem:[%s51 + $0xf8] sm:$0xff]
    %v1551 = vunpack.c.l.b16 %v1487
    %v1552 = vunpack.c.h.b16 %v1487
    %v1553 = vunpack.c.l.b16 %v1488
    %v1554 = vunpack.c.h.b16 %v1488
    %v1555 = vunpack.c.l.b16 %v1489
    %v1556 = vunpack.c.h.b16 %v1489
    %v1557 = vunpack.c.l.b16 %v1490
    %v1558 = vunpack.c.h.b16 %v1490
    %v1559 = vunpack.c.l.b16 %v1491
    %v1560 = vunpack.c.h.b16 %v1491
    %v1561 = vunpack.c.l.b16 %v1492
    %v1562 = vunpack.c.h.b16 %v1492
    %v1563 = vunpack.c.l.b16 %v1493
    %v1564 = vunpack.c.h.b16 %v1493
    %v1565 = vunpack.c.l.b16 %v1494
    %v1566 = vunpack.c.h.b16 %v1494
    %v1567 = vunpack.c.l.b16 %v1495
    %v1568 = vunpack.c.h.b16 %v1495
    %v1569 = vunpack.c.l.b16 %v1496
    %v1570 = vunpack.c.h.b16 %v1496
    %v1571 = vunpack.c.l.b16 %v1497
    %v1572 = vunpack.c.h.b16 %v1497
    %v1573 = vunpack.c.l.b16 %v1498
    %v1574 = vunpack.c.h.b16 %v1498
    %v1575 = vunpack.c.l.b16 %v1499
    %v1576 = vunpack.c.h.b16 %v1499
    %v1577 = vunpack.c.l.b16 %v1500
    %v1578 = vunpack.c.h.b16 %v1500
    %v1579 = vunpack.c.l.b16 %v1501
    %v1580 = vunpack.c.h.b16 %v1501
    %v1581 = vunpack.c.l.b16 %v1502
    %v1582 = vunpack.c.h.b16 %v1502
    %v1583 = vunpack.c.l.b16 %v1503
    %v1584 = vunpack.c.h.b16 %v1503
    %v1585 = vunpack.c.l.b16 %v1504
    %v1586 = vunpack.c.h.b16 %v1504
    %v1587 = vunpack.c.l.b16 %v1505
    %v1588 = vunpack.c.h.b16 %v1505
    %v1589 = vunpack.c.l.b16 %v1506
    %v1590 = vunpack.c.h.b16 %v1506
    %v1591 = vunpack.c.l.b16 %v1507
    %v1592 = vunpack.c.h.b16 %v1507
    %v1593 = vunpack.c.l.b16 %v1508
    %v1594 = vunpack.c.h.b16 %v1508
    %v1595 = vunpack.c.l.b16 %v1509
    %v1596 = vunpack.c.h.b16 %v1509
    %v1597 = vunpack.c.l.b16 %v1510
    %v1598 = vunpack.c.h.b16 %v1510
    %v1599 = vunpack.c.l.b16 %v1511
    %v1600 = vunpack.c.h.b16 %v1511
    %v1601 = vunpack.c.l.b16 %v1512
    %v1602 = vunpack.c.h.b16 %v1512
    %v1603 = vunpack.c.l.b16 %v1513
    %v1604 = vunpack.c.h.b16 %v1513
    %v1605 = vunpack.c.l.b16 %v1514
    %v1606 = vunpack.c.h.b16 %v1514
    %v1607 = vunpack.c.l.b16 %v1515
    %v1608 = vunpack.c.h.b16 %v1515
    %v1609 = vunpack.c.l.b16 %v1516
    %v1610 = vunpack.c.h.b16 %v1516
    %v1611 = vunpack.c.l.b16 %v1517
    %v1612 = vunpack.c.h.b16 %v1517
    %v1613 = vunpack.c.l.b16 %v1518
    %v1614 = vunpack.c.h.b16 %v1518
    %v1615 = vpack.c.b16 %v1567, %v1551
    %v1616 = vpack.c.b16 %v1568, %v1552
    %v1617 = vpack.c.b16 %v1569, %v1553
    %v1618 = vpack.c.b16 %v1570, %v1554
    %v1619 = vpack.c.b16 %v1571, %v1555
    %v1620 = vpack.c.b16 %v1572, %v1556
    %v1621 = vpack.c.b16 %v1573, %v1557
    %v1622 = vpack.c.b16 %v1574, %v1558
    %v1623 = vpack.c.b16 %v1575, %v1559
    %v1624 = vpack.c.b16 %v1576, %v1560
    %v1625 = vpack.c.b16 %v1577, %v1561
    %v1626 = vpack.c.b16 %v1578, %v1562
    %v1627 = vpack.c.b16 %v1579, %v1563
    %v1628 = vpack.c.b16 %v1580, %v1564
    %v1629 = vpack.c.b16 %v1581, %v1565
    %v1630 = vpack.c.b16 %v1582, %v1566
    %v1631 = vpack.c.b16 %v1599, %v1583
    %v1632 = vpack.c.b16 %v1600, %v1584
    %v1633 = vpack.c.b16 %v1601, %v1585
    %v1634 = vpack.c.b16 %v1602, %v1586
    %v1635 = vpack.c.b16 %v1603, %v1587
    %v1636 = vpack.c.b16 %v1604, %v1588
    %v1637 = vpack.c.b16 %v1605, %v1589
    %v1638 = vpack.c.b16 %v1606, %v1590
    %v1639 = vpack.c.b16 %v1607, %v1591
    %v1640 = vpack.c.b16 %v1608, %v1592
    %v1641 = vpack.c.b16 %v1609, %v1593
    %v1642 = vpack.c.b16 %v1610, %v1594
    %v1643 = vpack.c.b16 %v1611, %v1595
    %v1644 = vpack.c.b16 %v1612, %v1596
    %v1645 = vpack.c.b16 %v1613, %v1597
    %v1646 = vpack.c.b16 %v1614, %v1598
    %v1680 = vsel %vm949, %v1486, 0
    %1682 = vmatpush.bf16.msra.mxu0 0
    %1683 = vmatpush.bf16.msra.mxu0 0
    %1684 = vmatpush.bf16.msra.mxu0 0
    %1685 = vmatpush.bf16.msra.mxu0 0
    %1686 = vmatpush.bf16.msra.mxu0 0
    %1687 = vmatpush.bf16.msra.mxu0 0
    %1688 = vmatpush.bf16.msra.mxu0 %v1631
    %1689 = vmatpush.bf16.msra.mxu0 %v1615
    %1690 = vmatmul.bf16.gmra.mxu0 %v1680
    %v1691 = vpop.f32.mrf.mxu0
    %v1692 = vadd.f32 0.0, %v1691
    %v1693 = vpop.f32.mrf.mxu0
    %1694 = vdwg.mxu0
    %1695 = vmatpush.bf16.msra.mxu0 0
    %1696 = vmatpush.bf16.msra.mxu0 0
    %1697 = vmatpush.bf16.msra.mxu0 0
    %1698 = vmatpush.bf16.msra.mxu0 0
    %1699 = vmatpush.bf16.msra.mxu0 0
    %1700 = vmatpush.bf16.msra.mxu0 0
    %1701 = vmatpush.bf16.msra.mxu0 %v1632
    %1702 = vmatpush.bf16.msra.mxu0 %v1616
    %1703 = vmatmul.bf16.gmra.mxu0 %v1680
    %v1704 = vpop.f32.mrf.mxu0
    %v1705 = vadd.f32 0.0, %v1704
    %v1706 = vpop.f32.mrf.mxu0
    %1707 = vdwg.mxu0
    %1708 = vmatpush.bf16.msra.mxu0 0
    %1709 = vmatpush.bf16.msra.mxu0 0
    %1710 = vmatpush.bf16.msra.mxu0 0
    %1711 = vmatpush.bf16.msra.mxu0 0
    %1712 = vmatpush.bf16.msra.mxu0 0
    %1713 = vmatpush.bf16.msra.mxu0 0
    %1714 = vmatpush.bf16.msra.mxu0 %v1633
    %1715 = vmatpush.bf16.msra.mxu0 %v1617
    %1716 = vmatmul.bf16.gmra.mxu0 %v1680
    %v1717 = vpop.f32.mrf.mxu0
    %v1718 = vadd.f32 0.0, %v1717
    %v1719 = vpop.f32.mrf.mxu0
    %1720 = vdwg.mxu0
    %1721 = vmatpush.bf16.msra.mxu0 0
    %1722 = vmatpush.bf16.msra.mxu0 0
    %1723 = vmatpush.bf16.msra.mxu0 0
    %1724 = vmatpush.bf16.msra.mxu0 0
    %1725 = vmatpush.bf16.msra.mxu0 0
    %1726 = vmatpush.bf16.msra.mxu0 0
    %1727 = vmatpush.bf16.msra.mxu0 %v1634
    %1728 = vmatpush.bf16.msra.mxu0 %v1618
    %1729 = vmatmul.bf16.gmra.mxu0 %v1680
    %v1730 = vpop.f32.mrf.mxu0
    %v1731 = vadd.f32 0.0, %v1730
    %v1732 = vpop.f32.mrf.mxu0
    %1733 = vdwg.mxu0
    %1734 = vmatpush.bf16.msra.mxu0 0
    %1735 = vmatpush.bf16.msra.mxu0 0
    %1736 = vmatpush.bf16.msra.mxu0 0
    %1737 = vmatpush.bf16.msra.mxu0 0
    %1738 = vmatpush.bf16.msra.mxu0 0
    %1739 = vmatpush.bf16.msra.mxu0 0
    %1740 = vmatpush.bf16.msra.mxu0 %v1635
    %1741 = vmatpush.bf16.msra.mxu0 %v1619
    %1742 = vmatmul.bf16.gmra.mxu0 %v1680
    %v1743 = vpop.f32.mrf.mxu0
    %v1744 = vadd.f32 0.0, %v1743
    %v1745 = vpop.f32.mrf.mxu0
    %1746 = vdwg.mxu0
    %1747 = vmatpush.bf16.msra.mxu0 0
    %1748 = vmatpush.bf16.msra.mxu0 0
    %1749 = vmatpush.bf16.msra.mxu0 0
    %1750 = vmatpush.bf16.msra.mxu0 0
    %1751 = vmatpush.bf16.msra.mxu0 0
    %1752 = vmatpush.bf16.msra.mxu0 0
    %1753 = vmatpush.bf16.msra.mxu0 %v1636
    %1754 = vmatpush.bf16.msra.mxu0 %v1620
    %1755 = vmatmul.bf16.gmra.mxu0 %v1680
    %v1756 = vpop.f32.mrf.mxu0
    %v1757 = vadd.f32 0.0, %v1756
    %v1758 = vpop.f32.mrf.mxu0
    %1759 = vdwg.mxu0
    %1760 = vmatpush.bf16.msra.mxu0 0
    %1761 = vmatpush.bf16.msra.mxu0 0
    %1762 = vmatpush.bf16.msra.mxu0 0
    %1763 = vmatpush.bf16.msra.mxu0 0
    %1764 = vmatpush.bf16.msra.mxu0 0
    %1765 = vmatpush.bf16.msra.mxu0 0
    %1766 = vmatpush.bf16.msra.mxu0 %v1637
    %1767 = vmatpush.bf16.msra.mxu0 %v1621
    %1768 = vmatmul.bf16.gmra.mxu0 %v1680
    %v1769 = vpop.f32.mrf.mxu0
    %v1770 = vadd.f32 0.0, %v1769
    %v1771 = vpop.f32.mrf.mxu0
    %1772 = vdwg.mxu0
    %1773 = vmatpush.bf16.msra.mxu0 0
    %1774 = vmatpush.bf16.msra.mxu0 0
    %1775 = vmatpush.bf16.msra.mxu0 0
    %1776 = vmatpush.bf16.msra.mxu0 0
    %1777 = vmatpush.bf16.msra.mxu0 0
    %1778 = vmatpush.bf16.msra.mxu0 0
    %1779 = vmatpush.bf16.msra.mxu0 %v1638
    %1780 = vmatpush.bf16.msra.mxu0 %v1622
    %1781 = vmatmul.bf16.gmra.mxu0 %v1680
    %v1782 = vpop.f32.mrf.mxu0
    %v1783 = vadd.f32 0.0, %v1782
    %v1784 = vpop.f32.mrf.mxu0
    %1785 = vdwg.mxu0
    %1786 = vmatpush.bf16.msra.mxu0 0
    %1787 = vmatpush.bf16.msra.mxu0 0
    %1788 = vmatpush.bf16.msra.mxu0 0
    %1789 = vmatpush.bf16.msra.mxu0 0
    %1790 = vmatpush.bf16.msra.mxu0 0
    %1791 = vmatpush.bf16.msra.mxu0 0
    %1792 = vmatpush.bf16.msra.mxu0 %v1639
    %1793 = vmatpush.bf16.msra.mxu0 %v1623
    %1794 = vmatmul.bf16.gmra.mxu0 %v1680
    %v1795 = vpop.f32.mrf.mxu0
    %v1796 = vadd.f32 0.0, %v1795
    %v1797 = vpop.f32.mrf.mxu0
    %1798 = vdwg.mxu0
    %1799 = vmatpush.bf16.msra.mxu0 0
    %1800 = vmatpush.bf16.msra.mxu0 0
    %1801 = vmatpush.bf16.msra.mxu0 0
    %1802 = vmatpush.bf16.msra.mxu0 0
    %1803 = vmatpush.bf16.msra.mxu0 0
    %1804 = vmatpush.bf16.msra.mxu0 0
    %1805 = vmatpush.bf16.msra.mxu0 %v1640
    %1806 = vmatpush.bf16.msra.mxu0 %v1624
    %1807 = vmatmul.bf16.gmra.mxu0 %v1680
    %v1808 = vpop.f32.mrf.mxu0
    %v1809 = vadd.f32 0.0, %v1808
    %v1810 = vpop.f32.mrf.mxu0
    %1811 = vdwg.mxu0
    %1812 = vmatpush.bf16.msra.mxu0 0
    %1813 = vmatpush.bf16.msra.mxu0 0
    %1814 = vmatpush.bf16.msra.mxu0 0
    %1815 = vmatpush.bf16.msra.mxu0 0
    %1816 = vmatpush.bf16.msra.mxu0 0
    %1817 = vmatpush.bf16.msra.mxu0 0
    %1818 = vmatpush.bf16.msra.mxu0 %v1641
    %1819 = vmatpush.bf16.msra.mxu0 %v1625
    %1820 = vmatmul.bf16.gmra.mxu0 %v1680
    %v1821 = vpop.f32.mrf.mxu0
    %v1822 = vadd.f32 0.0, %v1821
    %v1823 = vpop.f32.mrf.mxu0
    %1824 = vdwg.mxu0
    %1825 = vmatpush.bf16.msra.mxu0 0
    %1826 = vmatpush.bf16.msra.mxu0 0
    %1827 = vmatpush.bf16.msra.mxu0 0
    %1828 = vmatpush.bf16.msra.mxu0 0
    %1829 = vmatpush.bf16.msra.mxu0 0
    %1830 = vmatpush.bf16.msra.mxu0 0
    %1831 = vmatpush.bf16.msra.mxu0 %v1642
    %1832 = vmatpush.bf16.msra.mxu0 %v1626
    %1833 = vmatmul.bf16.gmra.mxu0 %v1680
    %v1834 = vpop.f32.mrf.mxu0
    %v1835 = vadd.f32 0.0, %v1834
    %v1836 = vpop.f32.mrf.mxu0
    %1837 = vdwg.mxu0
    %1838 = vmatpush.bf16.msra.mxu0 0
    %1839 = vmatpush.bf16.msra.mxu0 0
    %1840 = vmatpush.bf16.msra.mxu0 0
    %1841 = vmatpush.bf16.msra.mxu0 0
    %1842 = vmatpush.bf16.msra.mxu0 0
    %1843 = vmatpush.bf16.msra.mxu0 0
    %1844 = vmatpush.bf16.msra.mxu0 %v1643
    %1845 = vmatpush.bf16.msra.mxu0 %v1627
    %1846 = vmatmul.bf16.gmra.mxu0 %v1680
    %v1847 = vpop.f32.mrf.mxu0
    %v1848 = vadd.f32 0.0, %v1847
    %v1849 = vpop.f32.mrf.mxu0
    %1850 = vdwg.mxu0
    %1851 = vmatpush.bf16.msra.mxu0 0
    %1852 = vmatpush.bf16.msra.mxu0 0
    %1853 = vmatpush.bf16.msra.mxu0 0
    %1854 = vmatpush.bf16.msra.mxu0 0
    %1855 = vmatpush.bf16.msra.mxu0 0
    %1856 = vmatpush.bf16.msra.mxu0 0
    %1857 = vmatpush.bf16.msra.mxu0 %v1644
    %1858 = vmatpush.bf16.msra.mxu0 %v1628
    %1859 = vmatmul.bf16.gmra.mxu0 %v1680
    %v1860 = vpop.f32.mrf.mxu0
    %v1861 = vadd.f32 0.0, %v1860
    %v1862 = vpop.f32.mrf.mxu0
    %1863 = vdwg.mxu0
    %1864 = vmatpush.bf16.msra.mxu0 0
    %1865 = vmatpush.bf16.msra.mxu0 0
    %1866 = vmatpush.bf16.msra.mxu0 0
    %1867 = vmatpush.bf16.msra.mxu0 0
    %1868 = vmatpush.bf16.msra.mxu0 0
    %1869 = vmatpush.bf16.msra.mxu0 0
    %1870 = vmatpush.bf16.msra.mxu0 %v1645
    %1871 = vmatpush.bf16.msra.mxu0 %v1629
    %1872 = vmatmul.bf16.gmra.mxu0 %v1680
    %v1873 = vpop.f32.mrf.mxu0
    %v1874 = vadd.f32 0.0, %v1873
    %v1875 = vpop.f32.mrf.mxu0
    %1876 = vdwg.mxu0
    %1877 = vmatpush.bf16.msra.mxu0 0
    %1878 = vmatpush.bf16.msra.mxu0 0
    %1879 = vmatpush.bf16.msra.mxu0 0
    %1880 = vmatpush.bf16.msra.mxu0 0
    %1881 = vmatpush.bf16.msra.mxu0 0
    %1882 = vmatpush.bf16.msra.mxu0 0
    %1883 = vmatpush.bf16.msra.mxu0 %v1646
    %1884 = vmatpush.bf16.msra.mxu0 %v1630
    %1885 = vmatmul.bf16.gmra.mxu0 %v1680
    %v1886 = vpop.f32.mrf.mxu0
    %v1887 = vadd.f32 0.0, %v1886
    %v1888 = vpop.f32.mrf.mxu0
    %1889 = vdwg.mxu0
    %v1906 = vrot.slane %v1705, 6
    %v1907 = vrot.slane %v1718, 4
    %v1908 = vrot.slane %v1731, 2
    %v1909 = vrot.slane %v1757, 6
    %v1910 = vrot.slane %v1770, 4
    %v1911 = vrot.slane %v1783, 2
    %v1912 = vrot.slane %v1809, 6
    %v1913 = vrot.slane %v1822, 4
    %v1914 = vrot.slane %v1835, 2
    %v1915 = vrot.slane %v1861, 6
    %v1916 = vrot.slane %v1874, 4
    %v1917 = vrot.slane %v1887, 2
    %vm1918 = vcmask 1041408
    %v1919 = vsel %vm1918, %v1692, %v1906
    %vm1920 = vcmask 1045508
    %v1921 = vsel %vm1920, %v1907, %v1908
    %vm1922 = vcmask 1043456
    %v1923 = vsel %vm1922, %v1919, %v1921
    %v1924 = vsel %vm1918, %v1744, %v1909
    %v1925 = vsel %vm1920, %v1910, %v1911
    %v1926 = vsel %vm1922, %v1924, %v1925
    %v1927 = vsel %vm1918, %v1796, %v1912
    %v1928 = vsel %vm1920, %v1913, %v1914
    %v1929 = vsel %vm1922, %v1927, %v1928
    %v1930 = vsel %vm1918, %v1848, %v1915
    %v1931 = vsel %vm1920, %v1916, %v1917
    %v1932 = vsel %vm1922, %v1930, %v1931
    %1937 = vst [vmem:[%s61] sm:$0xff] %v1923
    %1938 = vst [vmem:[%s61 + $0x8] sm:$0xff] %v1926
    %1939 = vst [vmem:[%s61 + $0x10] sm:$0xff] %v1929
    %1940 = vst [vmem:[%s61 + $0x18] sm:$0xff] %v1932
    // Predicated region
    $region106: #{netG_forward.16} parent=1 // pred_check
      _
    $region107: #{netG_forward.16} parent=1 // pred_check_branch
      %1942 = sbr.rel (0) target = $region109
    $region108: #{netG_forward.16} parent=1 // pred_region
      _
    $region109: #{netG_forward.16} parent=1 // pred_fallthru
      _
    // Predicated region
    $region110: #{netG_forward.16} parent=1 // pred_check
      _
    $region111: #{netG_forward.16} parent=1 // pred_check_branch
      %1944 = sbr.rel (0) target = $region113
    $region112: #{netG_forward.16} parent=1 // pred_region
      _
    $region113: #{netG_forward.16} parent=1 // pred_fallthru
      _
    // Predicated region
    $region114: #{netG_forward.16} parent=1 // pred_check
      _
    $region115: #{netG_forward.16} parent=1 // pred_check_branch
      %1946 = sbr.rel (0) target = $region117
    $region116: #{netG_forward.16} parent=1 // pred_region
      %1948 = vsyncadd [#allocation3], 0
      %s1950 = sshll.u32 [#allocation2], 4
      %s1951 = int_to_ptr.vmem [resolvable:$true] %s1950
      %s1952 = sshll.u32 %s57, 4
      %s1953 = int_to_ptr.hbm [resolvable:$true] %s1952
      %1955 = dma.vmem_to_hbm [thread:$0]  %s1951, 32, %s1953, [#allocation3]
    $region117: #{netG_forward.16} parent=1 // pred_fallthru
      _
    // Predicated region
    $region118: #{netG_forward.16} parent=1 // pred_check
      _
    $region119: #{netG_forward.16} parent=1 // pred_check_branch
      %1957 = sbr.rel (0) target = $region121
    $region120: #{netG_forward.16} parent=1 // pred_region
      _
    $region121: #{netG_forward.16} parent=1 // pred_fallthru
      _
    // Predicated region
    $region122: #{netG_forward.16} parent=1 // pred_check
      _
    $region123: #{netG_forward.16} parent=1 // pred_check_branch
      %1959 = sbr.rel (0) target = $region125
    $region124: #{netG_forward.16} parent=1 // pred_region
      _
    $region125: #{netG_forward.16} parent=1 // pred_fallthru
      _
    // Predicated region
    $region126: #{netG_forward.16} parent=1 // pred_check
      _
    $region127: #{netG_forward.16} parent=1 // pred_check_branch
      %1961 = sbr.rel (0) target = $region129
    $region128: #{netG_forward.16} parent=1 // pred_region
      _
    $region129: #{netG_forward.16} parent=1 // pred_fallthru
      _
    // Predicated region
    $region130: #{netG_forward.16} parent=1 // pred_check
      _
    $region131: #{netG_forward.16} parent=1 // pred_check_branch
      %1963 = sbr.rel (0) target = $region133
    $region132: #{netG_forward.16} parent=1 // pred_region
      _
    $region133: #{netG_forward.16} parent=1 // pred_fallthru
      _
    // Predicated region
    $region134: #{netG_forward.16} parent=1 // pred_check
      _
    $region135: #{netG_forward.16} parent=1 // pred_check_branch
      %1965 = sbr.rel (0) target = $region137
    $region136: #{netG_forward.16} parent=1 // pred_region
      %1967 = dma.done [#allocation3], 32
    $region137: #{netG_forward.16} parent=1 // pred_fallthru
      _
    // Predicated region
    $region138: #{netG_forward.16} parent=1 // pred_check
      _
    $region139: #{netG_forward.16} parent=1 // pred_check_branch
      %1969 = sbr.rel (0) target = $region141
    $region140: #{netG_forward.16} parent=1 // pred_region
      _
    $region141: #{netG_forward.16} parent=1 // pred_fallthru
      _
    // Predicated region
    $region142: #{netG_forward.16} parent=1 // pred_check
      _
    $region143: #{netG_forward.16} parent=1 // pred_check_branch
      %1971 = sbr.rel (0) target = $region145
    $region144: #{netG_forward.16} parent=1 // pred_region
      _
    $region145: #{netG_forward.16} parent=1 // pred_fallthru
      _
    %1972 = vsyncpa [#allocation3], 1

// kernel: netG_forward.17
$region0: #{netG_forward.17}
  #allocation0 [shape = 'u32[]', space=smem, size = 0x4, offset = 0x4, fixed_abs, tag = 'smem constant byte address 0x4 - core index']
  #allocation1 [shape = 'u32[72,128]{1,0:T(1,128)}', space=vmem, size = 0x9000, scoped, tag = 'internal scratch']
  %s0 = inlined_call_operand.vmem [shape: f32[32,128], index: 0, kind: input, shape index: {}]
  %s1 = inlined_call_operand.vmem [shape: f32[1,128], index: 1, kind: input, shape index: {}]
  %s2 = inlined_call_operand.vmem [shape: f32[1,128], index: 2, kind: input, shape index: {}]
  %s3 = inlined_call_operand.vmem [shape: bf16[128,1024], index: 3, kind: input, shape index: {}]
  %s4 = inlined_call_operand.vmem [shape: f32[32,1024], index: 4, kind: output, shape index: {}]
  %s5 = sld [smem:[#allocation0]]
  $region26: #{netG_forward.17} parent=0
    _
  %s7 = ssub.s32 1, %s5
  %s8 = scalar_select 0, %s7, %s5
  // Predicated region
  $region2: #{netG_forward.17} parent=0 // pred_check
    _
  $region3: #{netG_forward.17} parent=0 // pred_check_branch
    %10 = sbr.rel (0) target = $region5
  $region4: #{netG_forward.17} parent=0 // pred_region
    _
  $region5: #{netG_forward.17} parent=0 // pred_fallthru
    _
  // Predicated region
  $region6: #{netG_forward.17} parent=0 // pred_check
    _
  $region7: #{netG_forward.17} parent=0 // pred_check_branch
    %12 = sbr.rel (0) target = $region9
  $region8: #{netG_forward.17} parent=0 // pred_region
    _
  $region9: #{netG_forward.17} parent=0 // pred_fallthru
    _
  // Predicated region
  $region10: #{netG_forward.17} parent=0 // pred_check
    _
  $region11: #{netG_forward.17} parent=0 // pred_check_branch
    %14 = sbr.rel (0) target = $region13
  $region12: #{netG_forward.17} parent=0 // pred_region
    _
  $region13: #{netG_forward.17} parent=0 // pred_fallthru
    _
  // Predicated region
  $region14: #{netG_forward.17} parent=0 // pred_check
    _
  $region15: #{netG_forward.17} parent=0 // pred_check_branch
    %16 = sbr.rel (0) target = $region17
  $region16: #{netG_forward.17} parent=0 // pred_region
    _
  $region17: #{netG_forward.17} parent=0 // pred_fallthru
    _
  %v17 = vld [vmem:[%s0] sm:$0xff]
  %v18 = vld [vmem:[%s0 + $0x8] sm:$0xff]
  %v19 = vld [vmem:[%s0 + $0x10] sm:$0xff]
  %v20 = vld [vmem:[%s0 + $0x18] sm:$0xff]
  %v21 = vld [vmem:[%s1] sm:$0x1]
  %v22 = vld [vmem:[%s2] sm:$0x1]
  %v23 = vadd.f32 %v17, %v18
  %v24 = vadd.f32 %v23, %v19
  %v25 = vadd.f32 %v24, %v20
  %v26 = vrot.slane %v25, 4
  %v27 = vadd.f32 %v25, %v26
  %v28 = vrot.slane %v27, 2
  %v29 = vadd.f32 %v27, %v28
  %v30 = vrot.slane %v29, 1
  %v31 = vadd.f32 %v29, %v30
  %v32 = vrcp.pop 32.0
  %v33 = vmul.f32 32.0, %v32
  %v34 = vsub.f32 1.0, %v33
  %v35 = vmul.f32 %v32, %v34
  %v36 = vadd.f32 %v32, %v35
  %vm37 = vweird.f32 %v32
  %v38 = vsel %vm37, %v32, %v36
  %v39 = vmul.f32 %v31, %v38
  %v40 = vsub.f32 %v17, %v39
  %v41 = vsub.f32 %v18, %v39
  %v42 = vsub.f32 %v19, %v39
  %v43 = vsub.f32 %v20, %v39
  %v44 = vmul.f32 %v40, %v40
  %v45 = vmul.f32 %v41, %v41
  %v46 = vmul.f32 %v42, %v42
  %v47 = vmul.f32 %v43, %v43
  %v48 = vadd.f32 %v44, %v45
  %v49 = vadd.f32 %v48, %v46
  %v50 = vadd.f32 %v49, %v47
  %v51 = vrot.slane %v50, 4
  %v52 = vadd.f32 %v50, %v51
  %v53 = vrot.slane %v52, 2
  %v54 = vadd.f32 %v52, %v53
  %v55 = vrot.slane %v54, 1
  %v56 = vadd.f32 %v54, %v55
  %v57 = vmul.f32 %v56, %v38
  %v58 = vadd.f32 %v57, 1e-05
  %v59 = vrsqrt.pop %v58
  %v60 = vmul.f32 %v59, %v58
  %v61 = vmul.f32 %v60, %v59
  %v62 = vmul.f32 0.5, %v61
  %v63 = vsub.f32 1.5, %v62
  %v64 = vmul.f32 %v59, %v63
  %vm65 = vweird.f32 %v58
  %vm66 = vweird.f32 %v59
  %vm67 = vmor %vm65, %vm66
  %v68 = vsel %vm67, %v59, %v64
  %v69 = vmul.f32 %v40, %v68
  %v70 = vmul.f32 %v41, %v68
  %v71 = vmul.f32 %v42, %v68
  %v72 = vmul.f32 %v43, %v68
  %v74 = vperm.slane %v21, 0
  %v76 = vmul.f32 %v69, %v74
  %v77 = vmul.f32 %v70, %v74
  %v78 = vmul.f32 %v71, %v74
  %v79 = vmul.f32 %v72, %v74
  %v81 = vperm.slane %v22, 0
  %v83 = vadd.f32 %v76, %v81
  %v84 = vadd.f32 %v77, %v81
  %v85 = vadd.f32 %v78, %v81
  %v86 = vadd.f32 %v79, %v81
  %v87 = vmax.f32 %v83, 0.0
  %v88 = vmax.f32 %v84, 0.0
  %v89 = vmax.f32 %v85, 0.0
  %v90 = vmax.f32 %v86, 0.0
  %v91 = vpack.c.bf16 %v88, %v87
  %v92 = vpack.c.bf16 %v90, %v89
  %v93 = vld [vmem:[%s3] sm:$0xff]
  %v94 = vld [vmem:[%s3 + $0x8] sm:$0xff]
  %v95 = vld [vmem:[%s3 + $0x10] sm:$0xff]
  %v96 = vld [vmem:[%s3 + $0x18] sm:$0xff]
  %v97 = vld [vmem:[%s3 + $0x20] sm:$0xff]
  %v98 = vld [vmem:[%s3 + $0x28] sm:$0xff]
  %v99 = vld [vmem:[%s3 + $0x30] sm:$0xff]
  %v100 = vld [vmem:[%s3 + $0x38] sm:$0xff]
  %v101 = vld [vmem:[%s3 + $0x40] sm:$0xff]
  %v102 = vld [vmem:[%s3 + $0x48] sm:$0xff]
  %v103 = vld [vmem:[%s3 + $0x50] sm:$0xff]
  %v104 = vld [vmem:[%s3 + $0x58] sm:$0xff]
  %v105 = vld [vmem:[%s3 + $0x60] sm:$0xff]
  %v106 = vld [vmem:[%s3 + $0x68] sm:$0xff]
  %v107 = vld [vmem:[%s3 + $0x70] sm:$0xff]
  %v108 = vld [vmem:[%s3 + $0x78] sm:$0xff]
  %v109 = vld [vmem:[%s3 + $0x80] sm:$0xff]
  %v110 = vld [vmem:[%s3 + $0x88] sm:$0xff]
  %v111 = vld [vmem:[%s3 + $0x90] sm:$0xff]
  %v112 = vld [vmem:[%s3 + $0x98] sm:$0xff]
  %v113 = vld [vmem:[%s3 + $0xa0] sm:$0xff]
  %v114 = vld [vmem:[%s3 + $0xa8] sm:$0xff]
  %v115 = vld [vmem:[%s3 + $0xb0] sm:$0xff]
  %v116 = vld [vmem:[%s3 + $0xb8] sm:$0xff]
  %v117 = vld [vmem:[%s3 + $0xc0] sm:$0xff]
  %v118 = vld [vmem:[%s3 + $0xc8] sm:$0xff]
  %v119 = vld [vmem:[%s3 + $0xd0] sm:$0xff]
  %v120 = vld [vmem:[%s3 + $0xd8] sm:$0xff]
  %v121 = vld [vmem:[%s3 + $0xe0] sm:$0xff]
  %v122 = vld [vmem:[%s3 + $0xe8] sm:$0xff]
  %v123 = vld [vmem:[%s3 + $0xf0] sm:$0xff]
  %v124 = vld [vmem:[%s3 + $0xf8] sm:$0xff]
  %v125 = vld [vmem:[%s3 + $0x100] sm:$0xff]
  %v126 = vld [vmem:[%s3 + $0x108] sm:$0xff]
  %v127 = vld [vmem:[%s3 + $0x110] sm:$0xff]
  %v128 = vld [vmem:[%s3 + $0x118] sm:$0xff]
  %v129 = vld [vmem:[%s3 + $0x120] sm:$0xff]
  %v130 = vld [vmem:[%s3 + $0x128] sm:$0xff]
  %v131 = vld [vmem:[%s3 + $0x130] sm:$0xff]
  %v132 = vld [vmem:[%s3 + $0x138] sm:$0xff]
  %v133 = vld [vmem:[%s3 + $0x140] sm:$0xff]
  %v134 = vld [vmem:[%s3 + $0x148] sm:$0xff]
  %v135 = vld [vmem:[%s3 + $0x150] sm:$0xff]
  %v136 = vld [vmem:[%s3 + $0x158] sm:$0xff]
  %v137 = vld [vmem:[%s3 + $0x160] sm:$0xff]
  %v138 = vld [vmem:[%s3 + $0x168] sm:$0xff]
  %v139 = vld [vmem:[%s3 + $0x170] sm:$0xff]
  %v140 = vld [vmem:[%s3 + $0x178] sm:$0xff]
  %v141 = vld [vmem:[%s3 + $0x180] sm:$0xff]
  %v142 = vld [vmem:[%s3 + $0x188] sm:$0xff]
  %v143 = vld [vmem:[%s3 + $0x190] sm:$0xff]
  %v144 = vld [vmem:[%s3 + $0x198] sm:$0xff]
  %v145 = vld [vmem:[%s3 + $0x1a0] sm:$0xff]
  %v146 = vld [vmem:[%s3 + $0x1a8] sm:$0xff]
  %v147 = vld [vmem:[%s3 + $0x1b0] sm:$0xff]
  %v148 = vld [vmem:[%s3 + $0x1b8] sm:$0xff]
  %v149 = vld [vmem:[%s3 + $0x1c0] sm:$0xff]
  %v150 = vld [vmem:[%s3 + $0x1c8] sm:$0xff]
  %v151 = vld [vmem:[%s3 + $0x1d0] sm:$0xff]
  %v152 = vld [vmem:[%s3 + $0x1d8] sm:$0xff]
  %v153 = vld [vmem:[%s3 + $0x1e0] sm:$0xff]
  %v154 = vld [vmem:[%s3 + $0x1e8] sm:$0xff]
  %v155 = vld [vmem:[%s3 + $0x1f0] sm:$0xff]
  %v156 = vld [vmem:[%s3 + $0x1f8] sm:$0xff]
  %v221 = vunpack.c.l.b16 %v93
  %v222 = vunpack.c.h.b16 %v93
  %v223 = vunpack.c.l.b16 %v94
  %v224 = vunpack.c.h.b16 %v94
  %v225 = vunpack.c.l.b16 %v95
  %v226 = vunpack.c.h.b16 %v95
  %v227 = vunpack.c.l.b16 %v96
  %v228 = vunpack.c.h.b16 %v96
  %v229 = vunpack.c.l.b16 %v97
  %v230 = vunpack.c.h.b16 %v97
  %v231 = vunpack.c.l.b16 %v98
  %v232 = vunpack.c.h.b16 %v98
  %v233 = vunpack.c.l.b16 %v99
  %v234 = vunpack.c.h.b16 %v99
  %v235 = vunpack.c.l.b16 %v100
  %v236 = vunpack.c.h.b16 %v100
  %v237 = vunpack.c.l.b16 %v101
  %v238 = vunpack.c.h.b16 %v101
  %v239 = vunpack.c.l.b16 %v102
  %v240 = vunpack.c.h.b16 %v102
  %v241 = vunpack.c.l.b16 %v103
  %v242 = vunpack.c.h.b16 %v103
  %v243 = vunpack.c.l.b16 %v104
  %v244 = vunpack.c.h.b16 %v104
  %v245 = vunpack.c.l.b16 %v105
  %v246 = vunpack.c.h.b16 %v105
  %v247 = vunpack.c.l.b16 %v106
  %v248 = vunpack.c.h.b16 %v106
  %v249 = vunpack.c.l.b16 %v107
  %v250 = vunpack.c.h.b16 %v107
  %v251 = vunpack.c.l.b16 %v108
  %v252 = vunpack.c.h.b16 %v108
  %v253 = vunpack.c.l.b16 %v109
  %v254 = vunpack.c.h.b16 %v109
  %v255 = vunpack.c.l.b16 %v110
  %v256 = vunpack.c.h.b16 %v110
  %v257 = vunpack.c.l.b16 %v111
  %v258 = vunpack.c.h.b16 %v111
  %v259 = vunpack.c.l.b16 %v112
  %v260 = vunpack.c.h.b16 %v112
  %v261 = vunpack.c.l.b16 %v113
  %v262 = vunpack.c.h.b16 %v113
  %v263 = vunpack.c.l.b16 %v114
  %v264 = vunpack.c.h.b16 %v114
  %v265 = vunpack.c.l.b16 %v115
  %v266 = vunpack.c.h.b16 %v115
  %v267 = vunpack.c.l.b16 %v116
  %v268 = vunpack.c.h.b16 %v116
  %v269 = vunpack.c.l.b16 %v117
  %v270 = vunpack.c.h.b16 %v117
  %v271 = vunpack.c.l.b16 %v118
  %v272 = vunpack.c.h.b16 %v118
  %v273 = vunpack.c.l.b16 %v119
  %v274 = vunpack.c.h.b16 %v119
  %v275 = vunpack.c.l.b16 %v120
  %v276 = vunpack.c.h.b16 %v120
  %v277 = vunpack.c.l.b16 %v121
  %v278 = vunpack.c.h.b16 %v121
  %v279 = vunpack.c.l.b16 %v122
  %v280 = vunpack.c.h.b16 %v122
  %v281 = vunpack.c.l.b16 %v123
  %v282 = vunpack.c.h.b16 %v123
  %v283 = vunpack.c.l.b16 %v124
  %v284 = vunpack.c.h.b16 %v124
  %v285 = vunpack.c.l.b16 %v125
  %v286 = vunpack.c.h.b16 %v125
  %v287 = vunpack.c.l.b16 %v126
  %v288 = vunpack.c.h.b16 %v126
  %v289 = vunpack.c.l.b16 %v127
  %v290 = vunpack.c.h.b16 %v127
  %v291 = vunpack.c.l.b16 %v128
  %v292 = vunpack.c.h.b16 %v128
  %v293 = vunpack.c.l.b16 %v129
  %v294 = vunpack.c.h.b16 %v129
  %v295 = vunpack.c.l.b16 %v130
  %v296 = vunpack.c.h.b16 %v130
  %v297 = vunpack.c.l.b16 %v131
  %v298 = vunpack.c.h.b16 %v131
  %v299 = vunpack.c.l.b16 %v132
  %v300 = vunpack.c.h.b16 %v132
  %v301 = vunpack.c.l.b16 %v133
  %v302 = vunpack.c.h.b16 %v133
  %v303 = vunpack.c.l.b16 %v134
  %v304 = vunpack.c.h.b16 %v134
  %v305 = vunpack.c.l.b16 %v135
  %v306 = vunpack.c.h.b16 %v135
  %v307 = vunpack.c.l.b16 %v136
  %v308 = vunpack.c.h.b16 %v136
  %v309 = vunpack.c.l.b16 %v137
  %v310 = vunpack.c.h.b16 %v137
  %v311 = vunpack.c.l.b16 %v138
  %v312 = vunpack.c.h.b16 %v138
  %v313 = vunpack.c.l.b16 %v139
  %v314 = vunpack.c.h.b16 %v139
  %v315 = vunpack.c.l.b16 %v140
  %v316 = vunpack.c.h.b16 %v140
  %v317 = vunpack.c.l.b16 %v141
  %v318 = vunpack.c.h.b16 %v141
  %v319 = vunpack.c.l.b16 %v142
  %v320 = vunpack.c.h.b16 %v142
  %v321 = vunpack.c.l.b16 %v143
  %v322 = vunpack.c.h.b16 %v143
  %v323 = vunpack.c.l.b16 %v144
  %v324 = vunpack.c.h.b16 %v144
  %v325 = vunpack.c.l.b16 %v145
  %v326 = vunpack.c.h.b16 %v145
  %v327 = vunpack.c.l.b16 %v146
  %v328 = vunpack.c.h.b16 %v146
  %v329 = vunpack.c.l.b16 %v147
  %v330 = vunpack.c.h.b16 %v147
  %v331 = vunpack.c.l.b16 %v148
  %v332 = vunpack.c.h.b16 %v148
  %v333 = vunpack.c.l.b16 %v149
  %v334 = vunpack.c.h.b16 %v149
  %v335 = vunpack.c.l.b16 %v150
  %v336 = vunpack.c.h.b16 %v150
  %v337 = vunpack.c.l.b16 %v151
  %v338 = vunpack.c.h.b16 %v151
  %v339 = vunpack.c.l.b16 %v152
  %v340 = vunpack.c.h.b16 %v152
  %v341 = vunpack.c.l.b16 %v153
  %v342 = vunpack.c.h.b16 %v153
  %v343 = vunpack.c.l.b16 %v154
  %v344 = vunpack.c.h.b16 %v154
  %v345 = vunpack.c.l.b16 %v155
  %v346 = vunpack.c.h.b16 %v155
  %v347 = vunpack.c.l.b16 %v156
  %v348 = vunpack.c.h.b16 %v156
  %v349 = vpack.c.b16 %v229, %v221
  %v350 = vpack.c.b16 %v230, %v222
  %v351 = vpack.c.b16 %v231, %v223
  %v352 = vpack.c.b16 %v232, %v224
  %v353 = vpack.c.b16 %v233, %v225
  %v354 = vpack.c.b16 %v234, %v226
  %v355 = vpack.c.b16 %v235, %v227
  %v356 = vpack.c.b16 %v236, %v228
  %v357 = vpack.c.b16 %v245, %v237
  %v358 = vpack.c.b16 %v246, %v238
  %v359 = vpack.c.b16 %v247, %v239
  %v360 = vpack.c.b16 %v248, %v240
  %v361 = vpack.c.b16 %v249, %v241
  %v362 = vpack.c.b16 %v250, %v242
  %v363 = vpack.c.b16 %v251, %v243
  %v364 = vpack.c.b16 %v252, %v244
  %v365 = vpack.c.b16 %v261, %v253
  %v366 = vpack.c.b16 %v262, %v254
  %v367 = vpack.c.b16 %v263, %v255
  %v368 = vpack.c.b16 %v264, %v256
  %v369 = vpack.c.b16 %v265, %v257
  %v370 = vpack.c.b16 %v266, %v258
  %v371 = vpack.c.b16 %v267, %v259
  %v372 = vpack.c.b16 %v268, %v260
  %v373 = vpack.c.b16 %v277, %v269
  %v374 = vpack.c.b16 %v278, %v270
  %v375 = vpack.c.b16 %v279, %v271
  %v376 = vpack.c.b16 %v280, %v272
  %v377 = vpack.c.b16 %v281, %v273
  %v378 = vpack.c.b16 %v282, %v274
  %v379 = vpack.c.b16 %v283, %v275
  %v380 = vpack.c.b16 %v284, %v276
  %v381 = vpack.c.b16 %v293, %v285
  %v382 = vpack.c.b16 %v294, %v286
  %v383 = vpack.c.b16 %v295, %v287
  %v384 = vpack.c.b16 %v296, %v288
  %v385 = vpack.c.b16 %v297, %v289
  %v386 = vpack.c.b16 %v298, %v290
  %v387 = vpack.c.b16 %v299, %v291
  %v388 = vpack.c.b16 %v300, %v292
  %v389 = vpack.c.b16 %v309, %v301
  %v390 = vpack.c.b16 %v310, %v302
  %v391 = vpack.c.b16 %v311, %v303
  %v392 = vpack.c.b16 %v312, %v304
  %v393 = vpack.c.b16 %v313, %v305
  %v394 = vpack.c.b16 %v314, %v306
  %v395 = vpack.c.b16 %v315, %v307
  %v396 = vpack.c.b16 %v316, %v308
  %v397 = vpack.c.b16 %v325, %v317
  %v398 = vpack.c.b16 %v326, %v318
  %v399 = vpack.c.b16 %v327, %v319
  %v400 = vpack.c.b16 %v328, %v320
  %v401 = vpack.c.b16 %v329, %v321
  %v402 = vpack.c.b16 %v330, %v322
  %v403 = vpack.c.b16 %v331, %v323
  %v404 = vpack.c.b16 %v332, %v324
  %v405 = vpack.c.b16 %v341, %v333
  %v406 = vpack.c.b16 %v342, %v334
  %v407 = vpack.c.b16 %v343, %v335
  %v408 = vpack.c.b16 %v344, %v336
  %v409 = vpack.c.b16 %v345, %v337
  %v410 = vpack.c.b16 %v346, %v338
  %v411 = vpack.c.b16 %v347, %v339
  %v412 = vpack.c.b16 %v348, %v340
  %477 = vmatpush.bf16.msra.mxu0 %v405
  %478 = vmatpush.bf16.msra.mxu0 %v397
  %479 = vmatpush.bf16.msra.mxu0 %v389
  %480 = vmatpush.bf16.msra.mxu0 %v381
  %481 = vmatpush.bf16.msra.mxu0 %v373
  %482 = vmatpush.bf16.msra.mxu0 %v365
  %483 = vmatpush.bf16.msra.mxu0 %v357
  %484 = vmatpush.bf16.msra.mxu0 %v349
  %485 = vmatmul.bf16.gmra.mxu0 %v91
  %v486 = vpop.f32.mrf.mxu0
  %v487 = vadd.f32 0.0, %v486
  %v488 = vpop.f32.mrf.mxu0
  %v489 = vadd.f32 0.0, %v488
  %490 = vmatmul.bf16.gmra.mxu0 %v92
  %v491 = vpop.f32.mrf.mxu0
  %v492 = vadd.f32 0.0, %v491
  %v493 = vpop.f32.mrf.mxu0
  %v494 = vadd.f32 0.0, %v493
  %495 = vdwg.mxu0
  %496 = vmatpush.bf16.msra.mxu0 %v406
  %497 = vmatpush.bf16.msra.mxu0 %v398
  %498 = vmatpush.bf16.msra.mxu0 %v390
  %499 = vmatpush.bf16.msra.mxu0 %v382
  %500 = vmatpush.bf16.msra.mxu0 %v374
  %501 = vmatpush.bf16.msra.mxu0 %v366
  %502 = vmatpush.bf16.msra.mxu0 %v358
  %503 = vmatpush.bf16.msra.mxu0 %v350
  %504 = vmatmul.bf16.gmra.mxu0 %v91
  %v505 = vpop.f32.mrf.mxu0
  %v506 = vadd.f32 0.0, %v505
  %v507 = vpop.f32.mrf.mxu0
  %v508 = vadd.f32 0.0, %v507
  %509 = vmatmul.bf16.gmra.mxu0 %v92
  %v510 = vpop.f32.mrf.mxu0
  %v511 = vadd.f32 0.0, %v510
  %v512 = vpop.f32.mrf.mxu0
  %v513 = vadd.f32 0.0, %v512
  %514 = vdwg.mxu0
  %515 = vmatpush.bf16.msra.mxu0 %v407
  %516 = vmatpush.bf16.msra.mxu0 %v399
  %517 = vmatpush.bf16.msra.mxu0 %v391
  %518 = vmatpush.bf16.msra.mxu0 %v383
  %519 = vmatpush.bf16.msra.mxu0 %v375
  %520 = vmatpush.bf16.msra.mxu0 %v367
  %521 = vmatpush.bf16.msra.mxu0 %v359
  %522 = vmatpush.bf16.msra.mxu0 %v351
  %523 = vmatmul.bf16.gmra.mxu0 %v91
  %v524 = vpop.f32.mrf.mxu0
  %v525 = vadd.f32 0.0, %v524
  %v526 = vpop.f32.mrf.mxu0
  %v527 = vadd.f32 0.0, %v526
  %528 = vmatmul.bf16.gmra.mxu0 %v92
  %v529 = vpop.f32.mrf.mxu0
  %v530 = vadd.f32 0.0, %v529
  %v531 = vpop.f32.mrf.mxu0
  %v532 = vadd.f32 0.0, %v531
  %533 = vdwg.mxu0
  %534 = vmatpush.bf16.msra.mxu0 %v408
  %535 = vmatpush.bf16.msra.mxu0 %v400
  %536 = vmatpush.bf16.msra.mxu0 %v392
  %537 = vmatpush.bf16.msra.mxu0 %v384
  %538 = vmatpush.bf16.msra.mxu0 %v376
  %539 = vmatpush.bf16.msra.mxu0 %v368
  %540 = vmatpush.bf16.msra.mxu0 %v360
  %541 = vmatpush.bf16.msra.mxu0 %v352
  %542 = vmatmul.bf16.gmra.mxu0 %v91
  %v543 = vpop.f32.mrf.mxu0
  %v544 = vadd.f32 0.0, %v543
  %v545 = vpop.f32.mrf.mxu0
  %v546 = vadd.f32 0.0, %v545
  %547 = vmatmul.bf16.gmra.mxu0 %v92
  %v548 = vpop.f32.mrf.mxu0
  %v549 = vadd.f32 0.0, %v548
  %v550 = vpop.f32.mrf.mxu0
  %v551 = vadd.f32 0.0, %v550
  %552 = vdwg.mxu0
  %553 = vmatpush.bf16.msra.mxu0 %v409
  %554 = vmatpush.bf16.msra.mxu0 %v401
  %555 = vmatpush.bf16.msra.mxu0 %v393
  %556 = vmatpush.bf16.msra.mxu0 %v385
  %557 = vmatpush.bf16.msra.mxu0 %v377
  %558 = vmatpush.bf16.msra.mxu0 %v369
  %559 = vmatpush.bf16.msra.mxu0 %v361
  %560 = vmatpush.bf16.msra.mxu0 %v353
  %561 = vmatmul.bf16.gmra.mxu0 %v91
  %v562 = vpop.f32.mrf.mxu0
  %v563 = vadd.f32 0.0, %v562
  %v564 = vpop.f32.mrf.mxu0
  %v565 = vadd.f32 0.0, %v564
  %566 = vmatmul.bf16.gmra.mxu0 %v92
  %v567 = vpop.f32.mrf.mxu0
  %v568 = vadd.f32 0.0, %v567
  %v569 = vpop.f32.mrf.mxu0
  %v570 = vadd.f32 0.0, %v569
  %571 = vdwg.mxu0
  %572 = vmatpush.bf16.msra.mxu0 %v410
  %573 = vmatpush.bf16.msra.mxu0 %v402
  %574 = vmatpush.bf16.msra.mxu0 %v394
  %575 = vmatpush.bf16.msra.mxu0 %v386
  %576 = vmatpush.bf16.msra.mxu0 %v378
  %577 = vmatpush.bf16.msra.mxu0 %v370
  %578 = vmatpush.bf16.msra.mxu0 %v362
  %579 = vmatpush.bf16.msra.mxu0 %v354
  %580 = vmatmul.bf16.gmra.mxu0 %v91
  %v581 = vpop.f32.mrf.mxu0
  %v582 = vadd.f32 0.0, %v581
  %v583 = vpop.f32.mrf.mxu0
  %v584 = vadd.f32 0.0, %v583
  %585 = vmatmul.bf16.gmra.mxu0 %v92
  %v586 = vpop.f32.mrf.mxu0
  %v587 = vadd.f32 0.0, %v586
  %v588 = vpop.f32.mrf.mxu0
  %v589 = vadd.f32 0.0, %v588
  %590 = vdwg.mxu0
  %591 = vmatpush.bf16.msra.mxu0 %v411
  %592 = vmatpush.bf16.msra.mxu0 %v403
  %593 = vmatpush.bf16.msra.mxu0 %v395
  %594 = vmatpush.bf16.msra.mxu0 %v387
  %595 = vmatpush.bf16.msra.mxu0 %v379
  %596 = vmatpush.bf16.msra.mxu0 %v371
  %597 = vmatpush.bf16.msra.mxu0 %v363
  %598 = vmatpush.bf16.msra.mxu0 %v355
  %599 = vmatmul.bf16.gmra.mxu0 %v91
  %v600 = vpop.f32.mrf.mxu0
  %v601 = vadd.f32 0.0, %v600
  %v602 = vpop.f32.mrf.mxu0
  %v603 = vadd.f32 0.0, %v602
  %604 = vmatmul.bf16.gmra.mxu0 %v92
  %v605 = vpop.f32.mrf.mxu0
  %v606 = vadd.f32 0.0, %v605
  %v607 = vpop.f32.mrf.mxu0
  %v608 = vadd.f32 0.0, %v607
  %609 = vdwg.mxu0
  %610 = vmatpush.bf16.msra.mxu0 %v412
  %611 = vmatpush.bf16.msra.mxu0 %v404
  %612 = vmatpush.bf16.msra.mxu0 %v396
  %613 = vmatpush.bf16.msra.mxu0 %v388
  %614 = vmatpush.bf16.msra.mxu0 %v380
  %615 = vmatpush.bf16.msra.mxu0 %v372
  %616 = vmatpush.bf16.msra.mxu0 %v364
  %617 = vmatpush.bf16.msra.mxu0 %v356
  %618 = vmatmul.bf16.gmra.mxu0 %v91
  %v619 = vpop.f32.mrf.mxu0
  %v620 = vadd.f32 0.0, %v619
  %v621 = vpop.f32.mrf.mxu0
  %v622 = vadd.f32 0.0, %v621
  %623 = vmatmul.bf16.gmra.mxu0 %v92
  %v624 = vpop.f32.mrf.mxu0
  %v625 = vadd.f32 0.0, %v624
  %v626 = vpop.f32.mrf.mxu0
  %v627 = vadd.f32 0.0, %v626
  %628 = vdwg.mxu0
  %629 = vst [vmem:[%s4] sm:$0xff] %v487
  %630 = vst [vmem:[%s4 + $0x8] sm:$0xff] %v506
  %631 = vst [vmem:[%s4 + $0x10] sm:$0xff] %v525
  %632 = vst [vmem:[%s4 + $0x18] sm:$0xff] %v544
  %633 = vst [vmem:[%s4 + $0x20] sm:$0xff] %v563
  %634 = vst [vmem:[%s4 + $0x28] sm:$0xff] %v582
  %635 = vst [vmem:[%s4 + $0x30] sm:$0xff] %v601
  %636 = vst [vmem:[%s4 + $0x38] sm:$0xff] %v620
  %637 = vst [vmem:[%s4 + $0x40] sm:$0xff] %v489
  %638 = vst [vmem:[%s4 + $0x48] sm:$0xff] %v508
  %639 = vst [vmem:[%s4 + $0x50] sm:$0xff] %v527
  %640 = vst [vmem:[%s4 + $0x58] sm:$0xff] %v546
  %641 = vst [vmem:[%s4 + $0x60] sm:$0xff] %v565
  %642 = vst [vmem:[%s4 + $0x68] sm:$0xff] %v584
  %643 = vst [vmem:[%s4 + $0x70] sm:$0xff] %v603
  %644 = vst [vmem:[%s4 + $0x78] sm:$0xff] %v622
  %645 = vst [vmem:[%s4 + $0x80] sm:$0xff] %v492
  %646 = vst [vmem:[%s4 + $0x88] sm:$0xff] %v511
  %647 = vst [vmem:[%s4 + $0x90] sm:$0xff] %v530
  %648 = vst [vmem:[%s4 + $0x98] sm:$0xff] %v549
  %649 = vst [vmem:[%s4 + $0xa0] sm:$0xff] %v568
  %650 = vst [vmem:[%s4 + $0xa8] sm:$0xff] %v587
  %651 = vst [vmem:[%s4 + $0xb0] sm:$0xff] %v606
  %652 = vst [vmem:[%s4 + $0xb8] sm:$0xff] %v625
  %653 = vst [vmem:[%s4 + $0xc0] sm:$0xff] %v494
  %654 = vst [vmem:[%s4 + $0xc8] sm:$0xff] %v513
  %655 = vst [vmem:[%s4 + $0xd0] sm:$0xff] %v532
  %656 = vst [vmem:[%s4 + $0xd8] sm:$0xff] %v551
  %657 = vst [vmem:[%s4 + $0xe0] sm:$0xff] %v570
  %658 = vst [vmem:[%s4 + $0xe8] sm:$0xff] %v589
  %659 = vst [vmem:[%s4 + $0xf0] sm:$0xff] %v608
  %660 = vst [vmem:[%s4 + $0xf8] sm:$0xff] %v627
  // Predicated region
  $region18: #{netG_forward.17} parent=0 // pred_check
    _
  $region19: #{netG_forward.17} parent=0 // pred_check_branch
    %662 = sbr.rel (0) target = $region21
  $region20: #{netG_forward.17} parent=0 // pred_region
    _
  $region21: #{netG_forward.17} parent=0 // pred_fallthru
    _
  // Predicated region
  $region22: #{netG_forward.17} parent=0 // pred_check
    _
  $region23: #{netG_forward.17} parent=0 // pred_check_branch
    %664 = sbr.rel (0) target = $region25
  $region24: #{netG_forward.17} parent=0 // pred_region
    _
  $region25: #{netG_forward.17} parent=0 // pred_fallthru
    _

// kernel: netG_forward.18
$region0: #{netG_forward.18}
  #allocation0 [shape = 'u32[]', space=smem, size = 0x4, offset = 0x4, fixed_abs, tag = 'smem constant byte address 0x4 - core index']
  #allocation1 [shape = 'u32[72,128]{1,0:T(1,128)}', space=vmem, size = 0x9000, scoped, tag = 'internal scratch']
  %s0 = inlined_call_operand.vmem [shape: f32[128,64], index: 0, kind: input, shape index: {}]
  %s1 = inlined_call_operand.vmem [shape: f32[1,64], index: 1, kind: input, shape index: {}]
  %s2 = inlined_call_operand.vmem [shape: f32[1,64], index: 2, kind: input, shape index: {}]
  %s3 = inlined_call_operand.vmem [shape: bf16[64,1024], index: 3, kind: input, shape index: {}]
  %s4 = inlined_call_operand.vmem [shape: f32[128,1024], index: 4, kind: output, shape index: {}]
  %s5 = sld [smem:[#allocation0]]
  $region26: #{netG_forward.18} parent=0
    _
  %s7 = ssub.s32 1, %s5
  %s8 = scalar_select 0, %s7, %s5
  // Predicated region
  $region2: #{netG_forward.18} parent=0 // pred_check
    _
  $region3: #{netG_forward.18} parent=0 // pred_check_branch
    %10 = sbr.rel (0) target = $region5
  $region4: #{netG_forward.18} parent=0 // pred_region
    _
  $region5: #{netG_forward.18} parent=0 // pred_fallthru
    _
  // Predicated region
  $region6: #{netG_forward.18} parent=0 // pred_check
    _
  $region7: #{netG_forward.18} parent=0 // pred_check_branch
    %12 = sbr.rel (0) target = $region9
  $region8: #{netG_forward.18} parent=0 // pred_region
    _
  $region9: #{netG_forward.18} parent=0 // pred_fallthru
    _
  // Predicated region
  $region10: #{netG_forward.18} parent=0 // pred_check
    _
  $region11: #{netG_forward.18} parent=0 // pred_check_branch
    %14 = sbr.rel (0) target = $region13
  $region12: #{netG_forward.18} parent=0 // pred_region
    _
  $region13: #{netG_forward.18} parent=0 // pred_fallthru
    _
  // Predicated region
  $region14: #{netG_forward.18} parent=0 // pred_check
    _
  $region15: #{netG_forward.18} parent=0 // pred_check_branch
    %16 = sbr.rel (0) target = $region17
  $region16: #{netG_forward.18} parent=0 // pred_region
    _
  $region17: #{netG_forward.18} parent=0 // pred_fallthru
    _
  %v18 = vld [vmem:[%s0] sm:$0xff]
  %v19 = vld [vmem:[%s0 + $0x8] sm:$0xff]
  %v20 = vld [vmem:[%s0 + $0x10] sm:$0xff]
  %v21 = vld [vmem:[%s0 + $0x18] sm:$0xff]
  %v22 = vld [vmem:[%s0 + $0x20] sm:$0xff]
  %v23 = vld [vmem:[%s0 + $0x28] sm:$0xff]
  %v24 = vld [vmem:[%s0 + $0x30] sm:$0xff]
  %v25 = vld [vmem:[%s0 + $0x38] sm:$0xff]
  %v26 = vld [vmem:[%s0 + $0x40] sm:$0xff]
  %v27 = vld [vmem:[%s0 + $0x48] sm:$0xff]
  %v28 = vld [vmem:[%s0 + $0x50] sm:$0xff]
  %v29 = vld [vmem:[%s0 + $0x58] sm:$0xff]
  %v30 = vld [vmem:[%s0 + $0x60] sm:$0xff]
  %v31 = vld [vmem:[%s0 + $0x68] sm:$0xff]
  %v32 = vld [vmem:[%s0 + $0x70] sm:$0xff]
  %v33 = vld [vmem:[%s0 + $0x78] sm:$0xff]
  %v34 = vld [vmem:[%s1] sm:$0x1]
  %v35 = vld [vmem:[%s2] sm:$0x1]
  %vm36 = vcmask 523264
  %v37 = vsel %vm36, %v18, 0.0
  %v38 = vsel %vm36, %v19, 0.0
  %v39 = vadd.f32 %v37, %v38
  %v40 = vsel %vm36, %v20, 0.0
  %v41 = vadd.f32 %v39, %v40
  %v42 = vsel %vm36, %v21, 0.0
  %v43 = vadd.f32 %v41, %v42
  %v44 = vsel %vm36, %v22, 0.0
  %v45 = vadd.f32 %v43, %v44
  %v46 = vsel %vm36, %v23, 0.0
  %v47 = vadd.f32 %v45, %v46
  %v48 = vsel %vm36, %v24, 0.0
  %v49 = vadd.f32 %v47, %v48
  %v50 = vsel %vm36, %v25, 0.0
  %v51 = vadd.f32 %v49, %v50
  %v52 = vsel %vm36, %v26, 0.0
  %v53 = vadd.f32 %v51, %v52
  %v54 = vsel %vm36, %v27, 0.0
  %v55 = vadd.f32 %v53, %v54
  %v56 = vsel %vm36, %v28, 0.0
  %v57 = vadd.f32 %v55, %v56
  %v58 = vsel %vm36, %v29, 0.0
  %v59 = vadd.f32 %v57, %v58
  %v60 = vsel %vm36, %v30, 0.0
  %v61 = vadd.f32 %v59, %v60
  %v62 = vsel %vm36, %v31, 0.0
  %v63 = vadd.f32 %v61, %v62
  %v64 = vsel %vm36, %v32, 0.0
  %v65 = vadd.f32 %v63, %v64
  %v66 = vsel %vm36, %v33, 0.0
  %v67 = vadd.f32 %v65, %v66
  %v68 = vrot.slane %v67, 4
  %v69 = vadd.f32 %v67, %v68
  %v70 = vrot.slane %v69, 2
  %v71 = vadd.f32 %v69, %v70
  %v72 = vrot.slane %v71, 1
  %v73 = vadd.f32 %v71, %v72
  %v74 = vrcp.pop 128.0
  %v75 = vmul.f32 128.0, %v74
  %v76 = vsub.f32 1.0, %v75
  %v77 = vmul.f32 %v74, %v76
  %v78 = vadd.f32 %v74, %v77
  %vm79 = vweird.f32 %v74
  %v80 = vsel %vm79, %v74, %v78
  %v81 = vmul.f32 %v73, %v80
  %v82 = vsub.f32 %v18, %v81
  %v83 = vsub.f32 %v19, %v81
  %v84 = vsub.f32 %v20, %v81
  %v85 = vsub.f32 %v21, %v81
  %v86 = vsub.f32 %v22, %v81
  %v87 = vsub.f32 %v23, %v81
  %v88 = vsub.f32 %v24, %v81
  %v89 = vsub.f32 %v25, %v81
  %v90 = vsub.f32 %v26, %v81
  %v91 = vsub.f32 %v27, %v81
  %v92 = vsub.f32 %v28, %v81
  %v93 = vsub.f32 %v29, %v81
  %v94 = vsub.f32 %v30, %v81
  %v95 = vsub.f32 %v31, %v81
  %v96 = vsub.f32 %v32, %v81
  %v97 = vsub.f32 %v33, %v81
  %v98 = vmul.f32 %v82, %v82
  %v99 = vmul.f32 %v83, %v83
  %v100 = vmul.f32 %v84, %v84
  %v101 = vmul.f32 %v85, %v85
  %v102 = vmul.f32 %v86, %v86
  %v103 = vmul.f32 %v87, %v87
  %v104 = vmul.f32 %v88, %v88
  %v105 = vmul.f32 %v89, %v89
  %v106 = vmul.f32 %v90, %v90
  %v107 = vmul.f32 %v91, %v91
  %v108 = vmul.f32 %v92, %v92
  %v109 = vmul.f32 %v93, %v93
  %v110 = vmul.f32 %v94, %v94
  %v111 = vmul.f32 %v95, %v95
  %v112 = vmul.f32 %v96, %v96
  %v113 = vmul.f32 %v97, %v97
  %v114 = vsel %vm36, %v98, 0.0
  %v115 = vsel %vm36, %v99, 0.0
  %v116 = vadd.f32 %v114, %v115
  %v117 = vsel %vm36, %v100, 0.0
  %v118 = vadd.f32 %v116, %v117
  %v119 = vsel %vm36, %v101, 0.0
  %v120 = vadd.f32 %v118, %v119
  %v121 = vsel %vm36, %v102, 0.0
  %v122 = vadd.f32 %v120, %v121
  %v123 = vsel %vm36, %v103, 0.0
  %v124 = vadd.f32 %v122, %v123
  %v125 = vsel %vm36, %v104, 0.0
  %v126 = vadd.f32 %v124, %v125
  %v127 = vsel %vm36, %v105, 0.0
  %v128 = vadd.f32 %v126, %v127
  %v129 = vsel %vm36, %v106, 0.0
  %v130 = vadd.f32 %v128, %v129
  %v131 = vsel %vm36, %v107, 0.0
  %v132 = vadd.f32 %v130, %v131
  %v133 = vsel %vm36, %v108, 0.0
  %v134 = vadd.f32 %v132, %v133
  %v135 = vsel %vm36, %v109, 0.0
  %v136 = vadd.f32 %v134, %v135
  %v137 = vsel %vm36, %v110, 0.0
  %v138 = vadd.f32 %v136, %v137
  %v139 = vsel %vm36, %v111, 0.0
  %v140 = vadd.f32 %v138, %v139
  %v141 = vsel %vm36, %v112, 0.0
  %v142 = vadd.f32 %v140, %v141
  %v143 = vsel %vm36, %v113, 0.0
  %v144 = vadd.f32 %v142, %v143
  %v145 = vrot.slane %v144, 4
  %v146 = vadd.f32 %v144, %v145
  %v147 = vrot.slane %v146, 2
  %v148 = vadd.f32 %v146, %v147
  %v149 = vrot.slane %v148, 1
  %v150 = vadd.f32 %v148, %v149
  %v151 = vmul.f32 %v150, %v80
  %v152 = vadd.f32 %v151, 1e-05
  %v153 = vrsqrt.pop %v152
  %v154 = vmul.f32 %v153, %v152
  %v155 = vmul.f32 %v154, %v153
  %v156 = vmul.f32 0.5, %v155
  %v157 = vsub.f32 1.5, %v156
  %v158 = vmul.f32 %v153, %v157
  %vm159 = vweird.f32 %v152
  %vm160 = vweird.f32 %v153
  %vm161 = vmor %vm159, %vm160
  %v162 = vsel %vm161, %v153, %v158
  %v163 = vmul.f32 %v82, %v162
  %v164 = vmul.f32 %v83, %v162
  %v165 = vmul.f32 %v84, %v162
  %v166 = vmul.f32 %v85, %v162
  %v167 = vmul.f32 %v86, %v162
  %v168 = vmul.f32 %v87, %v162
  %v169 = vmul.f32 %v88, %v162
  %v170 = vmul.f32 %v89, %v162
  %v171 = vmul.f32 %v90, %v162
  %v172 = vmul.f32 %v91, %v162
  %v173 = vmul.f32 %v92, %v162
  %v174 = vmul.f32 %v93, %v162
  %v175 = vmul.f32 %v94, %v162
  %v176 = vmul.f32 %v95, %v162
  %v177 = vmul.f32 %v96, %v162
  %v178 = vmul.f32 %v97, %v162
  %v180 = vperm.slane %v34, 0
  %v182 = vmul.f32 %v163, %v180
  %v183 = vmul.f32 %v164, %v180
  %v184 = vmul.f32 %v165, %v180
  %v185 = vmul.f32 %v166, %v180
  %v186 = vmul.f32 %v167, %v180
  %v187 = vmul.f32 %v168, %v180
  %v188 = vmul.f32 %v169, %v180
  %v189 = vmul.f32 %v170, %v180
  %v190 = vmul.f32 %v171, %v180
  %v191 = vmul.f32 %v172, %v180
  %v192 = vmul.f32 %v173, %v180
  %v193 = vmul.f32 %v174, %v180
  %v194 = vmul.f32 %v175, %v180
  %v195 = vmul.f32 %v176, %v180
  %v196 = vmul.f32 %v177, %v180
  %v197 = vmul.f32 %v178, %v180
  %v199 = vperm.slane %v35, 0
  %v201 = vadd.f32 %v182, %v199
  %v202 = vadd.f32 %v183, %v199
  %v203 = vadd.f32 %v184, %v199
  %v204 = vadd.f32 %v185, %v199
  %v205 = vadd.f32 %v186, %v199
  %v206 = vadd.f32 %v187, %v199
  %v207 = vadd.f32 %v188, %v199
  %v208 = vadd.f32 %v189, %v199
  %v209 = vadd.f32 %v190, %v199
  %v210 = vadd.f32 %v191, %v199
  %v211 = vadd.f32 %v192, %v199
  %v212 = vadd.f32 %v193, %v199
  %v213 = vadd.f32 %v194, %v199
  %v214 = vadd.f32 %v195, %v199
  %v215 = vadd.f32 %v196, %v199
  %v216 = vadd.f32 %v197, %v199
  %v217 = vmax.f32 %v201, 0.0
  %v218 = vmax.f32 %v202, 0.0
  %v219 = vmax.f32 %v203, 0.0
  %v220 = vmax.f32 %v204, 0.0
  %v221 = vmax.f32 %v205, 0.0
  %v222 = vmax.f32 %v206, 0.0
  %v223 = vmax.f32 %v207, 0.0
  %v224 = vmax.f32 %v208, 0.0
  %v225 = vmax.f32 %v209, 0.0
  %v226 = vmax.f32 %v210, 0.0
  %v227 = vmax.f32 %v211, 0.0
  %v228 = vmax.f32 %v212, 0.0
  %v229 = vmax.f32 %v213, 0.0
  %v230 = vmax.f32 %v214, 0.0
  %v231 = vmax.f32 %v215, 0.0
  %v232 = vmax.f32 %v216, 0.0
  %v233 = vpack.c.bf16 %v218, %v217
  %v234 = vpack.c.bf16 %v220, %v219
  %v235 = vpack.c.bf16 %v222, %v221
  %v236 = vpack.c.bf16 %v224, %v223
  %v237 = vpack.c.bf16 %v226, %v225
  %v238 = vpack.c.bf16 %v228, %v227
  %v239 = vpack.c.bf16 %v230, %v229
  %v240 = vpack.c.bf16 %v232, %v231
  %v241 = vld [vmem:[%s3] sm:$0xff]
  %v242 = vld [vmem:[%s3 + $0x8] sm:$0xff]
  %v243 = vld [vmem:[%s3 + $0x10] sm:$0xff]
  %v244 = vld [vmem:[%s3 + $0x18] sm:$0xff]
  %v245 = vld [vmem:[%s3 + $0x20] sm:$0xff]
  %v246 = vld [vmem:[%s3 + $0x28] sm:$0xff]
  %v247 = vld [vmem:[%s3 + $0x30] sm:$0xff]
  %v248 = vld [vmem:[%s3 + $0x38] sm:$0xff]
  %v249 = vld [vmem:[%s3 + $0x40] sm:$0xff]
  %v250 = vld [vmem:[%s3 + $0x48] sm:$0xff]
  %v251 = vld [vmem:[%s3 + $0x50] sm:$0xff]
  %v252 = vld [vmem:[%s3 + $0x58] sm:$0xff]
  %v253 = vld [vmem:[%s3 + $0x60] sm:$0xff]
  %v254 = vld [vmem:[%s3 + $0x68] sm:$0xff]
  %v255 = vld [vmem:[%s3 + $0x70] sm:$0xff]
  %v256 = vld [vmem:[%s3 + $0x78] sm:$0xff]
  %v257 = vld [vmem:[%s3 + $0x80] sm:$0xff]
  %v258 = vld [vmem:[%s3 + $0x88] sm:$0xff]
  %v259 = vld [vmem:[%s3 + $0x90] sm:$0xff]
  %v260 = vld [vmem:[%s3 + $0x98] sm:$0xff]
  %v261 = vld [vmem:[%s3 + $0xa0] sm:$0xff]
  %v262 = vld [vmem:[%s3 + $0xa8] sm:$0xff]
  %v263 = vld [vmem:[%s3 + $0xb0] sm:$0xff]
  %v264 = vld [vmem:[%s3 + $0xb8] sm:$0xff]
  %v265 = vld [vmem:[%s3 + $0xc0] sm:$0xff]
  %v266 = vld [vmem:[%s3 + $0xc8] sm:$0xff]
  %v267 = vld [vmem:[%s3 + $0xd0] sm:$0xff]
  %v268 = vld [vmem:[%s3 + $0xd8] sm:$0xff]
  %v269 = vld [vmem:[%s3 + $0xe0] sm:$0xff]
  %v270 = vld [vmem:[%s3 + $0xe8] sm:$0xff]
  %v271 = vld [vmem:[%s3 + $0xf0] sm:$0xff]
  %v272 = vld [vmem:[%s3 + $0xf8] sm:$0xff]
  %v305 = vunpack.c.l.b16 %v241
  %v306 = vunpack.c.h.b16 %v241
  %v307 = vunpack.c.l.b16 %v242
  %v308 = vunpack.c.h.b16 %v242
  %v309 = vunpack.c.l.b16 %v243
  %v310 = vunpack.c.h.b16 %v243
  %v311 = vunpack.c.l.b16 %v244
  %v312 = vunpack.c.h.b16 %v244
  %v313 = vunpack.c.l.b16 %v245
  %v314 = vunpack.c.h.b16 %v245
  %v315 = vunpack.c.l.b16 %v246
  %v316 = vunpack.c.h.b16 %v246
  %v317 = vunpack.c.l.b16 %v247
  %v318 = vunpack.c.h.b16 %v247
  %v319 = vunpack.c.l.b16 %v248
  %v320 = vunpack.c.h.b16 %v248
  %v321 = vunpack.c.l.b16 %v249
  %v322 = vunpack.c.h.b16 %v249
  %v323 = vunpack.c.l.b16 %v250
  %v324 = vunpack.c.h.b16 %v250
  %v325 = vunpack.c.l.b16 %v251
  %v326 = vunpack.c.h.b16 %v251
  %v327 = vunpack.c.l.b16 %v252
  %v328 = vunpack.c.h.b16 %v252
  %v329 = vunpack.c.l.b16 %v253
  %v330 = vunpack.c.h.b16 %v253
  %v331 = vunpack.c.l.b16 %v254
  %v332 = vunpack.c.h.b16 %v254
  %v333 = vunpack.c.l.b16 %v255
  %v334 = vunpack.c.h.b16 %v255
  %v335 = vunpack.c.l.b16 %v256
  %v336 = vunpack.c.h.b16 %v256
  %v337 = vunpack.c.l.b16 %v257
  %v338 = vunpack.c.h.b16 %v257
  %v339 = vunpack.c.l.b16 %v258
  %v340 = vunpack.c.h.b16 %v258
  %v341 = vunpack.c.l.b16 %v259
  %v342 = vunpack.c.h.b16 %v259
  %v343 = vunpack.c.l.b16 %v260
  %v344 = vunpack.c.h.b16 %v260
  %v345 = vunpack.c.l.b16 %v261
  %v346 = vunpack.c.h.b16 %v261
  %v347 = vunpack.c.l.b16 %v262
  %v348 = vunpack.c.h.b16 %v262
  %v349 = vunpack.c.l.b16 %v263
  %v350 = vunpack.c.h.b16 %v263
  %v351 = vunpack.c.l.b16 %v264
  %v352 = vunpack.c.h.b16 %v264
  %v353 = vunpack.c.l.b16 %v265
  %v354 = vunpack.c.h.b16 %v265
  %v355 = vunpack.c.l.b16 %v266
  %v356 = vunpack.c.h.b16 %v266
  %v357 = vunpack.c.l.b16 %v267
  %v358 = vunpack.c.h.b16 %v267
  %v359 = vunpack.c.l.b16 %v268
  %v360 = vunpack.c.h.b16 %v268
  %v361 = vunpack.c.l.b16 %v269
  %v362 = vunpack.c.h.b16 %v269
  %v363 = vunpack.c.l.b16 %v270
  %v364 = vunpack.c.h.b16 %v270
  %v365 = vunpack.c.l.b16 %v271
  %v366 = vunpack.c.h.b16 %v271
  %v367 = vunpack.c.l.b16 %v272
  %v368 = vunpack.c.h.b16 %v272
  %v369 = vpack.c.b16 %v313, %v305
  %v370 = vpack.c.b16 %v314, %v306
  %v371 = vpack.c.b16 %v315, %v307
  %v372 = vpack.c.b16 %v316, %v308
  %v373 = vpack.c.b16 %v317, %v309
  %v374 = vpack.c.b16 %v318, %v310
  %v375 = vpack.c.b16 %v319, %v311
  %v376 = vpack.c.b16 %v320, %v312
  %v377 = vpack.c.b16 %v329, %v321
  %v378 = vpack.c.b16 %v330, %v322
  %v379 = vpack.c.b16 %v331, %v323
  %v380 = vpack.c.b16 %v332, %v324
  %v381 = vpack.c.b16 %v333, %v325
  %v382 = vpack.c.b16 %v334, %v326
  %v383 = vpack.c.b16 %v335, %v327
  %v384 = vpack.c.b16 %v336, %v328
  %v385 = vpack.c.b16 %v345, %v337
  %v386 = vpack.c.b16 %v346, %v338
  %v387 = vpack.c.b16 %v347, %v339
  %v388 = vpack.c.b16 %v348, %v340
  %v389 = vpack.c.b16 %v349, %v341
  %v390 = vpack.c.b16 %v350, %v342
  %v391 = vpack.c.b16 %v351, %v343
  %v392 = vpack.c.b16 %v352, %v344
  %v393 = vpack.c.b16 %v361, %v353
  %v394 = vpack.c.b16 %v362, %v354
  %v395 = vpack.c.b16 %v363, %v355
  %v396 = vpack.c.b16 %v364, %v356
  %v397 = vpack.c.b16 %v365, %v357
  %v398 = vpack.c.b16 %v366, %v358
  %v399 = vpack.c.b16 %v367, %v359
  %v400 = vpack.c.b16 %v368, %v360
  %v434 = vsel %vm36, %v233, 0
  %v437 = vsel %vm36, %v234, 0
  %v440 = vsel %vm36, %v235, 0
  %v443 = vsel %vm36, %v236, 0
  %v446 = vsel %vm36, %v237, 0
  %v449 = vsel %vm36, %v238, 0
  %v452 = vsel %vm36, %v239, 0
  %v455 = vsel %vm36, %v240, 0
  %457 = vmatpush.bf16.msra.mxu0 0
  %458 = vmatpush.bf16.msra.mxu0 0
  %459 = vmatpush.bf16.msra.mxu0 0
  %460 = vmatpush.bf16.msra.mxu0 0
  %461 = vmatpush.bf16.msra.mxu0 %v393
  %462 = vmatpush.bf16.msra.mxu0 %v385
  %463 = vmatpush.bf16.msra.mxu0 %v377
  %464 = vmatpush.bf16.msra.mxu0 %v369
  %465 = vmatmul.bf16.gmra.mxu0 %v434
  %v466 = vpop.f32.mrf.mxu0
  %v467 = vadd.f32 0.0, %v466
  %v468 = vpop.f32.mrf.mxu0
  %v469 = vadd.f32 0.0, %v468
  %470 = vmatmul.bf16.gmra.mxu0 %v437
  %v471 = vpop.f32.mrf.mxu0
  %v472 = vadd.f32 0.0, %v471
  %v473 = vpop.f32.mrf.mxu0
  %v474 = vadd.f32 0.0, %v473
  %475 = vmatmul.bf16.gmra.mxu0 %v440
  %v476 = vpop.f32.mrf.mxu0
  %v477 = vadd.f32 0.0, %v476
  %v478 = vpop.f32.mrf.mxu0
  %v479 = vadd.f32 0.0, %v478
  %480 = vmatmul.bf16.gmra.mxu0 %v443
  %v481 = vpop.f32.mrf.mxu0
  %v482 = vadd.f32 0.0, %v481
  %v483 = vpop.f32.mrf.mxu0
  %v484 = vadd.f32 0.0, %v483
  %485 = vmatmul.bf16.gmra.mxu0 %v446
  %v486 = vpop.f32.mrf.mxu0
  %v487 = vadd.f32 0.0, %v486
  %v488 = vpop.f32.mrf.mxu0
  %v489 = vadd.f32 0.0, %v488
  %490 = vmatmul.bf16.gmra.mxu0 %v449
  %v491 = vpop.f32.mrf.mxu0
  %v492 = vadd.f32 0.0, %v491
  %v493 = vpop.f32.mrf.mxu0
  %v494 = vadd.f32 0.0, %v493
  %495 = vmatmul.bf16.gmra.mxu0 %v452
  %v496 = vpop.f32.mrf.mxu0
  %v497 = vadd.f32 0.0, %v496
  %v498 = vpop.f32.mrf.mxu0
  %v499 = vadd.f32 0.0, %v498
  %500 = vmatmul.bf16.gmra.mxu0 %v455
  %v501 = vpop.f32.mrf.mxu0
  %v502 = vadd.f32 0.0, %v501
  %v503 = vpop.f32.mrf.mxu0
  %v504 = vadd.f32 0.0, %v503
  %505 = vdwg.mxu0
  %506 = vmatpush.bf16.msra.mxu0 0
  %507 = vmatpush.bf16.msra.mxu0 0
  %508 = vmatpush.bf16.msra.mxu0 0
  %509 = vmatpush.bf16.msra.mxu0 0
  %510 = vmatpush.bf16.msra.mxu0 %v394
  %511 = vmatpush.bf16.msra.mxu0 %v386
  %512 = vmatpush.bf16.msra.mxu0 %v378
  %513 = vmatpush.bf16.msra.mxu0 %v370
  %514 = vmatmul.bf16.gmra.mxu0 %v434
  %v515 = vpop.f32.mrf.mxu0
  %v516 = vadd.f32 0.0, %v515
  %v517 = vpop.f32.mrf.mxu0
  %v518 = vadd.f32 0.0, %v517
  %519 = vmatmul.bf16.gmra.mxu0 %v437
  %v520 = vpop.f32.mrf.mxu0
  %v521 = vadd.f32 0.0, %v520
  %v522 = vpop.f32.mrf.mxu0
  %v523 = vadd.f32 0.0, %v522
  %524 = vmatmul.bf16.gmra.mxu0 %v440
  %v525 = vpop.f32.mrf.mxu0
  %v526 = vadd.f32 0.0, %v525
  %v527 = vpop.f32.mrf.mxu0
  %v528 = vadd.f32 0.0, %v527
  %529 = vmatmul.bf16.gmra.mxu0 %v443
  %v530 = vpop.f32.mrf.mxu0
  %v531 = vadd.f32 0.0, %v530
  %v532 = vpop.f32.mrf.mxu0
  %v533 = vadd.f32 0.0, %v532
  %534 = vmatmul.bf16.gmra.mxu0 %v446
  %v535 = vpop.f32.mrf.mxu0
  %v536 = vadd.f32 0.0, %v535
  %v537 = vpop.f32.mrf.mxu0
  %v538 = vadd.f32 0.0, %v537
  %539 = vmatmul.bf16.gmra.mxu0 %v449
  %v540 = vpop.f32.mrf.mxu0
  %v541 = vadd.f32 0.0, %v540
  %v542 = vpop.f32.mrf.mxu0
  %v543 = vadd.f32 0.0, %v542
  %544 = vmatmul.bf16.gmra.mxu0 %v452
  %v545 = vpop.f32.mrf.mxu0
  %v546 = vadd.f32 0.0, %v545
  %v547 = vpop.f32.mrf.mxu0
  %v548 = vadd.f32 0.0, %v547
  %549 = vmatmul.bf16.gmra.mxu0 %v455
  %v550 = vpop.f32.mrf.mxu0
  %v551 = vadd.f32 0.0, %v550
  %v552 = vpop.f32.mrf.mxu0
  %v553 = vadd.f32 0.0, %v552
  %554 = vdwg.mxu0
  %555 = vmatpush.bf16.msra.mxu0 0
  %556 = vmatpush.bf16.msra.mxu0 0
  %557 = vmatpush.bf16.msra.mxu0 0
  %558 = vmatpush.bf16.msra.mxu0 0
  %559 = vmatpush.bf16.msra.mxu0 %v395
  %560 = vmatpush.bf16.msra.mxu0 %v387
  %561 = vmatpush.bf16.msra.mxu0 %v379
  %562 = vmatpush.bf16.msra.mxu0 %v371
  %563 = vmatmul.bf16.gmra.mxu0 %v434
  %v564 = vpop.f32.mrf.mxu0
  %v565 = vadd.f32 0.0, %v564
  %v566 = vpop.f32.mrf.mxu0
  %v567 = vadd.f32 0.0, %v566
  %568 = vmatmul.bf16.gmra.mxu0 %v437
  %v569 = vpop.f32.mrf.mxu0
  %v570 = vadd.f32 0.0, %v569
  %v571 = vpop.f32.mrf.mxu0
  %v572 = vadd.f32 0.0, %v571
  %573 = vmatmul.bf16.gmra.mxu0 %v440
  %v574 = vpop.f32.mrf.mxu0
  %v575 = vadd.f32 0.0, %v574
  %v576 = vpop.f32.mrf.mxu0
  %v577 = vadd.f32 0.0, %v576
  %578 = vmatmul.bf16.gmra.mxu0 %v443
  %v579 = vpop.f32.mrf.mxu0
  %v580 = vadd.f32 0.0, %v579
  %v581 = vpop.f32.mrf.mxu0
  %v582 = vadd.f32 0.0, %v581
  %583 = vmatmul.bf16.gmra.mxu0 %v446
  %v584 = vpop.f32.mrf.mxu0
  %v585 = vadd.f32 0.0, %v584
  %v586 = vpop.f32.mrf.mxu0
  %v587 = vadd.f32 0.0, %v586
  %588 = vmatmul.bf16.gmra.mxu0 %v449
  %v589 = vpop.f32.mrf.mxu0
  %v590 = vadd.f32 0.0, %v589
  %v591 = vpop.f32.mrf.mxu0
  %v592 = vadd.f32 0.0, %v591
  %593 = vmatmul.bf16.gmra.mxu0 %v452
  %v594 = vpop.f32.mrf.mxu0
  %v595 = vadd.f32 0.0, %v594
  %v596 = vpop.f32.mrf.mxu0
  %v597 = vadd.f32 0.0, %v596
  %598 = vmatmul.bf16.gmra.mxu0 %v455
  %v599 = vpop.f32.mrf.mxu0
  %v600 = vadd.f32 0.0, %v599
  %v601 = vpop.f32.mrf.mxu0
  %v602 = vadd.f32 0.0, %v601
  %603 = vdwg.mxu0
  %604 = vmatpush.bf16.msra.mxu0 0
  %605 = vmatpush.bf16.msra.mxu0 0
  %606 = vmatpush.bf16.msra.mxu0 0
  %607 = vmatpush.bf16.msra.mxu0 0
  %608 = vmatpush.bf16.msra.mxu0 %v396
  %609 = vmatpush.bf16.msra.mxu0 %v388
  %610 = vmatpush.bf16.msra.mxu0 %v380
  %611 = vmatpush.bf16.msra.mxu0 %v372
  %612 = vmatmul.bf16.gmra.mxu0 %v434
  %v613 = vpop.f32.mrf.mxu0
  %v614 = vadd.f32 0.0, %v613
  %v615 = vpop.f32.mrf.mxu0
  %v616 = vadd.f32 0.0, %v615
  %617 = vmatmul.bf16.gmra.mxu0 %v437
  %v618 = vpop.f32.mrf.mxu0
  %v619 = vadd.f32 0.0, %v618
  %v620 = vpop.f32.mrf.mxu0
  %v621 = vadd.f32 0.0, %v620
  %622 = vmatmul.bf16.gmra.mxu0 %v440
  %v623 = vpop.f32.mrf.mxu0
  %v624 = vadd.f32 0.0, %v623
  %v625 = vpop.f32.mrf.mxu0
  %v626 = vadd.f32 0.0, %v625
  %627 = vmatmul.bf16.gmra.mxu0 %v443
  %v628 = vpop.f32.mrf.mxu0
  %v629 = vadd.f32 0.0, %v628
  %v630 = vpop.f32.mrf.mxu0
  %v631 = vadd.f32 0.0, %v630
  %632 = vmatmul.bf16.gmra.mxu0 %v446
  %v633 = vpop.f32.mrf.mxu0
  %v634 = vadd.f32 0.0, %v633
  %v635 = vpop.f32.mrf.mxu0
  %v636 = vadd.f32 0.0, %v635
  %637 = vmatmul.bf16.gmra.mxu0 %v449
  %v638 = vpop.f32.mrf.mxu0
  %v639 = vadd.f32 0.0, %v638
  %v640 = vpop.f32.mrf.mxu0
  %v641 = vadd.f32 0.0, %v640
  %642 = vmatmul.bf16.gmra.mxu0 %v452
  %v643 = vpop.f32.mrf.mxu0
  %v644 = vadd.f32 0.0, %v643
  %v645 = vpop.f32.mrf.mxu0
  %v646 = vadd.f32 0.0, %v645
  %647 = vmatmul.bf16.gmra.mxu0 %v455
  %v648 = vpop.f32.mrf.mxu0
  %v649 = vadd.f32 0.0, %v648
  %v650 = vpop.f32.mrf.mxu0
  %v651 = vadd.f32 0.0, %v650
  %652 = vdwg.mxu0
  %653 = vmatpush.bf16.msra.mxu0 0
  %654 = vmatpush.bf16.msra.mxu0 0
  %655 = vmatpush.bf16.msra.mxu0 0
  %656 = vmatpush.bf16.msra.mxu0 0
  %657 = vmatpush.bf16.msra.mxu0 %v397
  %658 = vmatpush.bf16.msra.mxu0 %v389
  %659 = vmatpush.bf16.msra.mxu0 %v381
  %660 = vmatpush.bf16.msra.mxu0 %v373
  %661 = vmatmul.bf16.gmra.mxu0 %v434
  %v662 = vpop.f32.mrf.mxu0
  %v663 = vadd.f32 0.0, %v662
  %v664 = vpop.f32.mrf.mxu0
  %v665 = vadd.f32 0.0, %v664
  %666 = vmatmul.bf16.gmra.mxu0 %v437
  %v667 = vpop.f32.mrf.mxu0
  %v668 = vadd.f32 0.0, %v667
  %v669 = vpop.f32.mrf.mxu0
  %v670 = vadd.f32 0.0, %v669
  %671 = vmatmul.bf16.gmra.mxu0 %v440
  %v672 = vpop.f32.mrf.mxu0
  %v673 = vadd.f32 0.0, %v672
  %v674 = vpop.f32.mrf.mxu0
  %v675 = vadd.f32 0.0, %v674
  %676 = vmatmul.bf16.gmra.mxu0 %v443
  %v677 = vpop.f32.mrf.mxu0
  %v678 = vadd.f32 0.0, %v677
  %v679 = vpop.f32.mrf.mxu0
  %v680 = vadd.f32 0.0, %v679
  %681 = vmatmul.bf16.gmra.mxu0 %v446
  %v682 = vpop.f32.mrf.mxu0
  %v683 = vadd.f32 0.0, %v682
  %v684 = vpop.f32.mrf.mxu0
  %v685 = vadd.f32 0.0, %v684
  %686 = vmatmul.bf16.gmra.mxu0 %v449
  %v687 = vpop.f32.mrf.mxu0
  %v688 = vadd.f32 0.0, %v687
  %v689 = vpop.f32.mrf.mxu0
  %v690 = vadd.f32 0.0, %v689
  %691 = vmatmul.bf16.gmra.mxu0 %v452
  %v692 = vpop.f32.mrf.mxu0
  %v693 = vadd.f32 0.0, %v692
  %v694 = vpop.f32.mrf.mxu0
  %v695 = vadd.f32 0.0, %v694
  %696 = vmatmul.bf16.gmra.mxu0 %v455
  %v697 = vpop.f32.mrf.mxu0
  %v698 = vadd.f32 0.0, %v697
  %v699 = vpop.f32.mrf.mxu0
  %v700 = vadd.f32 0.0, %v699
  %701 = vdwg.mxu0
  %702 = vmatpush.bf16.msra.mxu0 0
  %703 = vmatpush.bf16.msra.mxu0 0
  %704 = vmatpush.bf16.msra.mxu0 0
  %705 = vmatpush.bf16.msra.mxu0 0
  %706 = vmatpush.bf16.msra.mxu0 %v398
  %707 = vmatpush.bf16.msra.mxu0 %v390
  %708 = vmatpush.bf16.msra.mxu0 %v382
  %709 = vmatpush.bf16.msra.mxu0 %v374
  %710 = vmatmul.bf16.gmra.mxu0 %v434
  %v711 = vpop.f32.mrf.mxu0
  %v712 = vadd.f32 0.0, %v711
  %v713 = vpop.f32.mrf.mxu0
  %v714 = vadd.f32 0.0, %v713
  %715 = vmatmul.bf16.gmra.mxu0 %v437
  %v716 = vpop.f32.mrf.mxu0
  %v717 = vadd.f32 0.0, %v716
  %v718 = vpop.f32.mrf.mxu0
  %v719 = vadd.f32 0.0, %v718
  %720 = vmatmul.bf16.gmra.mxu0 %v440
  %v721 = vpop.f32.mrf.mxu0
  %v722 = vadd.f32 0.0, %v721
  %v723 = vpop.f32.mrf.mxu0
  %v724 = vadd.f32 0.0, %v723
  %725 = vmatmul.bf16.gmra.mxu0 %v443
  %v726 = vpop.f32.mrf.mxu0
  %v727 = vadd.f32 0.0, %v726
  %v728 = vpop.f32.mrf.mxu0
  %v729 = vadd.f32 0.0, %v728
  %730 = vmatmul.bf16.gmra.mxu0 %v446
  %v731 = vpop.f32.mrf.mxu0
  %v732 = vadd.f32 0.0, %v731
  %v733 = vpop.f32.mrf.mxu0
  %v734 = vadd.f32 0.0, %v733
  %735 = vmatmul.bf16.gmra.mxu0 %v449
  %v736 = vpop.f32.mrf.mxu0
  %v737 = vadd.f32 0.0, %v736
  %v738 = vpop.f32.mrf.mxu0
  %v739 = vadd.f32 0.0, %v738
  %740 = vmatmul.bf16.gmra.mxu0 %v452
  %v741 = vpop.f32.mrf.mxu0
  %v742 = vadd.f32 0.0, %v741
  %v743 = vpop.f32.mrf.mxu0
  %v744 = vadd.f32 0.0, %v743
  %745 = vmatmul.bf16.gmra.mxu0 %v455
  %v746 = vpop.f32.mrf.mxu0
  %v747 = vadd.f32 0.0, %v746
  %v748 = vpop.f32.mrf.mxu0
  %v749 = vadd.f32 0.0, %v748
  %750 = vdwg.mxu0
  %751 = vmatpush.bf16.msra.mxu0 0
  %752 = vmatpush.bf16.msra.mxu0 0
  %753 = vmatpush.bf16.msra.mxu0 0
  %754 = vmatpush.bf16.msra.mxu0 0
  %755 = vmatpush.bf16.msra.mxu0 %v399
  %756 = vmatpush.bf16.msra.mxu0 %v391
  %757 = vmatpush.bf16.msra.mxu0 %v383
  %758 = vmatpush.bf16.msra.mxu0 %v375
  %759 = vmatmul.bf16.gmra.mxu0 %v434
  %v760 = vpop.f32.mrf.mxu0
  %v761 = vadd.f32 0.0, %v760
  %v762 = vpop.f32.mrf.mxu0
  %v763 = vadd.f32 0.0, %v762
  %764 = vmatmul.bf16.gmra.mxu0 %v437
  %v765 = vpop.f32.mrf.mxu0
  %v766 = vadd.f32 0.0, %v765
  %v767 = vpop.f32.mrf.mxu0
  %v768 = vadd.f32 0.0, %v767
  %769 = vmatmul.bf16.gmra.mxu0 %v440
  %v770 = vpop.f32.mrf.mxu0
  %v771 = vadd.f32 0.0, %v770
  %v772 = vpop.f32.mrf.mxu0
  %v773 = vadd.f32 0.0, %v772
  %774 = vmatmul.bf16.gmra.mxu0 %v443
  %v775 = vpop.f32.mrf.mxu0
  %v776 = vadd.f32 0.0, %v775
  %v777 = vpop.f32.mrf.mxu0
  %v778 = vadd.f32 0.0, %v777
  %779 = vmatmul.bf16.gmra.mxu0 %v446
  %v780 = vpop.f32.mrf.mxu0
  %v781 = vadd.f32 0.0, %v780
  %v782 = vpop.f32.mrf.mxu0
  %v783 = vadd.f32 0.0, %v782
  %784 = vmatmul.bf16.gmra.mxu0 %v449
  %v785 = vpop.f32.mrf.mxu0
  %v786 = vadd.f32 0.0, %v785
  %v787 = vpop.f32.mrf.mxu0
  %v788 = vadd.f32 0.0, %v787
  %789 = vmatmul.bf16.gmra.mxu0 %v452
  %v790 = vpop.f32.mrf.mxu0
  %v791 = vadd.f32 0.0, %v790
  %v792 = vpop.f32.mrf.mxu0
  %v793 = vadd.f32 0.0, %v792
  %794 = vmatmul.bf16.gmra.mxu0 %v455
  %v795 = vpop.f32.mrf.mxu0
  %v796 = vadd.f32 0.0, %v795
  %v797 = vpop.f32.mrf.mxu0
  %v798 = vadd.f32 0.0, %v797
  %799 = vdwg.mxu0
  %800 = vmatpush.bf16.msra.mxu0 0
  %801 = vmatpush.bf16.msra.mxu0 0
  %802 = vmatpush.bf16.msra.mxu0 0
  %803 = vmatpush.bf16.msra.mxu0 0
  %804 = vmatpush.bf16.msra.mxu0 %v400
  %805 = vmatpush.bf16.msra.mxu0 %v392
  %806 = vmatpush.bf16.msra.mxu0 %v384
  %807 = vmatpush.bf16.msra.mxu0 %v376
  %808 = vmatmul.bf16.gmra.mxu0 %v434
  %v809 = vpop.f32.mrf.mxu0
  %v810 = vadd.f32 0.0, %v809
  %v811 = vpop.f32.mrf.mxu0
  %v812 = vadd.f32 0.0, %v811
  %813 = vmatmul.bf16.gmra.mxu0 %v437
  %v814 = vpop.f32.mrf.mxu0
  %v815 = vadd.f32 0.0, %v814
  %v816 = vpop.f32.mrf.mxu0
  %v817 = vadd.f32 0.0, %v816
  %818 = vmatmul.bf16.gmra.mxu0 %v440
  %v819 = vpop.f32.mrf.mxu0
  %v820 = vadd.f32 0.0, %v819
  %v821 = vpop.f32.mrf.mxu0
  %v822 = vadd.f32 0.0, %v821
  %823 = vmatmul.bf16.gmra.mxu0 %v443
  %v824 = vpop.f32.mrf.mxu0
  %v825 = vadd.f32 0.0, %v824
  %v826 = vpop.f32.mrf.mxu0
  %v827 = vadd.f32 0.0, %v826
  %828 = vmatmul.bf16.gmra.mxu0 %v446
  %v829 = vpop.f32.mrf.mxu0
  %v830 = vadd.f32 0.0, %v829
  %v831 = vpop.f32.mrf.mxu0
  %v832 = vadd.f32 0.0, %v831
  %833 = vmatmul.bf16.gmra.mxu0 %v449
  %v834 = vpop.f32.mrf.mxu0
  %v835 = vadd.f32 0.0, %v834
  %v836 = vpop.f32.mrf.mxu0
  %v837 = vadd.f32 0.0, %v836
  %838 = vmatmul.bf16.gmra.mxu0 %v452
  %v839 = vpop.f32.mrf.mxu0
  %v840 = vadd.f32 0.0, %v839
  %v841 = vpop.f32.mrf.mxu0
  %v842 = vadd.f32 0.0, %v841
  %843 = vmatmul.bf16.gmra.mxu0 %v455
  %v844 = vpop.f32.mrf.mxu0
  %v845 = vadd.f32 0.0, %v844
  %v846 = vpop.f32.mrf.mxu0
  %v847 = vadd.f32 0.0, %v846
  %848 = vdwg.mxu0
  %849 = vst [vmem:[%s4] sm:$0xff] %v467
  %850 = vst [vmem:[%s4 + $0x8] sm:$0xff] %v516
  %851 = vst [vmem:[%s4 + $0x10] sm:$0xff] %v565
  %852 = vst [vmem:[%s4 + $0x18] sm:$0xff] %v614
  %853 = vst [vmem:[%s4 + $0x20] sm:$0xff] %v663
  %854 = vst [vmem:[%s4 + $0x28] sm:$0xff] %v712
  %855 = vst [vmem:[%s4 + $0x30] sm:$0xff] %v761
  %856 = vst [vmem:[%s4 + $0x38] sm:$0xff] %v810
  %857 = vst [vmem:[%s4 + $0x40] sm:$0xff] %v469
  %858 = vst [vmem:[%s4 + $0x48] sm:$0xff] %v518
  %859 = vst [vmem:[%s4 + $0x50] sm:$0xff] %v567
  %860 = vst [vmem:[%s4 + $0x58] sm:$0xff] %v616
  %861 = vst [vmem:[%s4 + $0x60] sm:$0xff] %v665
  %862 = vst [vmem:[%s4 + $0x68] sm:$0xff] %v714
  %863 = vst [vmem:[%s4 + $0x70] sm:$0xff] %v763
  %864 = vst [vmem:[%s4 + $0x78] sm:$0xff] %v812
  %865 = vst [vmem:[%s4 + $0x80] sm:$0xff] %v472
  %866 = vst [vmem:[%s4 + $0x88] sm:$0xff] %v521
  %867 = vst [vmem:[%s4 + $0x90] sm:$0xff] %v570
  %868 = vst [vmem:[%s4 + $0x98] sm:$0xff] %v619
  %869 = vst [vmem:[%s4 + $0xa0] sm:$0xff] %v668
  %870 = vst [vmem:[%s4 + $0xa8] sm:$0xff] %v717
  %871 = vst [vmem:[%s4 + $0xb0] sm:$0xff] %v766
  %872 = vst [vmem:[%s4 + $0xb8] sm:$0xff] %v815
  %873 = vst [vmem:[%s4 + $0xc0] sm:$0xff] %v474
  %874 = vst [vmem:[%s4 + $0xc8] sm:$0xff] %v523
  %875 = vst [vmem:[%s4 + $0xd0] sm:$0xff] %v572
  %876 = vst [vmem:[%s4 + $0xd8] sm:$0xff] %v621
  %877 = vst [vmem:[%s4 + $0xe0] sm:$0xff] %v670
  %878 = vst [vmem:[%s4 + $0xe8] sm:$0xff] %v719
  %879 = vst [vmem:[%s4 + $0xf0] sm:$0xff] %v768
  %880 = vst [vmem:[%s4 + $0xf8] sm:$0xff] %v817
  %881 = vst [vmem:[%s4 + $0x100] sm:$0xff] %v477
  %882 = vst [vmem:[%s4 + $0x108] sm:$0xff] %v526
  %883 = vst [vmem:[%s4 + $0x110] sm:$0xff] %v575
  %884 = vst [vmem:[%s4 + $0x118] sm:$0xff] %v624
  %885 = vst [vmem:[%s4 + $0x120] sm:$0xff] %v673
  %886 = vst [vmem:[%s4 + $0x128] sm:$0xff] %v722
  %887 = vst [vmem:[%s4 + $0x130] sm:$0xff] %v771
  %888 = vst [vmem:[%s4 + $0x138] sm:$0xff] %v820
  %889 = vst [vmem:[%s4 + $0x140] sm:$0xff] %v479
  %890 = vst [vmem:[%s4 + $0x148] sm:$0xff] %v528
  %891 = vst [vmem:[%s4 + $0x150] sm:$0xff] %v577
  %892 = vst [vmem:[%s4 + $0x158] sm:$0xff] %v626
  %893 = vst [vmem:[%s4 + $0x160] sm:$0xff] %v675
  %894 = vst [vmem:[%s4 + $0x168] sm:$0xff] %v724
  %895 = vst [vmem:[%s4 + $0x170] sm:$0xff] %v773
  %896 = vst [vmem:[%s4 + $0x178] sm:$0xff] %v822
  %897 = vst [vmem:[%s4 + $0x180] sm:$0xff] %v482
  %898 = vst [vmem:[%s4 + $0x188] sm:$0xff] %v531
  %899 = vst [vmem:[%s4 + $0x190] sm:$0xff] %v580
  %900 = vst [vmem:[%s4 + $0x198] sm:$0xff] %v629
  %901 = vst [vmem:[%s4 + $0x1a0] sm:$0xff] %v678
  %902 = vst [vmem:[%s4 + $0x1a8] sm:$0xff] %v727
  %903 = vst [vmem:[%s4 + $0x1b0] sm:$0xff] %v776
  %904 = vst [vmem:[%s4 + $0x1b8] sm:$0xff] %v825
  %905 = vst [vmem:[%s4 + $0x1c0] sm:$0xff] %v484
  %906 = vst [vmem:[%s4 + $0x1c8] sm:$0xff] %v533
  %907 = vst [vmem:[%s4 + $0x1d0] sm:$0xff] %v582
  %908 = vst [vmem:[%s4 + $0x1d8] sm:$0xff] %v631
  %909 = vst [vmem:[%s4 + $0x1e0] sm:$0xff] %v680
  %910 = vst [vmem:[%s4 + $0x1e8] sm:$0xff] %v729
  %911 = vst [vmem:[%s4 + $0x1f0] sm:$0xff] %v778
  %912 = vst [vmem:[%s4 + $0x1f8] sm:$0xff] %v827
  %913 = vst [vmem:[%s4 + $0x200] sm:$0xff] %v487
  %914 = vst [vmem:[%s4 + $0x208] sm:$0xff] %v536
  %915 = vst [vmem:[%s4 + $0x210] sm:$0xff] %v585
  %916 = vst [vmem:[%s4 + $0x218] sm:$0xff] %v634
  %917 = vst [vmem:[%s4 + $0x220] sm:$0xff] %v683
  %918 = vst [vmem:[%s4 + $0x228] sm:$0xff] %v732
  %919 = vst [vmem:[%s4 + $0x230] sm:$0xff] %v781
  %920 = vst [vmem:[%s4 + $0x238] sm:$0xff] %v830
  %921 = vst [vmem:[%s4 + $0x240] sm:$0xff] %v489
  %922 = vst [vmem:[%s4 + $0x248] sm:$0xff] %v538
  %923 = vst [vmem:[%s4 + $0x250] sm:$0xff] %v587
  %924 = vst [vmem:[%s4 + $0x258] sm:$0xff] %v636
  %925 = vst [vmem:[%s4 + $0x260] sm:$0xff] %v685
  %926 = vst [vmem:[%s4 + $0x268] sm:$0xff] %v734
  %927 = vst [vmem:[%s4 + $0x270] sm:$0xff] %v783
  %928 = vst [vmem:[%s4 + $0x278] sm:$0xff] %v832
  %929 = vst [vmem:[%s4 + $0x280] sm:$0xff] %v492
  %930 = vst [vmem:[%s4 + $0x288] sm:$0xff] %v541
  %931 = vst [vmem:[%s4 + $0x290] sm:$0xff] %v590
  %932 = vst [vmem:[%s4 + $0x298] sm:$0xff] %v639
  %933 = vst [vmem:[%s4 + $0x2a0] sm:$0xff] %v688
  %934 = vst [vmem:[%s4 + $0x2a8] sm:$0xff] %v737
  %935 = vst [vmem:[%s4 + $0x2b0] sm:$0xff] %v786
  %936 = vst [vmem:[%s4 + $0x2b8] sm:$0xff] %v835
  %937 = vst [vmem:[%s4 + $0x2c0] sm:$0xff] %v494
  %938 = vst [vmem:[%s4 + $0x2c8] sm:$0xff] %v543
  %939 = vst [vmem:[%s4 + $0x2d0] sm:$0xff] %v592
  %940 = vst [vmem:[%s4 + $0x2d8] sm:$0xff] %v641
  %941 = vst [vmem:[%s4 + $0x2e0] sm:$0xff] %v690
  %942 = vst [vmem:[%s4 + $0x2e8] sm:$0xff] %v739
  %943 = vst [vmem:[%s4 + $0x2f0] sm:$0xff] %v788
  %944 = vst [vmem:[%s4 + $0x2f8] sm:$0xff] %v837
  %945 = vst [vmem:[%s4 + $0x300] sm:$0xff] %v497
  %946 = vst [vmem:[%s4 + $0x308] sm:$0xff] %v546
  %947 = vst [vmem:[%s4 + $0x310] sm:$0xff] %v595
  %948 = vst [vmem:[%s4 + $0x318] sm:$0xff] %v644
  %949 = vst [vmem:[%s4 + $0x320] sm:$0xff] %v693
  %950 = vst [vmem:[%s4 + $0x328] sm:$0xff] %v742
  %951 = vst [vmem:[%s4 + $0x330] sm:$0xff] %v791
  %952 = vst [vmem:[%s4 + $0x338] sm:$0xff] %v840
  %953 = vst [vmem:[%s4 + $0x340] sm:$0xff] %v499
  %954 = vst [vmem:[%s4 + $0x348] sm:$0xff] %v548
  %955 = vst [vmem:[%s4 + $0x350] sm:$0xff] %v597
  %956 = vst [vmem:[%s4 + $0x358] sm:$0xff] %v646
  %957 = vst [vmem:[%s4 + $0x360] sm:$0xff] %v695
  %958 = vst [vmem:[%s4 + $0x368] sm:$0xff] %v744
  %959 = vst [vmem:[%s4 + $0x370] sm:$0xff] %v793
  %960 = vst [vmem:[%s4 + $0x378] sm:$0xff] %v842
  %961 = vst [vmem:[%s4 + $0x380] sm:$0xff] %v502
  %962 = vst [vmem:[%s4 + $0x388] sm:$0xff] %v551
  %963 = vst [vmem:[%s4 + $0x390] sm:$0xff] %v600
  %964 = vst [vmem:[%s4 + $0x398] sm:$0xff] %v649
  %965 = vst [vmem:[%s4 + $0x3a0] sm:$0xff] %v698
  %966 = vst [vmem:[%s4 + $0x3a8] sm:$0xff] %v747
  %967 = vst [vmem:[%s4 + $0x3b0] sm:$0xff] %v796
  %968 = vst [vmem:[%s4 + $0x3b8] sm:$0xff] %v845
  %969 = vst [vmem:[%s4 + $0x3c0] sm:$0xff] %v504
  %970 = vst [vmem:[%s4 + $0x3c8] sm:$0xff] %v553
  %971 = vst [vmem:[%s4 + $0x3d0] sm:$0xff] %v602
  %972 = vst [vmem:[%s4 + $0x3d8] sm:$0xff] %v651
  %973 = vst [vmem:[%s4 + $0x3e0] sm:$0xff] %v700
  %974 = vst [vmem:[%s4 + $0x3e8] sm:$0xff] %v749
  %975 = vst [vmem:[%s4 + $0x3f0] sm:$0xff] %v798
  %976 = vst [vmem:[%s4 + $0x3f8] sm:$0xff] %v847
  // Predicated region
  $region18: #{netG_forward.18} parent=0 // pred_check
    _
  $region19: #{netG_forward.18} parent=0 // pred_check_branch
    %978 = sbr.rel (0) target = $region21
  $region20: #{netG_forward.18} parent=0 // pred_region
    _
  $region21: #{netG_forward.18} parent=0 // pred_fallthru
    _
  // Predicated region
  $region22: #{netG_forward.18} parent=0 // pred_check
    _
  $region23: #{netG_forward.18} parent=0 // pred_check_branch
    %980 = sbr.rel (0) target = $region25
  $region24: #{netG_forward.18} parent=0 // pred_region
    _
  $region25: #{netG_forward.18} parent=0 // pred_fallthru
    _

// kernel: netG_forward.23
$region0: #{netG_forward.23}
  #allocation0 [shape = 'u32[]', space=smem, size = 0x4, offset = 0x4, fixed_abs, tag = 'smem constant byte address 0x4 - core index']
  #allocation1 [shape = 'u32[72,128]{1,0:T(1,128)}', space=vmem, size = 0x9000, scoped, tag = 'internal scratch']
  %s0 = inlined_call_operand.vmem [shape: f32[512,64], index: 0, kind: input, shape index: {}]
  %s1 = inlined_call_operand.vmem [shape: f32[1,64], index: 1, kind: input, shape index: {}]
  %s2 = inlined_call_operand.vmem [shape: f32[1,64], index: 2, kind: input, shape index: {}]
  %s3 = inlined_call_operand.vmem [shape: bf16[64,128], index: 3, kind: input, shape index: {}]
  %s4 = inlined_call_operand.vmem [shape: f32[512,128], index: 4, kind: output, shape index: {0}]
  %s5 = inlined_call_operand.hbm [shape: f32[512,64], index: 5, kind: output, shape index: {1}]
  %6 = xla_tuple %s4, %s5
  %s7 = sld [smem:[#allocation0]]
  $region34: #{netG_forward.23} parent=0
    _
  %s9 = ssub.s32 1, %s7
  %s10 = scalar_select 0, %s9, %s7
  $region1: #{netG_forward.23} parent=0
    #allocation2 [shape = 'u8[262144]{0}', space=vmem, size = 0x40000, scoped, tag = 'output window, operand 1, single buffered']
    #allocation3 [shape = 's32[1]{0}', space=sflag, size = 0x4, scoped, tag = 'scoped memory for netG_forward.23']
    %11 = vsyncpa [#allocation3], 0
    // Predicated region
    $region2: #{netG_forward.23} parent=1 // pred_check
      _
    $region3: #{netG_forward.23} parent=1 // pred_check_branch
      %13 = sbr.rel (0) target = $region5
    $region4: #{netG_forward.23} parent=1 // pred_region
      _
    $region5: #{netG_forward.23} parent=1 // pred_fallthru
      _
    // Predicated region
    $region6: #{netG_forward.23} parent=1 // pred_check
      _
    $region7: #{netG_forward.23} parent=1 // pred_check_branch
      %15 = sbr.rel (0) target = $region9
    $region8: #{netG_forward.23} parent=1 // pred_region
      _
    $region9: #{netG_forward.23} parent=1 // pred_fallthru
      _
    // Predicated region
    $region10: #{netG_forward.23} parent=1 // pred_check
      _
    $region11: #{netG_forward.23} parent=1 // pred_check_branch
      %17 = sbr.rel (0) target = $region13
    $region12: #{netG_forward.23} parent=1 // pred_region
      _
    $region13: #{netG_forward.23} parent=1 // pred_fallthru
      _
    // Predicated region
    $region14: #{netG_forward.23} parent=1 // pred_check
      _
    $region15: #{netG_forward.23} parent=1 // pred_check_branch
      %19 = sbr.rel (0) target = $region17
    $region16: #{netG_forward.23} parent=1 // pred_region
      _
    $region17: #{netG_forward.23} parent=1 // pred_fallthru
      _
    %v21 = vld [vmem:[%s0] sm:$0xff]
    %v22 = vld [vmem:[%s0 + $0x8] sm:$0xff]
    %v23 = vld [vmem:[%s0 + $0x10] sm:$0xff]
    %v24 = vld [vmem:[%s0 + $0x18] sm:$0xff]
    %v25 = vld [vmem:[%s0 + $0x20] sm:$0xff]
    %v26 = vld [vmem:[%s0 + $0x28] sm:$0xff]
    %v27 = vld [vmem:[%s0 + $0x30] sm:$0xff]
    %v28 = vld [vmem:[%s0 + $0x38] sm:$0xff]
    %v29 = vld [vmem:[%s0 + $0x40] sm:$0xff]
    %v30 = vld [vmem:[%s0 + $0x48] sm:$0xff]
    %v31 = vld [vmem:[%s0 + $0x50] sm:$0xff]
    %v32 = vld [vmem:[%s0 + $0x58] sm:$0xff]
    %v33 = vld [vmem:[%s0 + $0x60] sm:$0xff]
    %v34 = vld [vmem:[%s0 + $0x68] sm:$0xff]
    %v35 = vld [vmem:[%s0 + $0x70] sm:$0xff]
    %v36 = vld [vmem:[%s0 + $0x78] sm:$0xff]
    %v37 = vld [vmem:[%s0 + $0x80] sm:$0xff]
    %v38 = vld [vmem:[%s0 + $0x88] sm:$0xff]
    %v39 = vld [vmem:[%s0 + $0x90] sm:$0xff]
    %v40 = vld [vmem:[%s0 + $0x98] sm:$0xff]
    %v41 = vld [vmem:[%s0 + $0xa0] sm:$0xff]
    %v42 = vld [vmem:[%s0 + $0xa8] sm:$0xff]
    %v43 = vld [vmem:[%s0 + $0xb0] sm:$0xff]
    %v44 = vld [vmem:[%s0 + $0xb8] sm:$0xff]
    %v45 = vld [vmem:[%s0 + $0xc0] sm:$0xff]
    %v46 = vld [vmem:[%s0 + $0xc8] sm:$0xff]
    %v47 = vld [vmem:[%s0 + $0xd0] sm:$0xff]
    %v48 = vld [vmem:[%s0 + $0xd8] sm:$0xff]
    %v49 = vld [vmem:[%s0 + $0xe0] sm:$0xff]
    %v50 = vld [vmem:[%s0 + $0xe8] sm:$0xff]
    %v51 = vld [vmem:[%s0 + $0xf0] sm:$0xff]
    %v52 = vld [vmem:[%s0 + $0xf8] sm:$0xff]
    %v53 = vld [vmem:[%s0 + $0x100] sm:$0xff]
    %v54 = vld [vmem:[%s0 + $0x108] sm:$0xff]
    %v55 = vld [vmem:[%s0 + $0x110] sm:$0xff]
    %v56 = vld [vmem:[%s0 + $0x118] sm:$0xff]
    %v57 = vld [vmem:[%s0 + $0x120] sm:$0xff]
    %v58 = vld [vmem:[%s0 + $0x128] sm:$0xff]
    %v59 = vld [vmem:[%s0 + $0x130] sm:$0xff]
    %v60 = vld [vmem:[%s0 + $0x138] sm:$0xff]
    %v61 = vld [vmem:[%s0 + $0x140] sm:$0xff]
    %v62 = vld [vmem:[%s0 + $0x148] sm:$0xff]
    %v63 = vld [vmem:[%s0 + $0x150] sm:$0xff]
    %v64 = vld [vmem:[%s0 + $0x158] sm:$0xff]
    %v65 = vld [vmem:[%s0 + $0x160] sm:$0xff]
    %v66 = vld [vmem:[%s0 + $0x168] sm:$0xff]
    %v67 = vld [vmem:[%s0 + $0x170] sm:$0xff]
    %v68 = vld [vmem:[%s0 + $0x178] sm:$0xff]
    %v69 = vld [vmem:[%s0 + $0x180] sm:$0xff]
    %v70 = vld [vmem:[%s0 + $0x188] sm:$0xff]
    %v71 = vld [vmem:[%s0 + $0x190] sm:$0xff]
    %v72 = vld [vmem:[%s0 + $0x198] sm:$0xff]
    %v73 = vld [vmem:[%s0 + $0x1a0] sm:$0xff]
    %v74 = vld [vmem:[%s0 + $0x1a8] sm:$0xff]
    %v75 = vld [vmem:[%s0 + $0x1b0] sm:$0xff]
    %v76 = vld [vmem:[%s0 + $0x1b8] sm:$0xff]
    %v77 = vld [vmem:[%s0 + $0x1c0] sm:$0xff]
    %v78 = vld [vmem:[%s0 + $0x1c8] sm:$0xff]
    %v79 = vld [vmem:[%s0 + $0x1d0] sm:$0xff]
    %v80 = vld [vmem:[%s0 + $0x1d8] sm:$0xff]
    %v81 = vld [vmem:[%s0 + $0x1e0] sm:$0xff]
    %v82 = vld [vmem:[%s0 + $0x1e8] sm:$0xff]
    %v83 = vld [vmem:[%s0 + $0x1f0] sm:$0xff]
    %v84 = vld [vmem:[%s0 + $0x1f8] sm:$0xff]
    %v85 = vld [vmem:[%s1] sm:$0x1]
    %v86 = vld [vmem:[%s2] sm:$0x1]
    %vm87 = vcmask 523264
    %v88 = vsel %vm87, %v21, 0.0
    %v89 = vsel %vm87, %v22, 0.0
    %v90 = vadd.f32 %v88, %v89
    %v91 = vsel %vm87, %v23, 0.0
    %v92 = vadd.f32 %v90, %v91
    %v93 = vsel %vm87, %v24, 0.0
    %v94 = vadd.f32 %v92, %v93
    %v95 = vsel %vm87, %v25, 0.0
    %v96 = vadd.f32 %v94, %v95
    %v97 = vsel %vm87, %v26, 0.0
    %v98 = vadd.f32 %v96, %v97
    %v99 = vsel %vm87, %v27, 0.0
    %v100 = vadd.f32 %v98, %v99
    %v101 = vsel %vm87, %v28, 0.0
    %v102 = vadd.f32 %v100, %v101
    %v103 = vsel %vm87, %v29, 0.0
    %v104 = vadd.f32 %v102, %v103
    %v105 = vsel %vm87, %v30, 0.0
    %v106 = vadd.f32 %v104, %v105
    %v107 = vsel %vm87, %v31, 0.0
    %v108 = vadd.f32 %v106, %v107
    %v109 = vsel %vm87, %v32, 0.0
    %v110 = vadd.f32 %v108, %v109
    %v111 = vsel %vm87, %v33, 0.0
    %v112 = vadd.f32 %v110, %v111
    %v113 = vsel %vm87, %v34, 0.0
    %v114 = vadd.f32 %v112, %v113
    %v115 = vsel %vm87, %v35, 0.0
    %v116 = vadd.f32 %v114, %v115
    %v117 = vsel %vm87, %v36, 0.0
    %v118 = vadd.f32 %v116, %v117
    %v119 = vsel %vm87, %v37, 0.0
    %v120 = vadd.f32 %v118, %v119
    %v121 = vsel %vm87, %v38, 0.0
    %v122 = vadd.f32 %v120, %v121
    %v123 = vsel %vm87, %v39, 0.0
    %v124 = vadd.f32 %v122, %v123
    %v125 = vsel %vm87, %v40, 0.0
    %v126 = vadd.f32 %v124, %v125
    %v127 = vsel %vm87, %v41, 0.0
    %v128 = vadd.f32 %v126, %v127
    %v129 = vsel %vm87, %v42, 0.0
    %v130 = vadd.f32 %v128, %v129
    %v131 = vsel %vm87, %v43, 0.0
    %v132 = vadd.f32 %v130, %v131
    %v133 = vsel %vm87, %v44, 0.0
    %v134 = vadd.f32 %v132, %v133
    %v135 = vsel %vm87, %v45, 0.0
    %v136 = vadd.f32 %v134, %v135
    %v137 = vsel %vm87, %v46, 0.0
    %v138 = vadd.f32 %v136, %v137
    %v139 = vsel %vm87, %v47, 0.0
    %v140 = vadd.f32 %v138, %v139
    %v141 = vsel %vm87, %v48, 0.0
    %v142 = vadd.f32 %v140, %v141
    %v143 = vsel %vm87, %v49, 0.0
    %v144 = vadd.f32 %v142, %v143
    %v145 = vsel %vm87, %v50, 0.0
    %v146 = vadd.f32 %v144, %v145
    %v147 = vsel %vm87, %v51, 0.0
    %v148 = vadd.f32 %v146, %v147
    %v149 = vsel %vm87, %v52, 0.0
    %v150 = vadd.f32 %v148, %v149
    %v151 = vsel %vm87, %v53, 0.0
    %v152 = vadd.f32 %v150, %v151
    %v153 = vsel %vm87, %v54, 0.0
    %v154 = vadd.f32 %v152, %v153
    %v155 = vsel %vm87, %v55, 0.0
    %v156 = vadd.f32 %v154, %v155
    %v157 = vsel %vm87, %v56, 0.0
    %v158 = vadd.f32 %v156, %v157
    %v159 = vsel %vm87, %v57, 0.0
    %v160 = vadd.f32 %v158, %v159
    %v161 = vsel %vm87, %v58, 0.0
    %v162 = vadd.f32 %v160, %v161
    %v163 = vsel %vm87, %v59, 0.0
    %v164 = vadd.f32 %v162, %v163
    %v165 = vsel %vm87, %v60, 0.0
    %v166 = vadd.f32 %v164, %v165
    %v167 = vsel %vm87, %v61, 0.0
    %v168 = vadd.f32 %v166, %v167
    %v169 = vsel %vm87, %v62, 0.0
    %v170 = vadd.f32 %v168, %v169
    %v171 = vsel %vm87, %v63, 0.0
    %v172 = vadd.f32 %v170, %v171
    %v173 = vsel %vm87, %v64, 0.0
    %v174 = vadd.f32 %v172, %v173
    %v175 = vsel %vm87, %v65, 0.0
    %v176 = vadd.f32 %v174, %v175
    %v177 = vsel %vm87, %v66, 0.0
    %v178 = vadd.f32 %v176, %v177
    %v179 = vsel %vm87, %v67, 0.0
    %v180 = vadd.f32 %v178, %v179
    %v181 = vsel %vm87, %v68, 0.0
    %v182 = vadd.f32 %v180, %v181
    %v183 = vsel %vm87, %v69, 0.0
    %v184 = vadd.f32 %v182, %v183
    %v185 = vsel %vm87, %v70, 0.0
    %v186 = vadd.f32 %v184, %v185
    %v187 = vsel %vm87, %v71, 0.0
    %v188 = vadd.f32 %v186, %v187
    %v189 = vsel %vm87, %v72, 0.0
    %v190 = vadd.f32 %v188, %v189
    %v191 = vsel %vm87, %v73, 0.0
    %v192 = vadd.f32 %v190, %v191
    %v193 = vsel %vm87, %v74, 0.0
    %v194 = vadd.f32 %v192, %v193
    %v195 = vsel %vm87, %v75, 0.0
    %v196 = vadd.f32 %v194, %v195
    %v197 = vsel %vm87, %v76, 0.0
    %v198 = vadd.f32 %v196, %v197
    %v199 = vsel %vm87, %v77, 0.0
    %v200 = vadd.f32 %v198, %v199
    %v201 = vsel %vm87, %v78, 0.0
    %v202 = vadd.f32 %v200, %v201
    %v203 = vsel %vm87, %v79, 0.0
    %v204 = vadd.f32 %v202, %v203
    %v205 = vsel %vm87, %v80, 0.0
    %v206 = vadd.f32 %v204, %v205
    %v207 = vsel %vm87, %v81, 0.0
    %v208 = vadd.f32 %v206, %v207
    %v209 = vsel %vm87, %v82, 0.0
    %v210 = vadd.f32 %v208, %v209
    %v211 = vsel %vm87, %v83, 0.0
    %v212 = vadd.f32 %v210, %v211
    %v213 = vsel %vm87, %v84, 0.0
    %v214 = vadd.f32 %v212, %v213
    %v215 = vrot.slane %v214, 4
    %v216 = vadd.f32 %v214, %v215
    %v217 = vrot.slane %v216, 2
    %v218 = vadd.f32 %v216, %v217
    %v219 = vrot.slane %v218, 1
    %v220 = vadd.f32 %v218, %v219
    %v221 = vrcp.pop 512.0
    %v222 = vmul.f32 512.0, %v221
    %v223 = vsub.f32 1.0, %v222
    %v224 = vmul.f32 %v221, %v223
    %v225 = vadd.f32 %v221, %v224
    %vm226 = vweird.f32 %v221
    %v227 = vsel %vm226, %v221, %v225
    %v228 = vmul.f32 %v220, %v227
    %v229 = vsub.f32 %v21, %v228
    %v230 = vsub.f32 %v22, %v228
    %v231 = vsub.f32 %v23, %v228
    %v232 = vsub.f32 %v24, %v228
    %v233 = vsub.f32 %v25, %v228
    %v234 = vsub.f32 %v26, %v228
    %v235 = vsub.f32 %v27, %v228
    %v236 = vsub.f32 %v28, %v228
    %v237 = vsub.f32 %v29, %v228
    %v238 = vsub.f32 %v30, %v228
    %v239 = vsub.f32 %v31, %v228
    %v240 = vsub.f32 %v32, %v228
    %v241 = vsub.f32 %v33, %v228
    %v242 = vsub.f32 %v34, %v228
    %v243 = vsub.f32 %v35, %v228
    %v244 = vsub.f32 %v36, %v228
    %v245 = vsub.f32 %v37, %v228
    %v246 = vsub.f32 %v38, %v228
    %v247 = vsub.f32 %v39, %v228
    %v248 = vsub.f32 %v40, %v228
    %v249 = vsub.f32 %v41, %v228
    %v250 = vsub.f32 %v42, %v228
    %v251 = vsub.f32 %v43, %v228
    %v252 = vsub.f32 %v44, %v228
    %v253 = vsub.f32 %v45, %v228
    %v254 = vsub.f32 %v46, %v228
    %v255 = vsub.f32 %v47, %v228
    %v256 = vsub.f32 %v48, %v228
    %v257 = vsub.f32 %v49, %v228
    %v258 = vsub.f32 %v50, %v228
    %v259 = vsub.f32 %v51, %v228
    %v260 = vsub.f32 %v52, %v228
    %v261 = vsub.f32 %v53, %v228
    %v262 = vsub.f32 %v54, %v228
    %v263 = vsub.f32 %v55, %v228
    %v264 = vsub.f32 %v56, %v228
    %v265 = vsub.f32 %v57, %v228
    %v266 = vsub.f32 %v58, %v228
    %v267 = vsub.f32 %v59, %v228
    %v268 = vsub.f32 %v60, %v228
    %v269 = vsub.f32 %v61, %v228
    %v270 = vsub.f32 %v62, %v228
    %v271 = vsub.f32 %v63, %v228
    %v272 = vsub.f32 %v64, %v228
    %v273 = vsub.f32 %v65, %v228
    %v274 = vsub.f32 %v66, %v228
    %v275 = vsub.f32 %v67, %v228
    %v276 = vsub.f32 %v68, %v228
    %v277 = vsub.f32 %v69, %v228
    %v278 = vsub.f32 %v70, %v228
    %v279 = vsub.f32 %v71, %v228
    %v280 = vsub.f32 %v72, %v228
    %v281 = vsub.f32 %v73, %v228
    %v282 = vsub.f32 %v74, %v228
    %v283 = vsub.f32 %v75, %v228
    %v284 = vsub.f32 %v76, %v228
    %v285 = vsub.f32 %v77, %v228
    %v286 = vsub.f32 %v78, %v228
    %v287 = vsub.f32 %v79, %v228
    %v288 = vsub.f32 %v80, %v228
    %v289 = vsub.f32 %v81, %v228
    %v290 = vsub.f32 %v82, %v228
    %v291 = vsub.f32 %v83, %v228
    %v292 = vsub.f32 %v84, %v228
    %v293 = vmul.f32 %v229, %v229
    %v294 = vmul.f32 %v230, %v230
    %v295 = vmul.f32 %v231, %v231
    %v296 = vmul.f32 %v232, %v232
    %v297 = vmul.f32 %v233, %v233
    %v298 = vmul.f32 %v234, %v234
    %v299 = vmul.f32 %v235, %v235
    %v300 = vmul.f32 %v236, %v236
    %v301 = vmul.f32 %v237, %v237
    %v302 = vmul.f32 %v238, %v238
    %v303 = vmul.f32 %v239, %v239
    %v304 = vmul.f32 %v240, %v240
    %v305 = vmul.f32 %v241, %v241
    %v306 = vmul.f32 %v242, %v242
    %v307 = vmul.f32 %v243, %v243
    %v308 = vmul.f32 %v244, %v244
    %v309 = vmul.f32 %v245, %v245
    %v310 = vmul.f32 %v246, %v246
    %v311 = vmul.f32 %v247, %v247
    %v312 = vmul.f32 %v248, %v248
    %v313 = vmul.f32 %v249, %v249
    %v314 = vmul.f32 %v250, %v250
    %v315 = vmul.f32 %v251, %v251
    %v316 = vmul.f32 %v252, %v252
    %v317 = vmul.f32 %v253, %v253
    %v318 = vmul.f32 %v254, %v254
    %v319 = vmul.f32 %v255, %v255
    %v320 = vmul.f32 %v256, %v256
    %v321 = vmul.f32 %v257, %v257
    %v322 = vmul.f32 %v258, %v258
    %v323 = vmul.f32 %v259, %v259
    %v324 = vmul.f32 %v260, %v260
    %v325 = vmul.f32 %v261, %v261
    %v326 = vmul.f32 %v262, %v262
    %v327 = vmul.f32 %v263, %v263
    %v328 = vmul.f32 %v264, %v264
    %v329 = vmul.f32 %v265, %v265
    %v330 = vmul.f32 %v266, %v266
    %v331 = vmul.f32 %v267, %v267
    %v332 = vmul.f32 %v268, %v268
    %v333 = vmul.f32 %v269, %v269
    %v334 = vmul.f32 %v270, %v270
    %v335 = vmul.f32 %v271, %v271
    %v336 = vmul.f32 %v272, %v272
    %v337 = vmul.f32 %v273, %v273
    %v338 = vmul.f32 %v274, %v274
    %v339 = vmul.f32 %v275, %v275
    %v340 = vmul.f32 %v276, %v276
    %v341 = vmul.f32 %v277, %v277
    %v342 = vmul.f32 %v278, %v278
    %v343 = vmul.f32 %v279, %v279
    %v344 = vmul.f32 %v280, %v280
    %v345 = vmul.f32 %v281, %v281
    %v346 = vmul.f32 %v282, %v282
    %v347 = vmul.f32 %v283, %v283
    %v348 = vmul.f32 %v284, %v284
    %v349 = vmul.f32 %v285, %v285
    %v350 = vmul.f32 %v286, %v286
    %v351 = vmul.f32 %v287, %v287
    %v352 = vmul.f32 %v288, %v288
    %v353 = vmul.f32 %v289, %v289
    %v354 = vmul.f32 %v290, %v290
    %v355 = vmul.f32 %v291, %v291
    %v356 = vmul.f32 %v292, %v292
    %v357 = vsel %vm87, %v293, 0.0
    %v358 = vsel %vm87, %v294, 0.0
    %v359 = vadd.f32 %v357, %v358
    %v360 = vsel %vm87, %v295, 0.0
    %v361 = vadd.f32 %v359, %v360
    %v362 = vsel %vm87, %v296, 0.0
    %v363 = vadd.f32 %v361, %v362
    %v364 = vsel %vm87, %v297, 0.0
    %v365 = vadd.f32 %v363, %v364
    %v366 = vsel %vm87, %v298, 0.0
    %v367 = vadd.f32 %v365, %v366
    %v368 = vsel %vm87, %v299, 0.0
    %v369 = vadd.f32 %v367, %v368
    %v370 = vsel %vm87, %v300, 0.0
    %v371 = vadd.f32 %v369, %v370
    %v372 = vsel %vm87, %v301, 0.0
    %v373 = vadd.f32 %v371, %v372
    %v374 = vsel %vm87, %v302, 0.0
    %v375 = vadd.f32 %v373, %v374
    %v376 = vsel %vm87, %v303, 0.0
    %v377 = vadd.f32 %v375, %v376
    %v378 = vsel %vm87, %v304, 0.0
    %v379 = vadd.f32 %v377, %v378
    %v380 = vsel %vm87, %v305, 0.0
    %v381 = vadd.f32 %v379, %v380
    %v382 = vsel %vm87, %v306, 0.0
    %v383 = vadd.f32 %v381, %v382
    %v384 = vsel %vm87, %v307, 0.0
    %v385 = vadd.f32 %v383, %v384
    %v386 = vsel %vm87, %v308, 0.0
    %v387 = vadd.f32 %v385, %v386
    %v388 = vsel %vm87, %v309, 0.0
    %v389 = vadd.f32 %v387, %v388
    %v390 = vsel %vm87, %v310, 0.0
    %v391 = vadd.f32 %v389, %v390
    %v392 = vsel %vm87, %v311, 0.0
    %v393 = vadd.f32 %v391, %v392
    %v394 = vsel %vm87, %v312, 0.0
    %v395 = vadd.f32 %v393, %v394
    %v396 = vsel %vm87, %v313, 0.0
    %v397 = vadd.f32 %v395, %v396
    %v398 = vsel %vm87, %v314, 0.0
    %v399 = vadd.f32 %v397, %v398
    %v400 = vsel %vm87, %v315, 0.0
    %v401 = vadd.f32 %v399, %v400
    %v402 = vsel %vm87, %v316, 0.0
    %v403 = vadd.f32 %v401, %v402
    %v404 = vsel %vm87, %v317, 0.0
    %v405 = vadd.f32 %v403, %v404
    %v406 = vsel %vm87, %v318, 0.0
    %v407 = vadd.f32 %v405, %v406
    %v408 = vsel %vm87, %v319, 0.0
    %v409 = vadd.f32 %v407, %v408
    %v410 = vsel %vm87, %v320, 0.0
    %v411 = vadd.f32 %v409, %v410
    %v412 = vsel %vm87, %v321, 0.0
    %v413 = vadd.f32 %v411, %v412
    %v414 = vsel %vm87, %v322, 0.0
    %v415 = vadd.f32 %v413, %v414
    %v416 = vsel %vm87, %v323, 0.0
    %v417 = vadd.f32 %v415, %v416
    %v418 = vsel %vm87, %v324, 0.0
    %v419 = vadd.f32 %v417, %v418
    %v420 = vsel %vm87, %v325, 0.0
    %v421 = vadd.f32 %v419, %v420
    %v422 = vsel %vm87, %v326, 0.0
    %v423 = vadd.f32 %v421, %v422
    %v424 = vsel %vm87, %v327, 0.0
    %v425 = vadd.f32 %v423, %v424
    %v426 = vsel %vm87, %v328, 0.0
    %v427 = vadd.f32 %v425, %v426
    %v428 = vsel %vm87, %v329, 0.0
    %v429 = vadd.f32 %v427, %v428
    %v430 = vsel %vm87, %v330, 0.0
    %v431 = vadd.f32 %v429, %v430
    %v432 = vsel %vm87, %v331, 0.0
    %v433 = vadd.f32 %v431, %v432
    %v434 = vsel %vm87, %v332, 0.0
    %v435 = vadd.f32 %v433, %v434
    %v436 = vsel %vm87, %v333, 0.0
    %v437 = vadd.f32 %v435, %v436
    %v438 = vsel %vm87, %v334, 0.0
    %v439 = vadd.f32 %v437, %v438
    %v440 = vsel %vm87, %v335, 0.0
    %v441 = vadd.f32 %v439, %v440
    %v442 = vsel %vm87, %v336, 0.0
    %v443 = vadd.f32 %v441, %v442
    %v444 = vsel %vm87, %v337, 0.0
    %v445 = vadd.f32 %v443, %v444
    %v446 = vsel %vm87, %v338, 0.0
    %v447 = vadd.f32 %v445, %v446
    %v448 = vsel %vm87, %v339, 0.0
    %v449 = vadd.f32 %v447, %v448
    %v450 = vsel %vm87, %v340, 0.0
    %v451 = vadd.f32 %v449, %v450
    %v452 = vsel %vm87, %v341, 0.0
    %v453 = vadd.f32 %v451, %v452
    %v454 = vsel %vm87, %v342, 0.0
    %v455 = vadd.f32 %v453, %v454
    %v456 = vsel %vm87, %v343, 0.0
    %v457 = vadd.f32 %v455, %v456
    %v458 = vsel %vm87, %v344, 0.0
    %v459 = vadd.f32 %v457, %v458
    %v460 = vsel %vm87, %v345, 0.0
    %v461 = vadd.f32 %v459, %v460
    %v462 = vsel %vm87, %v346, 0.0
    %v463 = vadd.f32 %v461, %v462
    %v464 = vsel %vm87, %v347, 0.0
    %v465 = vadd.f32 %v463, %v464
    %v466 = vsel %vm87, %v348, 0.0
    %v467 = vadd.f32 %v465, %v466
    %v468 = vsel %vm87, %v349, 0.0
    %v469 = vadd.f32 %v467, %v468
    %v470 = vsel %vm87, %v350, 0.0
    %v471 = vadd.f32 %v469, %v470
    %v472 = vsel %vm87, %v351, 0.0
    %v473 = vadd.f32 %v471, %v472
    %v474 = vsel %vm87, %v352, 0.0
    %v475 = vadd.f32 %v473, %v474
    %v476 = vsel %vm87, %v353, 0.0
    %v477 = vadd.f32 %v475, %v476
    %v478 = vsel %vm87, %v354, 0.0
    %v479 = vadd.f32 %v477, %v478
    %v480 = vsel %vm87, %v355, 0.0
    %v481 = vadd.f32 %v479, %v480
    %v482 = vsel %vm87, %v356, 0.0
    %v483 = vadd.f32 %v481, %v482
    %v484 = vrot.slane %v483, 4
    %v485 = vadd.f32 %v483, %v484
    %v486 = vrot.slane %v485, 2
    %v487 = vadd.f32 %v485, %v486
    %v488 = vrot.slane %v487, 1
    %v489 = vadd.f32 %v487, %v488
    %v490 = vmul.f32 %v489, %v227
    %v491 = vadd.f32 %v490, 1e-05
    %v492 = vrsqrt.pop %v491
    %v493 = vmul.f32 %v492, %v491
    %v494 = vmul.f32 %v493, %v492
    %v495 = vmul.f32 0.5, %v494
    %v496 = vsub.f32 1.5, %v495
    %v497 = vmul.f32 %v492, %v496
    %vm498 = vweird.f32 %v491
    %vm499 = vweird.f32 %v492
    %vm500 = vmor %vm498, %vm499
    %v501 = vsel %vm500, %v492, %v497
    %v502 = vmul.f32 %v229, %v501
    %v503 = vmul.f32 %v230, %v501
    %v504 = vmul.f32 %v231, %v501
    %v505 = vmul.f32 %v232, %v501
    %v506 = vmul.f32 %v233, %v501
    %v507 = vmul.f32 %v234, %v501
    %v508 = vmul.f32 %v235, %v501
    %v509 = vmul.f32 %v236, %v501
    %v510 = vmul.f32 %v237, %v501
    %v511 = vmul.f32 %v238, %v501
    %v512 = vmul.f32 %v239, %v501
    %v513 = vmul.f32 %v240, %v501
    %v514 = vmul.f32 %v241, %v501
    %v515 = vmul.f32 %v242, %v501
    %v516 = vmul.f32 %v243, %v501
    %v517 = vmul.f32 %v244, %v501
    %v518 = vmul.f32 %v245, %v501
    %v519 = vmul.f32 %v246, %v501
    %v520 = vmul.f32 %v247, %v501
    %v521 = vmul.f32 %v248, %v501
    %v522 = vmul.f32 %v249, %v501
    %v523 = vmul.f32 %v250, %v501
    %v524 = vmul.f32 %v251, %v501
    %v525 = vmul.f32 %v252, %v501
    %v526 = vmul.f32 %v253, %v501
    %v527 = vmul.f32 %v254, %v501
    %v528 = vmul.f32 %v255, %v501
    %v529 = vmul.f32 %v256, %v501
    %v530 = vmul.f32 %v257, %v501
    %v531 = vmul.f32 %v258, %v501
    %v532 = vmul.f32 %v259, %v501
    %v533 = vmul.f32 %v260, %v501
    %v534 = vmul.f32 %v261, %v501
    %v535 = vmul.f32 %v262, %v501
    %v536 = vmul.f32 %v263, %v501
    %v537 = vmul.f32 %v264, %v501
    %v538 = vmul.f32 %v265, %v501
    %v539 = vmul.f32 %v266, %v501
    %v540 = vmul.f32 %v267, %v501
    %v541 = vmul.f32 %v268, %v501
    %v542 = vmul.f32 %v269, %v501
    %v543 = vmul.f32 %v270, %v501
    %v544 = vmul.f32 %v271, %v501
    %v545 = vmul.f32 %v272, %v501
    %v546 = vmul.f32 %v273, %v501
    %v547 = vmul.f32 %v274, %v501
    %v548 = vmul.f32 %v275, %v501
    %v549 = vmul.f32 %v276, %v501
    %v550 = vmul.f32 %v277, %v501
    %v551 = vmul.f32 %v278, %v501
    %v552 = vmul.f32 %v279, %v501
    %v553 = vmul.f32 %v280, %v501
    %v554 = vmul.f32 %v281, %v501
    %v555 = vmul.f32 %v282, %v501
    %v556 = vmul.f32 %v283, %v501
    %v557 = vmul.f32 %v284, %v501
    %v558 = vmul.f32 %v285, %v501
    %v559 = vmul.f32 %v286, %v501
    %v560 = vmul.f32 %v287, %v501
    %v561 = vmul.f32 %v288, %v501
    %v562 = vmul.f32 %v289, %v501
    %v563 = vmul.f32 %v290, %v501
    %v564 = vmul.f32 %v291, %v501
    %v565 = vmul.f32 %v292, %v501
    %v567 = vperm.slane %v85, 0
    %v569 = vmul.f32 %v502, %v567
    %v570 = vmul.f32 %v503, %v567
    %v571 = vmul.f32 %v504, %v567
    %v572 = vmul.f32 %v505, %v567
    %v573 = vmul.f32 %v506, %v567
    %v574 = vmul.f32 %v507, %v567
    %v575 = vmul.f32 %v508, %v567
    %v576 = vmul.f32 %v509, %v567
    %v577 = vmul.f32 %v510, %v567
    %v578 = vmul.f32 %v511, %v567
    %v579 = vmul.f32 %v512, %v567
    %v580 = vmul.f32 %v513, %v567
    %v581 = vmul.f32 %v514, %v567
    %v582 = vmul.f32 %v515, %v567
    %v583 = vmul.f32 %v516, %v567
    %v584 = vmul.f32 %v517, %v567
    %v585 = vmul.f32 %v518, %v567
    %v586 = vmul.f32 %v519, %v567
    %v587 = vmul.f32 %v520, %v567
    %v588 = vmul.f32 %v521, %v567
    %v589 = vmul.f32 %v522, %v567
    %v590 = vmul.f32 %v523, %v567
    %v591 = vmul.f32 %v524, %v567
    %v592 = vmul.f32 %v525, %v567
    %v593 = vmul.f32 %v526, %v567
    %v594 = vmul.f32 %v527, %v567
    %v595 = vmul.f32 %v528, %v567
    %v596 = vmul.f32 %v529, %v567
    %v597 = vmul.f32 %v530, %v567
    %v598 = vmul.f32 %v531, %v567
    %v599 = vmul.f32 %v532, %v567
    %v600 = vmul.f32 %v533, %v567
    %v601 = vmul.f32 %v534, %v567
    %v602 = vmul.f32 %v535, %v567
    %v603 = vmul.f32 %v536, %v567
    %v604 = vmul.f32 %v537, %v567
    %v605 = vmul.f32 %v538, %v567
    %v606 = vmul.f32 %v539, %v567
    %v607 = vmul.f32 %v540, %v567
    %v608 = vmul.f32 %v541, %v567
    %v609 = vmul.f32 %v542, %v567
    %v610 = vmul.f32 %v543, %v567
    %v611 = vmul.f32 %v544, %v567
    %v612 = vmul.f32 %v545, %v567
    %v613 = vmul.f32 %v546, %v567
    %v614 = vmul.f32 %v547, %v567
    %v615 = vmul.f32 %v548, %v567
    %v616 = vmul.f32 %v549, %v567
    %v617 = vmul.f32 %v550, %v567
    %v618 = vmul.f32 %v551, %v567
    %v619 = vmul.f32 %v552, %v567
    %v620 = vmul.f32 %v553, %v567
    %v621 = vmul.f32 %v554, %v567
    %v622 = vmul.f32 %v555, %v567
    %v623 = vmul.f32 %v556, %v567
    %v624 = vmul.f32 %v557, %v567
    %v625 = vmul.f32 %v558, %v567
    %v626 = vmul.f32 %v559, %v567
    %v627 = vmul.f32 %v560, %v567
    %v628 = vmul.f32 %v561, %v567
    %v629 = vmul.f32 %v562, %v567
    %v630 = vmul.f32 %v563, %v567
    %v631 = vmul.f32 %v564, %v567
    %v632 = vmul.f32 %v565, %v567
    %v634 = vperm.slane %v86, 0
    %v636 = vadd.f32 %v569, %v634
    %v637 = vadd.f32 %v570, %v634
    %v638 = vadd.f32 %v571, %v634
    %v639 = vadd.f32 %v572, %v634
    %v640 = vadd.f32 %v573, %v634
    %v641 = vadd.f32 %v574, %v634
    %v642 = vadd.f32 %v575, %v634
    %v643 = vadd.f32 %v576, %v634
    %v644 = vadd.f32 %v577, %v634
    %v645 = vadd.f32 %v578, %v634
    %v646 = vadd.f32 %v579, %v634
    %v647 = vadd.f32 %v580, %v634
    %v648 = vadd.f32 %v581, %v634
    %v649 = vadd.f32 %v582, %v634
    %v650 = vadd.f32 %v583, %v634
    %v651 = vadd.f32 %v584, %v634
    %v652 = vadd.f32 %v585, %v634
    %v653 = vadd.f32 %v586, %v634
    %v654 = vadd.f32 %v587, %v634
    %v655 = vadd.f32 %v588, %v634
    %v656 = vadd.f32 %v589, %v634
    %v657 = vadd.f32 %v590, %v634
    %v658 = vadd.f32 %v591, %v634
    %v659 = vadd.f32 %v592, %v634
    %v660 = vadd.f32 %v593, %v634
    %v661 = vadd.f32 %v594, %v634
    %v662 = vadd.f32 %v595, %v634
    %v663 = vadd.f32 %v596, %v634
    %v664 = vadd.f32 %v597, %v634
    %v665 = vadd.f32 %v598, %v634
    %v666 = vadd.f32 %v599, %v634
    %v667 = vadd.f32 %v600, %v634
    %v668 = vadd.f32 %v601, %v634
    %v669 = vadd.f32 %v602, %v634
    %v670 = vadd.f32 %v603, %v634
    %v671 = vadd.f32 %v604, %v634
    %v672 = vadd.f32 %v605, %v634
    %v673 = vadd.f32 %v606, %v634
    %v674 = vadd.f32 %v607, %v634
    %v675 = vadd.f32 %v608, %v634
    %v676 = vadd.f32 %v609, %v634
    %v677 = vadd.f32 %v610, %v634
    %v678 = vadd.f32 %v611, %v634
    %v679 = vadd.f32 %v612, %v634
    %v680 = vadd.f32 %v613, %v634
    %v681 = vadd.f32 %v614, %v634
    %v682 = vadd.f32 %v615, %v634
    %v683 = vadd.f32 %v616, %v634
    %v684 = vadd.f32 %v617, %v634
    %v685 = vadd.f32 %v618, %v634
    %v686 = vadd.f32 %v619, %v634
    %v687 = vadd.f32 %v620, %v634
    %v688 = vadd.f32 %v621, %v634
    %v689 = vadd.f32 %v622, %v634
    %v690 = vadd.f32 %v623, %v634
    %v691 = vadd.f32 %v624, %v634
    %v692 = vadd.f32 %v625, %v634
    %v693 = vadd.f32 %v626, %v634
    %v694 = vadd.f32 %v627, %v634
    %v695 = vadd.f32 %v628, %v634
    %v696 = vadd.f32 %v629, %v634
    %v697 = vadd.f32 %v630, %v634
    %v698 = vadd.f32 %v631, %v634
    %v699 = vadd.f32 %v632, %v634
    %v700 = vmax.f32 %v636, 0.0
    %v701 = vmax.f32 %v637, 0.0
    %v702 = vmax.f32 %v638, 0.0
    %v703 = vmax.f32 %v639, 0.0
    %v704 = vmax.f32 %v640, 0.0
    %v705 = vmax.f32 %v641, 0.0
    %v706 = vmax.f32 %v642, 0.0
    %v707 = vmax.f32 %v643, 0.0
    %v708 = vmax.f32 %v644, 0.0
    %v709 = vmax.f32 %v645, 0.0
    %v710 = vmax.f32 %v646, 0.0
    %v711 = vmax.f32 %v647, 0.0
    %v712 = vmax.f32 %v648, 0.0
    %v713 = vmax.f32 %v649, 0.0
    %v714 = vmax.f32 %v650, 0.0
    %v715 = vmax.f32 %v651, 0.0
    %v716 = vmax.f32 %v652, 0.0
    %v717 = vmax.f32 %v653, 0.0
    %v718 = vmax.f32 %v654, 0.0
    %v719 = vmax.f32 %v655, 0.0
    %v720 = vmax.f32 %v656, 0.0
    %v721 = vmax.f32 %v657, 0.0
    %v722 = vmax.f32 %v658, 0.0
    %v723 = vmax.f32 %v659, 0.0
    %v724 = vmax.f32 %v660, 0.0
    %v725 = vmax.f32 %v661, 0.0
    %v726 = vmax.f32 %v662, 0.0
    %v727 = vmax.f32 %v663, 0.0
    %v728 = vmax.f32 %v664, 0.0
    %v729 = vmax.f32 %v665, 0.0
    %v730 = vmax.f32 %v666, 0.0
    %v731 = vmax.f32 %v667, 0.0
    %v732 = vmax.f32 %v668, 0.0
    %v733 = vmax.f32 %v669, 0.0
    %v734 = vmax.f32 %v670, 0.0
    %v735 = vmax.f32 %v671, 0.0
    %v736 = vmax.f32 %v672, 0.0
    %v737 = vmax.f32 %v673, 0.0
    %v738 = vmax.f32 %v674, 0.0
    %v739 = vmax.f32 %v675, 0.0
    %v740 = vmax.f32 %v676, 0.0
    %v741 = vmax.f32 %v677, 0.0
    %v742 = vmax.f32 %v678, 0.0
    %v743 = vmax.f32 %v679, 0.0
    %v744 = vmax.f32 %v680, 0.0
    %v745 = vmax.f32 %v681, 0.0
    %v746 = vmax.f32 %v682, 0.0
    %v747 = vmax.f32 %v683, 0.0
    %v748 = vmax.f32 %v684, 0.0
    %v749 = vmax.f32 %v685, 0.0
    %v750 = vmax.f32 %v686, 0.0
    %v751 = vmax.f32 %v687, 0.0
    %v752 = vmax.f32 %v688, 0.0
    %v753 = vmax.f32 %v689, 0.0
    %v754 = vmax.f32 %v690, 0.0
    %v755 = vmax.f32 %v691, 0.0
    %v756 = vmax.f32 %v692, 0.0
    %v757 = vmax.f32 %v693, 0.0
    %v758 = vmax.f32 %v694, 0.0
    %v759 = vmax.f32 %v695, 0.0
    %v760 = vmax.f32 %v696, 0.0
    %v761 = vmax.f32 %v697, 0.0
    %v762 = vmax.f32 %v698, 0.0
    %v763 = vmax.f32 %v699, 0.0
    %764 = vst.msk [vmem:[#allocation2] sm:$0xff] %vm87, %v700
    %765 = vst.msk [vmem:[#allocation2 + $0x8] sm:$0xff] %vm87, %v701
    %766 = vst.msk [vmem:[#allocation2 + $0x10] sm:$0xff] %vm87, %v702
    %767 = vst.msk [vmem:[#allocation2 + $0x18] sm:$0xff] %vm87, %v703
    %768 = vst.msk [vmem:[#allocation2 + $0x20] sm:$0xff] %vm87, %v704
    %769 = vst.msk [vmem:[#allocation2 + $0x28] sm:$0xff] %vm87, %v705
    %770 = vst.msk [vmem:[#allocation2 + $0x30] sm:$0xff] %vm87, %v706
    %771 = vst.msk [vmem:[#allocation2 + $0x38] sm:$0xff] %vm87, %v707
    %772 = vst.msk [vmem:[#allocation2 + $0x40] sm:$0xff] %vm87, %v708
    %773 = vst.msk [vmem:[#allocation2 + $0x48] sm:$0xff] %vm87, %v709
    %774 = vst.msk [vmem:[#allocation2 + $0x50] sm:$0xff] %vm87, %v710
    %775 = vst.msk [vmem:[#allocation2 + $0x58] sm:$0xff] %vm87, %v711
    %776 = vst.msk [vmem:[#allocation2 + $0x60] sm:$0xff] %vm87, %v712
    %777 = vst.msk [vmem:[#allocation2 + $0x68] sm:$0xff] %vm87, %v713
    %778 = vst.msk [vmem:[#allocation2 + $0x70] sm:$0xff] %vm87, %v714
    %779 = vst.msk [vmem:[#allocation2 + $0x78] sm:$0xff] %vm87, %v715
    %780 = vst.msk [vmem:[#allocation2 + $0x80] sm:$0xff] %vm87, %v716
    %781 = vst.msk [vmem:[#allocation2 + $0x88] sm:$0xff] %vm87, %v717
    %782 = vst.msk [vmem:[#allocation2 + $0x90] sm:$0xff] %vm87, %v718
    %783 = vst.msk [vmem:[#allocation2 + $0x98] sm:$0xff] %vm87, %v719
    %784 = vst.msk [vmem:[#allocation2 + $0xa0] sm:$0xff] %vm87, %v720
    %785 = vst.msk [vmem:[#allocation2 + $0xa8] sm:$0xff] %vm87, %v721
    %786 = vst.msk [vmem:[#allocation2 + $0xb0] sm:$0xff] %vm87, %v722
    %787 = vst.msk [vmem:[#allocation2 + $0xb8] sm:$0xff] %vm87, %v723
    %788 = vst.msk [vmem:[#allocation2 + $0xc0] sm:$0xff] %vm87, %v724
    %789 = vst.msk [vmem:[#allocation2 + $0xc8] sm:$0xff] %vm87, %v725
    %790 = vst.msk [vmem:[#allocation2 + $0xd0] sm:$0xff] %vm87, %v726
    %791 = vst.msk [vmem:[#allocation2 + $0xd8] sm:$0xff] %vm87, %v727
    %792 = vst.msk [vmem:[#allocation2 + $0xe0] sm:$0xff] %vm87, %v728
    %793 = vst.msk [vmem:[#allocation2 + $0xe8] sm:$0xff] %vm87, %v729
    %794 = vst.msk [vmem:[#allocation2 + $0xf0] sm:$0xff] %vm87, %v730
    %795 = vst.msk [vmem:[#allocation2 + $0xf8] sm:$0xff] %vm87, %v731
    %796 = vst.msk [vmem:[#allocation2 + $0x100] sm:$0xff] %vm87, %v732
    %797 = vst.msk [vmem:[#allocation2 + $0x108] sm:$0xff] %vm87, %v733
    %798 = vst.msk [vmem:[#allocation2 + $0x110] sm:$0xff] %vm87, %v734
    %799 = vst.msk [vmem:[#allocation2 + $0x118] sm:$0xff] %vm87, %v735
    %800 = vst.msk [vmem:[#allocation2 + $0x120] sm:$0xff] %vm87, %v736
    %801 = vst.msk [vmem:[#allocation2 + $0x128] sm:$0xff] %vm87, %v737
    %802 = vst.msk [vmem:[#allocation2 + $0x130] sm:$0xff] %vm87, %v738
    %803 = vst.msk [vmem:[#allocation2 + $0x138] sm:$0xff] %vm87, %v739
    %804 = vst.msk [vmem:[#allocation2 + $0x140] sm:$0xff] %vm87, %v740
    %805 = vst.msk [vmem:[#allocation2 + $0x148] sm:$0xff] %vm87, %v741
    %806 = vst.msk [vmem:[#allocation2 + $0x150] sm:$0xff] %vm87, %v742
    %807 = vst.msk [vmem:[#allocation2 + $0x158] sm:$0xff] %vm87, %v743
    %808 = vst.msk [vmem:[#allocation2 + $0x160] sm:$0xff] %vm87, %v744
    %809 = vst.msk [vmem:[#allocation2 + $0x168] sm:$0xff] %vm87, %v745
    %810 = vst.msk [vmem:[#allocation2 + $0x170] sm:$0xff] %vm87, %v746
    %811 = vst.msk [vmem:[#allocation2 + $0x178] sm:$0xff] %vm87, %v747
    %812 = vst.msk [vmem:[#allocation2 + $0x180] sm:$0xff] %vm87, %v748
    %813 = vst.msk [vmem:[#allocation2 + $0x188] sm:$0xff] %vm87, %v749
    %814 = vst.msk [vmem:[#allocation2 + $0x190] sm:$0xff] %vm87, %v750
    %815 = vst.msk [vmem:[#allocation2 + $0x198] sm:$0xff] %vm87, %v751
    %816 = vst.msk [vmem:[#allocation2 + $0x1a0] sm:$0xff] %vm87, %v752
    %817 = vst.msk [vmem:[#allocation2 + $0x1a8] sm:$0xff] %vm87, %v753
    %818 = vst.msk [vmem:[#allocation2 + $0x1b0] sm:$0xff] %vm87, %v754
    %819 = vst.msk [vmem:[#allocation2 + $0x1b8] sm:$0xff] %vm87, %v755
    %820 = vst.msk [vmem:[#allocation2 + $0x1c0] sm:$0xff] %vm87, %v756
    %821 = vst.msk [vmem:[#allocation2 + $0x1c8] sm:$0xff] %vm87, %v757
    %822 = vst.msk [vmem:[#allocation2 + $0x1d0] sm:$0xff] %vm87, %v758
    %823 = vst.msk [vmem:[#allocation2 + $0x1d8] sm:$0xff] %vm87, %v759
    %824 = vst.msk [vmem:[#allocation2 + $0x1e0] sm:$0xff] %vm87, %v760
    %825 = vst.msk [vmem:[#allocation2 + $0x1e8] sm:$0xff] %vm87, %v761
    %826 = vst.msk [vmem:[#allocation2 + $0x1f0] sm:$0xff] %vm87, %v762
    %827 = vst.msk [vmem:[#allocation2 + $0x1f8] sm:$0xff] %vm87, %v763
    %v828 = vpack.c.bf16 %v701, %v700
    %v829 = vpack.c.bf16 %v703, %v702
    %v830 = vpack.c.bf16 %v705, %v704
    %v831 = vpack.c.bf16 %v707, %v706
    %v832 = vpack.c.bf16 %v709, %v708
    %v833 = vpack.c.bf16 %v711, %v710
    %v834 = vpack.c.bf16 %v713, %v712
    %v835 = vpack.c.bf16 %v715, %v714
    %v836 = vpack.c.bf16 %v717, %v716
    %v837 = vpack.c.bf16 %v719, %v718
    %v838 = vpack.c.bf16 %v721, %v720
    %v839 = vpack.c.bf16 %v723, %v722
    %v840 = vpack.c.bf16 %v725, %v724
    %v841 = vpack.c.bf16 %v727, %v726
    %v842 = vpack.c.bf16 %v729, %v728
    %v843 = vpack.c.bf16 %v731, %v730
    %v844 = vpack.c.bf16 %v733, %v732
    %v845 = vpack.c.bf16 %v735, %v734
    %v846 = vpack.c.bf16 %v737, %v736
    %v847 = vpack.c.bf16 %v739, %v738
    %v848 = vpack.c.bf16 %v741, %v740
    %v849 = vpack.c.bf16 %v743, %v742
    %v850 = vpack.c.bf16 %v745, %v744
    %v851 = vpack.c.bf16 %v747, %v746
    %v852 = vpack.c.bf16 %v749, %v748
    %v853 = vpack.c.bf16 %v751, %v750
    %v854 = vpack.c.bf16 %v753, %v752
    %v855 = vpack.c.bf16 %v755, %v754
    %v856 = vpack.c.bf16 %v757, %v756
    %v857 = vpack.c.bf16 %v759, %v758
    %v858 = vpack.c.bf16 %v761, %v760
    %v859 = vpack.c.bf16 %v763, %v762
    %v860 = vld [vmem:[%s3] sm:$0xf]
    %v861 = vld [vmem:[%s3 + $0x4] sm:$0xf]
    %v862 = vld [vmem:[%s3 + $0x8] sm:$0xf]
    %v863 = vld [vmem:[%s3 + $0xc] sm:$0xf]
    %v864 = vld [vmem:[%s3 + $0x10] sm:$0xf]
    %v865 = vld [vmem:[%s3 + $0x14] sm:$0xf]
    %v866 = vld [vmem:[%s3 + $0x18] sm:$0xf]
    %v867 = vld [vmem:[%s3 + $0x1c] sm:$0xf]
    %v876 = vunpack.c.l.b16 %v860
    %v877 = vunpack.c.l.b16 %v861
    %v878 = vunpack.c.l.b16 %v862
    %v879 = vunpack.c.l.b16 %v863
    %v880 = vunpack.c.l.b16 %v864
    %v881 = vunpack.c.l.b16 %v865
    %v882 = vunpack.c.l.b16 %v866
    %v883 = vunpack.c.l.b16 %v867
    %v884 = vpack.c.b16 %v877, %v876
    %v885 = vpack.c.b16 %v879, %v878
    %v886 = vpack.c.b16 %v881, %v880
    %v887 = vpack.c.b16 %v883, %v882
    %v893 = vsel %vm87, %v828, 0
    %v896 = vsel %vm87, %v829, 0
    %v899 = vsel %vm87, %v830, 0
    %v902 = vsel %vm87, %v831, 0
    %v905 = vsel %vm87, %v832, 0
    %v908 = vsel %vm87, %v833, 0
    %v911 = vsel %vm87, %v834, 0
    %v914 = vsel %vm87, %v835, 0
    %v917 = vsel %vm87, %v836, 0
    %v920 = vsel %vm87, %v837, 0
    %v923 = vsel %vm87, %v838, 0
    %v926 = vsel %vm87, %v839, 0
    %v929 = vsel %vm87, %v840, 0
    %v932 = vsel %vm87, %v841, 0
    %v935 = vsel %vm87, %v842, 0
    %v938 = vsel %vm87, %v843, 0
    %v941 = vsel %vm87, %v844, 0
    %v944 = vsel %vm87, %v845, 0
    %v947 = vsel %vm87, %v846, 0
    %v950 = vsel %vm87, %v847, 0
    %v953 = vsel %vm87, %v848, 0
    %v956 = vsel %vm87, %v849, 0
    %v959 = vsel %vm87, %v850, 0
    %v962 = vsel %vm87, %v851, 0
    %v965 = vsel %vm87, %v852, 0
    %v968 = vsel %vm87, %v853, 0
    %v971 = vsel %vm87, %v854, 0
    %v974 = vsel %vm87, %v855, 0
    %v977 = vsel %vm87, %v856, 0
    %v980 = vsel %vm87, %v857, 0
    %v983 = vsel %vm87, %v858, 0
    %v986 = vsel %vm87, %v859, 0
    %988 = vmatpush.bf16.msra.mxu0 0
    %989 = vmatpush.bf16.msra.mxu0 0
    %990 = vmatpush.bf16.msra.mxu0 0
    %991 = vmatpush.bf16.msra.mxu0 0
    %992 = vmatpush.bf16.msra.mxu0 %v887
    %993 = vmatpush.bf16.msra.mxu0 %v886
    %994 = vmatpush.bf16.msra.mxu0 %v885
    %995 = vmatpush.bf16.msra.mxu0 %v884
    %996 = vmatmul.bf16.gmra.mxu0 %v893
    %v997 = vpop.f32.mrf.mxu0
    %v998 = vadd.f32 0.0, %v997
    %v999 = vpop.f32.mrf.mxu0
    %v1000 = vadd.f32 0.0, %v999
    %1001 = vmatmul.bf16.gmra.mxu0 %v896
    %v1002 = vpop.f32.mrf.mxu0
    %v1003 = vadd.f32 0.0, %v1002
    %v1004 = vpop.f32.mrf.mxu0
    %v1005 = vadd.f32 0.0, %v1004
    %1006 = vmatmul.bf16.gmra.mxu0 %v899
    %v1007 = vpop.f32.mrf.mxu0
    %v1008 = vadd.f32 0.0, %v1007
    %v1009 = vpop.f32.mrf.mxu0
    %v1010 = vadd.f32 0.0, %v1009
    %1011 = vmatmul.bf16.gmra.mxu0 %v902
    %v1012 = vpop.f32.mrf.mxu0
    %v1013 = vadd.f32 0.0, %v1012
    %v1014 = vpop.f32.mrf.mxu0
    %v1015 = vadd.f32 0.0, %v1014
    %1016 = vmatmul.bf16.gmra.mxu0 %v905
    %v1017 = vpop.f32.mrf.mxu0
    %v1018 = vadd.f32 0.0, %v1017
    %v1019 = vpop.f32.mrf.mxu0
    %v1020 = vadd.f32 0.0, %v1019
    %1021 = vmatmul.bf16.gmra.mxu0 %v908
    %v1022 = vpop.f32.mrf.mxu0
    %v1023 = vadd.f32 0.0, %v1022
    %v1024 = vpop.f32.mrf.mxu0
    %v1025 = vadd.f32 0.0, %v1024
    %1026 = vmatmul.bf16.gmra.mxu0 %v911
    %v1027 = vpop.f32.mrf.mxu0
    %v1028 = vadd.f32 0.0, %v1027
    %v1029 = vpop.f32.mrf.mxu0
    %v1030 = vadd.f32 0.0, %v1029
    %1031 = vmatmul.bf16.gmra.mxu0 %v914
    %v1032 = vpop.f32.mrf.mxu0
    %v1033 = vadd.f32 0.0, %v1032
    %v1034 = vpop.f32.mrf.mxu0
    %v1035 = vadd.f32 0.0, %v1034
    %1036 = vmatmul.bf16.gmra.mxu0 %v917
    %v1037 = vpop.f32.mrf.mxu0
    %v1038 = vadd.f32 0.0, %v1037
    %v1039 = vpop.f32.mrf.mxu0
    %v1040 = vadd.f32 0.0, %v1039
    %1041 = vmatmul.bf16.gmra.mxu0 %v920
    %v1042 = vpop.f32.mrf.mxu0
    %v1043 = vadd.f32 0.0, %v1042
    %v1044 = vpop.f32.mrf.mxu0
    %v1045 = vadd.f32 0.0, %v1044
    %1046 = vmatmul.bf16.gmra.mxu0 %v923
    %v1047 = vpop.f32.mrf.mxu0
    %v1048 = vadd.f32 0.0, %v1047
    %v1049 = vpop.f32.mrf.mxu0
    %v1050 = vadd.f32 0.0, %v1049
    %1051 = vmatmul.bf16.gmra.mxu0 %v926
    %v1052 = vpop.f32.mrf.mxu0
    %v1053 = vadd.f32 0.0, %v1052
    %v1054 = vpop.f32.mrf.mxu0
    %v1055 = vadd.f32 0.0, %v1054
    %1056 = vmatmul.bf16.gmra.mxu0 %v929
    %v1057 = vpop.f32.mrf.mxu0
    %v1058 = vadd.f32 0.0, %v1057
    %v1059 = vpop.f32.mrf.mxu0
    %v1060 = vadd.f32 0.0, %v1059
    %1061 = vmatmul.bf16.gmra.mxu0 %v932
    %v1062 = vpop.f32.mrf.mxu0
    %v1063 = vadd.f32 0.0, %v1062
    %v1064 = vpop.f32.mrf.mxu0
    %v1065 = vadd.f32 0.0, %v1064
    %1066 = vmatmul.bf16.gmra.mxu0 %v935
    %v1067 = vpop.f32.mrf.mxu0
    %v1068 = vadd.f32 0.0, %v1067
    %v1069 = vpop.f32.mrf.mxu0
    %v1070 = vadd.f32 0.0, %v1069
    %1071 = vmatmul.bf16.gmra.mxu0 %v938
    %v1072 = vpop.f32.mrf.mxu0
    %v1073 = vadd.f32 0.0, %v1072
    %v1074 = vpop.f32.mrf.mxu0
    %v1075 = vadd.f32 0.0, %v1074
    %1076 = vmatmul.bf16.gmra.mxu0 %v941
    %v1077 = vpop.f32.mrf.mxu0
    %v1078 = vadd.f32 0.0, %v1077
    %v1079 = vpop.f32.mrf.mxu0
    %v1080 = vadd.f32 0.0, %v1079
    %1081 = vmatmul.bf16.gmra.mxu0 %v944
    %v1082 = vpop.f32.mrf.mxu0
    %v1083 = vadd.f32 0.0, %v1082
    %v1084 = vpop.f32.mrf.mxu0
    %v1085 = vadd.f32 0.0, %v1084
    %1086 = vmatmul.bf16.gmra.mxu0 %v947
    %v1087 = vpop.f32.mrf.mxu0
    %v1088 = vadd.f32 0.0, %v1087
    %v1089 = vpop.f32.mrf.mxu0
    %v1090 = vadd.f32 0.0, %v1089
    %1091 = vmatmul.bf16.gmra.mxu0 %v950
    %v1092 = vpop.f32.mrf.mxu0
    %v1093 = vadd.f32 0.0, %v1092
    %v1094 = vpop.f32.mrf.mxu0
    %v1095 = vadd.f32 0.0, %v1094
    %1096 = vmatmul.bf16.gmra.mxu0 %v953
    %v1097 = vpop.f32.mrf.mxu0
    %v1098 = vadd.f32 0.0, %v1097
    %v1099 = vpop.f32.mrf.mxu0
    %v1100 = vadd.f32 0.0, %v1099
    %1101 = vmatmul.bf16.gmra.mxu0 %v956
    %v1102 = vpop.f32.mrf.mxu0
    %v1103 = vadd.f32 0.0, %v1102
    %v1104 = vpop.f32.mrf.mxu0
    %v1105 = vadd.f32 0.0, %v1104
    %1106 = vmatmul.bf16.gmra.mxu0 %v959
    %v1107 = vpop.f32.mrf.mxu0
    %v1108 = vadd.f32 0.0, %v1107
    %v1109 = vpop.f32.mrf.mxu0
    %v1110 = vadd.f32 0.0, %v1109
    %1111 = vmatmul.bf16.gmra.mxu0 %v962
    %v1112 = vpop.f32.mrf.mxu0
    %v1113 = vadd.f32 0.0, %v1112
    %v1114 = vpop.f32.mrf.mxu0
    %v1115 = vadd.f32 0.0, %v1114
    %1116 = vmatmul.bf16.gmra.mxu0 %v965
    %v1117 = vpop.f32.mrf.mxu0
    %v1118 = vadd.f32 0.0, %v1117
    %v1119 = vpop.f32.mrf.mxu0
    %v1120 = vadd.f32 0.0, %v1119
    %1121 = vmatmul.bf16.gmra.mxu0 %v968
    %v1122 = vpop.f32.mrf.mxu0
    %v1123 = vadd.f32 0.0, %v1122
    %v1124 = vpop.f32.mrf.mxu0
    %v1125 = vadd.f32 0.0, %v1124
    %1126 = vmatmul.bf16.gmra.mxu0 %v971
    %v1127 = vpop.f32.mrf.mxu0
    %v1128 = vadd.f32 0.0, %v1127
    %v1129 = vpop.f32.mrf.mxu0
    %v1130 = vadd.f32 0.0, %v1129
    %1131 = vmatmul.bf16.gmra.mxu0 %v974
    %v1132 = vpop.f32.mrf.mxu0
    %v1133 = vadd.f32 0.0, %v1132
    %v1134 = vpop.f32.mrf.mxu0
    %v1135 = vadd.f32 0.0, %v1134
    %1136 = vmatmul.bf16.gmra.mxu0 %v977
    %v1137 = vpop.f32.mrf.mxu0
    %v1138 = vadd.f32 0.0, %v1137
    %v1139 = vpop.f32.mrf.mxu0
    %v1140 = vadd.f32 0.0, %v1139
    %1141 = vmatmul.bf16.gmra.mxu0 %v980
    %v1142 = vpop.f32.mrf.mxu0
    %v1143 = vadd.f32 0.0, %v1142
    %v1144 = vpop.f32.mrf.mxu0
    %v1145 = vadd.f32 0.0, %v1144
    %1146 = vmatmul.bf16.gmra.mxu0 %v983
    %v1147 = vpop.f32.mrf.mxu0
    %v1148 = vadd.f32 0.0, %v1147
    %v1149 = vpop.f32.mrf.mxu0
    %v1150 = vadd.f32 0.0, %v1149
    %1151 = vmatmul.bf16.gmra.mxu0 %v986
    %v1152 = vpop.f32.mrf.mxu0
    %v1153 = vadd.f32 0.0, %v1152
    %v1154 = vpop.f32.mrf.mxu0
    %v1155 = vadd.f32 0.0, %v1154
    %1156 = vdwg.mxu0
    %1157 = vst [vmem:[%s4] sm:$0xff] %v998
    %1158 = vst [vmem:[%s4 + $0x8] sm:$0xff] %v1000
    %1159 = vst [vmem:[%s4 + $0x10] sm:$0xff] %v1003
    %1160 = vst [vmem:[%s4 + $0x18] sm:$0xff] %v1005
    %1161 = vst [vmem:[%s4 + $0x20] sm:$0xff] %v1008
    %1162 = vst [vmem:[%s4 + $0x28] sm:$0xff] %v1010
    %1163 = vst [vmem:[%s4 + $0x30] sm:$0xff] %v1013
    %1164 = vst [vmem:[%s4 + $0x38] sm:$0xff] %v1015
    %1165 = vst [vmem:[%s4 + $0x40] sm:$0xff] %v1018
    %1166 = vst [vmem:[%s4 + $0x48] sm:$0xff] %v1020
    %1167 = vst [vmem:[%s4 + $0x50] sm:$0xff] %v1023
    %1168 = vst [vmem:[%s4 + $0x58] sm:$0xff] %v1025
    %1169 = vst [vmem:[%s4 + $0x60] sm:$0xff] %v1028
    %1170 = vst [vmem:[%s4 + $0x68] sm:$0xff] %v1030
    %1171 = vst [vmem:[%s4 + $0x70] sm:$0xff] %v1033
    %1172 = vst [vmem:[%s4 + $0x78] sm:$0xff] %v1035
    %1173 = vst [vmem:[%s4 + $0x80] sm:$0xff] %v1038
    %1174 = vst [vmem:[%s4 + $0x88] sm:$0xff] %v1040
    %1175 = vst [vmem:[%s4 + $0x90] sm:$0xff] %v1043
    %1176 = vst [vmem:[%s4 + $0x98] sm:$0xff] %v1045
    %1177 = vst [vmem:[%s4 + $0xa0] sm:$0xff] %v1048
    %1178 = vst [vmem:[%s4 + $0xa8] sm:$0xff] %v1050
    %1179 = vst [vmem:[%s4 + $0xb0] sm:$0xff] %v1053
    %1180 = vst [vmem:[%s4 + $0xb8] sm:$0xff] %v1055
    %1181 = vst [vmem:[%s4 + $0xc0] sm:$0xff] %v1058
    %1182 = vst [vmem:[%s4 + $0xc8] sm:$0xff] %v1060
    %1183 = vst [vmem:[%s4 + $0xd0] sm:$0xff] %v1063
    %1184 = vst [vmem:[%s4 + $0xd8] sm:$0xff] %v1065
    %1185 = vst [vmem:[%s4 + $0xe0] sm:$0xff] %v1068
    %1186 = vst [vmem:[%s4 + $0xe8] sm:$0xff] %v1070
    %1187 = vst [vmem:[%s4 + $0xf0] sm:$0xff] %v1073
    %1188 = vst [vmem:[%s4 + $0xf8] sm:$0xff] %v1075
    %1189 = vst [vmem:[%s4 + $0x100] sm:$0xff] %v1078
    %1190 = vst [vmem:[%s4 + $0x108] sm:$0xff] %v1080
    %1191 = vst [vmem:[%s4 + $0x110] sm:$0xff] %v1083
    %1192 = vst [vmem:[%s4 + $0x118] sm:$0xff] %v1085
    %1193 = vst [vmem:[%s4 + $0x120] sm:$0xff] %v1088
    %1194 = vst [vmem:[%s4 + $0x128] sm:$0xff] %v1090
    %1195 = vst [vmem:[%s4 + $0x130] sm:$0xff] %v1093
    %1196 = vst [vmem:[%s4 + $0x138] sm:$0xff] %v1095
    %1197 = vst [vmem:[%s4 + $0x140] sm:$0xff] %v1098
    %1198 = vst [vmem:[%s4 + $0x148] sm:$0xff] %v1100
    %1199 = vst [vmem:[%s4 + $0x150] sm:$0xff] %v1103
    %1200 = vst [vmem:[%s4 + $0x158] sm:$0xff] %v1105
    %1201 = vst [vmem:[%s4 + $0x160] sm:$0xff] %v1108
    %1202 = vst [vmem:[%s4 + $0x168] sm:$0xff] %v1110
    %1203 = vst [vmem:[%s4 + $0x170] sm:$0xff] %v1113
    %1204 = vst [vmem:[%s4 + $0x178] sm:$0xff] %v1115
    %1205 = vst [vmem:[%s4 + $0x180] sm:$0xff] %v1118
    %1206 = vst [vmem:[%s4 + $0x188] sm:$0xff] %v1120
    %1207 = vst [vmem:[%s4 + $0x190] sm:$0xff] %v1123
    %1208 = vst [vmem:[%s4 + $0x198] sm:$0xff] %v1125
    %1209 = vst [vmem:[%s4 + $0x1a0] sm:$0xff] %v1128
    %1210 = vst [vmem:[%s4 + $0x1a8] sm:$0xff] %v1130
    %1211 = vst [vmem:[%s4 + $0x1b0] sm:$0xff] %v1133
    %1212 = vst [vmem:[%s4 + $0x1b8] sm:$0xff] %v1135
    %1213 = vst [vmem:[%s4 + $0x1c0] sm:$0xff] %v1138
    %1214 = vst [vmem:[%s4 + $0x1c8] sm:$0xff] %v1140
    %1215 = vst [vmem:[%s4 + $0x1d0] sm:$0xff] %v1143
    %1216 = vst [vmem:[%s4 + $0x1d8] sm:$0xff] %v1145
    %1217 = vst [vmem:[%s4 + $0x1e0] sm:$0xff] %v1148
    %1218 = vst [vmem:[%s4 + $0x1e8] sm:$0xff] %v1150
    %1219 = vst [vmem:[%s4 + $0x1f0] sm:$0xff] %v1153
    %1220 = vst [vmem:[%s4 + $0x1f8] sm:$0xff] %v1155
    // Predicated region
    $region18: #{netG_forward.23} parent=1 // pred_check
      _
    $region19: #{netG_forward.23} parent=1 // pred_check_branch
      %1222 = sbr.rel (0) target = $region21
    $region20: #{netG_forward.23} parent=1 // pred_region
      _
    $region21: #{netG_forward.23} parent=1 // pred_fallthru
      _
    // Predicated region
    $region22: #{netG_forward.23} parent=1 // pred_check
      _
    $region23: #{netG_forward.23} parent=1 // pred_check_branch
      %1224 = sbr.rel (0) target = $region25
    $region24: #{netG_forward.23} parent=1 // pred_region
      %1226 = vsyncadd [#allocation3], 0
      %s1227 = sshll.u32 [#allocation2], 4
      %s1228 = int_to_ptr.vmem [resolvable:$true] %s1227
      %s1229 = sshll.u32 %s5, 4
      %s1230 = int_to_ptr.hbm [resolvable:$true] %s1229
      %1235 = dma.vmem_to_hbm [thread:$0]  %s1228, 8192, %s1230, [#allocation3], 128, 128, 8
    $region25: #{netG_forward.23} parent=1 // pred_fallthru
      _
    // Predicated region
    $region26: #{netG_forward.23} parent=1 // pred_check
      _
    $region27: #{netG_forward.23} parent=1 // pred_check_branch
      %1237 = sbr.rel (0) target = $region29
    $region28: #{netG_forward.23} parent=1 // pred_region
      _
    $region29: #{netG_forward.23} parent=1 // pred_fallthru
      _
    // Predicated region
    $region30: #{netG_forward.23} parent=1 // pred_check
      _
    $region31: #{netG_forward.23} parent=1 // pred_check_branch
      %1239 = sbr.rel (0) target = $region33
    $region32: #{netG_forward.23} parent=1 // pred_region
      %1241 = dma.done [#allocation3], 8192
    $region33: #{netG_forward.23} parent=1 // pred_fallthru
      _
    %1242 = vsyncpa [#allocation3], 1

// kernel: netG_forward.20
$region0: #{netG_forward.20}
  #allocation0 [shape = 'u32[]', space=smem, size = 0x4, offset = 0x4, fixed_abs, tag = 'smem constant byte address 0x4 - core index']
  #allocation1 [shape = 'u32[72,128]{1,0:T(1,128)}', space=vmem, size = 0x9000, scoped, tag = 'internal scratch']
  %s0 = inlined_call_operand.smem [shape: u32[31], index: -1, kind: input, shape index: {}]
  %s1 = sld [smem:[%s0]]
  %s2 = scalar_lea.smem %s0, 1
  %s3 = sld [smem:[%s2]]
  %s4 = scalar_lea.smem %s0, 2
  %s5 = sld [smem:[%s4]]
  %s6 = scalar_lea.smem %s0, 3
  %s7 = sld [smem:[%s6]]
  %s8 = scalar_lea.smem %s0, 4
  %s9 = sld [smem:[%s8]]
  %s10 = scalar_lea.smem %s0, 5
  %s11 = sld [smem:[%s10]]
  %s12 = scalar_lea.smem %s0, 6
  %s13 = sld [smem:[%s12]]
  %s14 = scalar_lea.smem %s0, 7
  %s15 = sld [smem:[%s14]]
  %s16 = scalar_lea.smem %s0, 8
  %s17 = sld [smem:[%s16]]
  %s18 = scalar_lea.smem %s0, 9
  %s19 = sld [smem:[%s18]]
  %s20 = scalar_lea.smem %s0, 10
  %s21 = sld [smem:[%s20]]
  %s22 = scalar_lea.smem %s0, 11
  %s23 = sld [smem:[%s22]]
  %s24 = scalar_lea.smem %s0, 12
  %s25 = sld [smem:[%s24]]
  %s26 = scalar_lea.smem %s0, 13
  %s27 = sld [smem:[%s26]]
  %s28 = scalar_lea.smem %s0, 14
  %s29 = sld [smem:[%s28]]
  %s30 = scalar_lea.smem %s0, 15
  %s31 = sld [smem:[%s30]]
  %s32 = scalar_lea.smem %s0, 16
  %s33 = sld [smem:[%s32]]
  %s34 = scalar_lea.smem %s0, 17
  %s35 = sld [smem:[%s34]]
  %s36 = scalar_lea.smem %s0, 18
  %s37 = sld [smem:[%s36]]
  %s38 = scalar_lea.smem %s0, 19
  %s39 = sld [smem:[%s38]]
  %s40 = scalar_lea.smem %s0, 20
  %s41 = sld [smem:[%s40]]
  %s42 = scalar_lea.smem %s0, 21
  %s43 = sld [smem:[%s42]]
  %s44 = scalar_lea.smem %s0, 22
  %s45 = sld [smem:[%s44]]
  %s46 = scalar_lea.smem %s0, 23
  %s47 = sld [smem:[%s46]]
  %s48 = scalar_lea.smem %s0, 24
  %s49 = sld [smem:[%s48]]
  %s50 = scalar_lea.smem %s0, 25
  %s51 = sld [smem:[%s50]]
  %s52 = scalar_lea.smem %s0, 26
  %s53 = sld [smem:[%s52]]
  %s54 = scalar_lea.smem %s0, 27
  %s55 = sld [smem:[%s54]]
  %s56 = scalar_lea.smem %s0, 28
  %s57 = sld [smem:[%s56]]
  %s58 = scalar_lea.smem %s0, 29
  %s59 = sld [smem:[%s58]]
  %s60 = scalar_lea.smem %s0, 30
  %s61 = sld [smem:[%s60]]
  %62 = xla_tuple %s53, %s55, %s57, %s59, %s61
  %s63 = sld [smem:[#allocation0]]
  $region146: #{netG_forward.20} parent=0
    _
  %s65 = ssub.s32 1, %s63
  %s66 = scalar_select 0, %s65, %s63
  $region1: #{netG_forward.20} parent=0
    #allocation2 [shape = 'u8[1024]{0}', space=vmem, size = 0x400, scoped, tag = 'output window, operand 0, single buffered']
    #allocation3 [shape = 's32[1]{0}', space=sflag, size = 0x4, scoped, tag = 'scoped memory for netG_forward.20']
    #allocation4 [shape = 'u8[1024]{0}', space=vmem, size = 0x400, scoped, tag = 'output window, operand 1, single buffered']
    #allocation5 [shape = 's32[1]{0}', space=sflag, size = 0x4, scoped, tag = 'scoped memory for netG_forward.20']
    #allocation6 [shape = 'u8[1024]{0}', space=vmem, size = 0x400, scoped, tag = 'output window, operand 2, single buffered']
    %67 = vsyncpa [#allocation3], 0
    %68 = vsyncpa [#allocation5], 0
    // Predicated region
    $region2: #{netG_forward.20} parent=1 // pred_check
      _
    $region3: #{netG_forward.20} parent=1 // pred_check_branch
      %70 = sbr.rel (0) target = $region5
    $region4: #{netG_forward.20} parent=1 // pred_region
      _
    $region5: #{netG_forward.20} parent=1 // pred_fallthru
      _
    // Predicated region
    $region6: #{netG_forward.20} parent=1 // pred_check
      _
    $region7: #{netG_forward.20} parent=1 // pred_check_branch
      %72 = sbr.rel (0) target = $region9
    $region8: #{netG_forward.20} parent=1 // pred_region
      _
    $region9: #{netG_forward.20} parent=1 // pred_fallthru
      _
    // Predicated region
    $region10: #{netG_forward.20} parent=1 // pred_check
      _
    $region11: #{netG_forward.20} parent=1 // pred_check_branch
      %74 = sbr.rel (0) target = $region13
    $region12: #{netG_forward.20} parent=1 // pred_region
      _
    $region13: #{netG_forward.20} parent=1 // pred_fallthru
      _
    // Predicated region
    $region14: #{netG_forward.20} parent=1 // pred_check
      _
    $region15: #{netG_forward.20} parent=1 // pred_check_branch
      %76 = sbr.rel (0) target = $region17
    $region16: #{netG_forward.20} parent=1 // pred_region
      _
    $region17: #{netG_forward.20} parent=1 // pred_fallthru
      _
    // Predicated region
    $region18: #{netG_forward.20} parent=1 // pred_check
      _
    $region19: #{netG_forward.20} parent=1 // pred_check_branch
      %78 = sbr.rel (0) target = $region21
    $region20: #{netG_forward.20} parent=1 // pred_region
      _
    $region21: #{netG_forward.20} parent=1 // pred_fallthru
      _
    // Predicated region
    $region22: #{netG_forward.20} parent=1 // pred_check
      _
    $region23: #{netG_forward.20} parent=1 // pred_check_branch
      %80 = sbr.rel (0) target = $region25
    $region24: #{netG_forward.20} parent=1 // pred_region
      _
    $region25: #{netG_forward.20} parent=1 // pred_fallthru
      _
    // Predicated region
    $region26: #{netG_forward.20} parent=1 // pred_check
      _
    $region27: #{netG_forward.20} parent=1 // pred_check_branch
      %82 = sbr.rel (0) target = $region29
    $region28: #{netG_forward.20} parent=1 // pred_region
      _
    $region29: #{netG_forward.20} parent=1 // pred_fallthru
      _
    // Predicated region
    $region30: #{netG_forward.20} parent=1 // pred_check
      _
    $region31: #{netG_forward.20} parent=1 // pred_check_branch
      %84 = sbr.rel (0) target = $region33
    $region32: #{netG_forward.20} parent=1 // pred_region
      _
    $region33: #{netG_forward.20} parent=1 // pred_fallthru
      _
    // Predicated region
    $region34: #{netG_forward.20} parent=1 // pred_check
      _
    $region35: #{netG_forward.20} parent=1 // pred_check_branch
      %86 = sbr.rel (0) target = $region37
    $region36: #{netG_forward.20} parent=1 // pred_region
      _
    $region37: #{netG_forward.20} parent=1 // pred_fallthru
      _
    // Predicated region
    $region38: #{netG_forward.20} parent=1 // pred_check
      _
    $region39: #{netG_forward.20} parent=1 // pred_check_branch
      %88 = sbr.rel (0) target = $region41
    $region40: #{netG_forward.20} parent=1 // pred_region
      _
    $region41: #{netG_forward.20} parent=1 // pred_fallthru
      _
    // Predicated region
    $region42: #{netG_forward.20} parent=1 // pred_check
      _
    $region43: #{netG_forward.20} parent=1 // pred_check_branch
      %90 = sbr.rel (0) target = $region45
    $region44: #{netG_forward.20} parent=1 // pred_region
      _
    $region45: #{netG_forward.20} parent=1 // pred_fallthru
      _
    // Predicated region
    $region46: #{netG_forward.20} parent=1 // pred_check
      _
    $region47: #{netG_forward.20} parent=1 // pred_check_branch
      %92 = sbr.rel (0) target = $region49
    $region48: #{netG_forward.20} parent=1 // pred_region
      _
    $region49: #{netG_forward.20} parent=1 // pred_fallthru
      _
    // Predicated region
    $region50: #{netG_forward.20} parent=1 // pred_check
      _
    $region51: #{netG_forward.20} parent=1 // pred_check_branch
      %94 = sbr.rel (0) target = $region53
    $region52: #{netG_forward.20} parent=1 // pred_region
      _
    $region53: #{netG_forward.20} parent=1 // pred_fallthru
      _
    // Predicated region
    $region54: #{netG_forward.20} parent=1 // pred_check
      _
    $region55: #{netG_forward.20} parent=1 // pred_check_branch
      %96 = sbr.rel (0) target = $region57
    $region56: #{netG_forward.20} parent=1 // pred_region
      _
    $region57: #{netG_forward.20} parent=1 // pred_fallthru
      _
    // Predicated region
    $region58: #{netG_forward.20} parent=1 // pred_check
      _
    $region59: #{netG_forward.20} parent=1 // pred_check_branch
      %98 = sbr.rel (0) target = $region61
    $region60: #{netG_forward.20} parent=1 // pred_region
      _
    $region61: #{netG_forward.20} parent=1 // pred_fallthru
      _
    // Predicated region
    $region62: #{netG_forward.20} parent=1 // pred_check
      _
    $region63: #{netG_forward.20} parent=1 // pred_check_branch
      %100 = sbr.rel (0) target = $region65
    $region64: #{netG_forward.20} parent=1 // pred_region
      _
    $region65: #{netG_forward.20} parent=1 // pred_fallthru
      _
    // Predicated region
    $region66: #{netG_forward.20} parent=1 // pred_check
      _
    $region67: #{netG_forward.20} parent=1 // pred_check_branch
      %102 = sbr.rel (0) target = $region69
    $region68: #{netG_forward.20} parent=1 // pred_region
      _
    $region69: #{netG_forward.20} parent=1 // pred_fallthru
      _
    // Predicated region
    $region70: #{netG_forward.20} parent=1 // pred_check
      _
    $region71: #{netG_forward.20} parent=1 // pred_check_branch
      %104 = sbr.rel (0) target = $region73
    $region72: #{netG_forward.20} parent=1 // pred_region
      _
    $region73: #{netG_forward.20} parent=1 // pred_fallthru
      _
    // Predicated region
    $region74: #{netG_forward.20} parent=1 // pred_check
      _
    $region75: #{netG_forward.20} parent=1 // pred_check_branch
      %106 = sbr.rel (0) target = $region77
    $region76: #{netG_forward.20} parent=1 // pred_region
      _
    $region77: #{netG_forward.20} parent=1 // pred_fallthru
      _
    // Predicated region
    $region78: #{netG_forward.20} parent=1 // pred_check
      _
    $region79: #{netG_forward.20} parent=1 // pred_check_branch
      %108 = sbr.rel (0) target = $region81
    $region80: #{netG_forward.20} parent=1 // pred_region
      _
    $region81: #{netG_forward.20} parent=1 // pred_fallthru
      _
    // Predicated region
    $region82: #{netG_forward.20} parent=1 // pred_check
      _
    $region83: #{netG_forward.20} parent=1 // pred_check_branch
      %110 = sbr.rel (0) target = $region85
    $region84: #{netG_forward.20} parent=1 // pred_region
      _
    $region85: #{netG_forward.20} parent=1 // pred_fallthru
      _
    // Predicated region
    $region86: #{netG_forward.20} parent=1 // pred_check
      _
    $region87: #{netG_forward.20} parent=1 // pred_check_branch
      %112 = sbr.rel (0) target = $region89
    $region88: #{netG_forward.20} parent=1 // pred_region
      _
    $region89: #{netG_forward.20} parent=1 // pred_fallthru
      _
    // Predicated region
    $region90: #{netG_forward.20} parent=1 // pred_check
      _
    $region91: #{netG_forward.20} parent=1 // pred_check_branch
      %114 = sbr.rel (0) target = $region93
    $region92: #{netG_forward.20} parent=1 // pred_region
      _
    $region93: #{netG_forward.20} parent=1 // pred_fallthru
      _
    // Predicated region
    $region94: #{netG_forward.20} parent=1 // pred_check
      _
    $region95: #{netG_forward.20} parent=1 // pred_check_branch
      %116 = sbr.rel (0) target = $region97
    $region96: #{netG_forward.20} parent=1 // pred_region
      _
    $region97: #{netG_forward.20} parent=1 // pred_fallthru
      _
    // Predicated region
    $region98: #{netG_forward.20} parent=1 // pred_check
      _
    $region99: #{netG_forward.20} parent=1 // pred_check_branch
      %118 = sbr.rel (0) target = $region101
    $region100: #{netG_forward.20} parent=1 // pred_region
      _
    $region101: #{netG_forward.20} parent=1 // pred_fallthru
      _
    // Predicated region
    $region102: #{netG_forward.20} parent=1 // pred_check
      _
    $region103: #{netG_forward.20} parent=1 // pred_check_branch
      %120 = sbr.rel (0) target = $region105
    $region104: #{netG_forward.20} parent=1 // pred_region
      _
    $region105: #{netG_forward.20} parent=1 // pred_fallthru
      _
    %v122 = vld [vmem:[%s1] sm:$0x3]
    %v123 = vld [vmem:[%s33] sm:$0xff]
    %v124 = vld [vmem:[%s33 + $0x8] sm:$0xff]
    %v125 = vld [vmem:[%s33 + $0x10] sm:$0xff]
    %v126 = vld [vmem:[%s33 + $0x18] sm:$0xff]
    %v127 = vld [vmem:[%s33 + $0x20] sm:$0xff]
    %v128 = vld [vmem:[%s33 + $0x28] sm:$0xff]
    %v129 = vld [vmem:[%s33 + $0x30] sm:$0xff]
    %v130 = vld [vmem:[%s33 + $0x38] sm:$0xff]
    %v131 = vld [vmem:[%s35] sm:$0x1]
    %v133 = vperm.slane %v131, 0
    %vm135 = vcmask 523264
    %v137 = vsel %vm135, %v122, 0
    %139 = vmatpush.msra.mxu0 0.0
    %140 = vmatpush.msra.mxu0 0.0
    %141 = vmatpush.msra.mxu0 0.0
    %142 = vmatpush.msra.mxu0 0.0
    %143 = vmatpush.msra.mxu0 0.0
    %144 = vmatpush.msra.mxu0 0.0
    %145 = vmatpush.msra.mxu0 0.0
    %146 = vmatpush.msra.mxu0 0.0
    %147 = vmatpush.msra.mxu0 %v130
    %148 = vmatpush.msra.mxu0 %v129
    %149 = vmatpush.msra.mxu0 %v128
    %150 = vmatpush.msra.mxu0 %v127
    %151 = vmatpush.msra.mxu0 %v126
    %152 = vmatpush.msra.mxu0 %v125
    %153 = vmatpush.msra.mxu0 %v124
    %154 = vmatpush.msra.mxu0 %v123
    %155 = vmatmul.f32.gmra.mxu0 %v137
    %v156 = vpop.f32.mrf.mxu0
    %v157 = vadd.f32 %v133, %v156
    %158 = vdwg.mxu0
    %v159 = vld [vmem:[%s3] sm:$0x3]
    %v160 = vxor.u32 %v157, 2147483648
    %v161 = vmul.f32 %v160, 1.442695
    %v162 = vpow.pop %v161
    %v163 = vadd.f32 %v162, 1.0
    %v164 = vrcp.pop %v163
    %v165 = vmul.f32 %v163, %v164
    %v166 = vsub.f32 1.0, %v165
    %v167 = vmul.f32 %v164, %v166
    %v168 = vadd.f32 %v164, %v167
    %vm169 = vweird.f32 %v163
    %vm170 = vweird.f32 %v164
    %vm171 = vmor %vm169, %vm170
    %v172 = vsel %vm171, %v164, %v168
    %v173 = vand.u32 2147483647, %v163
    %vm174 = vcmp.eq.f32.partialorder %v173, 8.507059e+37
    %v175 = vand.u32 %v163, 2147483648
    %v176 = vor.u32 1.1754944e-38, %v175
    %v177 = vsel %vm174, %v176, %v172
    %v178 = vmul.f32 1.0, %v177
    %v179 = vtanh.pop %v157
    %181 = vrot.lane.b32.xlu0 %v159, 32
    %v182 = vpop.permute.xlu0 %181
    %v184 = vmul.f32 %v178, %v182
    %186 = vrot.lane.b32.xlu0 %v179, 64
    %v187 = vpop.permute.xlu0 %186
    %v189 = vmul.f32 %v178, %v187
    %191 = vrot.lane.b32.xlu0 %v189, 32
    %v192 = vpop.permute.xlu0 %191
    %v194 = vadd.f32 %v184, %v192
    %v195 = vtanh.pop %v194
    %197 = vrot.lane.b32.xlu0 %v195, 64
    %v198 = vpop.permute.xlu0 %197
    %v200 = vmul.f32 %v178, %v198
    %202 = vrot.lane.b32.xlu0 %v200, 32
    %v203 = vpop.permute.xlu0 %202
    %vm205 = vcmask 254976
    %206 = vst.msk [vmem:[#allocation2] sm:$0x3] %vm205, %v203
    %208 = vrot.lane.b32.xlu0 %v194, 96
    %v209 = vpop.permute.xlu0 %208
    %211 = vst.msk [vmem:[#allocation4] sm:$0x3] %vm205, %v209
    %v212 = vld [vmem:[%s7] sm:$0xff]
    %v213 = vld [vmem:[%s7 + $0x8] sm:$0xff]
    %v214 = vld [vmem:[%s7 + $0x10] sm:$0xff]
    %v215 = vld [vmem:[%s7 + $0x18] sm:$0xff]
    %v216 = vld [vmem:[%s7 + $0x20] sm:$0xff]
    %v217 = vld [vmem:[%s7 + $0x28] sm:$0xff]
    %v218 = vld [vmem:[%s7 + $0x30] sm:$0xff]
    %v219 = vld [vmem:[%s7 + $0x38] sm:$0xff]
    %v220 = vld [vmem:[%s7 + $0x40] sm:$0xff]
    %v221 = vld [vmem:[%s7 + $0x48] sm:$0xff]
    %v222 = vld [vmem:[%s7 + $0x50] sm:$0xff]
    %v223 = vld [vmem:[%s7 + $0x58] sm:$0xff]
    %v224 = vld [vmem:[%s7 + $0x60] sm:$0xff]
    %v225 = vld [vmem:[%s7 + $0x68] sm:$0xff]
    %v226 = vld [vmem:[%s7 + $0x70] sm:$0xff]
    %v227 = vld [vmem:[%s7 + $0x78] sm:$0xff]
    %v228 = vld [vmem:[%s7 + $0x80] sm:$0xff]
    %v229 = vld [vmem:[%s7 + $0x88] sm:$0xff]
    %v230 = vld [vmem:[%s7 + $0x90] sm:$0xff]
    %v231 = vld [vmem:[%s7 + $0x98] sm:$0xff]
    %v232 = vld [vmem:[%s7 + $0xa0] sm:$0xff]
    %v233 = vld [vmem:[%s7 + $0xa8] sm:$0xff]
    %v234 = vld [vmem:[%s7 + $0xb0] sm:$0xff]
    %v235 = vld [vmem:[%s7 + $0xb8] sm:$0xff]
    %v236 = vld [vmem:[%s7 + $0xc0] sm:$0xff]
    %v237 = vld [vmem:[%s7 + $0xc8] sm:$0xff]
    %v238 = vld [vmem:[%s7 + $0xd0] sm:$0xff]
    %v239 = vld [vmem:[%s7 + $0xd8] sm:$0xff]
    %v240 = vld [vmem:[%s7 + $0xe0] sm:$0xff]
    %v241 = vld [vmem:[%s7 + $0xe8] sm:$0xff]
    %v242 = vld [vmem:[%s7 + $0xf0] sm:$0xff]
    %v243 = vld [vmem:[%s7 + $0xf8] sm:$0xff]
    %v244 = vld [vmem:[%s7 + $0x100] sm:$0xff]
    %v245 = vld [vmem:[%s7 + $0x108] sm:$0xff]
    %v246 = vld [vmem:[%s7 + $0x110] sm:$0xff]
    %v247 = vld [vmem:[%s7 + $0x118] sm:$0xff]
    %v248 = vld [vmem:[%s7 + $0x120] sm:$0xff]
    %v249 = vld [vmem:[%s7 + $0x128] sm:$0xff]
    %v250 = vld [vmem:[%s7 + $0x130] sm:$0xff]
    %v251 = vld [vmem:[%s7 + $0x138] sm:$0xff]
    %v252 = vld [vmem:[%s7 + $0x140] sm:$0xff]
    %v253 = vld [vmem:[%s7 + $0x148] sm:$0xff]
    %v254 = vld [vmem:[%s7 + $0x150] sm:$0xff]
    %v255 = vld [vmem:[%s7 + $0x158] sm:$0xff]
    %v256 = vld [vmem:[%s7 + $0x160] sm:$0xff]
    %v257 = vld [vmem:[%s7 + $0x168] sm:$0xff]
    %v258 = vld [vmem:[%s7 + $0x170] sm:$0xff]
    %v259 = vld [vmem:[%s7 + $0x178] sm:$0xff]
    %v260 = vld [vmem:[%s7 + $0x180] sm:$0xff]
    %v261 = vld [vmem:[%s7 + $0x188] sm:$0xff]
    %v262 = vld [vmem:[%s7 + $0x190] sm:$0xff]
    %v263 = vld [vmem:[%s7 + $0x198] sm:$0xff]
    %v264 = vld [vmem:[%s7 + $0x1a0] sm:$0xff]
    %v265 = vld [vmem:[%s7 + $0x1a8] sm:$0xff]
    %v266 = vld [vmem:[%s7 + $0x1b0] sm:$0xff]
    %v267 = vld [vmem:[%s7 + $0x1b8] sm:$0xff]
    %v268 = vld [vmem:[%s7 + $0x1c0] sm:$0xff]
    %v269 = vld [vmem:[%s7 + $0x1c8] sm:$0xff]
    %v270 = vld [vmem:[%s7 + $0x1d0] sm:$0xff]
    %v271 = vld [vmem:[%s7 + $0x1d8] sm:$0xff]
    %v272 = vld [vmem:[%s7 + $0x1e0] sm:$0xff]
    %v273 = vld [vmem:[%s7 + $0x1e8] sm:$0xff]
    %v274 = vld [vmem:[%s7 + $0x1f0] sm:$0xff]
    %v275 = vld [vmem:[%s7 + $0x1f8] sm:$0xff]
    %v276 = vld [vmem:[%s5] sm:$0xff]
    %v277 = vld [vmem:[%s5 + $0x8] sm:$0xff]
    %v278 = vld [vmem:[%s5 + $0x10] sm:$0xff]
    %v279 = vld [vmem:[%s5 + $0x18] sm:$0xff]
    %v280 = vld [vmem:[%s5 + $0x20] sm:$0xff]
    %v281 = vld [vmem:[%s5 + $0x28] sm:$0xff]
    %v282 = vld [vmem:[%s5 + $0x30] sm:$0xff]
    %v283 = vld [vmem:[%s5 + $0x38] sm:$0xff]
    %v284 = vld [vmem:[%s5 + $0x40] sm:$0xff]
    %v285 = vld [vmem:[%s5 + $0x48] sm:$0xff]
    %v286 = vld [vmem:[%s5 + $0x50] sm:$0xff]
    %v287 = vld [vmem:[%s5 + $0x58] sm:$0xff]
    %v288 = vld [vmem:[%s5 + $0x60] sm:$0xff]
    %v289 = vld [vmem:[%s5 + $0x68] sm:$0xff]
    %v290 = vld [vmem:[%s5 + $0x70] sm:$0xff]
    %v291 = vld [vmem:[%s5 + $0x78] sm:$0xff]
    %v292 = vld [vmem:[%s5 + $0x80] sm:$0xff]
    %v293 = vld [vmem:[%s5 + $0x88] sm:$0xff]
    %v294 = vld [vmem:[%s5 + $0x90] sm:$0xff]
    %v295 = vld [vmem:[%s5 + $0x98] sm:$0xff]
    %v296 = vld [vmem:[%s5 + $0xa0] sm:$0xff]
    %v297 = vld [vmem:[%s5 + $0xa8] sm:$0xff]
    %v298 = vld [vmem:[%s5 + $0xb0] sm:$0xff]
    %v299 = vld [vmem:[%s5 + $0xb8] sm:$0xff]
    %v300 = vld [vmem:[%s5 + $0xc0] sm:$0xff]
    %v301 = vld [vmem:[%s5 + $0xc8] sm:$0xff]
    %v302 = vld [vmem:[%s5 + $0xd0] sm:$0xff]
    %v303 = vld [vmem:[%s5 + $0xd8] sm:$0xff]
    %v304 = vld [vmem:[%s5 + $0xe0] sm:$0xff]
    %v305 = vld [vmem:[%s5 + $0xe8] sm:$0xff]
    %v306 = vld [vmem:[%s5 + $0xf0] sm:$0xff]
    %v307 = vld [vmem:[%s5 + $0xf8] sm:$0xff]
    %v308 = vld [vmem:[%s5 + $0x100] sm:$0xff]
    %v309 = vld [vmem:[%s5 + $0x108] sm:$0xff]
    %v310 = vld [vmem:[%s5 + $0x110] sm:$0xff]
    %v311 = vld [vmem:[%s5 + $0x118] sm:$0xff]
    %v312 = vld [vmem:[%s5 + $0x120] sm:$0xff]
    %v313 = vld [vmem:[%s5 + $0x128] sm:$0xff]
    %v314 = vld [vmem:[%s5 + $0x130] sm:$0xff]
    %v315 = vld [vmem:[%s5 + $0x138] sm:$0xff]
    %v316 = vld [vmem:[%s5 + $0x140] sm:$0xff]
    %v317 = vld [vmem:[%s5 + $0x148] sm:$0xff]
    %v318 = vld [vmem:[%s5 + $0x150] sm:$0xff]
    %v319 = vld [vmem:[%s5 + $0x158] sm:$0xff]
    %v320 = vld [vmem:[%s5 + $0x160] sm:$0xff]
    %v321 = vld [vmem:[%s5 + $0x168] sm:$0xff]
    %v322 = vld [vmem:[%s5 + $0x170] sm:$0xff]
    %v323 = vld [vmem:[%s5 + $0x178] sm:$0xff]
    %v324 = vld [vmem:[%s5 + $0x180] sm:$0xff]
    %v325 = vld [vmem:[%s5 + $0x188] sm:$0xff]
    %v326 = vld [vmem:[%s5 + $0x190] sm:$0xff]
    %v327 = vld [vmem:[%s5 + $0x198] sm:$0xff]
    %v328 = vld [vmem:[%s5 + $0x1a0] sm:$0xff]
    %v329 = vld [vmem:[%s5 + $0x1a8] sm:$0xff]
    %v330 = vld [vmem:[%s5 + $0x1b0] sm:$0xff]
    %v331 = vld [vmem:[%s5 + $0x1b8] sm:$0xff]
    %v332 = vld [vmem:[%s5 + $0x1c0] sm:$0xff]
    %v333 = vld [vmem:[%s5 + $0x1c8] sm:$0xff]
    %v334 = vld [vmem:[%s5 + $0x1d0] sm:$0xff]
    %v335 = vld [vmem:[%s5 + $0x1d8] sm:$0xff]
    %v336 = vld [vmem:[%s5 + $0x1e0] sm:$0xff]
    %v337 = vld [vmem:[%s5 + $0x1e8] sm:$0xff]
    %v338 = vld [vmem:[%s5 + $0x1f0] sm:$0xff]
    %v339 = vld [vmem:[%s5 + $0x1f8] sm:$0xff]
    %340 = vmatpush.msra.mxu0 %v291
    %341 = vmatpush.msra.mxu0 %v290
    %342 = vmatpush.msra.mxu0 %v289
    %343 = vmatpush.msra.mxu0 %v288
    %344 = vmatpush.msra.mxu0 %v287
    %345 = vmatpush.msra.mxu0 %v286
    %346 = vmatpush.msra.mxu0 %v285
    %347 = vmatpush.msra.mxu0 %v284
    %348 = vmatpush.msra.mxu0 %v283
    %349 = vmatpush.msra.mxu0 %v282
    %350 = vmatpush.msra.mxu0 %v281
    %351 = vmatpush.msra.mxu0 %v280
    %352 = vmatpush.msra.mxu0 %v279
    %353 = vmatpush.msra.mxu0 %v278
    %354 = vmatpush.msra.mxu0 %v277
    %355 = vmatpush.msra.mxu0 %v276
    %356 = vmatmul.f32.gmra.mxu0 %v212
    %v357 = vpop.f32.mrf.mxu0
    %v358 = vadd.f32 0.0, %v357
    %359 = vmatmul.f32.gmra.mxu0 %v216
    %v360 = vpop.f32.mrf.mxu0
    %v361 = vadd.f32 0.0, %v360
    %362 = vmatmul.f32.gmra.mxu0 %v220
    %v363 = vpop.f32.mrf.mxu0
    %v364 = vadd.f32 0.0, %v363
    %365 = vmatmul.f32.gmra.mxu0 %v224
    %v366 = vpop.f32.mrf.mxu0
    %v367 = vadd.f32 0.0, %v366
    %368 = vmatmul.f32.gmra.mxu0 %v228
    %v369 = vpop.f32.mrf.mxu0
    %v370 = vadd.f32 0.0, %v369
    %371 = vmatmul.f32.gmra.mxu0 %v232
    %v372 = vpop.f32.mrf.mxu0
    %v373 = vadd.f32 0.0, %v372
    %374 = vmatmul.f32.gmra.mxu0 %v236
    %v375 = vpop.f32.mrf.mxu0
    %v376 = vadd.f32 0.0, %v375
    %377 = vmatmul.f32.gmra.mxu0 %v240
    %v378 = vpop.f32.mrf.mxu0
    %v379 = vadd.f32 0.0, %v378
    %380 = vmatmul.f32.gmra.mxu0 %v244
    %v381 = vpop.f32.mrf.mxu0
    %v382 = vadd.f32 0.0, %v381
    %383 = vmatmul.f32.gmra.mxu0 %v248
    %v384 = vpop.f32.mrf.mxu0
    %v385 = vadd.f32 0.0, %v384
    %386 = vmatmul.f32.gmra.mxu0 %v252
    %v387 = vpop.f32.mrf.mxu0
    %v388 = vadd.f32 0.0, %v387
    %389 = vmatmul.f32.gmra.mxu0 %v256
    %v390 = vpop.f32.mrf.mxu0
    %v391 = vadd.f32 0.0, %v390
    %392 = vmatmul.f32.gmra.mxu0 %v260
    %v393 = vpop.f32.mrf.mxu0
    %v394 = vadd.f32 0.0, %v393
    %395 = vmatmul.f32.gmra.mxu0 %v264
    %v396 = vpop.f32.mrf.mxu0
    %v397 = vadd.f32 0.0, %v396
    %398 = vmatmul.f32.gmra.mxu0 %v268
    %v399 = vpop.f32.mrf.mxu0
    %v400 = vadd.f32 0.0, %v399
    %401 = vmatmul.f32.gmra.mxu0 %v272
    %v402 = vpop.f32.mrf.mxu0
    %v403 = vadd.f32 0.0, %v402
    %404 = vdwg.mxu0
    %405 = vmatpush.msra.mxu0 %v307
    %406 = vmatpush.msra.mxu0 %v306
    %407 = vmatpush.msra.mxu0 %v305
    %408 = vmatpush.msra.mxu0 %v304
    %409 = vmatpush.msra.mxu0 %v303
    %410 = vmatpush.msra.mxu0 %v302
    %411 = vmatpush.msra.mxu0 %v301
    %412 = vmatpush.msra.mxu0 %v300
    %413 = vmatpush.msra.mxu0 %v299
    %414 = vmatpush.msra.mxu0 %v298
    %415 = vmatpush.msra.mxu0 %v297
    %416 = vmatpush.msra.mxu0 %v296
    %417 = vmatpush.msra.mxu0 %v295
    %418 = vmatpush.msra.mxu0 %v294
    %419 = vmatpush.msra.mxu0 %v293
    %420 = vmatpush.msra.mxu0 %v292
    %421 = vmatmul.f32.gmra.mxu0 %v213
    %v422 = vpop.f32.mrf.mxu0
    %v423 = vadd.f32 %v358, %v422
    %424 = vmatmul.f32.gmra.mxu0 %v217
    %v425 = vpop.f32.mrf.mxu0
    %v426 = vadd.f32 %v361, %v425
    %427 = vmatmul.f32.gmra.mxu0 %v221
    %v428 = vpop.f32.mrf.mxu0
    %v429 = vadd.f32 %v364, %v428
    %430 = vmatmul.f32.gmra.mxu0 %v225
    %v431 = vpop.f32.mrf.mxu0
    %v432 = vadd.f32 %v367, %v431
    %433 = vmatmul.f32.gmra.mxu0 %v229
    %v434 = vpop.f32.mrf.mxu0
    %v435 = vadd.f32 %v370, %v434
    %436 = vmatmul.f32.gmra.mxu0 %v233
    %v437 = vpop.f32.mrf.mxu0
    %v438 = vadd.f32 %v373, %v437
    %439 = vmatmul.f32.gmra.mxu0 %v237
    %v440 = vpop.f32.mrf.mxu0
    %v441 = vadd.f32 %v376, %v440
    %442 = vmatmul.f32.gmra.mxu0 %v241
    %v443 = vpop.f32.mrf.mxu0
    %v444 = vadd.f32 %v379, %v443
    %445 = vmatmul.f32.gmra.mxu0 %v245
    %v446 = vpop.f32.mrf.mxu0
    %v447 = vadd.f32 %v382, %v446
    %448 = vmatmul.f32.gmra.mxu0 %v249
    %v449 = vpop.f32.mrf.mxu0
    %v450 = vadd.f32 %v385, %v449
    %451 = vmatmul.f32.gmra.mxu0 %v253
    %v452 = vpop.f32.mrf.mxu0
    %v453 = vadd.f32 %v388, %v452
    %454 = vmatmul.f32.gmra.mxu0 %v257
    %v455 = vpop.f32.mrf.mxu0
    %v456 = vadd.f32 %v391, %v455
    %457 = vmatmul.f32.gmra.mxu0 %v261
    %v458 = vpop.f32.mrf.mxu0
    %v459 = vadd.f32 %v394, %v458
    %460 = vmatmul.f32.gmra.mxu0 %v265
    %v461 = vpop.f32.mrf.mxu0
    %v462 = vadd.f32 %v397, %v461
    %463 = vmatmul.f32.gmra.mxu0 %v269
    %v464 = vpop.f32.mrf.mxu0
    %v465 = vadd.f32 %v400, %v464
    %466 = vmatmul.f32.gmra.mxu0 %v273
    %v467 = vpop.f32.mrf.mxu0
    %v468 = vadd.f32 %v403, %v467
    %469 = vdwg.mxu0
    %470 = vmatpush.msra.mxu0 %v323
    %471 = vmatpush.msra.mxu0 %v322
    %472 = vmatpush.msra.mxu0 %v321
    %473 = vmatpush.msra.mxu0 %v320
    %474 = vmatpush.msra.mxu0 %v319
    %475 = vmatpush.msra.mxu0 %v318
    %476 = vmatpush.msra.mxu0 %v317
    %477 = vmatpush.msra.mxu0 %v316
    %478 = vmatpush.msra.mxu0 %v315
    %479 = vmatpush.msra.mxu0 %v314
    %480 = vmatpush.msra.mxu0 %v313
    %481 = vmatpush.msra.mxu0 %v312
    %482 = vmatpush.msra.mxu0 %v311
    %483 = vmatpush.msra.mxu0 %v310
    %484 = vmatpush.msra.mxu0 %v309
    %485 = vmatpush.msra.mxu0 %v308
    %486 = vmatmul.f32.gmra.mxu0 %v214
    %v487 = vpop.f32.mrf.mxu0
    %v488 = vadd.f32 %v423, %v487
    %489 = vmatmul.f32.gmra.mxu0 %v218
    %v490 = vpop.f32.mrf.mxu0
    %v491 = vadd.f32 %v426, %v490
    %492 = vmatmul.f32.gmra.mxu0 %v222
    %v493 = vpop.f32.mrf.mxu0
    %v494 = vadd.f32 %v429, %v493
    %495 = vmatmul.f32.gmra.mxu0 %v226
    %v496 = vpop.f32.mrf.mxu0
    %v497 = vadd.f32 %v432, %v496
    %498 = vmatmul.f32.gmra.mxu0 %v230
    %v499 = vpop.f32.mrf.mxu0
    %v500 = vadd.f32 %v435, %v499
    %501 = vmatmul.f32.gmra.mxu0 %v234
    %v502 = vpop.f32.mrf.mxu0
    %v503 = vadd.f32 %v438, %v502
    %504 = vmatmul.f32.gmra.mxu0 %v238
    %v505 = vpop.f32.mrf.mxu0
    %v506 = vadd.f32 %v441, %v505
    %507 = vmatmul.f32.gmra.mxu0 %v242
    %v508 = vpop.f32.mrf.mxu0
    %v509 = vadd.f32 %v444, %v508
    %510 = vmatmul.f32.gmra.mxu0 %v246
    %v511 = vpop.f32.mrf.mxu0
    %v512 = vadd.f32 %v447, %v511
    %513 = vmatmul.f32.gmra.mxu0 %v250
    %v514 = vpop.f32.mrf.mxu0
    %v515 = vadd.f32 %v450, %v514
    %516 = vmatmul.f32.gmra.mxu0 %v254
    %v517 = vpop.f32.mrf.mxu0
    %v518 = vadd.f32 %v453, %v517
    %519 = vmatmul.f32.gmra.mxu0 %v258
    %v520 = vpop.f32.mrf.mxu0
    %v521 = vadd.f32 %v456, %v520
    %522 = vmatmul.f32.gmra.mxu0 %v262
    %v523 = vpop.f32.mrf.mxu0
    %v524 = vadd.f32 %v459, %v523
    %525 = vmatmul.f32.gmra.mxu0 %v266
    %v526 = vpop.f32.mrf.mxu0
    %v527 = vadd.f32 %v462, %v526
    %528 = vmatmul.f32.gmra.mxu0 %v270
    %v529 = vpop.f32.mrf.mxu0
    %v530 = vadd.f32 %v465, %v529
    %531 = vmatmul.f32.gmra.mxu0 %v274
    %v532 = vpop.f32.mrf.mxu0
    %v533 = vadd.f32 %v468, %v532
    %534 = vdwg.mxu0
    %535 = vmatpush.msra.mxu0 %v339
    %536 = vmatpush.msra.mxu0 %v338
    %537 = vmatpush.msra.mxu0 %v337
    %538 = vmatpush.msra.mxu0 %v336
    %539 = vmatpush.msra.mxu0 %v335
    %540 = vmatpush.msra.mxu0 %v334
    %541 = vmatpush.msra.mxu0 %v333
    %542 = vmatpush.msra.mxu0 %v332
    %543 = vmatpush.msra.mxu0 %v331
    %544 = vmatpush.msra.mxu0 %v330
    %545 = vmatpush.msra.mxu0 %v329
    %546 = vmatpush.msra.mxu0 %v328
    %547 = vmatpush.msra.mxu0 %v327
    %548 = vmatpush.msra.mxu0 %v326
    %549 = vmatpush.msra.mxu0 %v325
    %550 = vmatpush.msra.mxu0 %v324
    %551 = vmatmul.f32.gmra.mxu0 %v215
    %v552 = vpop.f32.mrf.mxu0
    %v553 = vadd.f32 %v488, %v552
    %554 = vmatmul.f32.gmra.mxu0 %v219
    %v555 = vpop.f32.mrf.mxu0
    %v556 = vadd.f32 %v491, %v555
    %557 = vmatmul.f32.gmra.mxu0 %v223
    %v558 = vpop.f32.mrf.mxu0
    %v559 = vadd.f32 %v494, %v558
    %560 = vmatmul.f32.gmra.mxu0 %v227
    %v561 = vpop.f32.mrf.mxu0
    %v562 = vadd.f32 %v497, %v561
    %563 = vmatmul.f32.gmra.mxu0 %v231
    %v564 = vpop.f32.mrf.mxu0
    %v565 = vadd.f32 %v500, %v564
    %566 = vmatmul.f32.gmra.mxu0 %v235
    %v567 = vpop.f32.mrf.mxu0
    %v568 = vadd.f32 %v503, %v567
    %569 = vmatmul.f32.gmra.mxu0 %v239
    %v570 = vpop.f32.mrf.mxu0
    %v571 = vadd.f32 %v506, %v570
    %572 = vmatmul.f32.gmra.mxu0 %v243
    %v573 = vpop.f32.mrf.mxu0
    %v574 = vadd.f32 %v509, %v573
    %575 = vmatmul.f32.gmra.mxu0 %v247
    %v576 = vpop.f32.mrf.mxu0
    %v577 = vadd.f32 %v512, %v576
    %578 = vmatmul.f32.gmra.mxu0 %v251
    %v579 = vpop.f32.mrf.mxu0
    %v580 = vadd.f32 %v515, %v579
    %581 = vmatmul.f32.gmra.mxu0 %v255
    %v582 = vpop.f32.mrf.mxu0
    %v583 = vadd.f32 %v518, %v582
    %584 = vmatmul.f32.gmra.mxu0 %v259
    %v585 = vpop.f32.mrf.mxu0
    %v586 = vadd.f32 %v521, %v585
    %587 = vmatmul.f32.gmra.mxu0 %v263
    %v588 = vpop.f32.mrf.mxu0
    %v589 = vadd.f32 %v524, %v588
    %590 = vmatmul.f32.gmra.mxu0 %v267
    %v591 = vpop.f32.mrf.mxu0
    %v592 = vadd.f32 %v527, %v591
    %593 = vmatmul.f32.gmra.mxu0 %v271
    %v594 = vpop.f32.mrf.mxu0
    %v595 = vadd.f32 %v530, %v594
    %596 = vmatmul.f32.gmra.mxu0 %v275
    %v597 = vpop.f32.mrf.mxu0
    %v598 = vadd.f32 %v533, %v597
    %599 = vdwg.mxu0
    %v600 = vld [vmem:[%s13] sm:$0x1]
    %v601 = vld [vmem:[%s15] sm:$0x1]
    %v602 = vsel %vm135, %v553, 0.0
    %v603 = vsel %vm135, %v556, 0.0
    %v604 = vadd.f32 %v602, %v603
    %v605 = vsel %vm135, %v559, 0.0
    %v606 = vadd.f32 %v604, %v605
    %v607 = vsel %vm135, %v562, 0.0
    %v608 = vadd.f32 %v606, %v607
    %v609 = vsel %vm135, %v565, 0.0
    %v610 = vadd.f32 %v608, %v609
    %v611 = vsel %vm135, %v568, 0.0
    %v612 = vadd.f32 %v610, %v611
    %v613 = vsel %vm135, %v571, 0.0
    %v614 = vadd.f32 %v612, %v613
    %v615 = vsel %vm135, %v574, 0.0
    %v616 = vadd.f32 %v614, %v615
    %v617 = vsel %vm135, %v577, 0.0
    %v618 = vadd.f32 %v616, %v617
    %v619 = vsel %vm135, %v580, 0.0
    %v620 = vadd.f32 %v618, %v619
    %v621 = vsel %vm135, %v583, 0.0
    %v622 = vadd.f32 %v620, %v621
    %v623 = vsel %vm135, %v586, 0.0
    %v624 = vadd.f32 %v622, %v623
    %v625 = vsel %vm135, %v589, 0.0
    %v626 = vadd.f32 %v624, %v625
    %v627 = vsel %vm135, %v592, 0.0
    %v628 = vadd.f32 %v626, %v627
    %v629 = vsel %vm135, %v595, 0.0
    %v630 = vadd.f32 %v628, %v629
    %v631 = vsel %vm135, %v598, 0.0
    %v632 = vadd.f32 %v630, %v631
    %v633 = vrot.slane %v632, 4
    %v634 = vadd.f32 %v632, %v633
    %v635 = vrot.slane %v634, 2
    %v636 = vadd.f32 %v634, %v635
    %v637 = vrot.slane %v636, 1
    %v638 = vadd.f32 %v636, %v637
    %v639 = vrcp.pop 128.0
    %v640 = vmul.f32 128.0, %v639
    %v641 = vsub.f32 1.0, %v640
    %v642 = vmul.f32 %v639, %v641
    %v643 = vadd.f32 %v639, %v642
    %vm644 = vweird.f32 %v639
    %v645 = vsel %vm644, %v639, %v643
    %v646 = vmul.f32 %v638, %v645
    %v647 = vsub.f32 %v553, %v646
    %v648 = vsub.f32 %v556, %v646
    %v649 = vsub.f32 %v559, %v646
    %v650 = vsub.f32 %v562, %v646
    %v651 = vsub.f32 %v565, %v646
    %v652 = vsub.f32 %v568, %v646
    %v653 = vsub.f32 %v571, %v646
    %v654 = vsub.f32 %v574, %v646
    %v655 = vsub.f32 %v577, %v646
    %v656 = vsub.f32 %v580, %v646
    %v657 = vsub.f32 %v583, %v646
    %v658 = vsub.f32 %v586, %v646
    %v659 = vsub.f32 %v589, %v646
    %v660 = vsub.f32 %v592, %v646
    %v661 = vsub.f32 %v595, %v646
    %v662 = vsub.f32 %v598, %v646
    %v663 = vmul.f32 %v647, %v647
    %v664 = vmul.f32 %v648, %v648
    %v665 = vmul.f32 %v649, %v649
    %v666 = vmul.f32 %v650, %v650
    %v667 = vmul.f32 %v651, %v651
    %v668 = vmul.f32 %v652, %v652
    %v669 = vmul.f32 %v653, %v653
    %v670 = vmul.f32 %v654, %v654
    %v671 = vmul.f32 %v655, %v655
    %v672 = vmul.f32 %v656, %v656
    %v673 = vmul.f32 %v657, %v657
    %v674 = vmul.f32 %v658, %v658
    %v675 = vmul.f32 %v659, %v659
    %v676 = vmul.f32 %v660, %v660
    %v677 = vmul.f32 %v661, %v661
    %v678 = vmul.f32 %v662, %v662
    %v679 = vsel %vm135, %v663, 0.0
    %v680 = vsel %vm135, %v664, 0.0
    %v681 = vadd.f32 %v679, %v680
    %v682 = vsel %vm135, %v665, 0.0
    %v683 = vadd.f32 %v681, %v682
    %v684 = vsel %vm135, %v666, 0.0
    %v685 = vadd.f32 %v683, %v684
    %v686 = vsel %vm135, %v667, 0.0
    %v687 = vadd.f32 %v685, %v686
    %v688 = vsel %vm135, %v668, 0.0
    %v689 = vadd.f32 %v687, %v688
    %v690 = vsel %vm135, %v669, 0.0
    %v691 = vadd.f32 %v689, %v690
    %v692 = vsel %vm135, %v670, 0.0
    %v693 = vadd.f32 %v691, %v692
    %v694 = vsel %vm135, %v671, 0.0
    %v695 = vadd.f32 %v693, %v694
    %v696 = vsel %vm135, %v672, 0.0
    %v697 = vadd.f32 %v695, %v696
    %v698 = vsel %vm135, %v673, 0.0
    %v699 = vadd.f32 %v697, %v698
    %v700 = vsel %vm135, %v674, 0.0
    %v701 = vadd.f32 %v699, %v700
    %v702 = vsel %vm135, %v675, 0.0
    %v703 = vadd.f32 %v701, %v702
    %v704 = vsel %vm135, %v676, 0.0
    %v705 = vadd.f32 %v703, %v704
    %v706 = vsel %vm135, %v677, 0.0
    %v707 = vadd.f32 %v705, %v706
    %v708 = vsel %vm135, %v678, 0.0
    %v709 = vadd.f32 %v707, %v708
    %v710 = vrot.slane %v709, 4
    %v711 = vadd.f32 %v709, %v710
    %v712 = vrot.slane %v711, 2
    %v713 = vadd.f32 %v711, %v712
    %v714 = vrot.slane %v713, 1
    %v715 = vadd.f32 %v713, %v714
    %v716 = vmul.f32 %v715, %v645
    %v717 = vadd.f32 %v716, 1e-05
    %v718 = vrsqrt.pop %v717
    %v719 = vmul.f32 %v718, %v717
    %v720 = vmul.f32 %v719, %v718
    %v721 = vmul.f32 0.5, %v720
    %v722 = vsub.f32 1.5, %v721
    %v723 = vmul.f32 %v718, %v722
    %vm724 = vweird.f32 %v717
    %vm725 = vweird.f32 %v718
    %vm726 = vmor %vm724, %vm725
    %v727 = vsel %vm726, %v718, %v723
    %v728 = vmul.f32 %v647, %v727
    %v729 = vmul.f32 %v648, %v727
    %v730 = vmul.f32 %v649, %v727
    %v731 = vmul.f32 %v650, %v727
    %v732 = vmul.f32 %v651, %v727
    %v733 = vmul.f32 %v652, %v727
    %v734 = vmul.f32 %v653, %v727
    %v735 = vmul.f32 %v654, %v727
    %v736 = vmul.f32 %v655, %v727
    %v737 = vmul.f32 %v656, %v727
    %v738 = vmul.f32 %v657, %v727
    %v739 = vmul.f32 %v658, %v727
    %v740 = vmul.f32 %v659, %v727
    %v741 = vmul.f32 %v660, %v727
    %v742 = vmul.f32 %v661, %v727
    %v743 = vmul.f32 %v662, %v727
    %v745 = vperm.slane %v600, 0
    %v747 = vmul.f32 %v728, %v745
    %v748 = vmul.f32 %v729, %v745
    %v749 = vmul.f32 %v730, %v745
    %v750 = vmul.f32 %v731, %v745
    %v751 = vmul.f32 %v732, %v745
    %v752 = vmul.f32 %v733, %v745
    %v753 = vmul.f32 %v734, %v745
    %v754 = vmul.f32 %v735, %v745
    %v755 = vmul.f32 %v736, %v745
    %v756 = vmul.f32 %v737, %v745
    %v757 = vmul.f32 %v738, %v745
    %v758 = vmul.f32 %v739, %v745
    %v759 = vmul.f32 %v740, %v745
    %v760 = vmul.f32 %v741, %v745
    %v761 = vmul.f32 %v742, %v745
    %v762 = vmul.f32 %v743, %v745
    %v764 = vperm.slane %v601, 0
    %v766 = vadd.f32 %v747, %v764
    %v767 = vadd.f32 %v748, %v764
    %v768 = vadd.f32 %v749, %v764
    %v769 = vadd.f32 %v750, %v764
    %v770 = vadd.f32 %v751, %v764
    %v771 = vadd.f32 %v752, %v764
    %v772 = vadd.f32 %v753, %v764
    %v773 = vadd.f32 %v754, %v764
    %v774 = vadd.f32 %v755, %v764
    %v775 = vadd.f32 %v756, %v764
    %v776 = vadd.f32 %v757, %v764
    %v777 = vadd.f32 %v758, %v764
    %v778 = vadd.f32 %v759, %v764
    %v779 = vadd.f32 %v760, %v764
    %v780 = vadd.f32 %v761, %v764
    %v781 = vadd.f32 %v762, %v764
    %vm782 = vcmp.gt.f32.partialorder %v766, 0.0
    %vm783 = vcmp.gt.f32.partialorder %v767, 0.0
    %vm784 = vcmp.gt.f32.partialorder %v768, 0.0
    %vm785 = vcmp.gt.f32.partialorder %v769, 0.0
    %vm786 = vcmp.gt.f32.partialorder %v770, 0.0
    %vm787 = vcmp.gt.f32.partialorder %v771, 0.0
    %vm788 = vcmp.gt.f32.partialorder %v772, 0.0
    %vm789 = vcmp.gt.f32.partialorder %v773, 0.0
    %vm790 = vcmp.gt.f32.partialorder %v774, 0.0
    %vm791 = vcmp.gt.f32.partialorder %v775, 0.0
    %vm792 = vcmp.gt.f32.partialorder %v776, 0.0
    %vm793 = vcmp.gt.f32.partialorder %v777, 0.0
    %vm794 = vcmp.gt.f32.partialorder %v778, 0.0
    %vm795 = vcmp.gt.f32.partialorder %v779, 0.0
    %vm796 = vcmp.gt.f32.partialorder %v780, 0.0
    %vm797 = vcmp.gt.f32.partialorder %v781, 0.0
    %v798 = vmul.f32 %v766, 0.2
    %v799 = vmul.f32 %v767, 0.2
    %v800 = vmul.f32 %v768, 0.2
    %v801 = vmul.f32 %v769, 0.2
    %v802 = vmul.f32 %v770, 0.2
    %v803 = vmul.f32 %v771, 0.2
    %v804 = vmul.f32 %v772, 0.2
    %v805 = vmul.f32 %v773, 0.2
    %v806 = vmul.f32 %v774, 0.2
    %v807 = vmul.f32 %v775, 0.2
    %v808 = vmul.f32 %v776, 0.2
    %v809 = vmul.f32 %v777, 0.2
    %v810 = vmul.f32 %v778, 0.2
    %v811 = vmul.f32 %v779, 0.2
    %v812 = vmul.f32 %v780, 0.2
    %v813 = vmul.f32 %v781, 0.2
    %v814 = vsel %vm782, %v766, %v798
    %v815 = vsel %vm783, %v767, %v799
    %v816 = vsel %vm784, %v768, %v800
    %v817 = vsel %vm785, %v769, %v801
    %v818 = vsel %vm786, %v770, %v802
    %v819 = vsel %vm787, %v771, %v803
    %v820 = vsel %vm788, %v772, %v804
    %v821 = vsel %vm789, %v773, %v805
    %v822 = vsel %vm790, %v774, %v806
    %v823 = vsel %vm791, %v775, %v807
    %v824 = vsel %vm792, %v776, %v808
    %v825 = vsel %vm793, %v777, %v809
    %v826 = vsel %vm794, %v778, %v810
    %v827 = vsel %vm795, %v779, %v811
    %v828 = vsel %vm796, %v780, %v812
    %v829 = vsel %vm797, %v781, %v813
    %v830 = vld [vmem:[%s9] sm:$0xff]
    %v831 = vld [vmem:[%s9 + $0x8] sm:$0xff]
    %v832 = vld [vmem:[%s9 + $0x10] sm:$0xff]
    %v833 = vld [vmem:[%s9 + $0x18] sm:$0xff]
    %834 = vmatpush.msra.mxu0 %v829
    %835 = vmatpush.msra.mxu0 %v828
    %836 = vmatpush.msra.mxu0 %v827
    %837 = vmatpush.msra.mxu0 %v826
    %838 = vmatpush.msra.mxu0 %v825
    %839 = vmatpush.msra.mxu0 %v824
    %840 = vmatpush.msra.mxu0 %v823
    %841 = vmatpush.msra.mxu0 %v822
    %842 = vmatpush.msra.mxu0 %v821
    %843 = vmatpush.msra.mxu0 %v820
    %844 = vmatpush.msra.mxu0 %v819
    %845 = vmatpush.msra.mxu0 %v818
    %846 = vmatpush.msra.mxu0 %v817
    %847 = vmatpush.msra.mxu0 %v816
    %848 = vmatpush.msra.mxu0 %v815
    %849 = vmatpush.msra.mxu0 %v814
    %850 = vmatmul.f32.gmra.mxu0 %v830
    %v851 = vpop.f32.mrf.mxu0
    %v852 = vadd.f32 0.0, %v851
    %853 = vmatmul.f32.gmra.mxu0 %v831
    %v854 = vpop.f32.mrf.mxu0
    %v855 = vadd.f32 0.0, %v854
    %856 = vmatmul.f32.gmra.mxu0 %v832
    %v857 = vpop.f32.mrf.mxu0
    %v858 = vadd.f32 0.0, %v857
    %859 = vmatmul.f32.gmra.mxu0 %v833
    %v860 = vpop.f32.mrf.mxu0
    %v861 = vadd.f32 0.0, %v860
    %862 = vdwg.mxu0
    %v863 = vld [vmem:[%s17] sm:$0x1]
    %v864 = vld [vmem:[%s19] sm:$0x1]
    %v865 = vsel %vm135, %v852, 0.0
    %v866 = vsel %vm135, %v855, 0.0
    %v867 = vadd.f32 %v865, %v866
    %v868 = vsel %vm135, %v858, 0.0
    %v869 = vadd.f32 %v867, %v868
    %v870 = vsel %vm135, %v861, 0.0
    %v871 = vadd.f32 %v869, %v870
    %v872 = vrot.slane %v871, 4
    %v873 = vadd.f32 %v871, %v872
    %v874 = vrot.slane %v873, 2
    %v875 = vadd.f32 %v873, %v874
    %v876 = vrot.slane %v875, 1
    %v877 = vadd.f32 %v875, %v876
    %v878 = vrcp.pop 32.0
    %v879 = vmul.f32 32.0, %v878
    %v880 = vsub.f32 1.0, %v879
    %v881 = vmul.f32 %v878, %v880
    %v882 = vadd.f32 %v878, %v881
    %vm883 = vweird.f32 %v878
    %v884 = vsel %vm883, %v878, %v882
    %v885 = vmul.f32 %v877, %v884
    %v886 = vsub.f32 %v852, %v885
    %v887 = vsub.f32 %v855, %v885
    %v888 = vsub.f32 %v858, %v885
    %v889 = vsub.f32 %v861, %v885
    %v890 = vmul.f32 %v886, %v886
    %v891 = vmul.f32 %v887, %v887
    %v892 = vmul.f32 %v888, %v888
    %v893 = vmul.f32 %v889, %v889
    %v894 = vsel %vm135, %v890, 0.0
    %v895 = vsel %vm135, %v891, 0.0
    %v896 = vadd.f32 %v894, %v895
    %v897 = vsel %vm135, %v892, 0.0
    %v898 = vadd.f32 %v896, %v897
    %v899 = vsel %vm135, %v893, 0.0
    %v900 = vadd.f32 %v898, %v899
    %v901 = vrot.slane %v900, 4
    %v902 = vadd.f32 %v900, %v901
    %v903 = vrot.slane %v902, 2
    %v904 = vadd.f32 %v902, %v903
    %v905 = vrot.slane %v904, 1
    %v906 = vadd.f32 %v904, %v905
    %v907 = vmul.f32 %v906, %v884
    %v908 = vadd.f32 %v907, 1e-05
    %v909 = vrsqrt.pop %v908
    %v910 = vmul.f32 %v909, %v908
    %v911 = vmul.f32 %v910, %v909
    %v912 = vmul.f32 0.5, %v911
    %v913 = vsub.f32 1.5, %v912
    %v914 = vmul.f32 %v909, %v913
    %vm915 = vweird.f32 %v908
    %vm916 = vweird.f32 %v909
    %vm917 = vmor %vm915, %vm916
    %v918 = vsel %vm917, %v909, %v914
    %v919 = vmul.f32 %v886, %v918
    %v920 = vmul.f32 %v887, %v918
    %v921 = vmul.f32 %v888, %v918
    %v922 = vmul.f32 %v889, %v918
    %v924 = vperm.slane %v863, 0
    %v926 = vmul.f32 %v919, %v924
    %v927 = vmul.f32 %v920, %v924
    %v928 = vmul.f32 %v921, %v924
    %v929 = vmul.f32 %v922, %v924
    %v931 = vperm.slane %v864, 0
    %v933 = vadd.f32 %v926, %v931
    %v934 = vadd.f32 %v927, %v931
    %v935 = vadd.f32 %v928, %v931
    %v936 = vadd.f32 %v929, %v931
    %vm937 = vcmp.gt.f32.partialorder %v933, 0.0
    %vm938 = vcmp.gt.f32.partialorder %v934, 0.0
    %vm939 = vcmp.gt.f32.partialorder %v935, 0.0
    %vm940 = vcmp.gt.f32.partialorder %v936, 0.0
    %v941 = vmul.f32 %v933, 0.2
    %v942 = vmul.f32 %v934, 0.2
    %v943 = vmul.f32 %v935, 0.2
    %v944 = vmul.f32 %v936, 0.2
    %v945 = vsel %vm937, %v933, %v941
    %v946 = vsel %vm938, %v934, %v942
    %v947 = vsel %vm939, %v935, %v943
    %v948 = vsel %vm940, %v936, %v944
    %v949 = vld [vmem:[%s11] sm:$0x3]
    %vm950 = vcmask 261120
    %v952 = vsel %vm950, %v949, 0
    %954 = vmatpush.msra.mxu0 0.0
    %955 = vmatpush.msra.mxu0 0.0
    %956 = vmatpush.msra.mxu0 0.0
    %957 = vmatpush.msra.mxu0 0.0
    %958 = vmatpush.msra.mxu0 0.0
    %959 = vmatpush.msra.mxu0 0.0
    %960 = vmatpush.msra.mxu0 0.0
    %961 = vmatpush.msra.mxu0 0.0
    %962 = vmatpush.msra.mxu0 0.0
    %963 = vmatpush.msra.mxu0 0.0
    %964 = vmatpush.msra.mxu0 0.0
    %965 = vmatpush.msra.mxu0 0.0
    %966 = vmatpush.msra.mxu0 %v948
    %967 = vmatpush.msra.mxu0 %v947
    %968 = vmatpush.msra.mxu0 %v946
    %969 = vmatpush.msra.mxu0 %v945
    %970 = vmatmul.f32.gmra.mxu0 %v952
    %v971 = vpop.f32.mrf.mxu0
    %v972 = vadd.f32 0.0, %v971
    %973 = vdwg.mxu0
    %s974 = scalar_lea.vmem %s11, 2
    %v975 = vld [vmem:[%s974] sm:$0x3]
    %v977 = vsel %vm950, %v975, 0
    %979 = vmatpush.msra.mxu0 0.0
    %980 = vmatpush.msra.mxu0 0.0
    %981 = vmatpush.msra.mxu0 0.0
    %982 = vmatpush.msra.mxu0 0.0
    %983 = vmatpush.msra.mxu0 0.0
    %984 = vmatpush.msra.mxu0 0.0
    %985 = vmatpush.msra.mxu0 0.0
    %986 = vmatpush.msra.mxu0 0.0
    %987 = vmatpush.msra.mxu0 0.0
    %988 = vmatpush.msra.mxu0 0.0
    %989 = vmatpush.msra.mxu0 0.0
    %990 = vmatpush.msra.mxu0 0.0
    %991 = vmatpush.msra.mxu0 %v948
    %992 = vmatpush.msra.mxu0 %v947
    %993 = vmatpush.msra.mxu0 %v946
    %994 = vmatpush.msra.mxu0 %v945
    %995 = vmatmul.f32.gmra.mxu0 %v977
    %v996 = vpop.f32.mrf.mxu0
    %v997 = vadd.f32 0.0, %v996
    %998 = vdwg.mxu0
    %s999 = scalar_lea.vmem %s11, 4
    %v1000 = vld [vmem:[%s999] sm:$0x3]
    %v1002 = vsel %vm950, %v1000, 0
    %1004 = vmatpush.msra.mxu0 0.0
    %1005 = vmatpush.msra.mxu0 0.0
    %1006 = vmatpush.msra.mxu0 0.0
    %1007 = vmatpush.msra.mxu0 0.0
    %1008 = vmatpush.msra.mxu0 0.0
    %1009 = vmatpush.msra.mxu0 0.0
    %1010 = vmatpush.msra.mxu0 0.0
    %1011 = vmatpush.msra.mxu0 0.0
    %1012 = vmatpush.msra.mxu0 0.0
    %1013 = vmatpush.msra.mxu0 0.0
    %1014 = vmatpush.msra.mxu0 0.0
    %1015 = vmatpush.msra.mxu0 0.0
    %1016 = vmatpush.msra.mxu0 %v948
    %1017 = vmatpush.msra.mxu0 %v947
    %1018 = vmatpush.msra.mxu0 %v946
    %1019 = vmatpush.msra.mxu0 %v945
    %1020 = vmatmul.f32.gmra.mxu0 %v1002
    %v1021 = vpop.f32.mrf.mxu0
    %v1022 = vadd.f32 0.0, %v1021
    %1023 = vdwg.mxu0
    %s1024 = scalar_lea.vmem %s11, 6
    %v1025 = vld [vmem:[%s1024] sm:$0x3]
    %v1027 = vsel %vm950, %v1025, 0
    %1029 = vmatpush.msra.mxu0 0.0
    %1030 = vmatpush.msra.mxu0 0.0
    %1031 = vmatpush.msra.mxu0 0.0
    %1032 = vmatpush.msra.mxu0 0.0
    %1033 = vmatpush.msra.mxu0 0.0
    %1034 = vmatpush.msra.mxu0 0.0
    %1035 = vmatpush.msra.mxu0 0.0
    %1036 = vmatpush.msra.mxu0 0.0
    %1037 = vmatpush.msra.mxu0 0.0
    %1038 = vmatpush.msra.mxu0 0.0
    %1039 = vmatpush.msra.mxu0 0.0
    %1040 = vmatpush.msra.mxu0 0.0
    %1041 = vmatpush.msra.mxu0 %v948
    %1042 = vmatpush.msra.mxu0 %v947
    %1043 = vmatpush.msra.mxu0 %v946
    %1044 = vmatpush.msra.mxu0 %v945
    %1045 = vmatmul.f32.gmra.mxu0 %v1027
    %v1046 = vpop.f32.mrf.mxu0
    %v1047 = vadd.f32 0.0, %v1046
    %1048 = vdwg.mxu0
    %vm1049 = vcmask 517120
    %v1050 = vsel %vm1049, %v972, 0.0
    %v1051 = vrot.slane %v1050, 4
    %v1052 = vadd.f32 %v1050, %v1051
    %v1053 = vrot.slane %v1052, 2
    %v1054 = vadd.f32 %v1052, %v1053
    %v1055 = vrot.slane %v1054, 1
    %v1056 = vadd.f32 %v1054, %v1055
    %v1057 = vadd.f32 %v1056, 0.0
    %v1058 = vsel %vm1049, %v997, 0.0
    %v1059 = vrot.slane %v1058, 4
    %v1060 = vadd.f32 %v1058, %v1059
    %v1061 = vrot.slane %v1060, 2
    %v1062 = vadd.f32 %v1060, %v1061
    %v1063 = vrot.slane %v1062, 1
    %v1064 = vadd.f32 %v1062, %v1063
    %v1065 = vadd.f32 %v1057, %v1064
    %v1066 = vsel %vm1049, %v1022, 0.0
    %v1067 = vrot.slane %v1066, 4
    %v1068 = vadd.f32 %v1066, %v1067
    %v1069 = vrot.slane %v1068, 2
    %v1070 = vadd.f32 %v1068, %v1069
    %v1071 = vrot.slane %v1070, 1
    %v1072 = vadd.f32 %v1070, %v1071
    %v1073 = vadd.f32 %v1065, %v1072
    %v1074 = vsel %vm1049, %v1047, 0.0
    %v1075 = vrot.slane %v1074, 4
    %v1076 = vadd.f32 %v1074, %v1075
    %v1077 = vrot.slane %v1076, 2
    %v1078 = vadd.f32 %v1076, %v1077
    %v1079 = vrot.slane %v1078, 1
    %v1080 = vadd.f32 %v1078, %v1079
    %v1081 = vadd.f32 %v1073, %v1080
    %v1082 = vrcp.pop 8.0
    %v1083 = vmul.f32 8.0, %v1082
    %v1084 = vsub.f32 1.0, %v1083
    %v1085 = vmul.f32 %v1082, %v1084
    %v1086 = vadd.f32 %v1082, %v1085
    %vm1087 = vweird.f32 %v1082
    %v1088 = vsel %vm1087, %v1082, %v1086
    %v1089 = vmul.f32 %v1081, %v1088
    %v1090 = vsub.f32 %v972, %v1089
    %v1091 = vmul.f32 %v1090, %v1090
    %v1092 = vsel %vm1049, %v1091, 0.0
    %v1093 = vrot.slane %v1092, 4
    %v1094 = vadd.f32 %v1092, %v1093
    %v1095 = vrot.slane %v1094, 2
    %v1096 = vadd.f32 %v1094, %v1095
    %v1097 = vrot.slane %v1096, 1
    %v1098 = vadd.f32 %v1096, %v1097
    %v1099 = vadd.f32 %v1098, 0.0
    %v1100 = vsub.f32 %v997, %v1089
    %v1101 = vmul.f32 %v1100, %v1100
    %v1102 = vsel %vm1049, %v1101, 0.0
    %v1103 = vrot.slane %v1102, 4
    %v1104 = vadd.f32 %v1102, %v1103
    %v1105 = vrot.slane %v1104, 2
    %v1106 = vadd.f32 %v1104, %v1105
    %v1107 = vrot.slane %v1106, 1
    %v1108 = vadd.f32 %v1106, %v1107
    %v1109 = vadd.f32 %v1099, %v1108
    %v1110 = vsub.f32 %v1022, %v1089
    %v1111 = vmul.f32 %v1110, %v1110
    %v1112 = vsel %vm1049, %v1111, 0.0
    %v1113 = vrot.slane %v1112, 4
    %v1114 = vadd.f32 %v1112, %v1113
    %v1115 = vrot.slane %v1114, 2
    %v1116 = vadd.f32 %v1114, %v1115
    %v1117 = vrot.slane %v1116, 1
    %v1118 = vadd.f32 %v1116, %v1117
    %v1119 = vadd.f32 %v1109, %v1118
    %v1120 = vsub.f32 %v1047, %v1089
    %v1121 = vmul.f32 %v1120, %v1120
    %v1122 = vsel %vm1049, %v1121, 0.0
    %v1123 = vrot.slane %v1122, 4
    %v1124 = vadd.f32 %v1122, %v1123
    %v1125 = vrot.slane %v1124, 2
    %v1126 = vadd.f32 %v1124, %v1125
    %v1127 = vrot.slane %v1126, 1
    %v1128 = vadd.f32 %v1126, %v1127
    %v1129 = vadd.f32 %v1119, %v1128
    %v1130 = vmul.f32 %v1129, %v1088
    %v1131 = vadd.f32 %v1130, 1e-05
    %v1132 = vrsqrt.pop %v1131
    %v1133 = vmul.f32 %v1132, %v1131
    %v1134 = vmul.f32 %v1133, %v1132
    %v1135 = vmul.f32 0.5, %v1134
    %v1136 = vsub.f32 1.5, %v1135
    %v1137 = vmul.f32 %v1132, %v1136
    %vm1138 = vweird.f32 %v1131
    %vm1139 = vweird.f32 %v1132
    %vm1140 = vmor %vm1138, %vm1139
    %v1141 = vsel %vm1140, %v1132, %v1137
    %v1142 = vmul.f32 %v1090, %v1141
    %v1143 = vld [vmem:[%s21] sm:$0x1]
    %v1145 = vperm.slane %v1143, 0
    %v1147 = vmul.f32 %v1142, %v1145
    %v1148 = vld [vmem:[%s23] sm:$0x1]
    %v1150 = vperm.slane %v1148, 0
    %v1152 = vadd.f32 %v1147, %v1150
    %v1153 = vmul.f32 %v1100, %v1141
    %v1154 = vmul.f32 %v1153, %v1145
    %v1155 = vadd.f32 %v1154, %v1150
    %v1156 = vmul.f32 %v1110, %v1141
    %v1157 = vmul.f32 %v1156, %v1145
    %v1158 = vadd.f32 %v1157, %v1150
    %v1159 = vmul.f32 %v1120, %v1141
    %v1160 = vmul.f32 %v1159, %v1145
    %v1161 = vadd.f32 %v1160, %v1150
    %vm1162 = vcmp.gt.f32.partialorder %v1152, 0.0
    %v1163 = vmul.f32 %v1152, 0.2
    %v1164 = vsel %vm1162, %v1152, %v1163
    %vm1165 = vcmp.gt.f32.partialorder %v1155, 0.0
    %v1166 = vmul.f32 %v1155, 0.2
    %v1167 = vsel %vm1165, %v1155, %v1166
    %vm1168 = vcmp.gt.f32.partialorder %v1158, 0.0
    %v1169 = vmul.f32 %v1158, 0.2
    %v1170 = vsel %vm1168, %v1158, %v1169
    %vm1171 = vcmp.gt.f32.partialorder %v1161, 0.0
    %v1172 = vmul.f32 %v1161, 0.2
    %v1173 = vsel %vm1171, %v1161, %v1172
    %v1174 = vld [vmem:[%s25] sm:$0xff]
    %v1175 = vld [vmem:[%s25 + $0x8] sm:$0xff]
    %v1176 = vld [vmem:[%s25 + $0x10] sm:$0xff]
    %v1177 = vld [vmem:[%s25 + $0x18] sm:$0xff]
    %v1178 = vld [vmem:[%s25 + $0x20] sm:$0xff]
    %v1179 = vld [vmem:[%s25 + $0x28] sm:$0xff]
    %v1180 = vld [vmem:[%s25 + $0x30] sm:$0xff]
    %v1181 = vld [vmem:[%s25 + $0x38] sm:$0xff]
    %v1182 = vld [vmem:[%s25 + $0x40] sm:$0xff]
    %v1183 = vld [vmem:[%s25 + $0x48] sm:$0xff]
    %v1184 = vld [vmem:[%s25 + $0x50] sm:$0xff]
    %v1185 = vld [vmem:[%s25 + $0x58] sm:$0xff]
    %v1186 = vld [vmem:[%s25 + $0x60] sm:$0xff]
    %v1187 = vld [vmem:[%s25 + $0x68] sm:$0xff]
    %v1188 = vld [vmem:[%s25 + $0x70] sm:$0xff]
    %v1189 = vld [vmem:[%s25 + $0x78] sm:$0xff]
    %v1190 = vld [vmem:[%s25 + $0x80] sm:$0xff]
    %v1191 = vld [vmem:[%s25 + $0x88] sm:$0xff]
    %v1192 = vld [vmem:[%s25 + $0x90] sm:$0xff]
    %v1193 = vld [vmem:[%s25 + $0x98] sm:$0xff]
    %v1194 = vld [vmem:[%s25 + $0xa0] sm:$0xff]
    %v1195 = vld [vmem:[%s25 + $0xa8] sm:$0xff]
    %v1196 = vld [vmem:[%s25 + $0xb0] sm:$0xff]
    %v1197 = vld [vmem:[%s25 + $0xb8] sm:$0xff]
    %v1198 = vld [vmem:[%s25 + $0xc0] sm:$0xff]
    %v1199 = vld [vmem:[%s25 + $0xc8] sm:$0xff]
    %v1200 = vld [vmem:[%s25 + $0xd0] sm:$0xff]
    %v1201 = vld [vmem:[%s25 + $0xd8] sm:$0xff]
    %v1202 = vld [vmem:[%s25 + $0xe0] sm:$0xff]
    %v1203 = vld [vmem:[%s25 + $0xe8] sm:$0xff]
    %v1204 = vld [vmem:[%s25 + $0xf0] sm:$0xff]
    %v1205 = vld [vmem:[%s25 + $0xf8] sm:$0xff]
    %v1206 = vld [vmem:[%s27] sm:$0x1]
    %v1208 = vsel %vm135, %v1164, 0
    %1210 = vmatpush.msra.mxu0 0.0
    %1211 = vmatpush.msra.mxu0 0.0
    %1212 = vmatpush.msra.mxu0 0.0
    %1213 = vmatpush.msra.mxu0 0.0
    %1214 = vmatpush.msra.mxu0 0.0
    %1215 = vmatpush.msra.mxu0 0.0
    %1216 = vmatpush.msra.mxu0 0.0
    %1217 = vmatpush.msra.mxu0 0.0
    %1218 = vmatpush.msra.mxu0 %v1181
    %1219 = vmatpush.msra.mxu0 %v1180
    %1220 = vmatpush.msra.mxu0 %v1179
    %1221 = vmatpush.msra.mxu0 %v1178
    %1222 = vmatpush.msra.mxu0 %v1177
    %1223 = vmatpush.msra.mxu0 %v1176
    %1224 = vmatpush.msra.mxu0 %v1175
    %1225 = vmatpush.msra.mxu0 %v1174
    %1226 = vmatmul.f32.gmra.mxu0 %v1208
    %v1227 = vpop.f32.mrf.mxu0
    %v1228 = vadd.f32 0.0, %v1227
    %1229 = vdwg.mxu0
    %v1231 = vperm.slane %v1206, 0
    %v1233 = vadd.f32 %v1231, %v1228
    %v1235 = vsel %vm135, %v1167, 0
    %1237 = vmatpush.msra.mxu0 0.0
    %1238 = vmatpush.msra.mxu0 0.0
    %1239 = vmatpush.msra.mxu0 0.0
    %1240 = vmatpush.msra.mxu0 0.0
    %1241 = vmatpush.msra.mxu0 0.0
    %1242 = vmatpush.msra.mxu0 0.0
    %1243 = vmatpush.msra.mxu0 0.0
    %1244 = vmatpush.msra.mxu0 0.0
    %1245 = vmatpush.msra.mxu0 %v1189
    %1246 = vmatpush.msra.mxu0 %v1188
    %1247 = vmatpush.msra.mxu0 %v1187
    %1248 = vmatpush.msra.mxu0 %v1186
    %1249 = vmatpush.msra.mxu0 %v1185
    %1250 = vmatpush.msra.mxu0 %v1184
    %1251 = vmatpush.msra.mxu0 %v1183
    %1252 = vmatpush.msra.mxu0 %v1182
    %1253 = vmatmul.f32.gmra.mxu0 %v1235
    %v1254 = vpop.f32.mrf.mxu0
    %v1255 = vadd.f32 0.0, %v1254
    %1256 = vdwg.mxu0
    %v1257 = vadd.f32 %v1233, %v1255
    %v1259 = vsel %vm135, %v1170, 0
    %1261 = vmatpush.msra.mxu0 0.0
    %1262 = vmatpush.msra.mxu0 0.0
    %1263 = vmatpush.msra.mxu0 0.0
    %1264 = vmatpush.msra.mxu0 0.0
    %1265 = vmatpush.msra.mxu0 0.0
    %1266 = vmatpush.msra.mxu0 0.0
    %1267 = vmatpush.msra.mxu0 0.0
    %1268 = vmatpush.msra.mxu0 0.0
    %1269 = vmatpush.msra.mxu0 %v1197
    %1270 = vmatpush.msra.mxu0 %v1196
    %1271 = vmatpush.msra.mxu0 %v1195
    %1272 = vmatpush.msra.mxu0 %v1194
    %1273 = vmatpush.msra.mxu0 %v1193
    %1274 = vmatpush.msra.mxu0 %v1192
    %1275 = vmatpush.msra.mxu0 %v1191
    %1276 = vmatpush.msra.mxu0 %v1190
    %1277 = vmatmul.f32.gmra.mxu0 %v1259
    %v1278 = vpop.f32.mrf.mxu0
    %v1279 = vadd.f32 0.0, %v1278
    %1280 = vdwg.mxu0
    %v1281 = vadd.f32 %v1257, %v1279
    %v1283 = vsel %vm135, %v1173, 0
    %1285 = vmatpush.msra.mxu0 0.0
    %1286 = vmatpush.msra.mxu0 0.0
    %1287 = vmatpush.msra.mxu0 0.0
    %1288 = vmatpush.msra.mxu0 0.0
    %1289 = vmatpush.msra.mxu0 0.0
    %1290 = vmatpush.msra.mxu0 0.0
    %1291 = vmatpush.msra.mxu0 0.0
    %1292 = vmatpush.msra.mxu0 0.0
    %1293 = vmatpush.msra.mxu0 %v1205
    %1294 = vmatpush.msra.mxu0 %v1204
    %1295 = vmatpush.msra.mxu0 %v1203
    %1296 = vmatpush.msra.mxu0 %v1202
    %1297 = vmatpush.msra.mxu0 %v1201
    %1298 = vmatpush.msra.mxu0 %v1200
    %1299 = vmatpush.msra.mxu0 %v1199
    %1300 = vmatpush.msra.mxu0 %v1198
    %1301 = vmatmul.f32.gmra.mxu0 %v1283
    %v1302 = vpop.f32.mrf.mxu0
    %v1303 = vadd.f32 0.0, %v1302
    %1304 = vdwg.mxu0
    %v1305 = vadd.f32 %v1281, %v1303
    %v1306 = vld [vmem:[%s29] sm:$0x1]
    %v1307 = vld [vmem:[%s31] sm:$0x1]
    %v1308 = vsel %vm205, %v1305, 0.0
    %v1309 = vrot.slane %v1308, 4
    %v1310 = vadd.f32 %v1308, %v1309
    %v1311 = vrot.slane %v1310, 2
    %v1312 = vadd.f32 %v1310, %v1311
    %v1313 = vrot.slane %v1312, 1
    %v1314 = vadd.f32 %v1312, %v1313
    %v1315 = vrcp.pop 2.0
    %v1316 = vmul.f32 2.0, %v1315
    %v1317 = vsub.f32 1.0, %v1316
    %v1318 = vmul.f32 %v1315, %v1317
    %v1319 = vadd.f32 %v1315, %v1318
    %vm1320 = vweird.f32 %v1315
    %v1321 = vsel %vm1320, %v1315, %v1319
    %v1322 = vmul.f32 %v1314, %v1321
    %v1323 = vsub.f32 %v1305, %v1322
    %v1324 = vmul.f32 %v1323, %v1323
    %v1325 = vsel %vm205, %v1324, 0.0
    %v1326 = vrot.slane %v1325, 4
    %v1327 = vadd.f32 %v1325, %v1326
    %v1328 = vrot.slane %v1327, 2
    %v1329 = vadd.f32 %v1327, %v1328
    %v1330 = vrot.slane %v1329, 1
    %v1331 = vadd.f32 %v1329, %v1330
    %v1332 = vmul.f32 %v1331, %v1321
    %v1333 = vadd.f32 %v1332, 1e-05
    %v1334 = vrsqrt.pop %v1333
    %v1335 = vmul.f32 %v1334, %v1333
    %v1336 = vmul.f32 %v1335, %v1334
    %v1337 = vmul.f32 0.5, %v1336
    %v1338 = vsub.f32 1.5, %v1337
    %v1339 = vmul.f32 %v1334, %v1338
    %vm1340 = vweird.f32 %v1333
    %vm1341 = vweird.f32 %v1334
    %vm1342 = vmor %vm1340, %vm1341
    %v1343 = vsel %vm1342, %v1334, %v1339
    %v1344 = vmul.f32 %v1323, %v1343
    %v1346 = vperm.slane %v1306, 0
    %v1348 = vmul.f32 %v1344, %v1346
    %v1350 = vperm.slane %v1307, 0
    %v1352 = vadd.f32 %v1348, %v1350
    %v1353 = vtanh.pop %v1352
    %v1354 = vld [vmem:[%s37] sm:$0xff]
    %v1355 = vld [vmem:[%s37 + $0x8] sm:$0xff]
    %v1356 = vld [vmem:[%s37 + $0x10] sm:$0xff]
    %v1357 = vld [vmem:[%s37 + $0x18] sm:$0xff]
    %v1358 = vld [vmem:[%s39] sm:$0xff]
    %v1359 = vld [vmem:[%s39 + $0x8] sm:$0xff]
    %v1360 = vld [vmem:[%s39 + $0x10] sm:$0xff]
    %v1361 = vld [vmem:[%s39 + $0x18] sm:$0xff]
    %v1363 = vsel %vm950, %v1353, 0
    %1365 = vmatpush.msra.mxu0 0.0
    %1366 = vmatpush.msra.mxu0 0.0
    %1367 = vmatpush.msra.mxu0 0.0
    %1368 = vmatpush.msra.mxu0 0.0
    %1369 = vmatpush.msra.mxu0 0.0
    %1370 = vmatpush.msra.mxu0 0.0
    %1371 = vmatpush.msra.mxu0 0.0
    %1372 = vmatpush.msra.mxu0 0.0
    %1373 = vmatpush.msra.mxu0 0.0
    %1374 = vmatpush.msra.mxu0 0.0
    %1375 = vmatpush.msra.mxu0 0.0
    %1376 = vmatpush.msra.mxu0 0.0
    %1377 = vmatpush.msra.mxu0 %v1361
    %1378 = vmatpush.msra.mxu0 %v1360
    %1379 = vmatpush.msra.mxu0 %v1359
    %1380 = vmatpush.msra.mxu0 %v1358
    %1381 = vmatmul.f32.gmra.mxu0 %v1363
    %v1382 = vpop.f32.mrf.mxu0
    %v1383 = vadd.f32 0.0, %v1382
    %1384 = vdwg.mxu0
    %v1385 = vsel %vm950, %v203, 0
    %1387 = vmatpush.msra.mxu0 0.0
    %1388 = vmatpush.msra.mxu0 0.0
    %1389 = vmatpush.msra.mxu0 0.0
    %1390 = vmatpush.msra.mxu0 0.0
    %1391 = vmatpush.msra.mxu0 0.0
    %1392 = vmatpush.msra.mxu0 0.0
    %1393 = vmatpush.msra.mxu0 0.0
    %1394 = vmatpush.msra.mxu0 0.0
    %1395 = vmatpush.msra.mxu0 0.0
    %1396 = vmatpush.msra.mxu0 0.0
    %1397 = vmatpush.msra.mxu0 0.0
    %1398 = vmatpush.msra.mxu0 0.0
    %1399 = vmatpush.msra.mxu0 %v1357
    %1400 = vmatpush.msra.mxu0 %v1356
    %1401 = vmatpush.msra.mxu0 %v1355
    %1402 = vmatpush.msra.mxu0 %v1354
    %1403 = vmatmul.f32.gmra.mxu0 %v1385
    %v1404 = vpop.f32.mrf.mxu0
    %v1405 = vadd.f32 %v1383, %v1404
    %1406 = vdwg.mxu0
    %v1407 = vld [vmem:[%s41] sm:$0x1]
    %v1409 = vperm.slane %v1407, 0
    %v1411 = vadd.f32 %v1405, %v1409
    %v1412 = vld [vmem:[%s43] sm:$0x1]
    %v1413 = vld [vmem:[%s45] sm:$0x1]
    %v1414 = vsel %vm205, %v1411, 0.0
    %v1415 = vrot.slane %v1414, 4
    %v1416 = vadd.f32 %v1414, %v1415
    %v1417 = vrot.slane %v1416, 2
    %v1418 = vadd.f32 %v1416, %v1417
    %v1419 = vrot.slane %v1418, 1
    %v1420 = vadd.f32 %v1418, %v1419
    %v1421 = vmul.f32 %v1420, %v1321
    %v1422 = vsub.f32 %v1411, %v1421
    %v1423 = vmul.f32 %v1422, %v1422
    %v1424 = vsel %vm205, %v1423, 0.0
    %v1425 = vrot.slane %v1424, 4
    %v1426 = vadd.f32 %v1424, %v1425
    %v1427 = vrot.slane %v1426, 2
    %v1428 = vadd.f32 %v1426, %v1427
    %v1429 = vrot.slane %v1428, 1
    %v1430 = vadd.f32 %v1428, %v1429
    %v1431 = vmul.f32 %v1430, %v1321
    %v1432 = vadd.f32 %v1431, 1e-05
    %v1433 = vrsqrt.pop %v1432
    %v1434 = vmul.f32 %v1433, %v1432
    %v1435 = vmul.f32 %v1434, %v1433
    %v1436 = vmul.f32 0.5, %v1435
    %v1437 = vsub.f32 1.5, %v1436
    %v1438 = vmul.f32 %v1433, %v1437
    %vm1439 = vweird.f32 %v1432
    %vm1440 = vweird.f32 %v1433
    %vm1441 = vmor %vm1439, %vm1440
    %v1442 = vsel %vm1441, %v1433, %v1438
    %v1443 = vmul.f32 %v1422, %v1442
    %v1445 = vperm.slane %v1412, 0
    %v1447 = vmul.f32 %v1443, %v1445
    %v1449 = vperm.slane %v1413, 0
    %v1451 = vadd.f32 %v1447, %v1449
    %v1452 = vtanh.pop %v1451
    %1453 = vst.msk [vmem:[#allocation6] sm:$0x3] %vm205, %v1452
    %v1454 = vld [vmem:[%s47] sm:$0xff]
    %v1455 = vld [vmem:[%s47 + $0x8] sm:$0xff]
    %v1456 = vld [vmem:[%s47 + $0x10] sm:$0xff]
    %v1457 = vld [vmem:[%s47 + $0x18] sm:$0xff]
    %v1458 = vld [vmem:[%s49] sm:$0x1]
    %v1460 = vperm.slane %v1458, 0
    %v1463 = vsel %vm950, %v1452, 0
    %1465 = vmatpush.msra.mxu0 0.0
    %1466 = vmatpush.msra.mxu0 0.0
    %1467 = vmatpush.msra.mxu0 0.0
    %1468 = vmatpush.msra.mxu0 0.0
    %1469 = vmatpush.msra.mxu0 0.0
    %1470 = vmatpush.msra.mxu0 0.0
    %1471 = vmatpush.msra.mxu0 0.0
    %1472 = vmatpush.msra.mxu0 0.0
    %1473 = vmatpush.msra.mxu0 0.0
    %1474 = vmatpush.msra.mxu0 0.0
    %1475 = vmatpush.msra.mxu0 0.0
    %1476 = vmatpush.msra.mxu0 0.0
    %1477 = vmatpush.msra.mxu0 %v1457
    %1478 = vmatpush.msra.mxu0 %v1456
    %1479 = vmatpush.msra.mxu0 %v1455
    %1480 = vmatpush.msra.mxu0 %v1454
    %1481 = vmatmul.f32.gmra.mxu0 %v1463
    %v1482 = vpop.f32.mrf.mxu0
    %v1483 = vadd.f32 %v1460, %v1482
    %1484 = vdwg.mxu0
    %vm1485 = vcmask 41984
    %1486 = vst.msk [vmem:[%s59] sm:$0x3] %vm1485, %v1483
    %v1487 = vpack.c.bf16 %v1452, %v1452
    %v1488 = vld [vmem:[%s51] sm:$0xff]
    %v1489 = vld [vmem:[%s51 + $0x8] sm:$0xff]
    %v1490 = vld [vmem:[%s51 + $0x10] sm:$0xff]
    %v1491 = vld [vmem:[%s51 + $0x18] sm:$0xff]
    %v1492 = vld [vmem:[%s51 + $0x20] sm:$0xff]
    %v1493 = vld [vmem:[%s51 + $0x28] sm:$0xff]
    %v1494 = vld [vmem:[%s51 + $0x30] sm:$0xff]
    %v1495 = vld [vmem:[%s51 + $0x38] sm:$0xff]
    %v1496 = vld [vmem:[%s51 + $0x40] sm:$0xff]
    %v1497 = vld [vmem:[%s51 + $0x48] sm:$0xff]
    %v1498 = vld [vmem:[%s51 + $0x50] sm:$0xff]
    %v1499 = vld [vmem:[%s51 + $0x58] sm:$0xff]
    %v1500 = vld [vmem:[%s51 + $0x60] sm:$0xff]
    %v1501 = vld [vmem:[%s51 + $0x68] sm:$0xff]
    %v1502 = vld [vmem:[%s51 + $0x70] sm:$0xff]
    %v1503 = vld [vmem:[%s51 + $0x78] sm:$0xff]
    %v1504 = vld [vmem:[%s51 + $0x80] sm:$0xff]
    %v1505 = vld [vmem:[%s51 + $0x88] sm:$0xff]
    %v1506 = vld [vmem:[%s51 + $0x90] sm:$0xff]
    %v1507 = vld [vmem:[%s51 + $0x98] sm:$0xff]
    %v1508 = vld [vmem:[%s51 + $0xa0] sm:$0xff]
    %v1509 = vld [vmem:[%s51 + $0xa8] sm:$0xff]
    %v1510 = vld [vmem:[%s51 + $0xb0] sm:$0xff]
    %v1511 = vld [vmem:[%s51 + $0xb8] sm:$0xff]
    %v1512 = vld [vmem:[%s51 + $0xc0] sm:$0xff]
    %v1513 = vld [vmem:[%s51 + $0xc8] sm:$0xff]
    %v1514 = vld [vmem:[%s51 + $0xd0] sm:$0xff]
    %v1515 = vld [vmem:[%s51 + $0xd8] sm:$0xff]
    %v1516 = vld [vmem:[%s51 + $0xe0] sm:$0xff]
    %v1517 = vld [vmem:[%s51 + $0xe8] sm:$0xff]
    %v1518 = vld [vmem:[%s51 + $0xf0] sm:$0xff]
    %v1519 = vld [vmem:[%s51 + $0xf8] sm:$0xff]
    %v1552 = vunpack.c.l.b16 %v1488
    %v1553 = vunpack.c.h.b16 %v1488
    %v1554 = vunpack.c.l.b16 %v1489
    %v1555 = vunpack.c.h.b16 %v1489
    %v1556 = vunpack.c.l.b16 %v1490
    %v1557 = vunpack.c.h.b16 %v1490
    %v1558 = vunpack.c.l.b16 %v1491
    %v1559 = vunpack.c.h.b16 %v1491
    %v1560 = vunpack.c.l.b16 %v1492
    %v1561 = vunpack.c.h.b16 %v1492
    %v1562 = vunpack.c.l.b16 %v1493
    %v1563 = vunpack.c.h.b16 %v1493
    %v1564 = vunpack.c.l.b16 %v1494
    %v1565 = vunpack.c.h.b16 %v1494
    %v1566 = vunpack.c.l.b16 %v1495
    %v1567 = vunpack.c.h.b16 %v1495
    %v1568 = vunpack.c.l.b16 %v1496
    %v1569 = vunpack.c.h.b16 %v1496
    %v1570 = vunpack.c.l.b16 %v1497
    %v1571 = vunpack.c.h.b16 %v1497
    %v1572 = vunpack.c.l.b16 %v1498
    %v1573 = vunpack.c.h.b16 %v1498
    %v1574 = vunpack.c.l.b16 %v1499
    %v1575 = vunpack.c.h.b16 %v1499
    %v1576 = vunpack.c.l.b16 %v1500
    %v1577 = vunpack.c.h.b16 %v1500
    %v1578 = vunpack.c.l.b16 %v1501
    %v1579 = vunpack.c.h.b16 %v1501
    %v1580 = vunpack.c.l.b16 %v1502
    %v1581 = vunpack.c.h.b16 %v1502
    %v1582 = vunpack.c.l.b16 %v1503
    %v1583 = vunpack.c.h.b16 %v1503
    %v1584 = vunpack.c.l.b16 %v1504
    %v1585 = vunpack.c.h.b16 %v1504
    %v1586 = vunpack.c.l.b16 %v1505
    %v1587 = vunpack.c.h.b16 %v1505
    %v1588 = vunpack.c.l.b16 %v1506
    %v1589 = vunpack.c.h.b16 %v1506
    %v1590 = vunpack.c.l.b16 %v1507
    %v1591 = vunpack.c.h.b16 %v1507
    %v1592 = vunpack.c.l.b16 %v1508
    %v1593 = vunpack.c.h.b16 %v1508
    %v1594 = vunpack.c.l.b16 %v1509
    %v1595 = vunpack.c.h.b16 %v1509
    %v1596 = vunpack.c.l.b16 %v1510
    %v1597 = vunpack.c.h.b16 %v1510
    %v1598 = vunpack.c.l.b16 %v1511
    %v1599 = vunpack.c.h.b16 %v1511
    %v1600 = vunpack.c.l.b16 %v1512
    %v1601 = vunpack.c.h.b16 %v1512
    %v1602 = vunpack.c.l.b16 %v1513
    %v1603 = vunpack.c.h.b16 %v1513
    %v1604 = vunpack.c.l.b16 %v1514
    %v1605 = vunpack.c.h.b16 %v1514
    %v1606 = vunpack.c.l.b16 %v1515
    %v1607 = vunpack.c.h.b16 %v1515
    %v1608 = vunpack.c.l.b16 %v1516
    %v1609 = vunpack.c.h.b16 %v1516
    %v1610 = vunpack.c.l.b16 %v1517
    %v1611 = vunpack.c.h.b16 %v1517
    %v1612 = vunpack.c.l.b16 %v1518
    %v1613 = vunpack.c.h.b16 %v1518
    %v1614 = vunpack.c.l.b16 %v1519
    %v1615 = vunpack.c.h.b16 %v1519
    %v1616 = vpack.c.b16 %v1568, %v1552
    %v1617 = vpack.c.b16 %v1569, %v1553
    %v1618 = vpack.c.b16 %v1570, %v1554
    %v1619 = vpack.c.b16 %v1571, %v1555
    %v1620 = vpack.c.b16 %v1572, %v1556
    %v1621 = vpack.c.b16 %v1573, %v1557
    %v1622 = vpack.c.b16 %v1574, %v1558
    %v1623 = vpack.c.b16 %v1575, %v1559
    %v1624 = vpack.c.b16 %v1576, %v1560
    %v1625 = vpack.c.b16 %v1577, %v1561
    %v1626 = vpack.c.b16 %v1578, %v1562
    %v1627 = vpack.c.b16 %v1579, %v1563
    %v1628 = vpack.c.b16 %v1580, %v1564
    %v1629 = vpack.c.b16 %v1581, %v1565
    %v1630 = vpack.c.b16 %v1582, %v1566
    %v1631 = vpack.c.b16 %v1583, %v1567
    %v1632 = vpack.c.b16 %v1600, %v1584
    %v1633 = vpack.c.b16 %v1601, %v1585
    %v1634 = vpack.c.b16 %v1602, %v1586
    %v1635 = vpack.c.b16 %v1603, %v1587
    %v1636 = vpack.c.b16 %v1604, %v1588
    %v1637 = vpack.c.b16 %v1605, %v1589
    %v1638 = vpack.c.b16 %v1606, %v1590
    %v1639 = vpack.c.b16 %v1607, %v1591
    %v1640 = vpack.c.b16 %v1608, %v1592
    %v1641 = vpack.c.b16 %v1609, %v1593
    %v1642 = vpack.c.b16 %v1610, %v1594
    %v1643 = vpack.c.b16 %v1611, %v1595
    %v1644 = vpack.c.b16 %v1612, %v1596
    %v1645 = vpack.c.b16 %v1613, %v1597
    %v1646 = vpack.c.b16 %v1614, %v1598
    %v1647 = vpack.c.b16 %v1615, %v1599
    %v1681 = vsel %vm950, %v1487, 0
    %1683 = vmatpush.bf16.msra.mxu0 0
    %1684 = vmatpush.bf16.msra.mxu0 0
    %1685 = vmatpush.bf16.msra.mxu0 0
    %1686 = vmatpush.bf16.msra.mxu0 0
    %1687 = vmatpush.bf16.msra.mxu0 0
    %1688 = vmatpush.bf16.msra.mxu0 0
    %1689 = vmatpush.bf16.msra.mxu0 %v1632
    %1690 = vmatpush.bf16.msra.mxu0 %v1616
    %1691 = vmatmul.bf16.gmra.mxu0 %v1681
    %v1692 = vpop.f32.mrf.mxu0
    %v1693 = vadd.f32 0.0, %v1692
    %v1694 = vpop.f32.mrf.mxu0
    %1695 = vdwg.mxu0
    %1696 = vmatpush.bf16.msra.mxu0 0
    %1697 = vmatpush.bf16.msra.mxu0 0
    %1698 = vmatpush.bf16.msra.mxu0 0
    %1699 = vmatpush.bf16.msra.mxu0 0
    %1700 = vmatpush.bf16.msra.mxu0 0
    %1701 = vmatpush.bf16.msra.mxu0 0
    %1702 = vmatpush.bf16.msra.mxu0 %v1633
    %1703 = vmatpush.bf16.msra.mxu0 %v1617
    %1704 = vmatmul.bf16.gmra.mxu0 %v1681
    %v1705 = vpop.f32.mrf.mxu0
    %v1706 = vadd.f32 0.0, %v1705
    %v1707 = vpop.f32.mrf.mxu0
    %1708 = vdwg.mxu0
    %1709 = vmatpush.bf16.msra.mxu0 0
    %1710 = vmatpush.bf16.msra.mxu0 0
    %1711 = vmatpush.bf16.msra.mxu0 0
    %1712 = vmatpush.bf16.msra.mxu0 0
    %1713 = vmatpush.bf16.msra.mxu0 0
    %1714 = vmatpush.bf16.msra.mxu0 0
    %1715 = vmatpush.bf16.msra.mxu0 %v1634
    %1716 = vmatpush.bf16.msra.mxu0 %v1618
    %1717 = vmatmul.bf16.gmra.mxu0 %v1681
    %v1718 = vpop.f32.mrf.mxu0
    %v1719 = vadd.f32 0.0, %v1718
    %v1720 = vpop.f32.mrf.mxu0
    %1721 = vdwg.mxu0
    %1722 = vmatpush.bf16.msra.mxu0 0
    %1723 = vmatpush.bf16.msra.mxu0 0
    %1724 = vmatpush.bf16.msra.mxu0 0
    %1725 = vmatpush.bf16.msra.mxu0 0
    %1726 = vmatpush.bf16.msra.mxu0 0
    %1727 = vmatpush.bf16.msra.mxu0 0
    %1728 = vmatpush.bf16.msra.mxu0 %v1635
    %1729 = vmatpush.bf16.msra.mxu0 %v1619
    %1730 = vmatmul.bf16.gmra.mxu0 %v1681
    %v1731 = vpop.f32.mrf.mxu0
    %v1732 = vadd.f32 0.0, %v1731
    %v1733 = vpop.f32.mrf.mxu0
    %1734 = vdwg.mxu0
    %1735 = vmatpush.bf16.msra.mxu0 0
    %1736 = vmatpush.bf16.msra.mxu0 0
    %1737 = vmatpush.bf16.msra.mxu0 0
    %1738 = vmatpush.bf16.msra.mxu0 0
    %1739 = vmatpush.bf16.msra.mxu0 0
    %1740 = vmatpush.bf16.msra.mxu0 0
    %1741 = vmatpush.bf16.msra.mxu0 %v1636
    %1742 = vmatpush.bf16.msra.mxu0 %v1620
    %1743 = vmatmul.bf16.gmra.mxu0 %v1681
    %v1744 = vpop.f32.mrf.mxu0
    %v1745 = vadd.f32 0.0, %v1744
    %v1746 = vpop.f32.mrf.mxu0
    %1747 = vdwg.mxu0
    %1748 = vmatpush.bf16.msra.mxu0 0
    %1749 = vmatpush.bf16.msra.mxu0 0
    %1750 = vmatpush.bf16.msra.mxu0 0
    %1751 = vmatpush.bf16.msra.mxu0 0
    %1752 = vmatpush.bf16.msra.mxu0 0
    %1753 = vmatpush.bf16.msra.mxu0 0
    %1754 = vmatpush.bf16.msra.mxu0 %v1637
    %1755 = vmatpush.bf16.msra.mxu0 %v1621
    %1756 = vmatmul.bf16.gmra.mxu0 %v1681
    %v1757 = vpop.f32.mrf.mxu0
    %v1758 = vadd.f32 0.0, %v1757
    %v1759 = vpop.f32.mrf.mxu0
    %1760 = vdwg.mxu0
    %1761 = vmatpush.bf16.msra.mxu0 0
    %1762 = vmatpush.bf16.msra.mxu0 0
    %1763 = vmatpush.bf16.msra.mxu0 0
    %1764 = vmatpush.bf16.msra.mxu0 0
    %1765 = vmatpush.bf16.msra.mxu0 0
    %1766 = vmatpush.bf16.msra.mxu0 0
    %1767 = vmatpush.bf16.msra.mxu0 %v1638
    %1768 = vmatpush.bf16.msra.mxu0 %v1622
    %1769 = vmatmul.bf16.gmra.mxu0 %v1681
    %v1770 = vpop.f32.mrf.mxu0
    %v1771 = vadd.f32 0.0, %v1770
    %v1772 = vpop.f32.mrf.mxu0
    %1773 = vdwg.mxu0
    %1774 = vmatpush.bf16.msra.mxu0 0
    %1775 = vmatpush.bf16.msra.mxu0 0
    %1776 = vmatpush.bf16.msra.mxu0 0
    %1777 = vmatpush.bf16.msra.mxu0 0
    %1778 = vmatpush.bf16.msra.mxu0 0
    %1779 = vmatpush.bf16.msra.mxu0 0
    %1780 = vmatpush.bf16.msra.mxu0 %v1639
    %1781 = vmatpush.bf16.msra.mxu0 %v1623
    %1782 = vmatmul.bf16.gmra.mxu0 %v1681
    %v1783 = vpop.f32.mrf.mxu0
    %v1784 = vadd.f32 0.0, %v1783
    %v1785 = vpop.f32.mrf.mxu0
    %1786 = vdwg.mxu0
    %1787 = vmatpush.bf16.msra.mxu0 0
    %1788 = vmatpush.bf16.msra.mxu0 0
    %1789 = vmatpush.bf16.msra.mxu0 0
    %1790 = vmatpush.bf16.msra.mxu0 0
    %1791 = vmatpush.bf16.msra.mxu0 0
    %1792 = vmatpush.bf16.msra.mxu0 0
    %1793 = vmatpush.bf16.msra.mxu0 %v1640
    %1794 = vmatpush.bf16.msra.mxu0 %v1624
    %1795 = vmatmul.bf16.gmra.mxu0 %v1681
    %v1796 = vpop.f32.mrf.mxu0
    %v1797 = vadd.f32 0.0, %v1796
    %v1798 = vpop.f32.mrf.mxu0
    %1799 = vdwg.mxu0
    %1800 = vmatpush.bf16.msra.mxu0 0
    %1801 = vmatpush.bf16.msra.mxu0 0
    %1802 = vmatpush.bf16.msra.mxu0 0
    %1803 = vmatpush.bf16.msra.mxu0 0
    %1804 = vmatpush.bf16.msra.mxu0 0
    %1805 = vmatpush.bf16.msra.mxu0 0
    %1806 = vmatpush.bf16.msra.mxu0 %v1641
    %1807 = vmatpush.bf16.msra.mxu0 %v1625
    %1808 = vmatmul.bf16.gmra.mxu0 %v1681
    %v1809 = vpop.f32.mrf.mxu0
    %v1810 = vadd.f32 0.0, %v1809
    %v1811 = vpop.f32.mrf.mxu0
    %1812 = vdwg.mxu0
    %1813 = vmatpush.bf16.msra.mxu0 0
    %1814 = vmatpush.bf16.msra.mxu0 0
    %1815 = vmatpush.bf16.msra.mxu0 0
    %1816 = vmatpush.bf16.msra.mxu0 0
    %1817 = vmatpush.bf16.msra.mxu0 0
    %1818 = vmatpush.bf16.msra.mxu0 0
    %1819 = vmatpush.bf16.msra.mxu0 %v1642
    %1820 = vmatpush.bf16.msra.mxu0 %v1626
    %1821 = vmatmul.bf16.gmra.mxu0 %v1681
    %v1822 = vpop.f32.mrf.mxu0
    %v1823 = vadd.f32 0.0, %v1822
    %v1824 = vpop.f32.mrf.mxu0
    %1825 = vdwg.mxu0
    %1826 = vmatpush.bf16.msra.mxu0 0
    %1827 = vmatpush.bf16.msra.mxu0 0
    %1828 = vmatpush.bf16.msra.mxu0 0
    %1829 = vmatpush.bf16.msra.mxu0 0
    %1830 = vmatpush.bf16.msra.mxu0 0
    %1831 = vmatpush.bf16.msra.mxu0 0
    %1832 = vmatpush.bf16.msra.mxu0 %v1643
    %1833 = vmatpush.bf16.msra.mxu0 %v1627
    %1834 = vmatmul.bf16.gmra.mxu0 %v1681
    %v1835 = vpop.f32.mrf.mxu0
    %v1836 = vadd.f32 0.0, %v1835
    %v1837 = vpop.f32.mrf.mxu0
    %1838 = vdwg.mxu0
    %1839 = vmatpush.bf16.msra.mxu0 0
    %1840 = vmatpush.bf16.msra.mxu0 0
    %1841 = vmatpush.bf16.msra.mxu0 0
    %1842 = vmatpush.bf16.msra.mxu0 0
    %1843 = vmatpush.bf16.msra.mxu0 0
    %1844 = vmatpush.bf16.msra.mxu0 0
    %1845 = vmatpush.bf16.msra.mxu0 %v1644
    %1846 = vmatpush.bf16.msra.mxu0 %v1628
    %1847 = vmatmul.bf16.gmra.mxu0 %v1681
    %v1848 = vpop.f32.mrf.mxu0
    %v1849 = vadd.f32 0.0, %v1848
    %v1850 = vpop.f32.mrf.mxu0
    %1851 = vdwg.mxu0
    %1852 = vmatpush.bf16.msra.mxu0 0
    %1853 = vmatpush.bf16.msra.mxu0 0
    %1854 = vmatpush.bf16.msra.mxu0 0
    %1855 = vmatpush.bf16.msra.mxu0 0
    %1856 = vmatpush.bf16.msra.mxu0 0
    %1857 = vmatpush.bf16.msra.mxu0 0
    %1858 = vmatpush.bf16.msra.mxu0 %v1645
    %1859 = vmatpush.bf16.msra.mxu0 %v1629
    %1860 = vmatmul.bf16.gmra.mxu0 %v1681
    %v1861 = vpop.f32.mrf.mxu0
    %v1862 = vadd.f32 0.0, %v1861
    %v1863 = vpop.f32.mrf.mxu0
    %1864 = vdwg.mxu0
    %1865 = vmatpush.bf16.msra.mxu0 0
    %1866 = vmatpush.bf16.msra.mxu0 0
    %1867 = vmatpush.bf16.msra.mxu0 0
    %1868 = vmatpush.bf16.msra.mxu0 0
    %1869 = vmatpush.bf16.msra.mxu0 0
    %1870 = vmatpush.bf16.msra.mxu0 0
    %1871 = vmatpush.bf16.msra.mxu0 %v1646
    %1872 = vmatpush.bf16.msra.mxu0 %v1630
    %1873 = vmatmul.bf16.gmra.mxu0 %v1681
    %v1874 = vpop.f32.mrf.mxu0
    %v1875 = vadd.f32 0.0, %v1874
    %v1876 = vpop.f32.mrf.mxu0
    %1877 = vdwg.mxu0
    %1878 = vmatpush.bf16.msra.mxu0 0
    %1879 = vmatpush.bf16.msra.mxu0 0
    %1880 = vmatpush.bf16.msra.mxu0 0
    %1881 = vmatpush.bf16.msra.mxu0 0
    %1882 = vmatpush.bf16.msra.mxu0 0
    %1883 = vmatpush.bf16.msra.mxu0 0
    %1884 = vmatpush.bf16.msra.mxu0 %v1647
    %1885 = vmatpush.bf16.msra.mxu0 %v1631
    %1886 = vmatmul.bf16.gmra.mxu0 %v1681
    %v1887 = vpop.f32.mrf.mxu0
    %v1888 = vadd.f32 0.0, %v1887
    %v1889 = vpop.f32.mrf.mxu0
    %1890 = vdwg.mxu0
    %v1907 = vrot.slane %v1706, 6
    %v1908 = vrot.slane %v1719, 4
    %v1909 = vrot.slane %v1732, 2
    %v1910 = vrot.slane %v1758, 6
    %v1911 = vrot.slane %v1771, 4
    %v1912 = vrot.slane %v1784, 2
    %v1913 = vrot.slane %v1810, 6
    %v1914 = vrot.slane %v1823, 4
    %v1915 = vrot.slane %v1836, 2
    %v1916 = vrot.slane %v1862, 6
    %v1917 = vrot.slane %v1875, 4
    %v1918 = vrot.slane %v1888, 2
    %vm1919 = vcmask 1041408
    %v1920 = vsel %vm1919, %v1693, %v1907
    %vm1921 = vcmask 1045508
    %v1922 = vsel %vm1921, %v1908, %v1909
    %vm1923 = vcmask 1043456
    %v1924 = vsel %vm1923, %v1920, %v1922
    %v1925 = vsel %vm1919, %v1745, %v1910
    %v1926 = vsel %vm1921, %v1911, %v1912
    %v1927 = vsel %vm1923, %v1925, %v1926
    %v1928 = vsel %vm1919, %v1797, %v1913
    %v1929 = vsel %vm1921, %v1914, %v1915
    %v1930 = vsel %vm1923, %v1928, %v1929
    %v1931 = vsel %vm1919, %v1849, %v1916
    %v1932 = vsel %vm1921, %v1917, %v1918
    %v1933 = vsel %vm1923, %v1931, %v1932
    %1938 = vst [vmem:[%s61] sm:$0xff] %v1924
    %1939 = vst [vmem:[%s61 + $0x8] sm:$0xff] %v1927
    %1940 = vst [vmem:[%s61 + $0x10] sm:$0xff] %v1930
    %1941 = vst [vmem:[%s61 + $0x18] sm:$0xff] %v1933
    // Predicated region
    $region106: #{netG_forward.20} parent=1 // pred_check
      _
    $region107: #{netG_forward.20} parent=1 // pred_check_branch
      %1943 = sbr.rel (0) target = $region109
    $region108: #{netG_forward.20} parent=1 // pred_region
      %1945 = vsyncadd [#allocation3], 0
      %s1947 = sshll.u32 [#allocation2], 4
      %s1948 = int_to_ptr.vmem [resolvable:$true] %s1947
      %s1949 = sshll.u32 %s53, 4
      %s1950 = int_to_ptr.hbm [resolvable:$true] %s1949
      %1952 = dma.vmem_to_hbm [thread:$0]  %s1948, 32, %s1950, [#allocation3]
    $region109: #{netG_forward.20} parent=1 // pred_fallthru
      _
    // Predicated region
    $region110: #{netG_forward.20} parent=1 // pred_check
      _
    $region111: #{netG_forward.20} parent=1 // pred_check_branch
      %1954 = sbr.rel (0) target = $region113
    $region112: #{netG_forward.20} parent=1 // pred_region
      %1956 = vsyncadd [#allocation5], 0
      %s1958 = sshll.u32 [#allocation4], 4
      %s1959 = int_to_ptr.vmem [resolvable:$true] %s1958
      %s1960 = sshll.u32 %s55, 4
      %s1961 = int_to_ptr.hbm [resolvable:$true] %s1960
      %1963 = dma.vmem_to_hbm [thread:$0]  %s1959, 32, %s1961, [#allocation5]
    $region113: #{netG_forward.20} parent=1 // pred_fallthru
      _
    // Predicated region
    $region114: #{netG_forward.20} parent=1 // pred_check
      _
    $region115: #{netG_forward.20} parent=1 // pred_check_branch
      %1965 = sbr.rel (0) target = $region117
    $region116: #{netG_forward.20} parent=1 // pred_region
      %1967 = vsyncadd [#allocation5], 0
      %s1969 = sshll.u32 [#allocation6], 4
      %s1970 = int_to_ptr.vmem [resolvable:$true] %s1969
      %s1971 = sshll.u32 %s57, 4
      %s1972 = int_to_ptr.hbm [resolvable:$true] %s1971
      %1974 = dma.vmem_to_hbm [thread:$0]  %s1970, 32, %s1972, [#allocation5]
    $region117: #{netG_forward.20} parent=1 // pred_fallthru
      _
    // Predicated region
    $region118: #{netG_forward.20} parent=1 // pred_check
      _
    $region119: #{netG_forward.20} parent=1 // pred_check_branch
      %1976 = sbr.rel (0) target = $region121
    $region120: #{netG_forward.20} parent=1 // pred_region
      _
    $region121: #{netG_forward.20} parent=1 // pred_fallthru
      _
    // Predicated region
    $region122: #{netG_forward.20} parent=1 // pred_check
      _
    $region123: #{netG_forward.20} parent=1 // pred_check_branch
      %1978 = sbr.rel (0) target = $region125
    $region124: #{netG_forward.20} parent=1 // pred_region
      _
    $region125: #{netG_forward.20} parent=1 // pred_fallthru
      _
    // Predicated region
    $region126: #{netG_forward.20} parent=1 // pred_check
      _
    $region127: #{netG_forward.20} parent=1 // pred_check_branch
      %1980 = sbr.rel (0) target = $region129
    $region128: #{netG_forward.20} parent=1 // pred_region
      %1982 = dma.done [#allocation3], 32
    $region129: #{netG_forward.20} parent=1 // pred_fallthru
      _
    // Predicated region
    $region130: #{netG_forward.20} parent=1 // pred_check
      _
    $region131: #{netG_forward.20} parent=1 // pred_check_branch
      %1984 = sbr.rel (0) target = $region133
    $region132: #{netG_forward.20} parent=1 // pred_region
      %1986 = dma.done [#allocation5], 32
    $region133: #{netG_forward.20} parent=1 // pred_fallthru
      _
    // Predicated region
    $region134: #{netG_forward.20} parent=1 // pred_check
      _
    $region135: #{netG_forward.20} parent=1 // pred_check_branch
      %1988 = sbr.rel (0) target = $region137
    $region136: #{netG_forward.20} parent=1 // pred_region
      %1990 = dma.done [#allocation5], 32
    $region137: #{netG_forward.20} parent=1 // pred_fallthru
      _
    // Predicated region
    $region138: #{netG_forward.20} parent=1 // pred_check
      _
    $region139: #{netG_forward.20} parent=1 // pred_check_branch
      %1992 = sbr.rel (0) target = $region141
    $region140: #{netG_forward.20} parent=1 // pred_region
      _
    $region141: #{netG_forward.20} parent=1 // pred_fallthru
      _
    // Predicated region
    $region142: #{netG_forward.20} parent=1 // pred_check
      _
    $region143: #{netG_forward.20} parent=1 // pred_check_branch
      %1994 = sbr.rel (0) target = $region145
    $region144: #{netG_forward.20} parent=1 // pred_region
      _
    $region145: #{netG_forward.20} parent=1 // pred_fallthru
      _
    %1995 = vsyncpa [#allocation3], 1
    %1996 = vsyncpa [#allocation5], 1

</llo_original>
